<compile_context>
chip_gen: v7x
topology: tpu7x:2x2x1
jax: 0.10.0
libtpu: 0.0.40
codegen_flags: <defaults>
</compile_context>

<pallas_src>
import functools

import jax
import jax.numpy as jnp
from jax.experimental import pallas as pl
from jax.experimental.pallas import tpu as pltpu
from jax.scipy.linalg import block_diag

# ----------------------------- model configuration (small, deterministic) ---
B = 2            # batch
F = 4            # feature_num (channels)
W = 64           # window_size  (B*W = 128 -> lane-dense folded layout)
MID = 8          # mid_channel
NUM_BLOCK = 2
SPA_KS = 3
FRE_KS = 3
FUS_KS = 3
R = 2            # channel-attention reduction

L = B * W        # folded lane length (= 128)

# block-diagonal (3-branch batched) conv weight shapes
C1O = 3 * MID                     # 24
C1I = 3 * SPA_KS * F              # 36
C2O = 3 * F                       # 12
C2I = 3 * SPA_KS * MID            # 72

# ---- packed weight/const slab row layout (single DMA'd operand per pallas_call)
R_W1 = 0                          # bd conv1 weight        (C1O, C1I)
R_W2 = R_W1 + C1O                 # bd conv2 weight        (C2O, C2I)
R_B1 = R_W2 + C2O                 # bd conv1 bias          (C1O, 1)
R_B2 = R_B1 + C1O                 # bd conv2 bias          (C2O, 1)
R_SA = R_B2 + C2O                 # spatial-attn conv w    (1, 2*FUS_KS)
R_CA1 = R_SA + 1                  # channel-attn w1        (F//R, F)
R_CA2 = R_CA1 + F // R            # channel-attn w2        (F, F//R)
R_CNN = R_CA2 + F                 # CNNI head conv w       (1, 3*F)      [last block only]
R_SCAL = R_CNN + 1                # [cnni_b, mlp_b]        (1, 2)        [last block only]
R_MM1 = R_SCAL + 1                # edge mask for -1 tap   (1, L)
R_MP1 = R_MM1 + 1                 # edge mask for +1 tap   (1, L)
R_SEG = R_MP1 + 1                 # window-segment masks   (B, L)
SLAB_ROWS = ((R_SEG + B + 7) // 8) * 8
SLAB_COLS = L
assert SLAB_COLS >= C2I

HIGHEST = jax.lax.Precision.HIGHEST


def _dot(a, b):
    return jnp.dot(a, b, preferred_element_type=jnp.float32, precision=HIGHEST)


def _relu(v):
    return jnp.maximum(v, 0.0)


# ----------------------------- in-kernel helpers ----------------------------
def _conv1d(x, wmat, bias, m_m1, m_p1):
    """'same' Conv1d (cross-correlation, k in {1,3}) on the folded (Cin, L=B*W) layout.

    x:     (Cin, L) f32, lanes are batch-major window segments.
    wmat:  (Cout, K*Cin) -- torch (Cout, Cin, K) reshaped tap-major in the wrapper.
    bias:  (Cout, 1) or None.
    m_m1/m_p1: (1, L) 0/1 masks zeroing taps whose -1 / +1 neighbour crosses a
               window (= batch segment) boundary.
    """
    cin, Ln = x.shape
    K = wmat.shape[1] // cin
    if K == 1:
        taps = x
    else:
        left = pltpu.roll(x, 1, axis=1) * m_m1          # pos w  <-  x[w-1]  (non-negative shift)
        right = pltpu.roll(x, Ln - 1, axis=1) * m_p1    # pos w  <-  x[w+1]
        taps = jnp.concatenate([left, x, right], axis=0)    # (3*Cin, L), tap-major
    out = _dot(wmat, taps)
    if bias is not None:
        out = out + bias
    return out


def _sff_block_body(stacked, slab_ref, segcols_ref, dinv_ref, nbatch):
    """One SFFBlock on the folded (., L=B*W) layout. stacked = [x; pha; amp] (3F, L)."""
    Fn = stacked.shape[0] // 3
    Ln = stacked.shape[1]
    Wn = Ln // nbatch

    # ---- constants / weights: static slices of the packed slab (free)
    m_m1 = slab_ref[R_MM1:R_MM1 + 1, :]
    m_p1 = slab_ref[R_MP1:R_MP1 + 1, :]
    seg = slab_ref[R_SEG:R_SEG + nbatch, :]             # (B, L) 0/1 window-segment masks
    seg_avg = segcols_ref[:, 0:nbatch]                   # (L, B) mean-pool matrix

    bd_w1 = slab_ref[R_W1:R_W1 + C1O, 0:C1I]
    bd_b1 = slab_ref[R_B1:R_B1 + C1O, 0:1]
    bd_w2 = slab_ref[R_W2:R_W2 + C2O, 0:C2I]
    bd_b2 = slab_ref[R_B2:R_B2 + C2O, 0:1]
    sa_w = slab_ref[R_SA:R_SA + 1, 0:2 * FUS_KS]
    ca_w1 = slab_ref[R_CA1:R_CA1 + F // R, 0:F]
    ca_w2 = slab_ref[R_CA2:R_CA2 + F, 0:F // R]

    # ---- SpatialFlow + phase + amplitude convs batched as 2 block-diagonal matmuls
    h1 = _relu(_conv1d(stacked, bd_w1, bd_b1, m_m1, m_p1))        # (3*MID, L)
    s2 = _conv1d(h1, bd_w2, bd_b2, m_m1, m_p1)                    # (3*F, L)
    spa = s2[0:Fn, :]
    rp = s2[Fn:2 * Fn, :]
    ra = s2[2 * Fn:3 * Fn, :]

    # ---- FrequencyFlow tail: inverse DFT as ONE 2L-deep MXU contraction, then magnitude
    ri = jnp.concatenate([ra * jnp.cos(rp), ra * jnp.sin(rp)], axis=1)   # (F, 2L) = [re | im]
    prod = _dot(ri, dinv_ref[...])                                       # (F, 2L) = [W*xr | W*xi]
    xr = prod[:, 0:Ln]                                                   # lane-tile aligned slices
    xi = prod[:, Ln:2 * Ln]
    fre = jnp.sqrt(xr * xr + xi * xi) * (1.0 / Wn)

    # ---- FusionBlock: spatial attention on (fre - spa)
    diff = fre - spa
    sa_in = jnp.concatenate([jnp.mean(diff, axis=0, keepdims=True),
                             jnp.max(diff, axis=0, keepdims=True)], axis=0)   # (2, L)
    sa_att = jax.nn.sigmoid(_conv1d(sa_in, sa_w, None, m_m1, m_p1))           # (1, L)
    c = spa + sa_att * diff                                                   # (F, L)

    # ---- FusionBlock: channel attention (matmul pooling / broadcast, no lane slicing)
    pmean = _dot(c, seg_avg)                                                  # (F, B)
    neg = jnp.float32(-1e30)
    pmax = jnp.concatenate(
        [jnp.max(jnp.where(seg[b:b + 1, :] > 0.5, c, neg), axis=1, keepdims=True)
         for b in range(nbatch)], axis=1)                                     # (F, B)
    pmat = jnp.concatenate([pmean, pmax], axis=1)                             # (F, 2B)
    hmid = _relu(_dot(ca_w1, pmat))
    mlp = _dot(ca_w2, hmid)                                                   # (F, 2B)
    att = jax.nn.sigmoid(mlp[:, 0:nbatch] + mlp[:, nbatch:2 * nbatch])        # (F, B)
    att_full = _dot(att, seg)                                                 # (F, L)

    return att_full * c + stacked[0:Fn, :]


# ----------------------------- kernels ---------------------------------------
def sff_block_kernel(nbatch, stacked_ref, slab_ref, segcols_ref, dinv_ref, o_ref):
    o_ref[...] = _sff_block_body(stacked_ref[...], slab_ref, segcols_ref, dinv_ref, nbatch)


def sff_block_head_kernel(nbatch, stacked_ref, slab_ref, segcols_ref, dinv_ref, o_ref):
    """Last SFFBlock fused with the CNNI (Conv1d F->1, k=3) + Linear(W->1) head."""
    feat = _sff_block_body(stacked_ref[...], slab_ref, segcols_ref, dinv_ref, nbatch)
    m_m1 = slab_ref[R_MM1:R_MM1 + 1, :]
    m_p1 = slab_ref[R_MP1:R_MP1 + 1, :]
    cnni_w = slab_ref[R_CNN:R_CNN + 1, 0:3 * F]
    cnni_b = slab_ref[R_SCAL:R_SCAL + 1, 0:1]
    mlp_b = slab_ref[R_SCAL:R_SCAL + 1, 1:2]
    mwmat = segcols_ref[:, nbatch:2 * nbatch]                # (L, B) block-diag Linear(W->1)
    h = _conv1d(feat, cnni_w, cnni_b, m_m1, m_p1)            # (1, L)
    o_ref[...] = _dot(h, mwmat) + mlp_b                      # (1, B)


# ----------------------------- wrapper ---------------------------------------
def _wconv(w):
    """torch Conv1d weight (Cout, Cin, K) -> (Cout, K*Cin), tap-major."""
    cout, cin, k = w.shape
    return jnp.transpose(w, (0, 2, 1)).reshape(cout, k * cin)


def _bd_conv_weight(ws):
    """Stack 3 parallel conv branches into one block-diagonal (sum Cout, K*sum Cin) weight."""
    K = ws[0].shape[2]
    taps = [block_diag(*[w[:, :, k] for w in ws]) for k in range(K)]
    return jnp.concatenate(taps, axis=1)


def _make_slab(bp, m_m1, m_p1, seg, head):
    slab = jnp.zeros((SLAB_ROWS, SLAB_COLS), jnp.float32)
    bd_w1 = _bd_conv_weight([bp['sf_w1'], bp['ph_w1'], bp['am_w1']])
    bd_w2 = _bd_conv_weight([bp['sf_w2'], bp['ph_w2'], bp['am_w2']])
    bd_b1 = jnp.concatenate([bp['sf_b1'], bp['ph_b1'], bp['am_b1']], axis=0)
    bd_b2 = jnp.concatenate([bp['sf_b2'], bp['ph_b2'], bp['am_b2']], axis=0)
    slab = slab.at[R_W1:R_W1 + C1O, 0:C1I].set(bd_w1)
    slab = slab.at[R_W2:R_W2 + C2O, 0:C2I].set(bd_w2)
    slab = slab.at[R_B1:R_B1 + C1O, 0:1].set(bd_b1)
    slab = slab.at[R_B2:R_B2 + C2O, 0:1].set(bd_b2)
    slab = slab.at[R_SA:R_SA + 1, 0:2 * FUS_KS].set(_wconv(bp['sa_w']))
    slab = slab.at[R_CA1:R_CA1 + F // R, 0:F].set(bp['ca_w1'])
    slab = slab.at[R_CA2:R_CA2 + F, 0:F // R].set(bp['ca_w2'])
    slab = slab.at[R_MM1:R_MM1 + 1, 0:L].set(m_m1)
    slab = slab.at[R_MP1:R_MP1 + 1, 0:L].set(m_p1)
    slab = slab.at[R_SEG:R_SEG + B, 0:L].set(seg)
    if head is not None:
        cnni_w, cnni_b, mlp_b = head
        slab = slab.at[R_CNN:R_CNN + 1, 0:3 * F].set(_wconv(cnni_w))
        slab = slab.at[R_SCAL:R_SCAL + 1, 0:1].set(cnni_b)
        slab = slab.at[R_SCAL:R_SCAL + 1, 1:2].set(mlp_b)
    return slab


def prepare_pallas_params(params):
    """Pack weights + constants into per-block slabs / shared operands (runs once, outside jit)."""
    n = jnp.arange(W, dtype=jnp.float32)
    ang = 2.0 * jnp.pi * n[:, None] * n[None, :] / W
    eye = jnp.eye(B, dtype=jnp.float32)
    Cm = jnp.kron(eye, jnp.cos(ang))                                        # (L, L)
    Sm = jnp.kron(eye, jnp.sin(ang))
    dinv = jnp.concatenate(
        [jnp.concatenate([Cm, Sm], axis=1),
         jnp.concatenate([-Sm, Cm], axis=1)], axis=0)                       # (2L, 2L) = (256, 256)

    pos = jnp.arange(L) % W
    m_m1 = (pos >= 1).astype(jnp.float32)[None, :]                          # -1 tap validity
    m_p1 = (pos <= W - 2).astype(jnp.float32)[None, :]                      # +1 tap validity
    seg = (jnp.arange(L)[None, :] // W == jnp.arange(B)[:, None]).astype(jnp.float32)  # (B, L)

    seg_avg = seg.T / float(W)                                              # (L, B) mean-pool
    mwmat = jnp.kron(eye, params['mlp_w'].reshape(W, 1))                    # (L, B) block-diag MLP
    segcols = jnp.concatenate([seg_avg, mwmat], axis=1)                     # (L, 2B)

    nblk = len(params['blocks'])
    slabs = []
    for i, bp in enumerate(params['blocks']):
        head = (params['cnni_w'], params['cnni_b'], params['mlp_b']) if i == nblk - 1 else None
        slabs.append(_make_slab(bp, m_m1, m_p1, seg, head))
    return dict(slabs=tuple(slabs), segcols=segcols, dinv=dinv)


@jax.jit
def sffnet_pallas(x, prep):
    Bn, Fn, Wn = x.shape
    Ln = Bn * Wn
    slabs, segcols, dinv = prep['slabs'], prep['segcols'], prep['dinv']

    feat2 = jnp.transpose(x, (1, 0, 2)).reshape(Fn, Ln)      # (F, B*W), batch-major lane segments
    nblk = len(slabs)
    soc = None
    for i, slab in enumerate(slabs):
        # TODO(synk): forward FFT + angle/abs have no Pallas primitive; an in-kernel DFT + atan2
        #   risks a +-pi branch-cut flip on the numerically-real Nyquist bin, so this stays
        #   plain-JAX glue (only reshapes between kernels, no transposes).
        fr = jnp.fft.fft(feat2.reshape(Fn, Bn, Wn), axis=2)
        pha2 = jnp.angle(fr).astype(jnp.float32).reshape(Fn, Ln)
        amp2 = jnp.abs(fr).astype(jnp.float32).reshape(Fn, Ln)
        stacked = jnp.concatenate([feat2, pha2, amp2], axis=0)      # (3F, L): single activation operand
        if i < nblk - 1:
            feat2 = pl.pallas_call(
                functools.partial(sff_block_kernel, Bn),
                out_shape=jax.ShapeDtypeStruct((Fn, Ln), jnp.float32),
            )(stacked, slab, segcols, dinv)
        else:
            soc = pl.pallas_call(
                functools.partial(sff_block_head_kernel, Bn),
                out_shape=jax.ShapeDtypeStruct((1, Bn), jnp.float32),
            )(stacked, slab, segcols, dinv)
    return soc.reshape(Bn, 1)


# ----------------------------- pure-JAX reference ---------------------------
def _conv1d_ref(x, w, b):
    P = w.shape[-1] // 2
    out = jax.lax.conv_general_dilated(
        x, w, window_strides=(1,), padding=[(P, P)],
        dimension_numbers=('NCH', 'OIH', 'NCH'),
        precision=HIGHEST)
    if b is not None:
        out = out + b[None, :, :]
    return out


def sffnet_ref(x, params):
    relu = jax.nn.relu
    feat = x
    for bp in params['blocks']:
        fr = jnp.fft.fft(feat, axis=2)
        pha = jnp.angle(fr)
        amp = jnp.abs(fr)
        spa = _conv1d_ref(relu(_conv1d_ref(feat, bp['sf_w1'], bp['sf_b1'])), bp['sf_w2'], bp['sf_b2'])
        rp = _conv1d_ref(relu(_conv1d_ref(pha, bp['ph_w1'], bp['ph_b1'])), bp['ph_w2'], bp['ph_b2'])
        ra = _conv1d_ref(relu(_conv1d_ref(amp, bp['am_w1'], bp['am_b1'])), bp['am_w2'], bp['am_b2'])
        comp = (ra * jnp.cos(rp) + 1j * (ra * jnp.sin(rp))).astype(jnp.complex64)
        fre = jnp.abs(jnp.fft.ifft(comp, axis=2))
        d = fre - spa
        sa_in = jnp.concatenate([jnp.mean(d, axis=1, keepdims=True),
                                 jnp.max(d, axis=1, keepdims=True)], axis=1)
        sa_out = jax.nn.sigmoid(_conv1d_ref(sa_in, bp['sa_w'], None)) * d
        c = spa + sa_out

        def mlp(v, bp=bp):
            h = relu(jnp.einsum('of,bfk->bok', bp['ca_w1'], v, precision=HIGHEST))
            return jnp.einsum('of,bfk->bok', bp['ca_w2'], h, precision=HIGHEST)

        att = jax.nn.sigmoid(mlp(jnp.mean(c, axis=2, keepdims=True))
                             + mlp(jnp.max(c, axis=2, keepdims=True)))
        feat = att * c + feat
    cn = _conv1d_ref(feat, params['cnni_w'], params['cnni_b'])
    flat = cn.reshape(cn.shape[0], -1)
    return jnp.dot(flat, params['mlp_w'].T, precision=HIGHEST) + params['mlp_b']


# ----------------------------- deterministic parameter init -----------------
def init_params(key):
    keys = iter(jax.random.split(key, 128))

    def conv_init(cout, cin, k, bias=True):
        w = jax.random.normal(next(keys), (cout, cin, k), jnp.float32) / jnp.sqrt(cin * k)
        b = (jax.random.normal(next(keys), (cout, 1), jnp.float32) * 0.1) if bias else None
        return w, b

    blocks = []
    for _ in range(NUM_BLOCK):
        sf_w1, sf_b1 = conv_init(MID, F, SPA_KS)
        sf_w2, sf_b2 = conv_init(F, MID, SPA_KS)
        ph_w1, ph_b1 = conv_init(MID, F, FRE_KS)
        ph_w2, ph_b2 = conv_init(F, MID, FRE_KS)
        am_w1, am_b1 = conv_init(MID, F, FRE_KS)
        am_w2, am_b2 = conv_init(F, MID, FRE_KS)
        sa_w, _ = conv_init(1, 2, FUS_KS, bias=False)
        ca_w1 = jax.random.normal(next(keys), (F // R, F), jnp.float32) / jnp.sqrt(F)
        ca_w2 = jax.random.normal(next(keys), (F, F // R), jnp.float32) / jnp.sqrt(F // R)
        blocks.append(dict(sf_w1=sf_w1, sf_b1=sf_b1, sf_w2=sf_w2, sf_b2=sf_b2,
                           ph_w1=ph_w1, ph_b1=ph_b1, ph_w2=ph_w2, ph_b2=ph_b2,
                           am_w1=am_w1, am_b1=am_b1, am_w2=am_w2, am_b2=am_b2,
                           sa_w=sa_w, ca_w1=ca_w1, ca_w2=ca_w2))
    cnni_w, cnni_b = conv_init(1, F, 3)
    mlp_w = jax.random.normal(next(keys), (1, W), jnp.float32) / jnp.sqrt(W)
    mlp_b = jax.random.normal(next(keys), (1, 1), jnp.float32) * 0.1
    return dict(blocks=blocks, cnni_w=cnni_w, cnni_b=cnni_b, mlp_w=mlp_w, mlp_b=mlp_b)


# ----------------------------- main ------------------------------------------
if __name__ == "__main__":
    key = jax.random.PRNGKey(0)
    kx, kp = jax.random.split(key)
    x = jax.random.normal(kx, (B, F, W), jnp.float32)
    params = init_params(kp)

    prep = prepare_pallas_params(params)
    out = sffnet_pallas(x, prep)
    out = jax.block_until_ready(out)
    assert out.shape == (B, 1), out.shape

    ref = sffnet_ref(x, params)
    if not bool(jnp.allclose(out, ref, atol=2e-3, rtol=2e-3)):
        raise SystemExit(f"mismatch: max abs err = {float(jnp.max(jnp.abs(out - ref)))}")

    print("KERNEL_OK")
</pallas_src>

<mosaic_0001>
module attributes {stable_mosaic.version = 11 : i64} {
  func.func @sff_block_kernel(%arg0: memref<12x128xf32, #tpu.memory_space<vmem>>, %arg1: memref<88x128xf32, #tpu.memory_space<vmem>>, %arg2: memref<128x4xf32, #tpu.memory_space<vmem>>, %arg3: memref<256x256xf32, #tpu.memory_space<vmem>>, %arg4: memref<4x128xf32, #tpu.memory_space<vmem>>) attributes {dimension_semantics = [], scalar_prefetch = 0 : i64, scratch_operands = 0 : i64, tpu.core_type = #tpu.core_type<tc>} {
    %c0 = arith.constant 0 : index
    %c0_0 = arith.constant 0 : index
    %0 = vector.load %arg0[%c0, %c0_0] : memref<12x128xf32, #tpu.memory_space<vmem>>, vector<12x128xf32>
    %c81 = arith.constant 81 : index
    %c0_1 = arith.constant 0 : index
    %1 = vector.load %arg1[%c81, %c0_1] : memref<88x128xf32, #tpu.memory_space<vmem>>, vector<1x128xf32>
    %c82 = arith.constant 82 : index
    %c0_2 = arith.constant 0 : index
    %2 = vector.load %arg1[%c82, %c0_2] : memref<88x128xf32, #tpu.memory_space<vmem>>, vector<1x128xf32>
    %c83 = arith.constant 83 : index
    %c0_3 = arith.constant 0 : index
    %3 = vector.load %arg1[%c83, %c0_3] : memref<88x128xf32, #tpu.memory_space<vmem>>, vector<2x128xf32>
    %c0_4 = arith.constant 0 : index
    %c0_5 = arith.constant 0 : index
    %4 = vector.load %arg2[%c0_4, %c0_5] : memref<128x4xf32, #tpu.memory_space<vmem>>, vector<128x2xf32>
    %c0_6 = arith.constant 0 : index
    %c0_7 = arith.constant 0 : index
    %5 = vector.load %arg1[%c0_6, %c0_7] : memref<88x128xf32, #tpu.memory_space<vmem>>, vector<24x36xf32>
    %c36 = arith.constant 36 : index
    %c0_8 = arith.constant 0 : index
    %6 = vector.load %arg1[%c36, %c0_8] : memref<88x128xf32, #tpu.memory_space<vmem>>, vector<24x1xf32>
    %c24 = arith.constant 24 : index
    %c0_9 = arith.constant 0 : index
    %7 = vector.load %arg1[%c24, %c0_9] : memref<88x128xf32, #tpu.memory_space<vmem>>, vector<12x72xf32>
    %c60 = arith.constant 60 : index
    %c0_10 = arith.constant 0 : index
    %8 = vector.load %arg1[%c60, %c0_10] : memref<88x128xf32, #tpu.memory_space<vmem>>, vector<12x1xf32>
    %c72 = arith.constant 72 : index
    %c0_11 = arith.constant 0 : index
    %9 = vector.load %arg1[%c72, %c0_11] : memref<88x128xf32, #tpu.memory_space<vmem>>, vector<1x6xf32>
    %c73 = arith.constant 73 : index
    %c0_12 = arith.constant 0 : index
    %10 = vector.load %arg1[%c73, %c0_12] : memref<88x128xf32, #tpu.memory_space<vmem>>, vector<2x4xf32>
    %c75 = arith.constant 75 : index
    %c0_13 = arith.constant 0 : index
    %11 = vector.load %arg1[%c75, %c0_13] : memref<88x128xf32, #tpu.memory_space<vmem>>, vector<4x2xf32>
    %c1_i32 = arith.constant 1 : i32
    %12 = tpu.dynamic_rotate %0 by %c1_i32 dim 1 : vector<12x128xf32>, i32 -> vector<12x128xf32>
    %13 = vector.broadcast %1 : vector<1x128xf32> to vector<12x128xf32>
    %14 = arith.mulf %12, %13 : vector<12x128xf32>
    %c127_i32 = arith.constant 127 : i32
    %15 = tpu.dynamic_rotate %0 by %c127_i32 dim 1 : vector<12x128xf32>, i32 -> vector<12x128xf32>
    %16 = vector.broadcast %2 : vector<1x128xf32> to vector<12x128xf32>
    %17 = arith.mulf %15, %16 : vector<12x128xf32>
    %18 = tpu.concatenate %14, %0, %17 in 0 : vector<12x128xf32>, vector<12x128xf32>, vector<12x128xf32> -> vector<36x128xf32>
    %cst = arith.constant dense<0.000000e+00> : vector<24x128xf32>
    %19 = tpu.matmul %5, %18, %cst {dimension_numbers = #tpu.dot_dimension_numbers<[1], [0], [0], [1], [0, 0, 1, 1], [], []>, precision = #tpu.contract_precision<fp32>} : vector<24x36xf32>, vector<36x128xf32>, vector<24x128xf32> -> vector<24x128xf32>
    %20 = vector.broadcast %6 : vector<24x1xf32> to vector<24x128xf32>
    %21 = arith.addf %19, %20 : vector<24x128xf32>
    %cst_14 = arith.constant 0.000000e+00 : f32
    %22 = vector.broadcast %cst_14 : f32 to vector<24x128xf32>
    %23 = arith.maximumf %21, %22 : vector<24x128xf32>
    %c1_i32_15 = arith.constant 1 : i32
    %24 = tpu.dynamic_rotate %23 by %c1_i32_15 dim 1 : vector<24x128xf32>, i32 -> vector<24x128xf32>
    %25 = vector.broadcast %1 : vector<1x128xf32> to vector<24x128xf32>
    %26 = arith.mulf %24, %25 : vector<24x128xf32>
    %c127_i32_16 = arith.constant 127 : i32
    %27 = tpu.dynamic_rotate %23 by %c127_i32_16 dim 1 : vector<24x128xf32>, i32 -> vector<24x128xf32>
    %28 = vector.broadcast %2 : vector<1x128xf32> to vector<24x128xf32>
    %29 = arith.mulf %27, %28 : vector<24x128xf32>
    %30 = tpu.concatenate %26, %23, %29 in 0 : vector<24x128xf32>, vector<24x128xf32>, vector<24x128xf32> -> vector<72x128xf32>
    %cst_17 = arith.constant dense<0.000000e+00> : vector<12x128xf32>
    %31 = tpu.matmul %7, %30, %cst_17 {dimension_numbers = #tpu.dot_dimension_numbers<[1], [0], [0], [1], [0, 0, 1, 1], [], []>, precision = #tpu.contract_precision<fp32>} : vector<12x72xf32>, vector<72x128xf32>, vector<12x128xf32> -> vector<12x128xf32>
    %32 = vector.broadcast %8 : vector<12x1xf32> to vector<12x128xf32>
    %33 = arith.addf %31, %32 : vector<12x128xf32>
    %34 = vector.extract_strided_slice %33 {offsets = [0, 0], sizes = [4, 128], strides = [1, 1]} : vector<12x128xf32> to vector<4x128xf32>
    %35 = vector.extract_strided_slice %33 {offsets = [4, 0], sizes = [4, 128], strides = [1, 1]} : vector<12x128xf32> to vector<4x128xf32>
    %36 = vector.extract_strided_slice %33 {offsets = [8, 0], sizes = [4, 128], strides = [1, 1]} : vector<12x128xf32> to vector<4x128xf32>
    %37 = math.cos %35 : vector<4x128xf32>
    %38 = arith.mulf %36, %37 : vector<4x128xf32>
    %39 = math.sin %35 : vector<4x128xf32>
    %40 = arith.mulf %36, %39 : vector<4x128xf32>
    %41 = tpu.concatenate %38, %40 in 1 : vector<4x128xf32>, vector<4x128xf32> -> vector<4x256xf32>
    %c0_18 = arith.constant 0 : index
    %c0_19 = arith.constant 0 : index
    %42 = vector.load %arg3[%c0_18, %c0_19] : memref<256x256xf32, #tpu.memory_space<vmem>>, vector<256x256xf32>
    %cst_20 = arith.constant dense<0.000000e+00> : vector<4x256xf32>
    %43 = tpu.matmul %41, %42, %cst_20 {dimension_numbers = #tpu.dot_dimension_numbers<[1], [0], [0], [1], [0, 0, 1, 1], [], []>, precision = #tpu.contract_precision<fp32>} : vector<4x256xf32>, vector<256x256xf32>, vector<4x256xf32> -> vector<4x256xf32>
    %44 = vector.extract_strided_slice %43 {offsets = [0, 0], sizes = [4, 128], strides = [1, 1]} : vector<4x256xf32> to vector<4x128xf32>
    %45 = vector.extract_strided_slice %43 {offsets = [0, 128], sizes = [4, 128], strides = [1, 1]} : vector<4x256xf32> to vector<4x128xf32>
    %46 = arith.mulf %44, %44 : vector<4x128xf32>
    %47 = arith.mulf %45, %45 : vector<4x128xf32>
    %48 = arith.addf %46, %47 : vector<4x128xf32>
    %49 = math.sqrt %48 : vector<4x128xf32>
    %cst_21 = arith.constant 1.562500e-02 : f32
    %50 = vector.broadcast %cst_21 : f32 to vector<4x128xf32>
    %51 = arith.mulf %49, %50 : vector<4x128xf32>
    %52 = arith.subf %51, %34 : vector<4x128xf32>
    %cst_22 = arith.constant dense<0.000000e+00> : vector<128xf32>
    %53 = vector.multi_reduction <add>, %52, %cst_22 [0] : vector<4x128xf32> to vector<128xf32>
    %54 = vector.shape_cast %53 : vector<128xf32> to vector<1x128xf32>
    %cst_23 = arith.constant 4.000000e+00 : f32
    %55 = vector.broadcast %cst_23 : f32 to vector<1x128xf32>
    %56 = arith.divf %54, %55 : vector<1x128xf32>
    %cst_24 = arith.constant dense<0xFF800000> : vector<128xf32>
    %57 = vector.multi_reduction <maximumf>, %52, %cst_24 [0] : vector<4x128xf32> to vector<128xf32>
    %58 = vector.shape_cast %57 : vector<128xf32> to vector<1x128xf32>
    %59 = tpu.concatenate %56, %58 in 0 : vector<1x128xf32>, vector<1x128xf32> -> vector<2x128xf32>
    %c1_i32_25 = arith.constant 1 : i32
    %60 = tpu.dynamic_rotate %59 by %c1_i32_25 dim 1 : vector<2x128xf32>, i32 -> vector<2x128xf32>
    %61 = vector.broadcast %1 : vector<1x128xf32> to vector<2x128xf32>
    %62 = arith.mulf %60, %61 : vector<2x128xf32>
    %c127_i32_26 = arith.constant 127 : i32
    %63 = tpu.dynamic_rotate %59 by %c127_i32_26 dim 1 : vector<2x128xf32>, i32 -> vector<2x128xf32>
    %64 = vector.broadcast %2 : vector<1x128xf32> to vector<2x128xf32>
    %65 = arith.mulf %63, %64 : vector<2x128xf32>
    %66 = tpu.concatenate %62, %59, %65 in 0 : vector<2x128xf32>, vector<2x128xf32>, vector<2x128xf32> -> vector<6x128xf32>
    %cst_27 = arith.constant dense<0.000000e+00> : vector<1x128xf32>
    %67 = tpu.matmul %9, %66, %cst_27 {dimension_numbers = #tpu.dot_dimension_numbers<[1], [0], [0], [1], [0, 0, 1, 1], [], []>, precision = #tpu.contract_precision<fp32>} : vector<1x6xf32>, vector<6x128xf32>, vector<1x128xf32> -> vector<1x128xf32>
    %68 = arith.negf %67 : vector<1x128xf32>
    %69 = math.exp %68 : vector<1x128xf32>
    %cst_28 = arith.constant 1.000000e+00 : f32
    %70 = vector.broadcast %cst_28 : f32 to vector<1x128xf32>
    %71 = arith.addf %70, %69 : vector<1x128xf32>
    %72 = arith.divf %70, %71 : vector<1x128xf32>
    %73 = vector.broadcast %72 : vector<1x128xf32> to vector<4x128xf32>
    %74 = arith.mulf %73, %52 : vector<4x128xf32>
    %75 = arith.addf %34, %74 : vector<4x128xf32>
    %cst_29 = arith.constant dense<0.000000e+00> : vector<4x2xf32>
    %76 = tpu.matmul %75, %4, %cst_29 {dimension_numbers = #tpu.dot_dimension_numbers<[1], [0], [0], [1], [0, 0, 1, 1], [], []>, precision = #tpu.contract_precision<fp32>} : vector<4x128xf32>, vector<128x2xf32>, vector<4x2xf32> -> vector<4x2xf32>
    %77 = vector.extract_strided_slice %3 {offsets = [0, 0], sizes = [1, 128], strides = [1, 1]} : vector<2x128xf32> to vector<1x128xf32>
    %cst_30 = arith.constant 5.000000e-01 : f32
    %78 = vector.broadcast %cst_30 : f32 to vector<1x128xf32>
    %79 = arith.cmpf ogt, %77, %78 : vector<1x128xf32>
    %cst_31 = arith.constant -1.000000e+30 : f32
    %80 = vector.shape_cast %79 : vector<1x128xi1> to vector<1x128xi1>
    %81 = vector.broadcast %80 : vector<1x128xi1> to vector<4x128xi1>
    %82 = vector.broadcast %cst_31 : f32 to vector<4x128xf32>
    %83 = arith.select %81, %75, %82 : vector<4x128xi1>, vector<4x128xf32>
    %cst_32 = arith.constant dense<0xFF800000> : vector<4xf32>
    %84 = vector.multi_reduction <maximumf>, %83, %cst_32 [1] : vector<4x128xf32> to vector<4xf32>
    %85 = vector.shape_cast %84 : vector<4xf32> to vector<4x1xf32>
    %86 = vector.extract_strided_slice %3 {offsets = [1, 0], sizes = [1, 128], strides = [1, 1]} : vector<2x128xf32> to vector<1x128xf32>
    %cst_33 = arith.constant 5.000000e-01 : f32
    %87 = vector.broadcast %cst_33 : f32 to vector<1x128xf32>
    %88 = arith.cmpf ogt, %86, %87 : vector<1x128xf32>
    %cst_34 = arith.constant -1.000000e+30 : f32
    %89 = vector.shape_cast %88 : vector<1x128xi1> to vector<1x128xi1>
    %90 = vector.broadcast %89 : vector<1x128xi1> to vector<4x128xi1>
    %91 = vector.broadcast %cst_34 : f32 to vector<4x128xf32>
    %92 = arith.select %90, %75, %91 : vector<4x128xi1>, vector<4x128xf32>
    %cst_35 = arith.constant dense<0xFF800000> : vector<4xf32>
    %93 = vector.multi_reduction <maximumf>, %92, %cst_35 [1] : vector<4x128xf32> to vector<4xf32>
    %94 = vector.shape_cast %93 : vector<4xf32> to vector<4x1xf32>
    %95 = tpu.concatenate %85, %94 in 1 : vector<4x1xf32>, vector<4x1xf32> -> vector<4x2xf32>
    %96 = tpu.concatenate %76, %95 in 1 : vector<4x2xf32>, vector<4x2xf32> -> vector<4x4xf32>
    %cst_36 = arith.constant dense<0.000000e+00> : vector<2x4xf32>
    %97 = tpu.matmul %10, %96, %cst_36 {dimension_numbers = #tpu.dot_dimension_numbers<[1], [0], [0], [1], [0, 0, 1, 1], [], []>, precision = #tpu.contract_precision<fp32>} : vector<2x4xf32>, vector<4x4xf32>, vector<2x4xf32> -> vector<2x4xf32>
    %cst_37 = arith.constant 0.000000e+00 : f32
    %98 = vector.broadcast %cst_37 : f32 to vector<2x4xf32>
    %99 = arith.maximumf %97, %98 : vector<2x4xf32>
    %cst_38 = arith.constant dense<0.000000e+00> : vector<4x4xf32>
    %100 = tpu.matmul %11, %99, %cst_38 {dimension_numbers = #tpu.dot_dimension_numbers<[1], [0], [0], [1], [0, 0, 1, 1], [], []>, precision = #tpu.contract_precision<fp32>} : vector<4x2xf32>, vector<2x4xf32>, vector<4x4xf32> -> vector<4x4xf32>
    %101 = vector.extract_strided_slice %100 {offsets = [0, 0], sizes = [4, 2], strides = [1, 1]} : vector<4x4xf32> to vector<4x2xf32>
    %102 = vector.extract_strided_slice %100 {offsets = [0, 2], sizes = [4, 2], strides = [1, 1]} : vector<4x4xf32> to vector<4x2xf32>
    %103 = arith.addf %101, %102 : vector<4x2xf32>
    %104 = arith.negf %103 : vector<4x2xf32>
    %105 = math.exp %104 : vector<4x2xf32>
    %cst_39 = arith.constant 1.000000e+00 : f32
    %106 = vector.broadcast %cst_39 : f32 to vector<4x2xf32>
    %107 = arith.addf %106, %105 : vector<4x2xf32>
    %108 = arith.divf %106, %107 : vector<4x2xf32>
    %cst_40 = arith.constant dense<0.000000e+00> : vector<4x128xf32>
    %109 = tpu.matmul %108, %3, %cst_40 {dimension_numbers = #tpu.dot_dimension_numbers<[1], [0], [0], [1], [0, 0, 1, 1], [], []>, precision = #tpu.contract_precision<fp32>} : vector<4x2xf32>, vector<2x128xf32>, vector<4x128xf32> -> vector<4x128xf32>
    %110 = arith.mulf %109, %75 : vector<4x128xf32>
    %111 = vector.extract_strided_slice %0 {offsets = [0, 0], sizes = [4, 128], strides = [1, 1]} : vector<12x128xf32> to vector<4x128xf32>
    %112 = arith.addf %110, %111 : vector<4x128xf32>
    %c0_41 = arith.constant 0 : index
    %c0_42 = arith.constant 0 : index
    %113 = vector.load %arg4[%c0_41, %c0_42] : memref<4x128xf32, #tpu.memory_space<vmem>>, vector<4x128xf32>
    tpu.vector_store %arg4[%c0_41, %c0_42], %112 {strides = array<i32>} : memref<4x128xf32, #tpu.memory_space<vmem>>, vector<4x128xf32>,
    return
  }
}

module attributes {stable_mosaic.version = 11 : i64} {
  func.func @sff_block_head_kernel(%arg0: memref<12x128xf32, #tpu.memory_space<vmem>>, %arg1: memref<88x128xf32, #tpu.memory_space<vmem>>, %arg2: memref<128x4xf32, #tpu.memory_space<vmem>>, %arg3: memref<256x256xf32, #tpu.memory_space<vmem>>, %arg4: memref<1x2xf32, #tpu.memory_space<vmem>>) attributes {dimension_semantics = [], scalar_prefetch = 0 : i64, scratch_operands = 0 : i64, tpu.core_type = #tpu.core_type<tc>} {
    %c0 = arith.constant 0 : index
    %c0_0 = arith.constant 0 : index
    %0 = vector.load %arg0[%c0, %c0_0] : memref<12x128xf32, #tpu.memory_space<vmem>>, vector<12x128xf32>
    %c81 = arith.constant 81 : index
    %c0_1 = arith.constant 0 : index
    %1 = vector.load %arg1[%c81, %c0_1] : memref<88x128xf32, #tpu.memory_space<vmem>>, vector<1x128xf32>
    %c82 = arith.constant 82 : index
    %c0_2 = arith.constant 0 : index
    %2 = vector.load %arg1[%c82, %c0_2] : memref<88x128xf32, #tpu.memory_space<vmem>>, vector<1x128xf32>
    %c83 = arith.constant 83 : index
    %c0_3 = arith.constant 0 : index
    %3 = vector.load %arg1[%c83, %c0_3] : memref<88x128xf32, #tpu.memory_space<vmem>>, vector<2x128xf32>
    %c0_4 = arith.constant 0 : index
    %c0_5 = arith.constant 0 : index
    %4 = vector.load %arg2[%c0_4, %c0_5] : memref<128x4xf32, #tpu.memory_space<vmem>>, vector<128x2xf32>
    %c0_6 = arith.constant 0 : index
    %c0_7 = arith.constant 0 : index
    %5 = vector.load %arg1[%c0_6, %c0_7] : memref<88x128xf32, #tpu.memory_space<vmem>>, vector<24x36xf32>
    %c36 = arith.constant 36 : index
    %c0_8 = arith.constant 0 : index
    %6 = vector.load %arg1[%c36, %c0_8] : memref<88x128xf32, #tpu.memory_space<vmem>>, vector<24x1xf32>
    %c24 = arith.constant 24 : index
    %c0_9 = arith.constant 0 : index
    %7 = vector.load %arg1[%c24, %c0_9] : memref<88x128xf32, #tpu.memory_space<vmem>>, vector<12x72xf32>
    %c60 = arith.constant 60 : index
    %c0_10 = arith.constant 0 : index
    %8 = vector.load %arg1[%c60, %c0_10] : memref<88x128xf32, #tpu.memory_space<vmem>>, vector<12x1xf32>
    %c72 = arith.constant 72 : index
    %c0_11 = arith.constant 0 : index
    %9 = vector.load %arg1[%c72, %c0_11] : memref<88x128xf32, #tpu.memory_space<vmem>>, vector<1x6xf32>
    %c73 = arith.constant 73 : index
    %c0_12 = arith.constant 0 : index
    %10 = vector.load %arg1[%c73, %c0_12] : memref<88x128xf32, #tpu.memory_space<vmem>>, vector<2x4xf32>
    %c75 = arith.constant 75 : index
    %c0_13 = arith.constant 0 : index
    %11 = vector.load %arg1[%c75, %c0_13] : memref<88x128xf32, #tpu.memory_space<vmem>>, vector<4x2xf32>
    %c1_i32 = arith.constant 1 : i32
    %12 = tpu.dynamic_rotate %0 by %c1_i32 dim 1 : vector<12x128xf32>, i32 -> vector<12x128xf32>
    %13 = vector.broadcast %1 : vector<1x128xf32> to vector<12x128xf32>
    %14 = arith.mulf %12, %13 : vector<12x128xf32>
    %c127_i32 = arith.constant 127 : i32
    %15 = tpu.dynamic_rotate %0 by %c127_i32 dim 1 : vector<12x128xf32>, i32 -> vector<12x128xf32>
    %16 = vector.broadcast %2 : vector<1x128xf32> to vector<12x128xf32>
    %17 = arith.mulf %15, %16 : vector<12x128xf32>
    %18 = tpu.concatenate %14, %0, %17 in 0 : vector<12x128xf32>, vector<12x128xf32>, vector<12x128xf32> -> vector<36x128xf32>
    %cst = arith.constant dense<0.000000e+00> : vector<24x128xf32>
    %19 = tpu.matmul %5, %18, %cst {dimension_numbers = #tpu.dot_dimension_numbers<[1], [0], [0], [1], [0, 0, 1, 1], [], []>, precision = #tpu.contract_precision<fp32>} : vector<24x36xf32>, vector<36x128xf32>, vector<24x128xf32> -> vector<24x128xf32>
    %20 = vector.broadcast %6 : vector<24x1xf32> to vector<24x128xf32>
    %21 = arith.addf %19, %20 : vector<24x128xf32>
    %cst_14 = arith.constant 0.000000e+00 : f32
    %22 = vector.broadcast %cst_14 : f32 to vector<24x128xf32>
    %23 = arith.maximumf %21, %22 : vector<24x128xf32>
    %c1_i32_15 = arith.constant 1 : i32
    %24 = tpu.dynamic_rotate %23 by %c1_i32_15 dim 1 : vector<24x128xf32>, i32 -> vector<24x128xf32>
    %25 = vector.broadcast %1 : vector<1x128xf32> to vector<24x128xf32>
    %26 = arith.mulf %24, %25 : vector<24x128xf32>
    %c127_i32_16 = arith.constant 127 : i32
    %27 = tpu.dynamic_rotate %23 by %c127_i32_16 dim 1 : vector<24x128xf32>, i32 -> vector<24x128xf32>
    %28 = vector.broadcast %2 : vector<1x128xf32> to vector<24x128xf32>
    %29 = arith.mulf %27, %28 : vector<24x128xf32>
    %30 = tpu.concatenate %26, %23, %29 in 0 : vector<24x128xf32>, vector<24x128xf32>, vector<24x128xf32> -> vector<72x128xf32>
    %cst_17 = arith.constant dense<0.000000e+00> : vector<12x128xf32>
    %31 = tpu.matmul %7, %30, %cst_17 {dimension_numbers = #tpu.dot_dimension_numbers<[1], [0], [0], [1], [0, 0, 1, 1], [], []>, precision = #tpu.contract_precision<fp32>} : vector<12x72xf32>, vector<72x128xf32>, vector<12x128xf32> -> vector<12x128xf32>
    %32 = vector.broadcast %8 : vector<12x1xf32> to vector<12x128xf32>
    %33 = arith.addf %31, %32 : vector<12x128xf32>
    %34 = vector.extract_strided_slice %33 {offsets = [0, 0], sizes = [4, 128], strides = [1, 1]} : vector<12x128xf32> to vector<4x128xf32>
    %35 = vector.extract_strided_slice %33 {offsets = [4, 0], sizes = [4, 128], strides = [1, 1]} : vector<12x128xf32> to vector<4x128xf32>
    %36 = vector.extract_strided_slice %33 {offsets = [8, 0], sizes = [4, 128], strides = [1, 1]} : vector<12x128xf32> to vector<4x128xf32>
    %37 = math.cos %35 : vector<4x128xf32>
    %38 = arith.mulf %36, %37 : vector<4x128xf32>
    %39 = math.sin %35 : vector<4x128xf32>
    %40 = arith.mulf %36, %39 : vector<4x128xf32>
    %41 = tpu.concatenate %38, %40 in 1 : vector<4x128xf32>, vector<4x128xf32> -> vector<4x256xf32>
    %c0_18 = arith.constant 0 : index
    %c0_19 = arith.constant 0 : index
    %42 = vector.load %arg3[%c0_18, %c0_19] : memref<256x256xf32, #tpu.memory_space<vmem>>, vector<256x256xf32>
    %cst_20 = arith.constant dense<0.000000e+00> : vector<4x256xf32>
    %43 = tpu.matmul %41, %42, %cst_20 {dimension_numbers = #tpu.dot_dimension_numbers<[1], [0], [0], [1], [0, 0, 1, 1], [], []>, precision = #tpu.contract_precision<fp32>} : vector<4x256xf32>, vector<256x256xf32>, vector<4x256xf32> -> vector<4x256xf32>
    %44 = vector.extract_strided_slice %43 {offsets = [0, 0], sizes = [4, 128], strides = [1, 1]} : vector<4x256xf32> to vector<4x128xf32>
    %45 = vector.extract_strided_slice %43 {offsets = [0, 128], sizes = [4, 128], strides = [1, 1]} : vector<4x256xf32> to vector<4x128xf32>
    %46 = arith.mulf %44, %44 : vector<4x128xf32>
    %47 = arith.mulf %45, %45 : vector<4x128xf32>
    %48 = arith.addf %46, %47 : vector<4x128xf32>
    %49 = math.sqrt %48 : vector<4x128xf32>
    %cst_21 = arith.constant 1.562500e-02 : f32
    %50 = vector.broadcast %cst_21 : f32 to vector<4x128xf32>
    %51 = arith.mulf %49, %50 : vector<4x128xf32>
    %52 = arith.subf %51, %34 : vector<4x128xf32>
    %cst_22 = arith.constant dense<0.000000e+00> : vector<128xf32>
    %53 = vector.multi_reduction <add>, %52, %cst_22 [0] : vector<4x128xf32> to vector<128xf32>
    %54 = vector.shape_cast %53 : vector<128xf32> to vector<1x128xf32>
    %cst_23 = arith.constant 4.000000e+00 : f32
    %55 = vector.broadcast %cst_23 : f32 to vector<1x128xf32>
    %56 = arith.divf %54, %55 : vector<1x128xf32>
    %cst_24 = arith.constant dense<0xFF800000> : vector<128xf32>
    %57 = vector.multi_reduction <maximumf>, %52, %cst_24 [0] : vector<4x128xf32> to vector<128xf32>
    %58 = vector.shape_cast %57 : vector<128xf32> to vector<1x128xf32>
    %59 = tpu.concatenate %56, %58 in 0 : vector<1x128xf32>, vector<1x128xf32> -> vector<2x128xf32>
    %c1_i32_25 = arith.constant 1 : i32
    %60 = tpu.dynamic_rotate %59 by %c1_i32_25 dim 1 : vector<2x128xf32>, i32 -> vector<2x128xf32>
    %61 = vector.broadcast %1 : vector<1x128xf32> to vector<2x128xf32>
    %62 = arith.mulf %60, %61 : vector<2x128xf32>
    %c127_i32_26 = arith.constant 127 : i32
    %63 = tpu.dynamic_rotate %59 by %c127_i32_26 dim 1 : vector<2x128xf32>, i32 -> vector<2x128xf32>
    %64 = vector.broadcast %2 : vector<1x128xf32> to vector<2x128xf32>
    %65 = arith.mulf %63, %64 : vector<2x128xf32>
    %66 = tpu.concatenate %62, %59, %65 in 0 : vector<2x128xf32>, vector<2x128xf32>, vector<2x128xf32> -> vector<6x128xf32>
    %cst_27 = arith.constant dense<0.000000e+00> : vector<1x128xf32>
    %67 = tpu.matmul %9, %66, %cst_27 {dimension_numbers = #tpu.dot_dimension_numbers<[1], [0], [0], [1], [0, 0, 1, 1], [], []>, precision = #tpu.contract_precision<fp32>} : vector<1x6xf32>, vector<6x128xf32>, vector<1x128xf32> -> vector<1x128xf32>
    %68 = arith.negf %67 : vector<1x128xf32>
    %69 = math.exp %68 : vector<1x128xf32>
    %cst_28 = arith.constant 1.000000e+00 : f32
    %70 = vector.broadcast %cst_28 : f32 to vector<1x128xf32>
    %71 = arith.addf %70, %69 : vector<1x128xf32>
    %72 = arith.divf %70, %71 : vector<1x128xf32>
    %73 = vector.broadcast %72 : vector<1x128xf32> to vector<4x128xf32>
    %74 = arith.mulf %73, %52 : vector<4x128xf32>
    %75 = arith.addf %34, %74 : vector<4x128xf32>
    %cst_29 = arith.constant dense<0.000000e+00> : vector<4x2xf32>
    %76 = tpu.matmul %75, %4, %cst_29 {dimension_numbers = #tpu.dot_dimension_numbers<[1], [0], [0], [1], [0, 0, 1, 1], [], []>, precision = #tpu.contract_precision<fp32>} : vector<4x128xf32>, vector<128x2xf32>, vector<4x2xf32> -> vector<4x2xf32>
    %77 = vector.extract_strided_slice %3 {offsets = [0, 0], sizes = [1, 128], strides = [1, 1]} : vector<2x128xf32> to vector<1x128xf32>
    %cst_30 = arith.constant 5.000000e-01 : f32
    %78 = vector.broadcast %cst_30 : f32 to vector<1x128xf32>
    %79 = arith.cmpf ogt, %77, %78 : vector<1x128xf32>
    %cst_31 = arith.constant -1.000000e+30 : f32
    %80 = vector.shape_cast %79 : vector<1x128xi1> to vector<1x128xi1>
    %81 = vector.broadcast %80 : vector<1x128xi1> to vector<4x128xi1>
    %82 = vector.broadcast %cst_31 : f32 to vector<4x128xf32>
    %83 = arith.select %81, %75, %82 : vector<4x128xi1>, vector<4x128xf32>
    %cst_32 = arith.constant dense<0xFF800000> : vector<4xf32>
    %84 = vector.multi_reduction <maximumf>, %83, %cst_32 [1] : vector<4x128xf32> to vector<4xf32>
    %85 = vector.shape_cast %84 : vector<4xf32> to vector<4x1xf32>
    %86 = vector.extract_strided_slice %3 {offsets = [1, 0], sizes = [1, 128], strides = [1, 1]} : vector<2x128xf32> to vector<1x128xf32>
    %cst_33 = arith.constant 5.000000e-01 : f32
    %87 = vector.broadcast %cst_33 : f32 to vector<1x128xf32>
    %88 = arith.cmpf ogt, %86, %87 : vector<1x128xf32>
    %cst_34 = arith.constant -1.000000e+30 : f32
    %89 = vector.shape_cast %88 : vector<1x128xi1> to vector<1x128xi1>
    %90 = vector.broadcast %89 : vector<1x128xi1> to vector<4x128xi1>
    %91 = vector.broadcast %cst_34 : f32 to vector<4x128xf32>
    %92 = arith.select %90, %75, %91 : vector<4x128xi1>, vector<4x128xf32>
    %cst_35 = arith.constant dense<0xFF800000> : vector<4xf32>
    %93 = vector.multi_reduction <maximumf>, %92, %cst_35 [1] : vector<4x128xf32> to vector<4xf32>
    %94 = vector.shape_cast %93 : vector<4xf32> to vector<4x1xf32>
    %95 = tpu.concatenate %85, %94 in 1 : vector<4x1xf32>, vector<4x1xf32> -> vector<4x2xf32>
    %96 = tpu.concatenate %76, %95 in 1 : vector<4x2xf32>, vector<4x2xf32> -> vector<4x4xf32>
    %cst_36 = arith.constant dense<0.000000e+00> : vector<2x4xf32>
    %97 = tpu.matmul %10, %96, %cst_36 {dimension_numbers = #tpu.dot_dimension_numbers<[1], [0], [0], [1], [0, 0, 1, 1], [], []>, precision = #tpu.contract_precision<fp32>} : vector<2x4xf32>, vector<4x4xf32>, vector<2x4xf32> -> vector<2x4xf32>
    %cst_37 = arith.constant 0.000000e+00 : f32
    %98 = vector.broadcast %cst_37 : f32 to vector<2x4xf32>
    %99 = arith.maximumf %97, %98 : vector<2x4xf32>
    %cst_38 = arith.constant dense<0.000000e+00> : vector<4x4xf32>
    %100 = tpu.matmul %11, %99, %cst_38 {dimension_numbers = #tpu.dot_dimension_numbers<[1], [0], [0], [1], [0, 0, 1, 1], [], []>, precision = #tpu.contract_precision<fp32>} : vector<4x2xf32>, vector<2x4xf32>, vector<4x4xf32> -> vector<4x4xf32>
    %101 = vector.extract_strided_slice %100 {offsets = [0, 0], sizes = [4, 2], strides = [1, 1]} : vector<4x4xf32> to vector<4x2xf32>
    %102 = vector.extract_strided_slice %100 {offsets = [0, 2], sizes = [4, 2], strides = [1, 1]} : vector<4x4xf32> to vector<4x2xf32>
    %103 = arith.addf %101, %102 : vector<4x2xf32>
    %104 = arith.negf %103 : vector<4x2xf32>
    %105 = math.exp %104 : vector<4x2xf32>
    %cst_39 = arith.constant 1.000000e+00 : f32
    %106 = vector.broadcast %cst_39 : f32 to vector<4x2xf32>
    %107 = arith.addf %106, %105 : vector<4x2xf32>
    %108 = arith.divf %106, %107 : vector<4x2xf32>
    %cst_40 = arith.constant dense<0.000000e+00> : vector<4x128xf32>
    %109 = tpu.matmul %108, %3, %cst_40 {dimension_numbers = #tpu.dot_dimension_numbers<[1], [0], [0], [1], [0, 0, 1, 1], [], []>, precision = #tpu.contract_precision<fp32>} : vector<4x2xf32>, vector<2x128xf32>, vector<4x128xf32> -> vector<4x128xf32>
    %110 = arith.mulf %109, %75 : vector<4x128xf32>
    %111 = vector.extract_strided_slice %0 {offsets = [0, 0], sizes = [4, 128], strides = [1, 1]} : vector<12x128xf32> to vector<4x128xf32>
    %112 = arith.addf %110, %111 : vector<4x128xf32>
    %c81_41 = arith.constant 81 : index
    %c0_42 = arith.constant 0 : index
    %113 = vector.load %arg1[%c81_41, %c0_42] : memref<88x128xf32, #tpu.memory_space<vmem>>, vector<1x128xf32>
    %c82_43 = arith.constant 82 : index
    %c0_44 = arith.constant 0 : index
    %114 = vector.load %arg1[%c82_43, %c0_44] : memref<88x128xf32, #tpu.memory_space<vmem>>, vector<1x128xf32>
    %c79 = arith.constant 79 : index
    %c0_45 = arith.constant 0 : index
    %115 = vector.load %arg1[%c79, %c0_45] : memref<88x128xf32, #tpu.memory_space<vmem>>, vector<1x12xf32>
    %c80 = arith.constant 80 : index
    %c0_46 = arith.constant 0 : index
    %116 = vector.load %arg1[%c80, %c0_46] : memref<88x128xf32, #tpu.memory_space<vmem>>, vector<1x1xf32>
    %c80_47 = arith.constant 80 : index
    %c1 = arith.constant 1 : index
    %117 = vector.load %arg1[%c80_47, %c1] : memref<88x128xf32, #tpu.memory_space<vmem>>, vector<1x1xf32>
    %c0_48 = arith.constant 0 : index
    %c2 = arith.constant 2 : index
    %118 = vector.load %arg2[%c0_48, %c2] : memref<128x4xf32, #tpu.memory_space<vmem>>, vector<128x2xf32>
    %c1_i32_49 = arith.constant 1 : i32
    %119 = tpu.dynamic_rotate %112 by %c1_i32_49 dim 1 : vector<4x128xf32>, i32 -> vector<4x128xf32>
    %120 = vector.broadcast %113 : vector<1x128xf32> to vector<4x128xf32>
    %121 = arith.mulf %119, %120 : vector<4x128xf32>
    %c127_i32_50 = arith.constant 127 : i32
    %122 = tpu.dynamic_rotate %112 by %c127_i32_50 dim 1 : vector<4x128xf32>, i32 -> vector<4x128xf32>
    %123 = vector.broadcast %114 : vector<1x128xf32> to vector<4x128xf32>
    %124 = arith.mulf %122, %123 : vector<4x128xf32>
    %125 = tpu.concatenate %121, %112, %124 in 0 : vector<4x128xf32>, vector<4x128xf32>, vector<4x128xf32> -> vector<12x128xf32>
    %cst_51 = arith.constant dense<0.000000e+00> : vector<1x128xf32>
    %126 = tpu.matmul %115, %125, %cst_51 {dimension_numbers = #tpu.dot_dimension_numbers<[1], [0], [0], [1], [0, 0, 1, 1], [], []>, precision = #tpu.contract_precision<fp32>} : vector<1x12xf32>, vector<12x128xf32>, vector<1x128xf32> -> vector<1x128xf32>
    %127 = vector.broadcast %116 : vector<1x1xf32> to vector<1x128xf32>
    %128 = arith.addf %126, %127 : vector<1x128xf32>
    %cst_52 = arith.constant dense<0.000000e+00> : vector<1x2xf32>
    %129 = tpu.matmul %128, %118, %cst_52 {dimension_numbers = #tpu.dot_dimension_numbers<[1], [0], [0], [1], [0, 0, 1, 1], [], []>, precision = #tpu.contract_precision<fp32>} : vector<1x128xf32>, vector<128x2xf32>, vector<1x2xf32> -> vector<1x2xf32>
    %130 = vector.broadcast %117 : vector<1x1xf32> to vector<1x2xf32>
    %131 = arith.addf %129, %130 : vector<1x2xf32>
    %c0_53 = arith.constant 0 : index
    %c0_54 = arith.constant 0 : index
    %132 = vector.load %arg4[%c0_53, %c0_54] : memref<1x2xf32, #tpu.memory_space<vmem>>, vector<1x2xf32>
    tpu.vector_store %arg4[%c0_53, %c0_54], %131 {strides = array<i32>} : memref<1x2xf32, #tpu.memory_space<vmem>>, vector<1x2xf32>,
    return
  }
}

</mosaic_0001>

<llo_original>
// kernel: sffnet_pallas.2
$region0: #{sffnet_pallas.2}
  #allocation0 [shape = 'u32[]', space=smem, size = 0x4, offset = 0x4, fixed_abs, tag = 'smem constant byte address 0x4 - core index']
  #allocation1 [shape = 'u32[144,128]{1,0:T(1,128)}', space=vmem, size = 0x12000, scoped, tag = 'internal scratch']
  %s0 = inlined_call_operand.vmem [shape: f32[12,128], index: 0, kind: input, shape index: {}]
  %s1 = inlined_call_operand.vmem [shape: f32[88,128], index: 1, kind: input, shape index: {}]
  %s2 = inlined_call_operand.vmem [shape: f32[128,4], index: 2, kind: input, shape index: {}]
  %s3 = inlined_call_operand.vmem [shape: f32[256,256], index: 3, kind: input, shape index: {}]
  %s4 = inlined_call_operand.vmem [shape: f32[4,128], index: 4, kind: output, shape index: {}]
  %s5 = sld [smem:[#allocation0]]
  $region26: #{sffnet_pallas.2} parent=0
    _
  %s7 = ssub.s32 1, %s5
  %s8 = scalar_select 0, %s7, %s5
  // Predicated region
  $region2: #{sffnet_pallas.2} parent=0 // pred_check
    _
  $region3: #{sffnet_pallas.2} parent=0 // pred_check_branch
    %10 = sbr.rel (0) target = $region5
  $region4: #{sffnet_pallas.2} parent=0 // pred_region
    _
  $region5: #{sffnet_pallas.2} parent=0 // pred_fallthru
    _
  // Predicated region
  $region6: #{sffnet_pallas.2} parent=0 // pred_check
    _
  $region7: #{sffnet_pallas.2} parent=0 // pred_check_branch
    %12 = sbr.rel (0) target = $region9
  $region8: #{sffnet_pallas.2} parent=0 // pred_region
    _
  $region9: #{sffnet_pallas.2} parent=0 // pred_fallthru
    _
  // Predicated region
  $region10: #{sffnet_pallas.2} parent=0 // pred_check
    _
  $region11: #{sffnet_pallas.2} parent=0 // pred_check_branch
    %14 = sbr.rel (0) target = $region13
  $region12: #{sffnet_pallas.2} parent=0 // pred_region
    _
  $region13: #{sffnet_pallas.2} parent=0 // pred_fallthru
    _
  // Predicated region
  $region14: #{sffnet_pallas.2} parent=0 // pred_check
    _
  $region15: #{sffnet_pallas.2} parent=0 // pred_check_branch
    %16 = sbr.rel (0) target = $region17
  $region16: #{sffnet_pallas.2} parent=0 // pred_region
    _
  $region17: #{sffnet_pallas.2} parent=0 // pred_fallthru
    _
  %v17 = vld [vmem:[%s0] sm:$0xff]
  %v18 = vld [vmem:[%s0 + $0x8] sm:$0xf]
  %v19 = vld [vmem:[%s1 + $0x51] sm:$0x1]
  %v20 = vld [vmem:[%s1 + $0x52] sm:$0x1]
  %v21 = vld [vmem:[%s1 + $0x53] sm:$0x3]
  %v22 = vld [vmem:[%s2] sm:$0xff]
  %v23 = vld [vmem:[%s2 + $0x8] sm:$0xff]
  %v24 = vld [vmem:[%s2 + $0x10] sm:$0xff]
  %v25 = vld [vmem:[%s2 + $0x18] sm:$0xff]
  %v26 = vld [vmem:[%s2 + $0x20] sm:$0xff]
  %v27 = vld [vmem:[%s2 + $0x28] sm:$0xff]
  %v28 = vld [vmem:[%s2 + $0x30] sm:$0xff]
  %v29 = vld [vmem:[%s2 + $0x38] sm:$0xff]
  %v30 = vld [vmem:[%s2 + $0x40] sm:$0xff]
  %v31 = vld [vmem:[%s2 + $0x48] sm:$0xff]
  %v32 = vld [vmem:[%s2 + $0x50] sm:$0xff]
  %v33 = vld [vmem:[%s2 + $0x58] sm:$0xff]
  %v34 = vld [vmem:[%s2 + $0x60] sm:$0xff]
  %v35 = vld [vmem:[%s2 + $0x68] sm:$0xff]
  %v36 = vld [vmem:[%s2 + $0x70] sm:$0xff]
  %v37 = vld [vmem:[%s2 + $0x78] sm:$0xff]
  %v38 = vld [vmem:[%s1] sm:$0xff]
  %v39 = vld [vmem:[%s1 + $0x8] sm:$0xff]
  %v40 = vld [vmem:[%s1 + $0x10] sm:$0xff]
  %v41 = vld [vmem:[%s1 + $0x24] sm:$0xff]
  %v42 = vld [vmem:[%s1 + $0x2c] sm:$0xff]
  %v43 = vld [vmem:[%s1 + $0x34] sm:$0xff]
  %v44 = vld [vmem:[%s1 + $0x18] sm:$0xff]
  %v45 = vld [vmem:[%s1 + $0x20] sm:$0xf]
  %v46 = vld [vmem:[%s1 + $0x3c] sm:$0xff]
  %v47 = vld [vmem:[%s1 + $0x44] sm:$0xf]
  %v48 = vld [vmem:[%s1 + $0x48] sm:$0x1]
  %v49 = vld [vmem:[%s1 + $0x49] sm:$0x3]
  %v50 = vld [vmem:[%s1 + $0x4b] sm:$0xf]
  %51 = vrot.lane.b32.xlu0 %v17, 1
  %v52 = vpop.permute.xlu0 %51
  %53 = vrot.lane.b32.xlu0 %v18, 1
  %v54 = vpop.permute.xlu0 %53
  %v55 = vlaneseq
  %v56 = vshrl.u32 %v55, 7
  %v57 = vsub.s32 0, %v56
  %v58 = vrot.slane %v19, %v57
  %v59 = vmul.f32 %v52, %v58
  %v60 = vmul.f32 %v54, %v58
  %61 = vrot.lane.b32.xlu0 %v17, 127
  %v62 = vpop.permute.xlu0 %61
  %63 = vrot.lane.b32.xlu0 %v18, 127
  %v64 = vpop.permute.xlu0 %63
  %v65 = vlaneseq
  %v66 = vshrl.u32 %v65, 7
  %v67 = vsub.s32 0, %v66
  %v68 = vrot.slane %v20, %v67
  %v69 = vmul.f32 %v62, %v68
  %v70 = vmul.f32 %v64, %v68
  %vm73 = vcmask 1043456
  %v74 = vrot.slane %v17, 4
  %v75 = vrot.slane %v18, 4
  %v76 = vsel %vm73, %v74, %v75
  %v79 = vsel %vm73, %v60, %v74
  %81 = vset.pattern.permute.xlu0 0
  %82 = vperm.xlu0 %81, %v41
  %v83 = vpop.permute.xlu0 %82
  %86 = vset.pattern.permute.xlu0 0
  %87 = vperm.xlu0 %86, %v42
  %v88 = vpop.permute.xlu0 %87
  %91 = vset.pattern.permute.xlu0 0
  %92 = vperm.xlu0 %91, %v43
  %v93 = vpop.permute.xlu0 %92
  %vm95 = vcmask 293888
  %v97 = vsel %vm95, %v38, 0
  %v100 = vsel %vm95, %v39, 0
  %v103 = vsel %vm95, %v40, 0
  %v106 = vsel %vm73, %v70, 0
  %108 = vmatprep.subr.mxu0 0.0
  %v109 = vand.u32 %v59, 4294901760
  %110 = vmatpush1.msra.mxu0 %v109
  %111 = vmatprep.subr.mxu0 0.0
  %v112 = vand.u32 %v79, 4294901760
  %113 = vmatpush1.msra.mxu0 %v112
  %114 = vmatprep.subr.mxu0 0.0
  %v115 = vand.u32 %v76, 4294901760
  %116 = vmatpush1.msra.mxu0 %v115
  %117 = vmatprep.subr.mxu0 0.0
  %v118 = vand.u32 %v69, 4294901760
  %119 = vmatpush1.msra.mxu0 %v118
  %120 = vmatprep.subr.mxu0 0.0
  %v121 = vand.u32 %v106, 4294901760
  %122 = vmatpush1.msra.mxu0 %v121
  %123 = vmatprep.subr.mxu0 0.0
  %124 = vmatpush1.msra.mxu0 0.0
  %125 = vmatprep.subr.mxu0 0.0
  %126 = vmatpush1.msra.mxu0 0.0
  %127 = vmatprep.subr.mxu0 0.0
  %128 = vmatpush1.msra.mxu0 0.0
  %129 = vmatprep.subr.mxu0 0.0
  %130 = vmatpush1.msra.mxu0 0.0
  %131 = vmatprep.subr.mxu0 0.0
  %132 = vmatpush1.msra.mxu0 0.0
  %133 = vmatprep.subr.mxu0 0.0
  %134 = vmatpush1.msra.mxu0 0.0
  %135 = vmatprep.subr.mxu0 0.0
  %136 = vmatpush1.msra.mxu0 0.0
  %137 = vmatprep.subr.mxu0 0.0
  %138 = vmatpush1.msra.mxu0 0.0
  %139 = vmatprep.subr.mxu0 0.0
  %140 = vmatpush1.msra.mxu0 0.0
  %141 = vmatprep.subr.mxu0 0.0
  %142 = vmatpush1.msra.mxu0 0.0
  %143 = vmatprep.subr.mxu0 0.0
  %144 = vmatpush1.msra.mxu0 0.0
  %145 = vmatprep.subr.mxu0 0.0
  %146 = vmatpush1.msra.mxu0 0.0
  %147 = vmatprep.subr.mxu0 0.0
  %148 = vmatpush1.msra.mxu0 0.0
  %149 = vmatprep.subr.mxu0 0.0
  %150 = vmatpush1.msra.mxu0 0.0
  %151 = vmatprep.subr.mxu0 0.0
  %152 = vmatpush1.msra.mxu0 0.0
  %153 = vmatprep.subr.mxu0 0.0
  %154 = vmatpush1.msra.mxu0 0.0
  %155 = vmatprep.subr.mxu0 0.0
  %156 = vmatpush1.msra.mxu0 0.0
  %157 = vmatprep.subr.mxu0 0.0
  %158 = vmatpush1.msra.mxu0 0.0
  %159 = vmatprep.subr.mxu0 0.0
  %160 = vmatpush1.msra.mxu0 0.0
  %161 = vmatprep.subr.mxu0 0.0
  %162 = vmatpush1.msra.mxu0 0.0
  %163 = vmatprep.subr.mxu0 0.0
  %164 = vmatpush1.msra.mxu0 0.0
  %165 = vmatprep.subr.mxu0 0.0
  %166 = vmatpush1.msra.mxu0 0.0
  %167 = vmatprep.subr.mxu0 0.0
  %168 = vmatpush1.msra.mxu0 0.0
  %169 = vmatprep.subr.mxu0 0.0
  %170 = vmatpush1.msra.mxu0 0.0
  %171 = vmatprep.subr.mxu0 0.0
  %172 = vmatpush1.msra.mxu0 0.0
  %173 = vmatprep.subr.mxu0 0.0
  %174 = vmatpush1.msra.mxu0 0.0
  %175 = vmatprep.subr.mxu0 0.0
  %176 = vmatpush1.msra.mxu0 0.0
  %177 = vmatprep.mubr.f32.mxu0 0.0
  %v178 = vand.u32 %v97, 4294901760
  %v179 = vsub.f32 %v97, %v178
  %v180 = vand.u32 %v179, 4294901760
  %v181 = vsub.f32 %v179, %v180
  %v182 = vand.u32 %v181, 4294901760
  %183 = vmatmul.mubr.f32.gmra.mrb[0].mxu0 %v182
  %v184 = vpop.f32.mrb[0].mxu0
  %v185 = vadd.f32 %v83, %v184
  %v186 = vpop.f32.mrb[0].mxu0
  %187 = vmatprep.mubr.f32.mxu0 0.0
  %v188 = vand.u32 %v100, 4294901760
  %v189 = vsub.f32 %v100, %v188
  %v190 = vand.u32 %v189, 4294901760
  %v191 = vsub.f32 %v189, %v190
  %v192 = vand.u32 %v191, 4294901760
  %193 = vmatmul.mubr.f32.gmra.mrb[0].mxu0 %v192
  %v194 = vpop.f32.mrb[0].mxu0
  %v195 = vadd.f32 %v88, %v194
  %v196 = vpop.f32.mrb[0].mxu0
  %197 = vmatprep.mubr.f32.mxu0 0.0
  %v198 = vand.u32 %v103, 4294901760
  %v199 = vsub.f32 %v103, %v198
  %v200 = vand.u32 %v199, 4294901760
  %v201 = vsub.f32 %v199, %v200
  %v202 = vand.u32 %v201, 4294901760
  %203 = vmatmul.mubr.f32.gmra.mrb[0].mxu0 %v202
  %v204 = vpop.f32.mrb[0].mxu0
  %v205 = vadd.f32 %v93, %v204
  %v206 = vpop.f32.mrb[0].mxu0
  %207 = vdwg.mxu0
  %208 = vmatprep.subr.mxu0 0.0
  %v209 = vand.u32 %v59, 4294901760
  %v210 = vsub.f32 %v59, %v209
  %v211 = vand.u32 %v210, 4294901760
  %v212 = vsub.f32 %v210, %v211
  %v213 = vand.u32 %v212, 4294901760
  %214 = vmatpush1.msra.mxu0 %v213
  %215 = vmatprep.subr.mxu0 0.0
  %v216 = vand.u32 %v79, 4294901760
  %v217 = vsub.f32 %v79, %v216
  %v218 = vand.u32 %v217, 4294901760
  %v219 = vsub.f32 %v217, %v218
  %v220 = vand.u32 %v219, 4294901760
  %221 = vmatpush1.msra.mxu0 %v220
  %222 = vmatprep.subr.mxu0 0.0
  %v223 = vand.u32 %v76, 4294901760
  %v224 = vsub.f32 %v76, %v223
  %v225 = vand.u32 %v224, 4294901760
  %v226 = vsub.f32 %v224, %v225
  %v227 = vand.u32 %v226, 4294901760
  %228 = vmatpush1.msra.mxu0 %v227
  %229 = vmatprep.subr.mxu0 0.0
  %v230 = vand.u32 %v69, 4294901760
  %v231 = vsub.f32 %v69, %v230
  %v232 = vand.u32 %v231, 4294901760
  %v233 = vsub.f32 %v231, %v232
  %v234 = vand.u32 %v233, 4294901760
  %235 = vmatpush1.msra.mxu0 %v234
  %236 = vmatprep.subr.mxu0 0.0
  %v237 = vand.u32 %v106, 4294901760
  %v238 = vsub.f32 %v106, %v237
  %v239 = vand.u32 %v238, 4294901760
  %v240 = vsub.f32 %v238, %v239
  %v241 = vand.u32 %v240, 4294901760
  %242 = vmatpush1.msra.mxu0 %v241
  %243 = vmatprep.subr.mxu0 0.0
  %244 = vmatpush1.msra.mxu0 0.0
  %245 = vmatprep.subr.mxu0 0.0
  %246 = vmatpush1.msra.mxu0 0.0
  %247 = vmatprep.subr.mxu0 0.0
  %248 = vmatpush1.msra.mxu0 0.0
  %249 = vmatprep.subr.mxu0 0.0
  %250 = vmatpush1.msra.mxu0 0.0
  %251 = vmatprep.subr.mxu0 0.0
  %252 = vmatpush1.msra.mxu0 0.0
  %253 = vmatprep.subr.mxu0 0.0
  %254 = vmatpush1.msra.mxu0 0.0
  %255 = vmatprep.subr.mxu0 0.0
  %256 = vmatpush1.msra.mxu0 0.0
  %257 = vmatprep.subr.mxu0 0.0
  %258 = vmatpush1.msra.mxu0 0.0
  %259 = vmatprep.subr.mxu0 0.0
  %260 = vmatpush1.msra.mxu0 0.0
  %261 = vmatprep.subr.mxu0 0.0
  %262 = vmatpush1.msra.mxu0 0.0
  %263 = vmatprep.subr.mxu0 0.0
  %264 = vmatpush1.msra.mxu0 0.0
  %265 = vmatprep.subr.mxu0 0.0
  %266 = vmatpush1.msra.mxu0 0.0
  %267 = vmatprep.subr.mxu0 0.0
  %268 = vmatpush1.msra.mxu0 0.0
  %269 = vmatprep.subr.mxu0 0.0
  %270 = vmatpush1.msra.mxu0 0.0
  %271 = vmatprep.subr.mxu0 0.0
  %272 = vmatpush1.msra.mxu0 0.0
  %273 = vmatprep.subr.mxu0 0.0
  %274 = vmatpush1.msra.mxu0 0.0
  %275 = vmatprep.subr.mxu0 0.0
  %276 = vmatpush1.msra.mxu0 0.0
  %277 = vmatprep.subr.mxu0 0.0
  %278 = vmatpush1.msra.mxu0 0.0
  %279 = vmatprep.subr.mxu0 0.0
  %280 = vmatpush1.msra.mxu0 0.0
  %281 = vmatprep.subr.mxu0 0.0
  %282 = vmatpush1.msra.mxu0 0.0
  %283 = vmatprep.subr.mxu0 0.0
  %284 = vmatpush1.msra.mxu0 0.0
  %285 = vmatprep.subr.mxu0 0.0
  %286 = vmatpush1.msra.mxu0 0.0
  %287 = vmatprep.subr.mxu0 0.0
  %288 = vmatpush1.msra.mxu0 0.0
  %289 = vmatprep.subr.mxu0 0.0
  %290 = vmatpush1.msra.mxu0 0.0
  %291 = vmatprep.subr.mxu0 0.0
  %292 = vmatpush1.msra.mxu0 0.0
  %293 = vmatprep.subr.mxu0 0.0
  %294 = vmatpush1.msra.mxu0 0.0
  %295 = vmatprep.subr.mxu0 0.0
  %296 = vmatpush1.msra.mxu0 0.0
  %297 = vmatprep.mubr.f32.mxu0 0.0
  %v298 = vand.u32 %v97, 4294901760
  %299 = vmatmul.mubr.f32.gmra.mrb[0].mxu0 %v298
  %v300 = vpop.f32.mrb[0].mxu0
  %v301 = vadd.f32 %v185, %v300
  %v302 = vpop.f32.mrb[0].mxu0
  %303 = vmatprep.mubr.f32.mxu0 0.0
  %v304 = vand.u32 %v100, 4294901760
  %305 = vmatmul.mubr.f32.gmra.mrb[0].mxu0 %v304
  %v306 = vpop.f32.mrb[0].mxu0
  %v307 = vadd.f32 %v195, %v306
  %v308 = vpop.f32.mrb[0].mxu0
  %309 = vmatprep.mubr.f32.mxu0 0.0
  %v310 = vand.u32 %v103, 4294901760
  %311 = vmatmul.mubr.f32.gmra.mrb[0].mxu0 %v310
  %v312 = vpop.f32.mrb[0].mxu0
  %v313 = vadd.f32 %v205, %v312
  %v314 = vpop.f32.mrb[0].mxu0
  %315 = vdwg.mxu0
  %316 = vmatprep.subr.mxu0 0.0
  %v317 = vand.u32 %v59, 4294901760
  %v318 = vsub.f32 %v59, %v317
  %319 = vmatpush1.msra.mxu0 %v318
  %320 = vmatprep.subr.mxu0 0.0
  %v321 = vand.u32 %v79, 4294901760
  %v322 = vsub.f32 %v79, %v321
  %323 = vmatpush1.msra.mxu0 %v322
  %324 = vmatprep.subr.mxu0 0.0
  %v325 = vand.u32 %v76, 4294901760
  %v326 = vsub.f32 %v76, %v325
  %327 = vmatpush1.msra.mxu0 %v326
  %328 = vmatprep.subr.mxu0 0.0
  %v329 = vand.u32 %v69, 4294901760
  %v330 = vsub.f32 %v69, %v329
  %331 = vmatpush1.msra.mxu0 %v330
  %332 = vmatprep.subr.mxu0 0.0
  %v333 = vand.u32 %v106, 4294901760
  %v334 = vsub.f32 %v106, %v333
  %335 = vmatpush1.msra.mxu0 %v334
  %336 = vmatprep.subr.mxu0 0.0
  %337 = vmatpush1.msra.mxu0 0.0
  %338 = vmatprep.subr.mxu0 0.0
  %339 = vmatpush1.msra.mxu0 0.0
  %340 = vmatprep.subr.mxu0 0.0
  %341 = vmatpush1.msra.mxu0 0.0
  %342 = vmatprep.subr.mxu0 0.0
  %343 = vmatpush1.msra.mxu0 0.0
  %344 = vmatprep.subr.mxu0 0.0
  %345 = vmatpush1.msra.mxu0 0.0
  %346 = vmatprep.subr.mxu0 0.0
  %347 = vmatpush1.msra.mxu0 0.0
  %348 = vmatprep.subr.mxu0 0.0
  %349 = vmatpush1.msra.mxu0 0.0
  %350 = vmatprep.subr.mxu0 0.0
  %351 = vmatpush1.msra.mxu0 0.0
  %352 = vmatprep.subr.mxu0 0.0
  %353 = vmatpush1.msra.mxu0 0.0
  %354 = vmatprep.subr.mxu0 0.0
  %355 = vmatpush1.msra.mxu0 0.0
  %356 = vmatprep.subr.mxu0 0.0
  %357 = vmatpush1.msra.mxu0 0.0
  %358 = vmatprep.subr.mxu0 0.0
  %359 = vmatpush1.msra.mxu0 0.0
  %360 = vmatprep.subr.mxu0 0.0
  %361 = vmatpush1.msra.mxu0 0.0
  %362 = vmatprep.subr.mxu0 0.0
  %363 = vmatpush1.msra.mxu0 0.0
  %364 = vmatprep.subr.mxu0 0.0
  %365 = vmatpush1.msra.mxu0 0.0
  %366 = vmatprep.subr.mxu0 0.0
  %367 = vmatpush1.msra.mxu0 0.0
  %368 = vmatprep.subr.mxu0 0.0
  %369 = vmatpush1.msra.mxu0 0.0
  %370 = vmatprep.subr.mxu0 0.0
  %371 = vmatpush1.msra.mxu0 0.0
  %372 = vmatprep.subr.mxu0 0.0
  %373 = vmatpush1.msra.mxu0 0.0
  %374 = vmatprep.subr.mxu0 0.0
  %375 = vmatpush1.msra.mxu0 0.0
  %376 = vmatprep.subr.mxu0 0.0
  %377 = vmatpush1.msra.mxu0 0.0
  %378 = vmatprep.subr.mxu0 0.0
  %379 = vmatpush1.msra.mxu0 0.0
  %380 = vmatprep.subr.mxu0 0.0
  %381 = vmatpush1.msra.mxu0 0.0
  %382 = vmatprep.subr.mxu0 0.0
  %383 = vmatpush1.msra.mxu0 0.0
  %384 = vmatprep.subr.mxu0 0.0
  %385 = vmatpush1.msra.mxu0 0.0
  %386 = vmatprep.subr.mxu0 0.0
  %387 = vmatpush1.msra.mxu0 0.0
  %388 = vmatprep.subr.mxu0 0.0
  %389 = vmatpush1.msra.mxu0 0.0
  %390 = vmatprep.mubr.f32.mxu0 0.0
  %v391 = vand.u32 %v97, 4294901760
  %v392 = vsub.f32 %v97, %v391
  %393 = vmatmul.mubr.f32.gmra.mrb[0].mxu0 %v392
  %v394 = vpop.f32.mrb[0].mxu0
  %v395 = vadd.f32 %v301, %v394
  %v396 = vpop.f32.mrb[0].mxu0
  %397 = vmatprep.mubr.f32.mxu0 0.0
  %v398 = vand.u32 %v100, 4294901760
  %v399 = vsub.f32 %v100, %v398
  %400 = vmatmul.mubr.f32.gmra.mrb[0].mxu0 %v399
  %v401 = vpop.f32.mrb[0].mxu0
  %v402 = vadd.f32 %v307, %v401
  %v403 = vpop.f32.mrb[0].mxu0
  %404 = vmatprep.mubr.f32.mxu0 0.0
  %v405 = vand.u32 %v103, 4294901760
  %v406 = vsub.f32 %v103, %v405
  %407 = vmatmul.mubr.f32.gmra.mrb[0].mxu0 %v406
  %v408 = vpop.f32.mrb[0].mxu0
  %v409 = vadd.f32 %v313, %v408
  %v410 = vpop.f32.mrb[0].mxu0
  %411 = vdwg.mxu0
  %412 = vmatprep.subr.mxu0 0.0
  %v413 = vand.u32 %v59, 4294901760
  %414 = vmatpush1.msra.mxu0 %v413
  %415 = vmatprep.subr.mxu0 0.0
  %v416 = vand.u32 %v79, 4294901760
  %417 = vmatpush1.msra.mxu0 %v416
  %418 = vmatprep.subr.mxu0 0.0
  %v419 = vand.u32 %v76, 4294901760
  %420 = vmatpush1.msra.mxu0 %v419
  %421 = vmatprep.subr.mxu0 0.0
  %v422 = vand.u32 %v69, 4294901760
  %423 = vmatpush1.msra.mxu0 %v422
  %424 = vmatprep.subr.mxu0 0.0
  %v425 = vand.u32 %v106, 4294901760
  %426 = vmatpush1.msra.mxu0 %v425
  %427 = vmatprep.subr.mxu0 0.0
  %428 = vmatpush1.msra.mxu0 0.0
  %429 = vmatprep.subr.mxu0 0.0
  %430 = vmatpush1.msra.mxu0 0.0
  %431 = vmatprep.subr.mxu0 0.0
  %432 = vmatpush1.msra.mxu0 0.0
  %433 = vmatprep.subr.mxu0 0.0
  %434 = vmatpush1.msra.mxu0 0.0
  %435 = vmatprep.subr.mxu0 0.0
  %436 = vmatpush1.msra.mxu0 0.0
  %437 = vmatprep.subr.mxu0 0.0
  %438 = vmatpush1.msra.mxu0 0.0
  %439 = vmatprep.subr.mxu0 0.0
  %440 = vmatpush1.msra.mxu0 0.0
  %441 = vmatprep.subr.mxu0 0.0
  %442 = vmatpush1.msra.mxu0 0.0
  %443 = vmatprep.subr.mxu0 0.0
  %444 = vmatpush1.msra.mxu0 0.0
  %445 = vmatprep.subr.mxu0 0.0
  %446 = vmatpush1.msra.mxu0 0.0
  %447 = vmatprep.subr.mxu0 0.0
  %448 = vmatpush1.msra.mxu0 0.0
  %449 = vmatprep.subr.mxu0 0.0
  %450 = vmatpush1.msra.mxu0 0.0
  %451 = vmatprep.subr.mxu0 0.0
  %452 = vmatpush1.msra.mxu0 0.0
  %453 = vmatprep.subr.mxu0 0.0
  %454 = vmatpush1.msra.mxu0 0.0
  %455 = vmatprep.subr.mxu0 0.0
  %456 = vmatpush1.msra.mxu0 0.0
  %457 = vmatprep.subr.mxu0 0.0
  %458 = vmatpush1.msra.mxu0 0.0
  %459 = vmatprep.subr.mxu0 0.0
  %460 = vmatpush1.msra.mxu0 0.0
  %461 = vmatprep.subr.mxu0 0.0
  %462 = vmatpush1.msra.mxu0 0.0
  %463 = vmatprep.subr.mxu0 0.0
  %464 = vmatpush1.msra.mxu0 0.0
  %465 = vmatprep.subr.mxu0 0.0
  %466 = vmatpush1.msra.mxu0 0.0
  %467 = vmatprep.subr.mxu0 0.0
  %468 = vmatpush1.msra.mxu0 0.0
  %469 = vmatprep.subr.mxu0 0.0
  %470 = vmatpush1.msra.mxu0 0.0
  %471 = vmatprep.subr.mxu0 0.0
  %472 = vmatpush1.msra.mxu0 0.0
  %473 = vmatprep.subr.mxu0 0.0
  %474 = vmatpush1.msra.mxu0 0.0
  %475 = vmatprep.subr.mxu0 0.0
  %476 = vmatpush1.msra.mxu0 0.0
  %477 = vmatprep.subr.mxu0 0.0
  %478 = vmatpush1.msra.mxu0 0.0
  %479 = vmatprep.subr.mxu0 0.0
  %480 = vmatpush1.msra.mxu0 0.0
  %481 = vmatprep.mubr.f32.mxu0 0.0
  %v482 = vand.u32 %v97, 4294901760
  %v483 = vsub.f32 %v97, %v482
  %v484 = vand.u32 %v483, 4294901760
  %485 = vmatmul.mubr.f32.gmra.mrb[0].mxu0 %v484
  %v486 = vpop.f32.mrb[0].mxu0
  %v487 = vadd.f32 %v395, %v486
  %v488 = vpop.f32.mrb[0].mxu0
  %489 = vmatprep.mubr.f32.mxu0 0.0
  %v490 = vand.u32 %v100, 4294901760
  %v491 = vsub.f32 %v100, %v490
  %v492 = vand.u32 %v491, 4294901760
  %493 = vmatmul.mubr.f32.gmra.mrb[0].mxu0 %v492
  %v494 = vpop.f32.mrb[0].mxu0
  %v495 = vadd.f32 %v402, %v494
  %v496 = vpop.f32.mrb[0].mxu0
  %497 = vmatprep.mubr.f32.mxu0 0.0
  %v498 = vand.u32 %v103, 4294901760
  %v499 = vsub.f32 %v103, %v498
  %v500 = vand.u32 %v499, 4294901760
  %501 = vmatmul.mubr.f32.gmra.mrb[0].mxu0 %v500
  %v502 = vpop.f32.mrb[0].mxu0
  %v503 = vadd.f32 %v409, %v502
  %v504 = vpop.f32.mrb[0].mxu0
  %505 = vdwg.mxu0
  %506 = vmatprep.subr.mxu0 0.0
  %v507 = vand.u32 %v59, 4294901760
  %v508 = vsub.f32 %v59, %v507
  %v509 = vand.u32 %v508, 4294901760
  %510 = vmatpush1.msra.mxu0 %v509
  %511 = vmatprep.subr.mxu0 0.0
  %v512 = vand.u32 %v79, 4294901760
  %v513 = vsub.f32 %v79, %v512
  %v514 = vand.u32 %v513, 4294901760
  %515 = vmatpush1.msra.mxu0 %v514
  %516 = vmatprep.subr.mxu0 0.0
  %v517 = vand.u32 %v76, 4294901760
  %v518 = vsub.f32 %v76, %v517
  %v519 = vand.u32 %v518, 4294901760
  %520 = vmatpush1.msra.mxu0 %v519
  %521 = vmatprep.subr.mxu0 0.0
  %v522 = vand.u32 %v69, 4294901760
  %v523 = vsub.f32 %v69, %v522
  %v524 = vand.u32 %v523, 4294901760
  %525 = vmatpush1.msra.mxu0 %v524
  %526 = vmatprep.subr.mxu0 0.0
  %v527 = vand.u32 %v106, 4294901760
  %v528 = vsub.f32 %v106, %v527
  %v529 = vand.u32 %v528, 4294901760
  %530 = vmatpush1.msra.mxu0 %v529
  %531 = vmatprep.subr.mxu0 0.0
  %532 = vmatpush1.msra.mxu0 0.0
  %533 = vmatprep.subr.mxu0 0.0
  %534 = vmatpush1.msra.mxu0 0.0
  %535 = vmatprep.subr.mxu0 0.0
  %536 = vmatpush1.msra.mxu0 0.0
  %537 = vmatprep.subr.mxu0 0.0
  %538 = vmatpush1.msra.mxu0 0.0
  %539 = vmatprep.subr.mxu0 0.0
  %540 = vmatpush1.msra.mxu0 0.0
  %541 = vmatprep.subr.mxu0 0.0
  %542 = vmatpush1.msra.mxu0 0.0
  %543 = vmatprep.subr.mxu0 0.0
  %544 = vmatpush1.msra.mxu0 0.0
  %545 = vmatprep.subr.mxu0 0.0
  %546 = vmatpush1.msra.mxu0 0.0
  %547 = vmatprep.subr.mxu0 0.0
  %548 = vmatpush1.msra.mxu0 0.0
  %549 = vmatprep.subr.mxu0 0.0
  %550 = vmatpush1.msra.mxu0 0.0
  %551 = vmatprep.subr.mxu0 0.0
  %552 = vmatpush1.msra.mxu0 0.0
  %553 = vmatprep.subr.mxu0 0.0
  %554 = vmatpush1.msra.mxu0 0.0
  %555 = vmatprep.subr.mxu0 0.0
  %556 = vmatpush1.msra.mxu0 0.0
  %557 = vmatprep.subr.mxu0 0.0
  %558 = vmatpush1.msra.mxu0 0.0
  %559 = vmatprep.subr.mxu0 0.0
  %560 = vmatpush1.msra.mxu0 0.0
  %561 = vmatprep.subr.mxu0 0.0
  %562 = vmatpush1.msra.mxu0 0.0
  %563 = vmatprep.subr.mxu0 0.0
  %564 = vmatpush1.msra.mxu0 0.0
  %565 = vmatprep.subr.mxu0 0.0
  %566 = vmatpush1.msra.mxu0 0.0
  %567 = vmatprep.subr.mxu0 0.0
  %568 = vmatpush1.msra.mxu0 0.0
  %569 = vmatprep.subr.mxu0 0.0
  %570 = vmatpush1.msra.mxu0 0.0
  %571 = vmatprep.subr.mxu0 0.0
  %572 = vmatpush1.msra.mxu0 0.0
  %573 = vmatprep.subr.mxu0 0.0
  %574 = vmatpush1.msra.mxu0 0.0
  %575 = vmatprep.subr.mxu0 0.0
  %576 = vmatpush1.msra.mxu0 0.0
  %577 = vmatprep.subr.mxu0 0.0
  %578 = vmatpush1.msra.mxu0 0.0
  %579 = vmatprep.subr.mxu0 0.0
  %580 = vmatpush1.msra.mxu0 0.0
  %581 = vmatprep.subr.mxu0 0.0
  %582 = vmatpush1.msra.mxu0 0.0
  %583 = vmatprep.subr.mxu0 0.0
  %584 = vmatpush1.msra.mxu0 0.0
  %585 = vmatprep.mubr.f32.mxu0 0.0
  %v586 = vand.u32 %v97, 4294901760
  %587 = vmatmul.mubr.f32.gmra.mrb[0].mxu0 %v586
  %v588 = vpop.f32.mrb[0].mxu0
  %v589 = vadd.f32 %v487, %v588
  %v590 = vpop.f32.mrb[0].mxu0
  %591 = vmatprep.mubr.f32.mxu0 0.0
  %v592 = vand.u32 %v100, 4294901760
  %593 = vmatmul.mubr.f32.gmra.mrb[0].mxu0 %v592
  %v594 = vpop.f32.mrb[0].mxu0
  %v595 = vadd.f32 %v495, %v594
  %v596 = vpop.f32.mrb[0].mxu0
  %597 = vmatprep.mubr.f32.mxu0 0.0
  %v598 = vand.u32 %v103, 4294901760
  %599 = vmatmul.mubr.f32.gmra.mrb[0].mxu0 %v598
  %v600 = vpop.f32.mrb[0].mxu0
  %v601 = vadd.f32 %v503, %v600
  %v602 = vpop.f32.mrb[0].mxu0
  %603 = vdwg.mxu0
  %604 = vmatprep.subr.mxu0 0.0
  %v605 = vand.u32 %v59, 4294901760
  %606 = vmatpush1.msra.mxu0 %v605
  %607 = vmatprep.subr.mxu0 0.0
  %v608 = vand.u32 %v79, 4294901760
  %609 = vmatpush1.msra.mxu0 %v608
  %610 = vmatprep.subr.mxu0 0.0
  %v611 = vand.u32 %v76, 4294901760
  %612 = vmatpush1.msra.mxu0 %v611
  %613 = vmatprep.subr.mxu0 0.0
  %v614 = vand.u32 %v69, 4294901760
  %615 = vmatpush1.msra.mxu0 %v614
  %616 = vmatprep.subr.mxu0 0.0
  %v617 = vand.u32 %v106, 4294901760
  %618 = vmatpush1.msra.mxu0 %v617
  %619 = vmatprep.subr.mxu0 0.0
  %620 = vmatpush1.msra.mxu0 0.0
  %621 = vmatprep.subr.mxu0 0.0
  %622 = vmatpush1.msra.mxu0 0.0
  %623 = vmatprep.subr.mxu0 0.0
  %624 = vmatpush1.msra.mxu0 0.0
  %625 = vmatprep.subr.mxu0 0.0
  %626 = vmatpush1.msra.mxu0 0.0
  %627 = vmatprep.subr.mxu0 0.0
  %628 = vmatpush1.msra.mxu0 0.0
  %629 = vmatprep.subr.mxu0 0.0
  %630 = vmatpush1.msra.mxu0 0.0
  %631 = vmatprep.subr.mxu0 0.0
  %632 = vmatpush1.msra.mxu0 0.0
  %633 = vmatprep.subr.mxu0 0.0
  %634 = vmatpush1.msra.mxu0 0.0
  %635 = vmatprep.subr.mxu0 0.0
  %636 = vmatpush1.msra.mxu0 0.0
  %637 = vmatprep.subr.mxu0 0.0
  %638 = vmatpush1.msra.mxu0 0.0
  %639 = vmatprep.subr.mxu0 0.0
  %640 = vmatpush1.msra.mxu0 0.0
  %641 = vmatprep.subr.mxu0 0.0
  %642 = vmatpush1.msra.mxu0 0.0
  %643 = vmatprep.subr.mxu0 0.0
  %644 = vmatpush1.msra.mxu0 0.0
  %645 = vmatprep.subr.mxu0 0.0
  %646 = vmatpush1.msra.mxu0 0.0
  %647 = vmatprep.subr.mxu0 0.0
  %648 = vmatpush1.msra.mxu0 0.0
  %649 = vmatprep.subr.mxu0 0.0
  %650 = vmatpush1.msra.mxu0 0.0
  %651 = vmatprep.subr.mxu0 0.0
  %652 = vmatpush1.msra.mxu0 0.0
  %653 = vmatprep.subr.mxu0 0.0
  %654 = vmatpush1.msra.mxu0 0.0
  %655 = vmatprep.subr.mxu0 0.0
  %656 = vmatpush1.msra.mxu0 0.0
  %657 = vmatprep.subr.mxu0 0.0
  %658 = vmatpush1.msra.mxu0 0.0
  %659 = vmatprep.subr.mxu0 0.0
  %660 = vmatpush1.msra.mxu0 0.0
  %661 = vmatprep.subr.mxu0 0.0
  %662 = vmatpush1.msra.mxu0 0.0
  %663 = vmatprep.subr.mxu0 0.0
  %664 = vmatpush1.msra.mxu0 0.0
  %665 = vmatprep.subr.mxu0 0.0
  %666 = vmatpush1.msra.mxu0 0.0
  %667 = vmatprep.subr.mxu0 0.0
  %668 = vmatpush1.msra.mxu0 0.0
  %669 = vmatprep.subr.mxu0 0.0
  %670 = vmatpush1.msra.mxu0 0.0
  %671 = vmatprep.subr.mxu0 0.0
  %672 = vmatpush1.msra.mxu0 0.0
  %673 = vmatprep.mubr.f32.mxu0 0.0
  %v674 = vand.u32 %v97, 4294901760
  %675 = vmatmul.mubr.f32.gmra.mrb[0].mxu0 %v674
  %v676 = vpop.f32.mrb[0].mxu0
  %v677 = vadd.f32 %v589, %v676
  %v678 = vpop.f32.mrb[0].mxu0
  %679 = vmatprep.mubr.f32.mxu0 0.0
  %v680 = vand.u32 %v100, 4294901760
  %681 = vmatmul.mubr.f32.gmra.mrb[0].mxu0 %v680
  %v682 = vpop.f32.mrb[0].mxu0
  %v683 = vadd.f32 %v595, %v682
  %v684 = vpop.f32.mrb[0].mxu0
  %685 = vmatprep.mubr.f32.mxu0 0.0
  %v686 = vand.u32 %v103, 4294901760
  %687 = vmatmul.mubr.f32.gmra.mrb[0].mxu0 %v686
  %v688 = vpop.f32.mrb[0].mxu0
  %v689 = vadd.f32 %v601, %v688
  %v690 = vpop.f32.mrb[0].mxu0
  %691 = vdwg.mxu0
  %v692 = vmax.f32 %v677, 0.0
  %v693 = vmax.f32 %v683, 0.0
  %v694 = vmax.f32 %v689, 0.0
  %695 = vrot.lane.b32.xlu0 %v692, 1
  %v696 = vpop.permute.xlu0 %695
  %697 = vrot.lane.b32.xlu0 %v693, 1
  %v698 = vpop.permute.xlu0 %697
  %699 = vrot.lane.b32.xlu0 %v694, 1
  %v700 = vpop.permute.xlu0 %699
  %v701 = vmul.f32 %v696, %v58
  %v702 = vmul.f32 %v698, %v58
  %v703 = vmul.f32 %v700, %v58
  %704 = vrot.lane.b32.xlu0 %v692, 127
  %v705 = vpop.permute.xlu0 %704
  %706 = vrot.lane.b32.xlu0 %v693, 127
  %v707 = vpop.permute.xlu0 %706
  %708 = vrot.lane.b32.xlu0 %v694, 127
  %v709 = vpop.permute.xlu0 %708
  %v710 = vmul.f32 %v705, %v68
  %v711 = vmul.f32 %v707, %v68
  %v712 = vmul.f32 %v709, %v68
  %714 = vset.pattern.permute.xlu0 0
  %715 = vperm.xlu0 %714, %v46
  %v716 = vpop.permute.xlu0 %715
  %719 = vset.pattern.permute.xlu0 0
  %720 = vperm.xlu0 %719, %v47
  %v721 = vpop.permute.xlu0 %720
  %vm723 = vcmask 588800
  %v725 = vsel %vm723, %v44, 0
  %v728 = vsel %vm723, %v45, 0
  %730 = vmatprep.subr.mxu0 0.0
  %v731 = vand.u32 %v701, 4294901760
  %732 = vmatpush1.msra.mxu0 %v731
  %733 = vmatprep.subr.mxu0 0.0
  %v734 = vand.u32 %v702, 4294901760
  %735 = vmatpush1.msra.mxu0 %v734
  %736 = vmatprep.subr.mxu0 0.0
  %v737 = vand.u32 %v703, 4294901760
  %738 = vmatpush1.msra.mxu0 %v737
  %739 = vmatprep.subr.mxu0 0.0
  %v740 = vand.u32 %v692, 4294901760
  %741 = vmatpush1.msra.mxu0 %v740
  %742 = vmatprep.subr.mxu0 0.0
  %v743 = vand.u32 %v693, 4294901760
  %744 = vmatpush1.msra.mxu0 %v743
  %745 = vmatprep.subr.mxu0 0.0
  %v746 = vand.u32 %v694, 4294901760
  %747 = vmatpush1.msra.mxu0 %v746
  %748 = vmatprep.subr.mxu0 0.0
  %v749 = vand.u32 %v710, 4294901760
  %750 = vmatpush1.msra.mxu0 %v749
  %751 = vmatprep.subr.mxu0 0.0
  %v752 = vand.u32 %v711, 4294901760
  %753 = vmatpush1.msra.mxu0 %v752
  %754 = vmatprep.subr.mxu0 0.0
  %v755 = vand.u32 %v712, 4294901760
  %756 = vmatpush1.msra.mxu0 %v755
  %757 = vmatprep.subr.mxu0 0.0
  %758 = vmatpush1.msra.mxu0 0.0
  %759 = vmatprep.subr.mxu0 0.0
  %760 = vmatpush1.msra.mxu0 0.0
  %761 = vmatprep.subr.mxu0 0.0
  %762 = vmatpush1.msra.mxu0 0.0
  %763 = vmatprep.subr.mxu0 0.0
  %764 = vmatpush1.msra.mxu0 0.0
  %765 = vmatprep.subr.mxu0 0.0
  %766 = vmatpush1.msra.mxu0 0.0
  %767 = vmatprep.subr.mxu0 0.0
  %768 = vmatpush1.msra.mxu0 0.0
  %769 = vmatprep.subr.mxu0 0.0
  %770 = vmatpush1.msra.mxu0 0.0
  %771 = vmatprep.subr.mxu0 0.0
  %772 = vmatpush1.msra.mxu0 0.0
  %773 = vmatprep.subr.mxu0 0.0
  %774 = vmatpush1.msra.mxu0 0.0
  %775 = vmatprep.subr.mxu0 0.0
  %776 = vmatpush1.msra.mxu0 0.0
  %777 = vmatprep.subr.mxu0 0.0
  %778 = vmatpush1.msra.mxu0 0.0
  %779 = vmatprep.subr.mxu0 0.0
  %780 = vmatpush1.msra.mxu0 0.0
  %781 = vmatprep.subr.mxu0 0.0
  %782 = vmatpush1.msra.mxu0 0.0
  %783 = vmatprep.subr.mxu0 0.0
  %784 = vmatpush1.msra.mxu0 0.0
  %785 = vmatprep.subr.mxu0 0.0
  %786 = vmatpush1.msra.mxu0 0.0
  %787 = vmatprep.subr.mxu0 0.0
  %788 = vmatpush1.msra.mxu0 0.0
  %789 = vmatprep.subr.mxu0 0.0
  %790 = vmatpush1.msra.mxu0 0.0
  %791 = vmatprep.subr.mxu0 0.0
  %792 = vmatpush1.msra.mxu0 0.0
  %793 = vmatprep.subr.mxu0 0.0
  %794 = vmatpush1.msra.mxu0 0.0
  %795 = vmatprep.subr.mxu0 0.0
  %796 = vmatpush1.msra.mxu0 0.0
  %797 = vmatprep.subr.mxu0 0.0
  %798 = vmatpush1.msra.mxu0 0.0
  %799 = vmatprep.subr.mxu0 0.0
  %800 = vmatpush1.msra.mxu0 0.0
  %801 = vmatprep.subr.mxu0 0.0
  %802 = vmatpush1.msra.mxu0 0.0
  %803 = vmatprep.mubr.f32.mxu0 0.0
  %v804 = vand.u32 %v725, 4294901760
  %v805 = vsub.f32 %v725, %v804
  %v806 = vand.u32 %v805, 4294901760
  %v807 = vsub.f32 %v805, %v806
  %v808 = vand.u32 %v807, 4294901760
  %809 = vmatmul.mubr.f32.gmra.mrb[0].mxu0 %v808
  %v810 = vpop.f32.mrb[0].mxu0
  %v811 = vadd.f32 %v716, %v810
  %v812 = vpop.f32.mrb[0].mxu0
  %813 = vmatprep.mubr.f32.mxu0 0.0
  %v814 = vand.u32 %v728, 4294901760
  %v815 = vsub.f32 %v728, %v814
  %v816 = vand.u32 %v815, 4294901760
  %v817 = vsub.f32 %v815, %v816
  %v818 = vand.u32 %v817, 4294901760
  %819 = vmatmul.mubr.f32.gmra.mrb[0].mxu0 %v818
  %v820 = vpop.f32.mrb[0].mxu0
  %v821 = vadd.f32 %v721, %v820
  %v822 = vpop.f32.mrb[0].mxu0
  %823 = vdwg.mxu0
  %824 = vmatprep.subr.mxu0 0.0
  %v825 = vand.u32 %v701, 4294901760
  %v826 = vsub.f32 %v701, %v825
  %v827 = vand.u32 %v826, 4294901760
  %v828 = vsub.f32 %v826, %v827
  %v829 = vand.u32 %v828, 4294901760
  %830 = vmatpush1.msra.mxu0 %v829
  %831 = vmatprep.subr.mxu0 0.0
  %v832 = vand.u32 %v702, 4294901760
  %v833 = vsub.f32 %v702, %v832
  %v834 = vand.u32 %v833, 4294901760
  %v835 = vsub.f32 %v833, %v834
  %v836 = vand.u32 %v835, 4294901760
  %837 = vmatpush1.msra.mxu0 %v836
  %838 = vmatprep.subr.mxu0 0.0
  %v839 = vand.u32 %v703, 4294901760
  %v840 = vsub.f32 %v703, %v839
  %v841 = vand.u32 %v840, 4294901760
  %v842 = vsub.f32 %v840, %v841
  %v843 = vand.u32 %v842, 4294901760
  %844 = vmatpush1.msra.mxu0 %v843
  %845 = vmatprep.subr.mxu0 0.0
  %v846 = vand.u32 %v692, 4294901760
  %v847 = vsub.f32 %v692, %v846
  %v848 = vand.u32 %v847, 4294901760
  %v849 = vsub.f32 %v847, %v848
  %v850 = vand.u32 %v849, 4294901760
  %851 = vmatpush1.msra.mxu0 %v850
  %852 = vmatprep.subr.mxu0 0.0
  %v853 = vand.u32 %v693, 4294901760
  %v854 = vsub.f32 %v693, %v853
  %v855 = vand.u32 %v854, 4294901760
  %v856 = vsub.f32 %v854, %v855
  %v857 = vand.u32 %v856, 4294901760
  %858 = vmatpush1.msra.mxu0 %v857
  %859 = vmatprep.subr.mxu0 0.0
  %v860 = vand.u32 %v694, 4294901760
  %v861 = vsub.f32 %v694, %v860
  %v862 = vand.u32 %v861, 4294901760
  %v863 = vsub.f32 %v861, %v862
  %v864 = vand.u32 %v863, 4294901760
  %865 = vmatpush1.msra.mxu0 %v864
  %866 = vmatprep.subr.mxu0 0.0
  %v867 = vand.u32 %v710, 4294901760
  %v868 = vsub.f32 %v710, %v867
  %v869 = vand.u32 %v868, 4294901760
  %v870 = vsub.f32 %v868, %v869
  %v871 = vand.u32 %v870, 4294901760
  %872 = vmatpush1.msra.mxu0 %v871
  %873 = vmatprep.subr.mxu0 0.0
  %v874 = vand.u32 %v711, 4294901760
  %v875 = vsub.f32 %v711, %v874
  %v876 = vand.u32 %v875, 4294901760
  %v877 = vsub.f32 %v875, %v876
  %v878 = vand.u32 %v877, 4294901760
  %879 = vmatpush1.msra.mxu0 %v878
  %880 = vmatprep.subr.mxu0 0.0
  %v881 = vand.u32 %v712, 4294901760
  %v882 = vsub.f32 %v712, %v881
  %v883 = vand.u32 %v882, 4294901760
  %v884 = vsub.f32 %v882, %v883
  %v885 = vand.u32 %v884, 4294901760
  %886 = vmatpush1.msra.mxu0 %v885
  %887 = vmatprep.subr.mxu0 0.0
  %888 = vmatpush1.msra.mxu0 0.0
  %889 = vmatprep.subr.mxu0 0.0
  %890 = vmatpush1.msra.mxu0 0.0
  %891 = vmatprep.subr.mxu0 0.0
  %892 = vmatpush1.msra.mxu0 0.0
  %893 = vmatprep.subr.mxu0 0.0
  %894 = vmatpush1.msra.mxu0 0.0
  %895 = vmatprep.subr.mxu0 0.0
  %896 = vmatpush1.msra.mxu0 0.0
  %897 = vmatprep.subr.mxu0 0.0
  %898 = vmatpush1.msra.mxu0 0.0
  %899 = vmatprep.subr.mxu0 0.0
  %900 = vmatpush1.msra.mxu0 0.0
  %901 = vmatprep.subr.mxu0 0.0
  %902 = vmatpush1.msra.mxu0 0.0
  %903 = vmatprep.subr.mxu0 0.0
  %904 = vmatpush1.msra.mxu0 0.0
  %905 = vmatprep.subr.mxu0 0.0
  %906 = vmatpush1.msra.mxu0 0.0
  %907 = vmatprep.subr.mxu0 0.0
  %908 = vmatpush1.msra.mxu0 0.0
  %909 = vmatprep.subr.mxu0 0.0
  %910 = vmatpush1.msra.mxu0 0.0
  %911 = vmatprep.subr.mxu0 0.0
  %912 = vmatpush1.msra.mxu0 0.0
  %913 = vmatprep.subr.mxu0 0.0
  %914 = vmatpush1.msra.mxu0 0.0
  %915 = vmatprep.subr.mxu0 0.0
  %916 = vmatpush1.msra.mxu0 0.0
  %917 = vmatprep.subr.mxu0 0.0
  %918 = vmatpush1.msra.mxu0 0.0
  %919 = vmatprep.subr.mxu0 0.0
  %920 = vmatpush1.msra.mxu0 0.0
  %921 = vmatprep.subr.mxu0 0.0
  %922 = vmatpush1.msra.mxu0 0.0
  %923 = vmatprep.subr.mxu0 0.0
  %924 = vmatpush1.msra.mxu0 0.0
  %925 = vmatprep.subr.mxu0 0.0
  %926 = vmatpush1.msra.mxu0 0.0
  %927 = vmatprep.subr.mxu0 0.0
  %928 = vmatpush1.msra.mxu0 0.0
  %929 = vmatprep.subr.mxu0 0.0
  %930 = vmatpush1.msra.mxu0 0.0
  %931 = vmatprep.subr.mxu0 0.0
  %932 = vmatpush1.msra.mxu0 0.0
  %933 = vmatprep.mubr.f32.mxu0 0.0
  %v934 = vand.u32 %v725, 4294901760
  %935 = vmatmul.mubr.f32.gmra.mrb[0].mxu0 %v934
  %v936 = vpop.f32.mrb[0].mxu0
  %v937 = vadd.f32 %v811, %v936
  %v938 = vpop.f32.mrb[0].mxu0
  %939 = vmatprep.mubr.f32.mxu0 0.0
  %v940 = vand.u32 %v728, 4294901760
  %941 = vmatmul.mubr.f32.gmra.mrb[0].mxu0 %v940
  %v942 = vpop.f32.mrb[0].mxu0
  %v943 = vadd.f32 %v821, %v942
  %v944 = vpop.f32.mrb[0].mxu0
  %945 = vdwg.mxu0
  %946 = vmatprep.subr.mxu0 0.0
  %v947 = vand.u32 %v701, 4294901760
  %v948 = vsub.f32 %v701, %v947
  %949 = vmatpush1.msra.mxu0 %v948
  %950 = vmatprep.subr.mxu0 0.0
  %v951 = vand.u32 %v702, 4294901760
  %v952 = vsub.f32 %v702, %v951
  %953 = vmatpush1.msra.mxu0 %v952
  %954 = vmatprep.subr.mxu0 0.0
  %v955 = vand.u32 %v703, 4294901760
  %v956 = vsub.f32 %v703, %v955
  %957 = vmatpush1.msra.mxu0 %v956
  %958 = vmatprep.subr.mxu0 0.0
  %v959 = vand.u32 %v692, 4294901760
  %v960 = vsub.f32 %v692, %v959
  %961 = vmatpush1.msra.mxu0 %v960
  %962 = vmatprep.subr.mxu0 0.0
  %v963 = vand.u32 %v693, 4294901760
  %v964 = vsub.f32 %v693, %v963
  %965 = vmatpush1.msra.mxu0 %v964
  %966 = vmatprep.subr.mxu0 0.0
  %v967 = vand.u32 %v694, 4294901760
  %v968 = vsub.f32 %v694, %v967
  %969 = vmatpush1.msra.mxu0 %v968
  %970 = vmatprep.subr.mxu0 0.0
  %v971 = vand.u32 %v710, 4294901760
  %v972 = vsub.f32 %v710, %v971
  %973 = vmatpush1.msra.mxu0 %v972
  %974 = vmatprep.subr.mxu0 0.0
  %v975 = vand.u32 %v711, 4294901760
  %v976 = vsub.f32 %v711, %v975
  %977 = vmatpush1.msra.mxu0 %v976
  %978 = vmatprep.subr.mxu0 0.0
  %v979 = vand.u32 %v712, 4294901760
  %v980 = vsub.f32 %v712, %v979
  %981 = vmatpush1.msra.mxu0 %v980
  %982 = vmatprep.subr.mxu0 0.0
  %983 = vmatpush1.msra.mxu0 0.0
  %984 = vmatprep.subr.mxu0 0.0
  %985 = vmatpush1.msra.mxu0 0.0
  %986 = vmatprep.subr.mxu0 0.0
  %987 = vmatpush1.msra.mxu0 0.0
  %988 = vmatprep.subr.mxu0 0.0
  %989 = vmatpush1.msra.mxu0 0.0
  %990 = vmatprep.subr.mxu0 0.0
  %991 = vmatpush1.msra.mxu0 0.0
  %992 = vmatprep.subr.mxu0 0.0
  %993 = vmatpush1.msra.mxu0 0.0
  %994 = vmatprep.subr.mxu0 0.0
  %995 = vmatpush1.msra.mxu0 0.0
  %996 = vmatprep.subr.mxu0 0.0
  %997 = vmatpush1.msra.mxu0 0.0
  %998 = vmatprep.subr.mxu0 0.0
  %999 = vmatpush1.msra.mxu0 0.0
  %1000 = vmatprep.subr.mxu0 0.0
  %1001 = vmatpush1.msra.mxu0 0.0
  %1002 = vmatprep.subr.mxu0 0.0
  %1003 = vmatpush1.msra.mxu0 0.0
  %1004 = vmatprep.subr.mxu0 0.0
  %1005 = vmatpush1.msra.mxu0 0.0
  %1006 = vmatprep.subr.mxu0 0.0
  %1007 = vmatpush1.msra.mxu0 0.0
  %1008 = vmatprep.subr.mxu0 0.0
  %1009 = vmatpush1.msra.mxu0 0.0
  %1010 = vmatprep.subr.mxu0 0.0
  %1011 = vmatpush1.msra.mxu0 0.0
  %1012 = vmatprep.subr.mxu0 0.0
  %1013 = vmatpush1.msra.mxu0 0.0
  %1014 = vmatprep.subr.mxu0 0.0
  %1015 = vmatpush1.msra.mxu0 0.0
  %1016 = vmatprep.subr.mxu0 0.0
  %1017 = vmatpush1.msra.mxu0 0.0
  %1018 = vmatprep.subr.mxu0 0.0
  %1019 = vmatpush1.msra.mxu0 0.0
  %1020 = vmatprep.subr.mxu0 0.0
  %1021 = vmatpush1.msra.mxu0 0.0
  %1022 = vmatprep.subr.mxu0 0.0
  %1023 = vmatpush1.msra.mxu0 0.0
  %1024 = vmatprep.subr.mxu0 0.0
  %1025 = vmatpush1.msra.mxu0 0.0
  %1026 = vmatprep.subr.mxu0 0.0
  %1027 = vmatpush1.msra.mxu0 0.0
  %1028 = vmatprep.mubr.f32.mxu0 0.0
  %v1029 = vand.u32 %v725, 4294901760
  %v1030 = vsub.f32 %v725, %v1029
  %1031 = vmatmul.mubr.f32.gmra.mrb[0].mxu0 %v1030
  %v1032 = vpop.f32.mrb[0].mxu0
  %v1033 = vadd.f32 %v937, %v1032
  %v1034 = vpop.f32.mrb[0].mxu0
  %1035 = vmatprep.mubr.f32.mxu0 0.0
  %v1036 = vand.u32 %v728, 4294901760
  %v1037 = vsub.f32 %v728, %v1036
  %1038 = vmatmul.mubr.f32.gmra.mrb[0].mxu0 %v1037
  %v1039 = vpop.f32.mrb[0].mxu0
  %v1040 = vadd.f32 %v943, %v1039
  %v1041 = vpop.f32.mrb[0].mxu0
  %1042 = vdwg.mxu0
  %1043 = vmatprep.subr.mxu0 0.0
  %v1044 = vand.u32 %v701, 4294901760
  %1045 = vmatpush1.msra.mxu0 %v1044
  %1046 = vmatprep.subr.mxu0 0.0
  %v1047 = vand.u32 %v702, 4294901760
  %1048 = vmatpush1.msra.mxu0 %v1047
  %1049 = vmatprep.subr.mxu0 0.0
  %v1050 = vand.u32 %v703, 4294901760
  %1051 = vmatpush1.msra.mxu0 %v1050
  %1052 = vmatprep.subr.mxu0 0.0
  %v1053 = vand.u32 %v692, 4294901760
  %1054 = vmatpush1.msra.mxu0 %v1053
  %1055 = vmatprep.subr.mxu0 0.0
  %v1056 = vand.u32 %v693, 4294901760
  %1057 = vmatpush1.msra.mxu0 %v1056
  %1058 = vmatprep.subr.mxu0 0.0
  %v1059 = vand.u32 %v694, 4294901760
  %1060 = vmatpush1.msra.mxu0 %v1059
  %1061 = vmatprep.subr.mxu0 0.0
  %v1062 = vand.u32 %v710, 4294901760
  %1063 = vmatpush1.msra.mxu0 %v1062
  %1064 = vmatprep.subr.mxu0 0.0
  %v1065 = vand.u32 %v711, 4294901760
  %1066 = vmatpush1.msra.mxu0 %v1065
  %1067 = vmatprep.subr.mxu0 0.0
  %v1068 = vand.u32 %v712, 4294901760
  %1069 = vmatpush1.msra.mxu0 %v1068
  %1070 = vmatprep.subr.mxu0 0.0
  %1071 = vmatpush1.msra.mxu0 0.0
  %1072 = vmatprep.subr.mxu0 0.0
  %1073 = vmatpush1.msra.mxu0 0.0
  %1074 = vmatprep.subr.mxu0 0.0
  %1075 = vmatpush1.msra.mxu0 0.0
  %1076 = vmatprep.subr.mxu0 0.0
  %1077 = vmatpush1.msra.mxu0 0.0
  %1078 = vmatprep.subr.mxu0 0.0
  %1079 = vmatpush1.msra.mxu0 0.0
  %1080 = vmatprep.subr.mxu0 0.0
  %1081 = vmatpush1.msra.mxu0 0.0
  %1082 = vmatprep.subr.mxu0 0.0
  %1083 = vmatpush1.msra.mxu0 0.0
  %1084 = vmatprep.subr.mxu0 0.0
  %1085 = vmatpush1.msra.mxu0 0.0
  %1086 = vmatprep.subr.mxu0 0.0
  %1087 = vmatpush1.msra.mxu0 0.0
  %1088 = vmatprep.subr.mxu0 0.0
  %1089 = vmatpush1.msra.mxu0 0.0
  %1090 = vmatprep.subr.mxu0 0.0
  %1091 = vmatpush1.msra.mxu0 0.0
  %1092 = vmatprep.subr.mxu0 0.0
  %1093 = vmatpush1.msra.mxu0 0.0
  %1094 = vmatprep.subr.mxu0 0.0
  %1095 = vmatpush1.msra.mxu0 0.0
  %1096 = vmatprep.subr.mxu0 0.0
  %1097 = vmatpush1.msra.mxu0 0.0
  %1098 = vmatprep.subr.mxu0 0.0
  %1099 = vmatpush1.msra.mxu0 0.0
  %1100 = vmatprep.subr.mxu0 0.0
  %1101 = vmatpush1.msra.mxu0 0.0
  %1102 = vmatprep.subr.mxu0 0.0
  %1103 = vmatpush1.msra.mxu0 0.0
  %1104 = vmatprep.subr.mxu0 0.0
  %1105 = vmatpush1.msra.mxu0 0.0
  %1106 = vmatprep.subr.mxu0 0.0
  %1107 = vmatpush1.msra.mxu0 0.0
  %1108 = vmatprep.subr.mxu0 0.0
  %1109 = vmatpush1.msra.mxu0 0.0
  %1110 = vmatprep.subr.mxu0 0.0
  %1111 = vmatpush1.msra.mxu0 0.0
  %1112 = vmatprep.subr.mxu0 0.0
  %1113 = vmatpush1.msra.mxu0 0.0
  %1114 = vmatprep.subr.mxu0 0.0
  %1115 = vmatpush1.msra.mxu0 0.0
  %1116 = vmatprep.mubr.f32.mxu0 0.0
  %v1117 = vand.u32 %v725, 4294901760
  %v1118 = vsub.f32 %v725, %v1117
  %v1119 = vand.u32 %v1118, 4294901760
  %1120 = vmatmul.mubr.f32.gmra.mrb[0].mxu0 %v1119
  %v1121 = vpop.f32.mrb[0].mxu0
  %v1122 = vadd.f32 %v1033, %v1121
  %v1123 = vpop.f32.mrb[0].mxu0
  %1124 = vmatprep.mubr.f32.mxu0 0.0
  %v1125 = vand.u32 %v728, 4294901760
  %v1126 = vsub.f32 %v728, %v1125
  %v1127 = vand.u32 %v1126, 4294901760
  %1128 = vmatmul.mubr.f32.gmra.mrb[0].mxu0 %v1127
  %v1129 = vpop.f32.mrb[0].mxu0
  %v1130 = vadd.f32 %v1040, %v1129
  %v1131 = vpop.f32.mrb[0].mxu0
  %1132 = vdwg.mxu0
  %1133 = vmatprep.subr.mxu0 0.0
  %v1134 = vand.u32 %v701, 4294901760
  %v1135 = vsub.f32 %v701, %v1134
  %v1136 = vand.u32 %v1135, 4294901760
  %1137 = vmatpush1.msra.mxu0 %v1136
  %1138 = vmatprep.subr.mxu0 0.0
  %v1139 = vand.u32 %v702, 4294901760
  %v1140 = vsub.f32 %v702, %v1139
  %v1141 = vand.u32 %v1140, 4294901760
  %1142 = vmatpush1.msra.mxu0 %v1141
  %1143 = vmatprep.subr.mxu0 0.0
  %v1144 = vand.u32 %v703, 4294901760
  %v1145 = vsub.f32 %v703, %v1144
  %v1146 = vand.u32 %v1145, 4294901760
  %1147 = vmatpush1.msra.mxu0 %v1146
  %1148 = vmatprep.subr.mxu0 0.0
  %v1149 = vand.u32 %v692, 4294901760
  %v1150 = vsub.f32 %v692, %v1149
  %v1151 = vand.u32 %v1150, 4294901760
  %1152 = vmatpush1.msra.mxu0 %v1151
  %1153 = vmatprep.subr.mxu0 0.0
  %v1154 = vand.u32 %v693, 4294901760
  %v1155 = vsub.f32 %v693, %v1154
  %v1156 = vand.u32 %v1155, 4294901760
  %1157 = vmatpush1.msra.mxu0 %v1156
  %1158 = vmatprep.subr.mxu0 0.0
  %v1159 = vand.u32 %v694, 4294901760
  %v1160 = vsub.f32 %v694, %v1159
  %v1161 = vand.u32 %v1160, 4294901760
  %1162 = vmatpush1.msra.mxu0 %v1161
  %1163 = vmatprep.subr.mxu0 0.0
  %v1164 = vand.u32 %v710, 4294901760
  %v1165 = vsub.f32 %v710, %v1164
  %v1166 = vand.u32 %v1165, 4294901760
  %1167 = vmatpush1.msra.mxu0 %v1166
  %1168 = vmatprep.subr.mxu0 0.0
  %v1169 = vand.u32 %v711, 4294901760
  %v1170 = vsub.f32 %v711, %v1169
  %v1171 = vand.u32 %v1170, 4294901760
  %1172 = vmatpush1.msra.mxu0 %v1171
  %1173 = vmatprep.subr.mxu0 0.0
  %v1174 = vand.u32 %v712, 4294901760
  %v1175 = vsub.f32 %v712, %v1174
  %v1176 = vand.u32 %v1175, 4294901760
  %1177 = vmatpush1.msra.mxu0 %v1176
  %1178 = vmatprep.subr.mxu0 0.0
  %1179 = vmatpush1.msra.mxu0 0.0
  %1180 = vmatprep.subr.mxu0 0.0
  %1181 = vmatpush1.msra.mxu0 0.0
  %1182 = vmatprep.subr.mxu0 0.0
  %1183 = vmatpush1.msra.mxu0 0.0
  %1184 = vmatprep.subr.mxu0 0.0
  %1185 = vmatpush1.msra.mxu0 0.0
  %1186 = vmatprep.subr.mxu0 0.0
  %1187 = vmatpush1.msra.mxu0 0.0
  %1188 = vmatprep.subr.mxu0 0.0
  %1189 = vmatpush1.msra.mxu0 0.0
  %1190 = vmatprep.subr.mxu0 0.0
  %1191 = vmatpush1.msra.mxu0 0.0
  %1192 = vmatprep.subr.mxu0 0.0
  %1193 = vmatpush1.msra.mxu0 0.0
  %1194 = vmatprep.subr.mxu0 0.0
  %1195 = vmatpush1.msra.mxu0 0.0
  %1196 = vmatprep.subr.mxu0 0.0
  %1197 = vmatpush1.msra.mxu0 0.0
  %1198 = vmatprep.subr.mxu0 0.0
  %1199 = vmatpush1.msra.mxu0 0.0
  %1200 = vmatprep.subr.mxu0 0.0
  %1201 = vmatpush1.msra.mxu0 0.0
  %1202 = vmatprep.subr.mxu0 0.0
  %1203 = vmatpush1.msra.mxu0 0.0
  %1204 = vmatprep.subr.mxu0 0.0
  %1205 = vmatpush1.msra.mxu0 0.0
  %1206 = vmatprep.subr.mxu0 0.0
  %1207 = vmatpush1.msra.mxu0 0.0
  %1208 = vmatprep.subr.mxu0 0.0
  %1209 = vmatpush1.msra.mxu0 0.0
  %1210 = vmatprep.subr.mxu0 0.0
  %1211 = vmatpush1.msra.mxu0 0.0
  %1212 = vmatprep.subr.mxu0 0.0
  %1213 = vmatpush1.msra.mxu0 0.0
  %1214 = vmatprep.subr.mxu0 0.0
  %1215 = vmatpush1.msra.mxu0 0.0
  %1216 = vmatprep.subr.mxu0 0.0
  %1217 = vmatpush1.msra.mxu0 0.0
  %1218 = vmatprep.subr.mxu0 0.0
  %1219 = vmatpush1.msra.mxu0 0.0
  %1220 = vmatprep.subr.mxu0 0.0
  %1221 = vmatpush1.msra.mxu0 0.0
  %1222 = vmatprep.subr.mxu0 0.0
  %1223 = vmatpush1.msra.mxu0 0.0
  %1224 = vmatprep.mubr.f32.mxu0 0.0
  %v1225 = vand.u32 %v725, 4294901760
  %1226 = vmatmul.mubr.f32.gmra.mrb[0].mxu0 %v1225
  %v1227 = vpop.f32.mrb[0].mxu0
  %v1228 = vadd.f32 %v1122, %v1227
  %v1229 = vpop.f32.mrb[0].mxu0
  %1230 = vmatprep.mubr.f32.mxu0 0.0
  %v1231 = vand.u32 %v728, 4294901760
  %1232 = vmatmul.mubr.f32.gmra.mrb[0].mxu0 %v1231
  %v1233 = vpop.f32.mrb[0].mxu0
  %v1234 = vadd.f32 %v1130, %v1233
  %v1235 = vpop.f32.mrb[0].mxu0
  %1236 = vdwg.mxu0
  %1237 = vmatprep.subr.mxu0 0.0
  %v1238 = vand.u32 %v701, 4294901760
  %1239 = vmatpush1.msra.mxu0 %v1238
  %1240 = vmatprep.subr.mxu0 0.0
  %v1241 = vand.u32 %v702, 4294901760
  %1242 = vmatpush1.msra.mxu0 %v1241
  %1243 = vmatprep.subr.mxu0 0.0
  %v1244 = vand.u32 %v703, 4294901760
  %1245 = vmatpush1.msra.mxu0 %v1244
  %1246 = vmatprep.subr.mxu0 0.0
  %v1247 = vand.u32 %v692, 4294901760
  %1248 = vmatpush1.msra.mxu0 %v1247
  %1249 = vmatprep.subr.mxu0 0.0
  %v1250 = vand.u32 %v693, 4294901760
  %1251 = vmatpush1.msra.mxu0 %v1250
  %1252 = vmatprep.subr.mxu0 0.0
  %v1253 = vand.u32 %v694, 4294901760
  %1254 = vmatpush1.msra.mxu0 %v1253
  %1255 = vmatprep.subr.mxu0 0.0
  %v1256 = vand.u32 %v710, 4294901760
  %1257 = vmatpush1.msra.mxu0 %v1256
  %1258 = vmatprep.subr.mxu0 0.0
  %v1259 = vand.u32 %v711, 4294901760
  %1260 = vmatpush1.msra.mxu0 %v1259
  %1261 = vmatprep.subr.mxu0 0.0
  %v1262 = vand.u32 %v712, 4294901760
  %1263 = vmatpush1.msra.mxu0 %v1262
  %1264 = vmatprep.subr.mxu0 0.0
  %1265 = vmatpush1.msra.mxu0 0.0
  %1266 = vmatprep.subr.mxu0 0.0
  %1267 = vmatpush1.msra.mxu0 0.0
  %1268 = vmatprep.subr.mxu0 0.0
  %1269 = vmatpush1.msra.mxu0 0.0
  %1270 = vmatprep.subr.mxu0 0.0
  %1271 = vmatpush1.msra.mxu0 0.0
  %1272 = vmatprep.subr.mxu0 0.0
  %1273 = vmatpush1.msra.mxu0 0.0
  %1274 = vmatprep.subr.mxu0 0.0
  %1275 = vmatpush1.msra.mxu0 0.0
  %1276 = vmatprep.subr.mxu0 0.0
  %1277 = vmatpush1.msra.mxu0 0.0
  %1278 = vmatprep.subr.mxu0 0.0
  %1279 = vmatpush1.msra.mxu0 0.0
  %1280 = vmatprep.subr.mxu0 0.0
  %1281 = vmatpush1.msra.mxu0 0.0
  %1282 = vmatprep.subr.mxu0 0.0
  %1283 = vmatpush1.msra.mxu0 0.0
  %1284 = vmatprep.subr.mxu0 0.0
  %1285 = vmatpush1.msra.mxu0 0.0
  %1286 = vmatprep.subr.mxu0 0.0
  %1287 = vmatpush1.msra.mxu0 0.0
  %1288 = vmatprep.subr.mxu0 0.0
  %1289 = vmatpush1.msra.mxu0 0.0
  %1290 = vmatprep.subr.mxu0 0.0
  %1291 = vmatpush1.msra.mxu0 0.0
  %1292 = vmatprep.subr.mxu0 0.0
  %1293 = vmatpush1.msra.mxu0 0.0
  %1294 = vmatprep.subr.mxu0 0.0
  %1295 = vmatpush1.msra.mxu0 0.0
  %1296 = vmatprep.subr.mxu0 0.0
  %1297 = vmatpush1.msra.mxu0 0.0
  %1298 = vmatprep.subr.mxu0 0.0
  %1299 = vmatpush1.msra.mxu0 0.0
  %1300 = vmatprep.subr.mxu0 0.0
  %1301 = vmatpush1.msra.mxu0 0.0
  %1302 = vmatprep.subr.mxu0 0.0
  %1303 = vmatpush1.msra.mxu0 0.0
  %1304 = vmatprep.subr.mxu0 0.0
  %1305 = vmatpush1.msra.mxu0 0.0
  %1306 = vmatprep.subr.mxu0 0.0
  %1307 = vmatpush1.msra.mxu0 0.0
  %1308 = vmatprep.subr.mxu0 0.0
  %1309 = vmatpush1.msra.mxu0 0.0
  %1310 = vmatprep.mubr.f32.mxu0 0.0
  %v1311 = vand.u32 %v725, 4294901760
  %1312 = vmatmul.mubr.f32.gmra.mrb[0].mxu0 %v1311
  %v1313 = vpop.f32.mrb[0].mxu0
  %v1314 = vadd.f32 %v1228, %v1313
  %v1315 = vpop.f32.mrb[0].mxu0
  %1316 = vmatprep.mubr.f32.mxu0 0.0
  %v1317 = vand.u32 %v728, 4294901760
  %1318 = vmatmul.mubr.f32.gmra.mrb[0].mxu0 %v1317
  %v1319 = vpop.f32.mrb[0].mxu0
  %v1320 = vadd.f32 %v1234, %v1319
  %v1321 = vpop.f32.mrb[0].mxu0
  %1322 = vdwg.mxu0
  %v1323 = vand.u32 2147483647, %v1314
  %vm1324 = vcmp.le.f32.partialorder %v1323, 0.7853982
  %vm1325 = vcmp.lt.s32.totalorder %v1314, 0
  %v1326 = vand.u32 %v1314, 2139095040
  %v1327 = vshrl.u32 %v1326, 23
  %v1328 = vsub.s32 %v1327, 127
  %v1329 = vand.u32 2147483647, %v1314
  %v1330 = vand.u32 %v1329, 8388607
  %v1331 = vor.u32 %v1330, 8388608
  %v1332 = vsub.s32 0, %v1331
  %v1333 = vadd.s32 %v1328, 1
  %vm1334 = vcmp.gt.s32.totalorder %v1333, 0
  %v1335 = vsel %vm1334, %v1333, 0
  %v1336 = vshrl.u32 %v1335, 5
  %v1337 = vand.u32 %v1335, 31
  %v1338 = vsub.s32 32, %v1337
  %v1339 = vshrl.u32 683565275, %v1338
  %v1340 = vshll.u32 683565275, %v1337
  %v1341 = vshrl.u32 2475754826, %v1338
  %v1342 = vor.u32 %v1340, %v1341
  %v1343 = vshll.u32 2475754826, %v1337
  %v1344 = vshrl.u32 2131351028, %v1338
  %v1345 = vor.u32 %v1343, %v1344
  %v1346 = vshll.u32 2131351028, %v1337
  %v1347 = vshrl.u32 2102212464, %v1338
  %v1348 = vor.u32 %v1346, %v1347
  %v1349 = vshll.u32 2102212464, %v1337
  %v1350 = vshrl.u32 920167782, %v1338
  %v1351 = vor.u32 %v1349, %v1350
  %v1352 = vshll.u32 920167782, %v1337
  %v1353 = vshrl.u32 1326507024, %v1338
  %v1354 = vor.u32 %v1352, %v1353
  %vm1355 = vcmp.lt.s32.totalorder %v1336, 1
  %vm1356 = vcmp.lt.s32.totalorder %v1336, 2
  %vm1357 = vcmp.lt.s32.totalorder %v1336, 3
  %vm1358 = vcmp.lt.s32.totalorder %v1336, 4
  %v1359 = vsel %vm1355, %v1339, %v1342
  %v1360 = vsel %vm1358, %v1348, 2102212464
  %v1361 = vsel %vm1357, %v1345, %v1360
  %v1362 = vsel %vm1356, %v1359, %v1361
  %v1363 = vsel %vm1355, %v1342, %v1345
  %v1364 = vsel %vm1358, %v1351, 920167782
  %v1365 = vsel %vm1357, %v1348, %v1364
  %v1366 = vsel %vm1356, %v1363, %v1365
  %v1367 = vsel %vm1355, %v1345, %v1348
  %v1368 = vsel %vm1358, %v1354, 1326507024
  %v1369 = vsel %vm1357, %v1351, %v1368
  %v1370 = vsel %vm1356, %v1367, %v1369
  %v1371 = vshll.u32 %v1331, 8
  %v1372 = vmul.u32.u64.compose %v1371, %v1370
  %v1373 = vextract.low.u32 %v1372
  %v1374 = vextract.high.u32 %v1372
  %v1375 = vmul.u32.u64.compose %v1371, %v1366
  %v1376 = vextract.low.u32 %v1375
  %v1377 = vextract.high.u32 %v1375
  %v1378 = vmul.u32 %v1371, %v1362
  %v1379 = vadd.s32 %v1374, %v1376
  %vm1380 = vc.u32 %v1374, %v1376
  %v1381 = vadd.s32 %v1377, 1
  %v1382 = vsel %vm1380, %v1381, %v1377
  %v1383 = vadd.s32 %v1378, %v1382
  %v1384 = vadd.s32 %v1383, 536870912
  %v1385 = vshrl.u32 %v1384, 30
  %v1386 = vshll.u32 %v1385, 30
  %v1387 = vsub.s32 %v1383, %v1386
  %vm1388 = vcmp.lt.s32.totalorder %v1387, 0
  %v1389 = vsub.s32 0, %v1387
  %v1390 = vsel %vm1388, %v1389, %v1387
  %v1391 = vclz %v1390
  %v1392 = vsub.s32 %v1391, 2
  %vm1393 = vcmp.gt.s32.totalorder 0, %v1392
  %v1394 = vsel %vm1393, 0, %v1392
  %v1395 = vsub.s32 32, %v1394
  %v1396 = vshll.u32 %v1387, %v1394
  %v1397 = vshrl.u32 %v1379, %v1395
  %v1398 = vor.u32 %v1396, %v1397
  %v1399 = vsub.s32 4294967266, %v1394
  %v1400 = vadd.s32 %v1399, 127
  %v1401 = vshll.u32 %v1400, 23
  %v1402 = vor.u32 4788187, %v1401
  %v1403 = vand.u32 2147483647, %v1402
  %v1405 = vcvt.s32.f32 %v1398
  %v1406 = vmul.f32 %v1405, %v1403
  %v1407 = vxor.u32 %v1406, 2147483648
  %v1408 = vsel %vm1325, %v1407, %v1406
  %v1409 = vsub.s32 4, %v1385
  %v1410 = vsel %vm1325, %v1409, %v1385
  %v1411 = vsel %vm1324, %v1314, %v1408
  %v1412 = vsel %vm1324, 0, %v1410
  %v1413 = vcosq.f32.pop %v1411
  %v1414 = vsinq.f32.pop %v1411
  %vm1415 = vweird.f32 %v1314
  %v1416 = vand.u32 %v1412, 3
  %vm1417 = vcmp.lt.s32.totalorder %v1416, 2
  %vm1418 = vcmp.eq.s32.totalorder %v1416, 0
  %v1419 = vxor.u32 %v1414, 2147483648
  %v1420 = vsel %vm1418, %v1413, %v1419
  %vm1421 = vcmp.eq.s32.totalorder %v1416, 2
  %v1422 = vxor.u32 %v1413, 2147483648
  %v1423 = vsel %vm1421, %v1422, %v1414
  %v1424 = vsel %vm1417, %v1420, %v1423
  %v1425 = vsel %vm1415, nan, %v1424
  %v1427 = vrot.slane %v1425, 4
  %v1429 = vmul.f32 %v1320, %v1427
  %v1430 = vand.u32 2147483647, %v1314
  %vm1431 = vcmp.le.f32.partialorder %v1430, 0.7853982
  %vm1432 = vcmp.lt.s32.totalorder %v1314, 0
  %v1433 = vand.u32 %v1314, 2139095040
  %v1434 = vshrl.u32 %v1433, 23
  %v1435 = vsub.s32 %v1434, 127
  %v1436 = vand.u32 2147483647, %v1314
  %v1437 = vand.u32 %v1436, 8388607
  %v1438 = vor.u32 %v1437, 8388608
  %v1439 = vsub.s32 0, %v1438
  %v1440 = vadd.s32 %v1435, 1
  %vm1441 = vcmp.gt.s32.totalorder %v1440, 0
  %v1442 = vsel %vm1441, %v1440, 0
  %v1443 = vshrl.u32 %v1442, 5
  %v1444 = vand.u32 %v1442, 31
  %v1445 = vsub.s32 32, %v1444
  %v1446 = vshrl.u32 683565275, %v1445
  %v1447 = vshll.u32 683565275, %v1444
  %v1448 = vshrl.u32 2475754826, %v1445
  %v1449 = vor.u32 %v1447, %v1448
  %v1450 = vshll.u32 2475754826, %v1444
  %v1451 = vshrl.u32 2131351028, %v1445
  %v1452 = vor.u32 %v1450, %v1451
  %v1453 = vshll.u32 2131351028, %v1444
  %v1454 = vshrl.u32 2102212464, %v1445
  %v1455 = vor.u32 %v1453, %v1454
  %v1456 = vshll.u32 2102212464, %v1444
  %v1457 = vshrl.u32 920167782, %v1445
  %v1458 = vor.u32 %v1456, %v1457
  %v1459 = vshll.u32 920167782, %v1444
  %v1460 = vshrl.u32 1326507024, %v1445
  %v1461 = vor.u32 %v1459, %v1460
  %vm1462 = vcmp.lt.s32.totalorder %v1443, 1
  %vm1463 = vcmp.lt.s32.totalorder %v1443, 2
  %vm1464 = vcmp.lt.s32.totalorder %v1443, 3
  %vm1465 = vcmp.lt.s32.totalorder %v1443, 4
  %v1466 = vsel %vm1462, %v1446, %v1449
  %v1467 = vsel %vm1465, %v1455, 2102212464
  %v1468 = vsel %vm1464, %v1452, %v1467
  %v1469 = vsel %vm1463, %v1466, %v1468
  %v1470 = vsel %vm1462, %v1449, %v1452
  %v1471 = vsel %vm1465, %v1458, 920167782
  %v1472 = vsel %vm1464, %v1455, %v1471
  %v1473 = vsel %vm1463, %v1470, %v1472
  %v1474 = vsel %vm1462, %v1452, %v1455
  %v1475 = vsel %vm1465, %v1461, 1326507024
  %v1476 = vsel %vm1464, %v1458, %v1475
  %v1477 = vsel %vm1463, %v1474, %v1476
  %v1478 = vshll.u32 %v1438, 8
  %v1479 = vmul.u32.u64.compose %v1478, %v1477
  %v1480 = vextract.low.u32 %v1479
  %v1481 = vextract.high.u32 %v1479
  %v1482 = vmul.u32.u64.compose %v1478, %v1473
  %v1483 = vextract.low.u32 %v1482
  %v1484 = vextract.high.u32 %v1482
  %v1485 = vmul.u32 %v1478, %v1469
  %v1486 = vadd.s32 %v1481, %v1483
  %vm1487 = vc.u32 %v1481, %v1483
  %v1488 = vadd.s32 %v1484, 1
  %v1489 = vsel %vm1487, %v1488, %v1484
  %v1490 = vadd.s32 %v1485, %v1489
  %v1491 = vadd.s32 %v1490, 536870912
  %v1492 = vshrl.u32 %v1491, 30
  %v1493 = vshll.u32 %v1492, 30
  %v1494 = vsub.s32 %v1490, %v1493
  %vm1495 = vcmp.lt.s32.totalorder %v1494, 0
  %v1496 = vsub.s32 0, %v1494
  %v1497 = vsel %vm1495, %v1496, %v1494
  %v1498 = vclz %v1497
  %v1499 = vsub.s32 %v1498, 2
  %vm1500 = vcmp.gt.s32.totalorder 0, %v1499
  %v1501 = vsel %vm1500, 0, %v1499
  %v1502 = vsub.s32 32, %v1501
  %v1503 = vshll.u32 %v1494, %v1501
  %v1504 = vshrl.u32 %v1486, %v1502
  %v1505 = vor.u32 %v1503, %v1504
  %v1506 = vsub.s32 4294967266, %v1501
  %v1507 = vadd.s32 %v1506, 127
  %v1508 = vshll.u32 %v1507, 23
  %v1509 = vor.u32 4788187, %v1508
  %v1510 = vand.u32 2147483647, %v1509
  %v1512 = vcvt.s32.f32 %v1505
  %v1513 = vmul.f32 %v1512, %v1510
  %v1514 = vxor.u32 %v1513, 2147483648
  %v1515 = vsel %vm1432, %v1514, %v1513
  %v1516 = vsub.s32 4, %v1492
  %v1517 = vsel %vm1432, %v1516, %v1492
  %v1518 = vsel %vm1431, %v1314, %v1515
  %v1519 = vsel %vm1431, 0, %v1517
  %v1520 = vcosq.f32.pop %v1518
  %v1521 = vsinq.f32.pop %v1518
  %vm1522 = vweird.f32 %v1314
  %v1523 = vadd.s32 %v1519, 3
  %v1524 = vand.u32 %v1523, 3
  %vm1525 = vcmp.lt.s32.totalorder %v1524, 2
  %vm1526 = vcmp.eq.s32.totalorder %v1524, 0
  %v1527 = vxor.u32 %v1521, 2147483648
  %v1528 = vsel %vm1526, %v1520, %v1527
  %vm1529 = vcmp.eq.s32.totalorder %v1524, 2
  %v1530 = vxor.u32 %v1520, 2147483648
  %v1531 = vsel %vm1529, %v1530, %v1521
  %v1532 = vsel %vm1525, %v1528, %v1531
  %v1533 = vsel %vm1522, nan, %v1532
  %v1535 = vrot.slane %v1533, 4
  %v1537 = vmul.f32 %v1320, %v1535
  %v1538 = vld [vmem:[%s3] sm:$0xff]
  %v1539 = vld [vmem:[%s3 + $0x8] sm:$0xff]
  %v1540 = vld [vmem:[%s3 + $0x10] sm:$0xff]
  %v1541 = vld [vmem:[%s3 + $0x18] sm:$0xff]
  %v1542 = vld [vmem:[%s3 + $0x20] sm:$0xff]
  %v1543 = vld [vmem:[%s3 + $0x28] sm:$0xff]
  %v1544 = vld [vmem:[%s3 + $0x30] sm:$0xff]
  %v1545 = vld [vmem:[%s3 + $0x38] sm:$0xff]
  %v1546 = vld [vmem:[%s3 + $0x40] sm:$0xff]
  %v1547 = vld [vmem:[%s3 + $0x48] sm:$0xff]
  %v1548 = vld [vmem:[%s3 + $0x50] sm:$0xff]
  %v1549 = vld [vmem:[%s3 + $0x58] sm:$0xff]
  %v1550 = vld [vmem:[%s3 + $0x60] sm:$0xff]
  %v1551 = vld [vmem:[%s3 + $0x68] sm:$0xff]
  %v1552 = vld [vmem:[%s3 + $0x70] sm:$0xff]
  %v1553 = vld [vmem:[%s3 + $0x78] sm:$0xff]
  %v1554 = vld [vmem:[%s3 + $0x80] sm:$0xff]
  %v1555 = vld [vmem:[%s3 + $0x88] sm:$0xff]
  %v1556 = vld [vmem:[%s3 + $0x90] sm:$0xff]
  %v1557 = vld [vmem:[%s3 + $0x98] sm:$0xff]
  %v1558 = vld [vmem:[%s3 + $0xa0] sm:$0xff]
  %v1559 = vld [vmem:[%s3 + $0xa8] sm:$0xff]
  %v1560 = vld [vmem:[%s3 + $0xb0] sm:$0xff]
  %v1561 = vld [vmem:[%s3 + $0xb8] sm:$0xff]
  %v1562 = vld [vmem:[%s3 + $0xc0] sm:$0xff]
  %v1563 = vld [vmem:[%s3 + $0xc8] sm:$0xff]
  %v1564 = vld [vmem:[%s3 + $0xd0] sm:$0xff]
  %v1565 = vld [vmem:[%s3 + $0xd8] sm:$0xff]
  %v1566 = vld [vmem:[%s3 + $0xe0] sm:$0xff]
  %v1567 = vld [vmem:[%s3 + $0xe8] sm:$0xff]
  %v1568 = vld [vmem:[%s3 + $0xf0] sm:$0xff]
  %v1569 = vld [vmem:[%s3 + $0xf8] sm:$0xff]
  %v1570 = vld [vmem:[%s3 + $0x100] sm:$0xff]
  %v1571 = vld [vmem:[%s3 + $0x108] sm:$0xff]
  %v1572 = vld [vmem:[%s3 + $0x110] sm:$0xff]
  %v1573 = vld [vmem:[%s3 + $0x118] sm:$0xff]
  %v1574 = vld [vmem:[%s3 + $0x120] sm:$0xff]
  %v1575 = vld [vmem:[%s3 + $0x128] sm:$0xff]
  %v1576 = vld [vmem:[%s3 + $0x130] sm:$0xff]
  %v1577 = vld [vmem:[%s3 + $0x138] sm:$0xff]
  %v1578 = vld [vmem:[%s3 + $0x140] sm:$0xff]
  %v1579 = vld [vmem:[%s3 + $0x148] sm:$0xff]
  %v1580 = vld [vmem:[%s3 + $0x150] sm:$0xff]
  %v1581 = vld [vmem:[%s3 + $0x158] sm:$0xff]
  %v1582 = vld [vmem:[%s3 + $0x160] sm:$0xff]
  %v1583 = vld [vmem:[%s3 + $0x168] sm:$0xff]
  %v1584 = vld [vmem:[%s3 + $0x170] sm:$0xff]
  %v1585 = vld [vmem:[%s3 + $0x178] sm:$0xff]
  %v1586 = vld [vmem:[%s3 + $0x180] sm:$0xff]
  %v1587 = vld [vmem:[%s3 + $0x188] sm:$0xff]
  %v1588 = vld [vmem:[%s3 + $0x190] sm:$0xff]
  %v1589 = vld [vmem:[%s3 + $0x198] sm:$0xff]
  %v1590 = vld [vmem:[%s3 + $0x1a0] sm:$0xff]
  %v1591 = vld [vmem:[%s3 + $0x1a8] sm:$0xff]
  %v1592 = vld [vmem:[%s3 + $0x1b0] sm:$0xff]
  %v1593 = vld [vmem:[%s3 + $0x1b8] sm:$0xff]
  %v1594 = vld [vmem:[%s3 + $0x1c0] sm:$0xff]
  %v1595 = vld [vmem:[%s3 + $0x1c8] sm:$0xff]
  %v1596 = vld [vmem:[%s3 + $0x1d0] sm:$0xff]
  %v1597 = vld [vmem:[%s3 + $0x1d8] sm:$0xff]
  %v1598 = vld [vmem:[%s3 + $0x1e0] sm:$0xff]
  %v1599 = vld [vmem:[%s3 + $0x1e8] sm:$0xff]
  %v1600 = vld [vmem:[%s3 + $0x1f0] sm:$0xff]
  %v1601 = vld [vmem:[%s3 + $0x1f8] sm:$0xff]
  %v1602 = vand.u32 %v1539, 4294901760
  %1603 = vmatprep.subr.mxu0 %v1602
  %v1604 = vand.u32 %v1538, 4294901760
  %1605 = vmatpush1.msra.mxu0 %v1604
  %v1606 = vand.u32 %v1541, 4294901760
  %1607 = vmatprep.subr.mxu0 %v1606
  %v1608 = vand.u32 %v1540, 4294901760
  %1609 = vmatpush1.msra.mxu0 %v1608
  %v1610 = vand.u32 %v1543, 4294901760
  %1611 = vmatprep.subr.mxu0 %v1610
  %v1612 = vand.u32 %v1542, 4294901760
  %1613 = vmatpush1.msra.mxu0 %v1612
  %v1614 = vand.u32 %v1545, 4294901760
  %1615 = vmatprep.subr.mxu0 %v1614
  %v1616 = vand.u32 %v1544, 4294901760
  %1617 = vmatpush1.msra.mxu0 %v1616
  %v1618 = vand.u32 %v1547, 4294901760
  %1619 = vmatprep.subr.mxu0 %v1618
  %v1620 = vand.u32 %v1546, 4294901760
  %1621 = vmatpush1.msra.mxu0 %v1620
  %v1622 = vand.u32 %v1549, 4294901760
  %1623 = vmatprep.subr.mxu0 %v1622
  %v1624 = vand.u32 %v1548, 4294901760
  %1625 = vmatpush1.msra.mxu0 %v1624
  %v1626 = vand.u32 %v1551, 4294901760
  %1627 = vmatprep.subr.mxu0 %v1626
  %v1628 = vand.u32 %v1550, 4294901760
  %1629 = vmatpush1.msra.mxu0 %v1628
  %v1630 = vand.u32 %v1553, 4294901760
  %1631 = vmatprep.subr.mxu0 %v1630
  %v1632 = vand.u32 %v1552, 4294901760
  %1633 = vmatpush1.msra.mxu0 %v1632
  %v1634 = vand.u32 %v1555, 4294901760
  %1635 = vmatprep.subr.mxu0 %v1634
  %v1636 = vand.u32 %v1554, 4294901760
  %1637 = vmatpush1.msra.mxu0 %v1636
  %v1638 = vand.u32 %v1557, 4294901760
  %1639 = vmatprep.subr.mxu0 %v1638
  %v1640 = vand.u32 %v1556, 4294901760
  %1641 = vmatpush1.msra.mxu0 %v1640
  %v1642 = vand.u32 %v1559, 4294901760
  %1643 = vmatprep.subr.mxu0 %v1642
  %v1644 = vand.u32 %v1558, 4294901760
  %1645 = vmatpush1.msra.mxu0 %v1644
  %v1646 = vand.u32 %v1561, 4294901760
  %1647 = vmatprep.subr.mxu0 %v1646
  %v1648 = vand.u32 %v1560, 4294901760
  %1649 = vmatpush1.msra.mxu0 %v1648
  %v1650 = vand.u32 %v1563, 4294901760
  %1651 = vmatprep.subr.mxu0 %v1650
  %v1652 = vand.u32 %v1562, 4294901760
  %1653 = vmatpush1.msra.mxu0 %v1652
  %v1654 = vand.u32 %v1565, 4294901760
  %1655 = vmatprep.subr.mxu0 %v1654
  %v1656 = vand.u32 %v1564, 4294901760
  %1657 = vmatpush1.msra.mxu0 %v1656
  %v1658 = vand.u32 %v1567, 4294901760
  %1659 = vmatprep.subr.mxu0 %v1658
  %v1660 = vand.u32 %v1566, 4294901760
  %1661 = vmatpush1.msra.mxu0 %v1660
  %v1662 = vand.u32 %v1569, 4294901760
  %1663 = vmatprep.subr.mxu0 %v1662
  %v1664 = vand.u32 %v1568, 4294901760
  %1665 = vmatpush1.msra.mxu0 %v1664
  %v1666 = vand.u32 %v1571, 4294901760
  %1667 = vmatprep.subr.mxu0 %v1666
  %v1668 = vand.u32 %v1570, 4294901760
  %1669 = vmatpush1.msra.mxu0 %v1668
  %v1670 = vand.u32 %v1573, 4294901760
  %1671 = vmatprep.subr.mxu0 %v1670
  %v1672 = vand.u32 %v1572, 4294901760
  %1673 = vmatpush1.msra.mxu0 %v1672
  %v1674 = vand.u32 %v1575, 4294901760
  %1675 = vmatprep.subr.mxu0 %v1674
  %v1676 = vand.u32 %v1574, 4294901760
  %1677 = vmatpush1.msra.mxu0 %v1676
  %v1678 = vand.u32 %v1577, 4294901760
  %1679 = vmatprep.subr.mxu0 %v1678
  %v1680 = vand.u32 %v1576, 4294901760
  %1681 = vmatpush1.msra.mxu0 %v1680
  %v1682 = vand.u32 %v1579, 4294901760
  %1683 = vmatprep.subr.mxu0 %v1682
  %v1684 = vand.u32 %v1578, 4294901760
  %1685 = vmatpush1.msra.mxu0 %v1684
  %v1686 = vand.u32 %v1581, 4294901760
  %1687 = vmatprep.subr.mxu0 %v1686
  %v1688 = vand.u32 %v1580, 4294901760
  %1689 = vmatpush1.msra.mxu0 %v1688
  %v1690 = vand.u32 %v1583, 4294901760
  %1691 = vmatprep.subr.mxu0 %v1690
  %v1692 = vand.u32 %v1582, 4294901760
  %1693 = vmatpush1.msra.mxu0 %v1692
  %v1694 = vand.u32 %v1585, 4294901760
  %1695 = vmatprep.subr.mxu0 %v1694
  %v1696 = vand.u32 %v1584, 4294901760
  %1697 = vmatpush1.msra.mxu0 %v1696
  %v1698 = vand.u32 %v1587, 4294901760
  %1699 = vmatprep.subr.mxu0 %v1698
  %v1700 = vand.u32 %v1586, 4294901760
  %1701 = vmatpush1.msra.mxu0 %v1700
  %v1702 = vand.u32 %v1589, 4294901760
  %1703 = vmatprep.subr.mxu0 %v1702
  %v1704 = vand.u32 %v1588, 4294901760
  %1705 = vmatpush1.msra.mxu0 %v1704
  %v1706 = vand.u32 %v1591, 4294901760
  %1707 = vmatprep.subr.mxu0 %v1706
  %v1708 = vand.u32 %v1590, 4294901760
  %1709 = vmatpush1.msra.mxu0 %v1708
  %v1710 = vand.u32 %v1593, 4294901760
  %1711 = vmatprep.subr.mxu0 %v1710
  %v1712 = vand.u32 %v1592, 4294901760
  %1713 = vmatpush1.msra.mxu0 %v1712
  %v1714 = vand.u32 %v1595, 4294901760
  %1715 = vmatprep.subr.mxu0 %v1714
  %v1716 = vand.u32 %v1594, 4294901760
  %1717 = vmatpush1.msra.mxu0 %v1716
  %v1718 = vand.u32 %v1597, 4294901760
  %1719 = vmatprep.subr.mxu0 %v1718
  %v1720 = vand.u32 %v1596, 4294901760
  %1721 = vmatpush1.msra.mxu0 %v1720
  %v1722 = vand.u32 %v1599, 4294901760
  %1723 = vmatprep.subr.mxu0 %v1722
  %v1724 = vand.u32 %v1598, 4294901760
  %1725 = vmatpush1.msra.mxu0 %v1724
  %v1726 = vand.u32 %v1601, 4294901760
  %1727 = vmatprep.subr.mxu0 %v1726
  %v1728 = vand.u32 %v1600, 4294901760
  %1729 = vmatpush1.msra.mxu0 %v1728
  %v1730 = vand.u32 %v1537, 4294901760
  %v1731 = vsub.f32 %v1537, %v1730
  %v1732 = vand.u32 %v1731, 4294901760
  %v1733 = vsub.f32 %v1731, %v1732
  %v1734 = vand.u32 %v1733, 4294901760
  %1735 = vmatprep.mubr.f32.mxu0 %v1734
  %v1736 = vand.u32 %v1429, 4294901760
  %v1737 = vsub.f32 %v1429, %v1736
  %v1738 = vand.u32 %v1737, 4294901760
  %v1739 = vsub.f32 %v1737, %v1738
  %v1740 = vand.u32 %v1739, 4294901760
  %1741 = vmatmul.mubr.f32.gmra.mrb[0].mxu0 %v1740
  %v1742 = vpop.f32.mrb[0].mxu0
  %v1743 = vadd.f32 0.0, %v1742
  %v1744 = vpop.f32.mrb[0].mxu0
  %v1745 = vadd.f32 0.0, %v1744
  %1746 = vdwg.mxu0
  %v1747 = vand.u32 %v1539, 4294901760
  %v1748 = vsub.f32 %v1539, %v1747
  %v1749 = vand.u32 %v1748, 4294901760
  %v1750 = vsub.f32 %v1748, %v1749
  %v1751 = vand.u32 %v1750, 4294901760
  %1752 = vmatprep.subr.mxu0 %v1751
  %v1753 = vand.u32 %v1538, 4294901760
  %v1754 = vsub.f32 %v1538, %v1753
  %v1755 = vand.u32 %v1754, 4294901760
  %v1756 = vsub.f32 %v1754, %v1755
  %v1757 = vand.u32 %v1756, 4294901760
  %1758 = vmatpush1.msra.mxu0 %v1757
  %v1759 = vand.u32 %v1541, 4294901760
  %v1760 = vsub.f32 %v1541, %v1759
  %v1761 = vand.u32 %v1760, 4294901760
  %v1762 = vsub.f32 %v1760, %v1761
  %v1763 = vand.u32 %v1762, 4294901760
  %1764 = vmatprep.subr.mxu0 %v1763
  %v1765 = vand.u32 %v1540, 4294901760
  %v1766 = vsub.f32 %v1540, %v1765
  %v1767 = vand.u32 %v1766, 4294901760
  %v1768 = vsub.f32 %v1766, %v1767
  %v1769 = vand.u32 %v1768, 4294901760
  %1770 = vmatpush1.msra.mxu0 %v1769
  %v1771 = vand.u32 %v1543, 4294901760
  %v1772 = vsub.f32 %v1543, %v1771
  %v1773 = vand.u32 %v1772, 4294901760
  %v1774 = vsub.f32 %v1772, %v1773
  %v1775 = vand.u32 %v1774, 4294901760
  %1776 = vmatprep.subr.mxu0 %v1775
  %v1777 = vand.u32 %v1542, 4294901760
  %v1778 = vsub.f32 %v1542, %v1777
  %v1779 = vand.u32 %v1778, 4294901760
  %v1780 = vsub.f32 %v1778, %v1779
  %v1781 = vand.u32 %v1780, 4294901760
  %1782 = vmatpush1.msra.mxu0 %v1781
  %v1783 = vand.u32 %v1545, 4294901760
  %v1784 = vsub.f32 %v1545, %v1783
  %v1785 = vand.u32 %v1784, 4294901760
  %v1786 = vsub.f32 %v1784, %v1785
  %v1787 = vand.u32 %v1786, 4294901760
  %1788 = vmatprep.subr.mxu0 %v1787
  %v1789 = vand.u32 %v1544, 4294901760
  %v1790 = vsub.f32 %v1544, %v1789
  %v1791 = vand.u32 %v1790, 4294901760
  %v1792 = vsub.f32 %v1790, %v1791
  %v1793 = vand.u32 %v1792, 4294901760
  %1794 = vmatpush1.msra.mxu0 %v1793
  %v1795 = vand.u32 %v1547, 4294901760
  %v1796 = vsub.f32 %v1547, %v1795
  %v1797 = vand.u32 %v1796, 4294901760
  %v1798 = vsub.f32 %v1796, %v1797
  %v1799 = vand.u32 %v1798, 4294901760
  %1800 = vmatprep.subr.mxu0 %v1799
  %v1801 = vand.u32 %v1546, 4294901760
  %v1802 = vsub.f32 %v1546, %v1801
  %v1803 = vand.u32 %v1802, 4294901760
  %v1804 = vsub.f32 %v1802, %v1803
  %v1805 = vand.u32 %v1804, 4294901760
  %1806 = vmatpush1.msra.mxu0 %v1805
  %v1807 = vand.u32 %v1549, 4294901760
  %v1808 = vsub.f32 %v1549, %v1807
  %v1809 = vand.u32 %v1808, 4294901760
  %v1810 = vsub.f32 %v1808, %v1809
  %v1811 = vand.u32 %v1810, 4294901760
  %1812 = vmatprep.subr.mxu0 %v1811
  %v1813 = vand.u32 %v1548, 4294901760
  %v1814 = vsub.f32 %v1548, %v1813
  %v1815 = vand.u32 %v1814, 4294901760
  %v1816 = vsub.f32 %v1814, %v1815
  %v1817 = vand.u32 %v1816, 4294901760
  %1818 = vmatpush1.msra.mxu0 %v1817
  %v1819 = vand.u32 %v1551, 4294901760
  %v1820 = vsub.f32 %v1551, %v1819
  %v1821 = vand.u32 %v1820, 4294901760
  %v1822 = vsub.f32 %v1820, %v1821
  %v1823 = vand.u32 %v1822, 4294901760
  %1824 = vmatprep.subr.mxu0 %v1823
  %v1825 = vand.u32 %v1550, 4294901760
  %v1826 = vsub.f32 %v1550, %v1825
  %v1827 = vand.u32 %v1826, 4294901760
  %v1828 = vsub.f32 %v1826, %v1827
  %v1829 = vand.u32 %v1828, 4294901760
  %1830 = vmatpush1.msra.mxu0 %v1829
  %v1831 = vand.u32 %v1553, 4294901760
  %v1832 = vsub.f32 %v1553, %v1831
  %v1833 = vand.u32 %v1832, 4294901760
  %v1834 = vsub.f32 %v1832, %v1833
  %v1835 = vand.u32 %v1834, 4294901760
  %1836 = vmatprep.subr.mxu0 %v1835
  %v1837 = vand.u32 %v1552, 4294901760
  %v1838 = vsub.f32 %v1552, %v1837
  %v1839 = vand.u32 %v1838, 4294901760
  %v1840 = vsub.f32 %v1838, %v1839
  %v1841 = vand.u32 %v1840, 4294901760
  %1842 = vmatpush1.msra.mxu0 %v1841
  %v1843 = vand.u32 %v1555, 4294901760
  %v1844 = vsub.f32 %v1555, %v1843
  %v1845 = vand.u32 %v1844, 4294901760
  %v1846 = vsub.f32 %v1844, %v1845
  %v1847 = vand.u32 %v1846, 4294901760
  %1848 = vmatprep.subr.mxu0 %v1847
  %v1849 = vand.u32 %v1554, 4294901760
  %v1850 = vsub.f32 %v1554, %v1849
  %v1851 = vand.u32 %v1850, 4294901760
  %v1852 = vsub.f32 %v1850, %v1851
  %v1853 = vand.u32 %v1852, 4294901760
  %1854 = vmatpush1.msra.mxu0 %v1853
  %v1855 = vand.u32 %v1557, 4294901760
  %v1856 = vsub.f32 %v1557, %v1855
  %v1857 = vand.u32 %v1856, 4294901760
  %v1858 = vsub.f32 %v1856, %v1857
  %v1859 = vand.u32 %v1858, 4294901760
  %1860 = vmatprep.subr.mxu0 %v1859
  %v1861 = vand.u32 %v1556, 4294901760
  %v1862 = vsub.f32 %v1556, %v1861
  %v1863 = vand.u32 %v1862, 4294901760
  %v1864 = vsub.f32 %v1862, %v1863
  %v1865 = vand.u32 %v1864, 4294901760
  %1866 = vmatpush1.msra.mxu0 %v1865
  %v1867 = vand.u32 %v1559, 4294901760
  %v1868 = vsub.f32 %v1559, %v1867
  %v1869 = vand.u32 %v1868, 4294901760
  %v1870 = vsub.f32 %v1868, %v1869
  %v1871 = vand.u32 %v1870, 4294901760
  %1872 = vmatprep.subr.mxu0 %v1871
  %v1873 = vand.u32 %v1558, 4294901760
  %v1874 = vsub.f32 %v1558, %v1873
  %v1875 = vand.u32 %v1874, 4294901760
  %v1876 = vsub.f32 %v1874, %v1875
  %v1877 = vand.u32 %v1876, 4294901760
  %1878 = vmatpush1.msra.mxu0 %v1877
  %v1879 = vand.u32 %v1561, 4294901760
  %v1880 = vsub.f32 %v1561, %v1879
  %v1881 = vand.u32 %v1880, 4294901760
  %v1882 = vsub.f32 %v1880, %v1881
  %v1883 = vand.u32 %v1882, 4294901760
  %1884 = vmatprep.subr.mxu0 %v1883
  %v1885 = vand.u32 %v1560, 4294901760
  %v1886 = vsub.f32 %v1560, %v1885
  %v1887 = vand.u32 %v1886, 4294901760
  %v1888 = vsub.f32 %v1886, %v1887
  %v1889 = vand.u32 %v1888, 4294901760
  %1890 = vmatpush1.msra.mxu0 %v1889
  %v1891 = vand.u32 %v1563, 4294901760
  %v1892 = vsub.f32 %v1563, %v1891
  %v1893 = vand.u32 %v1892, 4294901760
  %v1894 = vsub.f32 %v1892, %v1893
  %v1895 = vand.u32 %v1894, 4294901760
  %1896 = vmatprep.subr.mxu0 %v1895
  %v1897 = vand.u32 %v1562, 4294901760
  %v1898 = vsub.f32 %v1562, %v1897
  %v1899 = vand.u32 %v1898, 4294901760
  %v1900 = vsub.f32 %v1898, %v1899
  %v1901 = vand.u32 %v1900, 4294901760
  %1902 = vmatpush1.msra.mxu0 %v1901
  %v1903 = vand.u32 %v1565, 4294901760
  %v1904 = vsub.f32 %v1565, %v1903
  %v1905 = vand.u32 %v1904, 4294901760
  %v1906 = vsub.f32 %v1904, %v1905
  %v1907 = vand.u32 %v1906, 4294901760
  %1908 = vmatprep.subr.mxu0 %v1907
  %v1909 = vand.u32 %v1564, 4294901760
  %v1910 = vsub.f32 %v1564, %v1909
  %v1911 = vand.u32 %v1910, 4294901760
  %v1912 = vsub.f32 %v1910, %v1911
  %v1913 = vand.u32 %v1912, 4294901760
  %1914 = vmatpush1.msra.mxu0 %v1913
  %v1915 = vand.u32 %v1567, 4294901760
  %v1916 = vsub.f32 %v1567, %v1915
  %v1917 = vand.u32 %v1916, 4294901760
  %v1918 = vsub.f32 %v1916, %v1917
  %v1919 = vand.u32 %v1918, 4294901760
  %1920 = vmatprep.subr.mxu0 %v1919
  %v1921 = vand.u32 %v1566, 4294901760
  %v1922 = vsub.f32 %v1566, %v1921
  %v1923 = vand.u32 %v1922, 4294901760
  %v1924 = vsub.f32 %v1922, %v1923
  %v1925 = vand.u32 %v1924, 4294901760
  %1926 = vmatpush1.msra.mxu0 %v1925
  %v1927 = vand.u32 %v1569, 4294901760
  %v1928 = vsub.f32 %v1569, %v1927
  %v1929 = vand.u32 %v1928, 4294901760
  %v1930 = vsub.f32 %v1928, %v1929
  %v1931 = vand.u32 %v1930, 4294901760
  %1932 = vmatprep.subr.mxu0 %v1931
  %v1933 = vand.u32 %v1568, 4294901760
  %v1934 = vsub.f32 %v1568, %v1933
  %v1935 = vand.u32 %v1934, 4294901760
  %v1936 = vsub.f32 %v1934, %v1935
  %v1937 = vand.u32 %v1936, 4294901760
  %1938 = vmatpush1.msra.mxu0 %v1937
  %v1939 = vand.u32 %v1571, 4294901760
  %v1940 = vsub.f32 %v1571, %v1939
  %v1941 = vand.u32 %v1940, 4294901760
  %v1942 = vsub.f32 %v1940, %v1941
  %v1943 = vand.u32 %v1942, 4294901760
  %1944 = vmatprep.subr.mxu0 %v1943
  %v1945 = vand.u32 %v1570, 4294901760
  %v1946 = vsub.f32 %v1570, %v1945
  %v1947 = vand.u32 %v1946, 4294901760
  %v1948 = vsub.f32 %v1946, %v1947
  %v1949 = vand.u32 %v1948, 4294901760
  %1950 = vmatpush1.msra.mxu0 %v1949
  %v1951 = vand.u32 %v1573, 4294901760
  %v1952 = vsub.f32 %v1573, %v1951
  %v1953 = vand.u32 %v1952, 4294901760
  %v1954 = vsub.f32 %v1952, %v1953
  %v1955 = vand.u32 %v1954, 4294901760
  %1956 = vmatprep.subr.mxu0 %v1955
  %v1957 = vand.u32 %v1572, 4294901760
  %v1958 = vsub.f32 %v1572, %v1957
  %v1959 = vand.u32 %v1958, 4294901760
  %v1960 = vsub.f32 %v1958, %v1959
  %v1961 = vand.u32 %v1960, 4294901760
  %1962 = vmatpush1.msra.mxu0 %v1961
  %v1963 = vand.u32 %v1575, 4294901760
  %v1964 = vsub.f32 %v1575, %v1963
  %v1965 = vand.u32 %v1964, 4294901760
  %v1966 = vsub.f32 %v1964, %v1965
  %v1967 = vand.u32 %v1966, 4294901760
  %1968 = vmatprep.subr.mxu0 %v1967
  %v1969 = vand.u32 %v1574, 4294901760
  %v1970 = vsub.f32 %v1574, %v1969
  %v1971 = vand.u32 %v1970, 4294901760
  %v1972 = vsub.f32 %v1970, %v1971
  %v1973 = vand.u32 %v1972, 4294901760
  %1974 = vmatpush1.msra.mxu0 %v1973
  %v1975 = vand.u32 %v1577, 4294901760
  %v1976 = vsub.f32 %v1577, %v1975
  %v1977 = vand.u32 %v1976, 4294901760
  %v1978 = vsub.f32 %v1976, %v1977
  %v1979 = vand.u32 %v1978, 4294901760
  %1980 = vmatprep.subr.mxu0 %v1979
  %v1981 = vand.u32 %v1576, 4294901760
  %v1982 = vsub.f32 %v1576, %v1981
  %v1983 = vand.u32 %v1982, 4294901760
  %v1984 = vsub.f32 %v1982, %v1983
  %v1985 = vand.u32 %v1984, 4294901760
  %1986 = vmatpush1.msra.mxu0 %v1985
  %v1987 = vand.u32 %v1579, 4294901760
  %v1988 = vsub.f32 %v1579, %v1987
  %v1989 = vand.u32 %v1988, 4294901760
  %v1990 = vsub.f32 %v1988, %v1989
  %v1991 = vand.u32 %v1990, 4294901760
  %1992 = vmatprep.subr.mxu0 %v1991
  %v1993 = vand.u32 %v1578, 4294901760
  %v1994 = vsub.f32 %v1578, %v1993
  %v1995 = vand.u32 %v1994, 4294901760
  %v1996 = vsub.f32 %v1994, %v1995
  %v1997 = vand.u32 %v1996, 4294901760
  %1998 = vmatpush1.msra.mxu0 %v1997
  %v1999 = vand.u32 %v1581, 4294901760
  %v2000 = vsub.f32 %v1581, %v1999
  %v2001 = vand.u32 %v2000, 4294901760
  %v2002 = vsub.f32 %v2000, %v2001
  %v2003 = vand.u32 %v2002, 4294901760
  %2004 = vmatprep.subr.mxu0 %v2003
  %v2005 = vand.u32 %v1580, 4294901760
  %v2006 = vsub.f32 %v1580, %v2005
  %v2007 = vand.u32 %v2006, 4294901760
  %v2008 = vsub.f32 %v2006, %v2007
  %v2009 = vand.u32 %v2008, 4294901760
  %2010 = vmatpush1.msra.mxu0 %v2009
  %v2011 = vand.u32 %v1583, 4294901760
  %v2012 = vsub.f32 %v1583, %v2011
  %v2013 = vand.u32 %v2012, 4294901760
  %v2014 = vsub.f32 %v2012, %v2013
  %v2015 = vand.u32 %v2014, 4294901760
  %2016 = vmatprep.subr.mxu0 %v2015
  %v2017 = vand.u32 %v1582, 4294901760
  %v2018 = vsub.f32 %v1582, %v2017
  %v2019 = vand.u32 %v2018, 4294901760
  %v2020 = vsub.f32 %v2018, %v2019
  %v2021 = vand.u32 %v2020, 4294901760
  %2022 = vmatpush1.msra.mxu0 %v2021
  %v2023 = vand.u32 %v1585, 4294901760
  %v2024 = vsub.f32 %v1585, %v2023
  %v2025 = vand.u32 %v2024, 4294901760
  %v2026 = vsub.f32 %v2024, %v2025
  %v2027 = vand.u32 %v2026, 4294901760
  %2028 = vmatprep.subr.mxu0 %v2027
  %v2029 = vand.u32 %v1584, 4294901760
  %v2030 = vsub.f32 %v1584, %v2029
  %v2031 = vand.u32 %v2030, 4294901760
  %v2032 = vsub.f32 %v2030, %v2031
  %v2033 = vand.u32 %v2032, 4294901760
  %2034 = vmatpush1.msra.mxu0 %v2033
  %v2035 = vand.u32 %v1587, 4294901760
  %v2036 = vsub.f32 %v1587, %v2035
  %v2037 = vand.u32 %v2036, 4294901760
  %v2038 = vsub.f32 %v2036, %v2037
  %v2039 = vand.u32 %v2038, 4294901760
  %2040 = vmatprep.subr.mxu0 %v2039
  %v2041 = vand.u32 %v1586, 4294901760
  %v2042 = vsub.f32 %v1586, %v2041
  %v2043 = vand.u32 %v2042, 4294901760
  %v2044 = vsub.f32 %v2042, %v2043
  %v2045 = vand.u32 %v2044, 4294901760
  %2046 = vmatpush1.msra.mxu0 %v2045
  %v2047 = vand.u32 %v1589, 4294901760
  %v2048 = vsub.f32 %v1589, %v2047
  %v2049 = vand.u32 %v2048, 4294901760
  %v2050 = vsub.f32 %v2048, %v2049
  %v2051 = vand.u32 %v2050, 4294901760
  %2052 = vmatprep.subr.mxu0 %v2051
  %v2053 = vand.u32 %v1588, 4294901760
  %v2054 = vsub.f32 %v1588, %v2053
  %v2055 = vand.u32 %v2054, 4294901760
  %v2056 = vsub.f32 %v2054, %v2055
  %v2057 = vand.u32 %v2056, 4294901760
  %2058 = vmatpush1.msra.mxu0 %v2057
  %v2059 = vand.u32 %v1591, 4294901760
  %v2060 = vsub.f32 %v1591, %v2059
  %v2061 = vand.u32 %v2060, 4294901760
  %v2062 = vsub.f32 %v2060, %v2061
  %v2063 = vand.u32 %v2062, 4294901760
  %2064 = vmatprep.subr.mxu0 %v2063
  %v2065 = vand.u32 %v1590, 4294901760
  %v2066 = vsub.f32 %v1590, %v2065
  %v2067 = vand.u32 %v2066, 4294901760
  %v2068 = vsub.f32 %v2066, %v2067
  %v2069 = vand.u32 %v2068, 4294901760
  %2070 = vmatpush1.msra.mxu0 %v2069
  %v2071 = vand.u32 %v1593, 4294901760
  %v2072 = vsub.f32 %v1593, %v2071
  %v2073 = vand.u32 %v2072, 4294901760
  %v2074 = vsub.f32 %v2072, %v2073
  %v2075 = vand.u32 %v2074, 4294901760
  %2076 = vmatprep.subr.mxu0 %v2075
  %v2077 = vand.u32 %v1592, 4294901760
  %v2078 = vsub.f32 %v1592, %v2077
  %v2079 = vand.u32 %v2078, 4294901760
  %v2080 = vsub.f32 %v2078, %v2079
  %v2081 = vand.u32 %v2080, 4294901760
  %2082 = vmatpush1.msra.mxu0 %v2081
  %v2083 = vand.u32 %v1595, 4294901760
  %v2084 = vsub.f32 %v1595, %v2083
  %v2085 = vand.u32 %v2084, 4294901760
  %v2086 = vsub.f32 %v2084, %v2085
  %v2087 = vand.u32 %v2086, 4294901760
  %2088 = vmatprep.subr.mxu0 %v2087
  %v2089 = vand.u32 %v1594, 4294901760
  %v2090 = vsub.f32 %v1594, %v2089
  %v2091 = vand.u32 %v2090, 4294901760
  %v2092 = vsub.f32 %v2090, %v2091
  %v2093 = vand.u32 %v2092, 4294901760
  %2094 = vmatpush1.msra.mxu0 %v2093
  %v2095 = vand.u32 %v1597, 4294901760
  %v2096 = vsub.f32 %v1597, %v2095
  %v2097 = vand.u32 %v2096, 4294901760
  %v2098 = vsub.f32 %v2096, %v2097
  %v2099 = vand.u32 %v2098, 4294901760
  %2100 = vmatprep.subr.mxu0 %v2099
  %v2101 = vand.u32 %v1596, 4294901760
  %v2102 = vsub.f32 %v1596, %v2101
  %v2103 = vand.u32 %v2102, 4294901760
  %v2104 = vsub.f32 %v2102, %v2103
  %v2105 = vand.u32 %v2104, 4294901760
  %2106 = vmatpush1.msra.mxu0 %v2105
  %v2107 = vand.u32 %v1599, 4294901760
  %v2108 = vsub.f32 %v1599, %v2107
  %v2109 = vand.u32 %v2108, 4294901760
  %v2110 = vsub.f32 %v2108, %v2109
  %v2111 = vand.u32 %v2110, 4294901760
  %2112 = vmatprep.subr.mxu0 %v2111
  %v2113 = vand.u32 %v1598, 4294901760
  %v2114 = vsub.f32 %v1598, %v2113
  %v2115 = vand.u32 %v2114, 4294901760
  %v2116 = vsub.f32 %v2114, %v2115
  %v2117 = vand.u32 %v2116, 4294901760
  %2118 = vmatpush1.msra.mxu0 %v2117
  %v2119 = vand.u32 %v1601, 4294901760
  %v2120 = vsub.f32 %v1601, %v2119
  %v2121 = vand.u32 %v2120, 4294901760
  %v2122 = vsub.f32 %v2120, %v2121
  %v2123 = vand.u32 %v2122, 4294901760
  %2124 = vmatprep.subr.mxu0 %v2123
  %v2125 = vand.u32 %v1600, 4294901760
  %v2126 = vsub.f32 %v1600, %v2125
  %v2127 = vand.u32 %v2126, 4294901760
  %v2128 = vsub.f32 %v2126, %v2127
  %v2129 = vand.u32 %v2128, 4294901760
  %2130 = vmatpush1.msra.mxu0 %v2129
  %v2131 = vand.u32 %v1537, 4294901760
  %2132 = vmatprep.mubr.f32.mxu0 %v2131
  %v2133 = vand.u32 %v1429, 4294901760
  %2134 = vmatmul.mubr.f32.gmra.mrb[0].mxu0 %v2133
  %v2135 = vpop.f32.mrb[0].mxu0
  %v2136 = vadd.f32 %v1743, %v2135
  %v2137 = vpop.f32.mrb[0].mxu0
  %v2138 = vadd.f32 %v1745, %v2137
  %2139 = vdwg.mxu0
  %v2140 = vand.u32 %v1539, 4294901760
  %v2141 = vsub.f32 %v1539, %v2140
  %2142 = vmatprep.subr.mxu0 %v2141
  %v2143 = vand.u32 %v1538, 4294901760
  %v2144 = vsub.f32 %v1538, %v2143
  %2145 = vmatpush1.msra.mxu0 %v2144
  %v2146 = vand.u32 %v1541, 4294901760
  %v2147 = vsub.f32 %v1541, %v2146
  %2148 = vmatprep.subr.mxu0 %v2147
  %v2149 = vand.u32 %v1540, 4294901760
  %v2150 = vsub.f32 %v1540, %v2149
  %2151 = vmatpush1.msra.mxu0 %v2150
  %v2152 = vand.u32 %v1543, 4294901760
  %v2153 = vsub.f32 %v1543, %v2152
  %2154 = vmatprep.subr.mxu0 %v2153
  %v2155 = vand.u32 %v1542, 4294901760
  %v2156 = vsub.f32 %v1542, %v2155
  %2157 = vmatpush1.msra.mxu0 %v2156
  %v2158 = vand.u32 %v1545, 4294901760
  %v2159 = vsub.f32 %v1545, %v2158
  %2160 = vmatprep.subr.mxu0 %v2159
  %v2161 = vand.u32 %v1544, 4294901760
  %v2162 = vsub.f32 %v1544, %v2161
  %2163 = vmatpush1.msra.mxu0 %v2162
  %v2164 = vand.u32 %v1547, 4294901760
  %v2165 = vsub.f32 %v1547, %v2164
  %2166 = vmatprep.subr.mxu0 %v2165
  %v2167 = vand.u32 %v1546, 4294901760
  %v2168 = vsub.f32 %v1546, %v2167
  %2169 = vmatpush1.msra.mxu0 %v2168
  %v2170 = vand.u32 %v1549, 4294901760
  %v2171 = vsub.f32 %v1549, %v2170
  %2172 = vmatprep.subr.mxu0 %v2171
  %v2173 = vand.u32 %v1548, 4294901760
  %v2174 = vsub.f32 %v1548, %v2173
  %2175 = vmatpush1.msra.mxu0 %v2174
  %v2176 = vand.u32 %v1551, 4294901760
  %v2177 = vsub.f32 %v1551, %v2176
  %2178 = vmatprep.subr.mxu0 %v2177
  %v2179 = vand.u32 %v1550, 4294901760
  %v2180 = vsub.f32 %v1550, %v2179
  %2181 = vmatpush1.msra.mxu0 %v2180
  %v2182 = vand.u32 %v1553, 4294901760
  %v2183 = vsub.f32 %v1553, %v2182
  %2184 = vmatprep.subr.mxu0 %v2183
  %v2185 = vand.u32 %v1552, 4294901760
  %v2186 = vsub.f32 %v1552, %v2185
  %2187 = vmatpush1.msra.mxu0 %v2186
  %v2188 = vand.u32 %v1555, 4294901760
  %v2189 = vsub.f32 %v1555, %v2188
  %2190 = vmatprep.subr.mxu0 %v2189
  %v2191 = vand.u32 %v1554, 4294901760
  %v2192 = vsub.f32 %v1554, %v2191
  %2193 = vmatpush1.msra.mxu0 %v2192
  %v2194 = vand.u32 %v1557, 4294901760
  %v2195 = vsub.f32 %v1557, %v2194
  %2196 = vmatprep.subr.mxu0 %v2195
  %v2197 = vand.u32 %v1556, 4294901760
  %v2198 = vsub.f32 %v1556, %v2197
  %2199 = vmatpush1.msra.mxu0 %v2198
  %v2200 = vand.u32 %v1559, 4294901760
  %v2201 = vsub.f32 %v1559, %v2200
  %2202 = vmatprep.subr.mxu0 %v2201
  %v2203 = vand.u32 %v1558, 4294901760
  %v2204 = vsub.f32 %v1558, %v2203
  %2205 = vmatpush1.msra.mxu0 %v2204
  %v2206 = vand.u32 %v1561, 4294901760
  %v2207 = vsub.f32 %v1561, %v2206
  %2208 = vmatprep.subr.mxu0 %v2207
  %v2209 = vand.u32 %v1560, 4294901760
  %v2210 = vsub.f32 %v1560, %v2209
  %2211 = vmatpush1.msra.mxu0 %v2210
  %v2212 = vand.u32 %v1563, 4294901760
  %v2213 = vsub.f32 %v1563, %v2212
  %2214 = vmatprep.subr.mxu0 %v2213
  %v2215 = vand.u32 %v1562, 4294901760
  %v2216 = vsub.f32 %v1562, %v2215
  %2217 = vmatpush1.msra.mxu0 %v2216
  %v2218 = vand.u32 %v1565, 4294901760
  %v2219 = vsub.f32 %v1565, %v2218
  %2220 = vmatprep.subr.mxu0 %v2219
  %v2221 = vand.u32 %v1564, 4294901760
  %v2222 = vsub.f32 %v1564, %v2221
  %2223 = vmatpush1.msra.mxu0 %v2222
  %v2224 = vand.u32 %v1567, 4294901760
  %v2225 = vsub.f32 %v1567, %v2224
  %2226 = vmatprep.subr.mxu0 %v2225
  %v2227 = vand.u32 %v1566, 4294901760
  %v2228 = vsub.f32 %v1566, %v2227
  %2229 = vmatpush1.msra.mxu0 %v2228
  %v2230 = vand.u32 %v1569, 4294901760
  %v2231 = vsub.f32 %v1569, %v2230
  %2232 = vmatprep.subr.mxu0 %v2231
  %v2233 = vand.u32 %v1568, 4294901760
  %v2234 = vsub.f32 %v1568, %v2233
  %2235 = vmatpush1.msra.mxu0 %v2234
  %v2236 = vand.u32 %v1571, 4294901760
  %v2237 = vsub.f32 %v1571, %v2236
  %2238 = vmatprep.subr.mxu0 %v2237
  %v2239 = vand.u32 %v1570, 4294901760
  %v2240 = vsub.f32 %v1570, %v2239
  %2241 = vmatpush1.msra.mxu0 %v2240
  %v2242 = vand.u32 %v1573, 4294901760
  %v2243 = vsub.f32 %v1573, %v2242
  %2244 = vmatprep.subr.mxu0 %v2243
  %v2245 = vand.u32 %v1572, 4294901760
  %v2246 = vsub.f32 %v1572, %v2245
  %2247 = vmatpush1.msra.mxu0 %v2246
  %v2248 = vand.u32 %v1575, 4294901760
  %v2249 = vsub.f32 %v1575, %v2248
  %2250 = vmatprep.subr.mxu0 %v2249
  %v2251 = vand.u32 %v1574, 4294901760
  %v2252 = vsub.f32 %v1574, %v2251
  %2253 = vmatpush1.msra.mxu0 %v2252
  %v2254 = vand.u32 %v1577, 4294901760
  %v2255 = vsub.f32 %v1577, %v2254
  %2256 = vmatprep.subr.mxu0 %v2255
  %v2257 = vand.u32 %v1576, 4294901760
  %v2258 = vsub.f32 %v1576, %v2257
  %2259 = vmatpush1.msra.mxu0 %v2258
  %v2260 = vand.u32 %v1579, 4294901760
  %v2261 = vsub.f32 %v1579, %v2260
  %2262 = vmatprep.subr.mxu0 %v2261
  %v2263 = vand.u32 %v1578, 4294901760
  %v2264 = vsub.f32 %v1578, %v2263
  %2265 = vmatpush1.msra.mxu0 %v2264
  %v2266 = vand.u32 %v1581, 4294901760
  %v2267 = vsub.f32 %v1581, %v2266
  %2268 = vmatprep.subr.mxu0 %v2267
  %v2269 = vand.u32 %v1580, 4294901760
  %v2270 = vsub.f32 %v1580, %v2269
  %2271 = vmatpush1.msra.mxu0 %v2270
  %v2272 = vand.u32 %v1583, 4294901760
  %v2273 = vsub.f32 %v1583, %v2272
  %2274 = vmatprep.subr.mxu0 %v2273
  %v2275 = vand.u32 %v1582, 4294901760
  %v2276 = vsub.f32 %v1582, %v2275
  %2277 = vmatpush1.msra.mxu0 %v2276
  %v2278 = vand.u32 %v1585, 4294901760
  %v2279 = vsub.f32 %v1585, %v2278
  %2280 = vmatprep.subr.mxu0 %v2279
  %v2281 = vand.u32 %v1584, 4294901760
  %v2282 = vsub.f32 %v1584, %v2281
  %2283 = vmatpush1.msra.mxu0 %v2282
  %v2284 = vand.u32 %v1587, 4294901760
  %v2285 = vsub.f32 %v1587, %v2284
  %2286 = vmatprep.subr.mxu0 %v2285
  %v2287 = vand.u32 %v1586, 4294901760
  %v2288 = vsub.f32 %v1586, %v2287
  %2289 = vmatpush1.msra.mxu0 %v2288
  %v2290 = vand.u32 %v1589, 4294901760
  %v2291 = vsub.f32 %v1589, %v2290
  %2292 = vmatprep.subr.mxu0 %v2291
  %v2293 = vand.u32 %v1588, 4294901760
  %v2294 = vsub.f32 %v1588, %v2293
  %2295 = vmatpush1.msra.mxu0 %v2294
  %v2296 = vand.u32 %v1591, 4294901760
  %v2297 = vsub.f32 %v1591, %v2296
  %2298 = vmatprep.subr.mxu0 %v2297
  %v2299 = vand.u32 %v1590, 4294901760
  %v2300 = vsub.f32 %v1590, %v2299
  %2301 = vmatpush1.msra.mxu0 %v2300
  %v2302 = vand.u32 %v1593, 4294901760
  %v2303 = vsub.f32 %v1593, %v2302
  %2304 = vmatprep.subr.mxu0 %v2303
  %v2305 = vand.u32 %v1592, 4294901760
  %v2306 = vsub.f32 %v1592, %v2305
  %2307 = vmatpush1.msra.mxu0 %v2306
  %v2308 = vand.u32 %v1595, 4294901760
  %v2309 = vsub.f32 %v1595, %v2308
  %2310 = vmatprep.subr.mxu0 %v2309
  %v2311 = vand.u32 %v1594, 4294901760
  %v2312 = vsub.f32 %v1594, %v2311
  %2313 = vmatpush1.msra.mxu0 %v2312
  %v2314 = vand.u32 %v1597, 4294901760
  %v2315 = vsub.f32 %v1597, %v2314
  %2316 = vmatprep.subr.mxu0 %v2315
  %v2317 = vand.u32 %v1596, 4294901760
  %v2318 = vsub.f32 %v1596, %v2317
  %2319 = vmatpush1.msra.mxu0 %v2318
  %v2320 = vand.u32 %v1599, 4294901760
  %v2321 = vsub.f32 %v1599, %v2320
  %2322 = vmatprep.subr.mxu0 %v2321
  %v2323 = vand.u32 %v1598, 4294901760
  %v2324 = vsub.f32 %v1598, %v2323
  %2325 = vmatpush1.msra.mxu0 %v2324
  %v2326 = vand.u32 %v1601, 4294901760
  %v2327 = vsub.f32 %v1601, %v2326
  %2328 = vmatprep.subr.mxu0 %v2327
  %v2329 = vand.u32 %v1600, 4294901760
  %v2330 = vsub.f32 %v1600, %v2329
  %2331 = vmatpush1.msra.mxu0 %v2330
  %v2332 = vand.u32 %v1537, 4294901760
  %v2333 = vsub.f32 %v1537, %v2332
  %2334 = vmatprep.mubr.f32.mxu0 %v2333
  %v2335 = vand.u32 %v1429, 4294901760
  %v2336 = vsub.f32 %v1429, %v2335
  %2337 = vmatmul.mubr.f32.gmra.mrb[0].mxu0 %v2336
  %v2338 = vpop.f32.mrb[0].mxu0
  %v2339 = vadd.f32 %v2136, %v2338
  %v2340 = vpop.f32.mrb[0].mxu0
  %v2341 = vadd.f32 %v2138, %v2340
  %2342 = vdwg.mxu0
  %v2343 = vand.u32 %v1539, 4294901760
  %2344 = vmatprep.subr.mxu0 %v2343
  %v2345 = vand.u32 %v1538, 4294901760
  %2346 = vmatpush1.msra.mxu0 %v2345
  %v2347 = vand.u32 %v1541, 4294901760
  %2348 = vmatprep.subr.mxu0 %v2347
  %v2349 = vand.u32 %v1540, 4294901760
  %2350 = vmatpush1.msra.mxu0 %v2349
  %v2351 = vand.u32 %v1543, 4294901760
  %2352 = vmatprep.subr.mxu0 %v2351
  %v2353 = vand.u32 %v1542, 4294901760
  %2354 = vmatpush1.msra.mxu0 %v2353
  %v2355 = vand.u32 %v1545, 4294901760
  %2356 = vmatprep.subr.mxu0 %v2355
  %v2357 = vand.u32 %v1544, 4294901760
  %2358 = vmatpush1.msra.mxu0 %v2357
  %v2359 = vand.u32 %v1547, 4294901760
  %2360 = vmatprep.subr.mxu0 %v2359
  %v2361 = vand.u32 %v1546, 4294901760
  %2362 = vmatpush1.msra.mxu0 %v2361
  %v2363 = vand.u32 %v1549, 4294901760
  %2364 = vmatprep.subr.mxu0 %v2363
  %v2365 = vand.u32 %v1548, 4294901760
  %2366 = vmatpush1.msra.mxu0 %v2365
  %v2367 = vand.u32 %v1551, 4294901760
  %2368 = vmatprep.subr.mxu0 %v2367
  %v2369 = vand.u32 %v1550, 4294901760
  %2370 = vmatpush1.msra.mxu0 %v2369
  %v2371 = vand.u32 %v1553, 4294901760
  %2372 = vmatprep.subr.mxu0 %v2371
  %v2373 = vand.u32 %v1552, 4294901760
  %2374 = vmatpush1.msra.mxu0 %v2373
  %v2375 = vand.u32 %v1555, 4294901760
  %2376 = vmatprep.subr.mxu0 %v2375
  %v2377 = vand.u32 %v1554, 4294901760
  %2378 = vmatpush1.msra.mxu0 %v2377
  %v2379 = vand.u32 %v1557, 4294901760
  %2380 = vmatprep.subr.mxu0 %v2379
  %v2381 = vand.u32 %v1556, 4294901760
  %2382 = vmatpush1.msra.mxu0 %v2381
  %v2383 = vand.u32 %v1559, 4294901760
  %2384 = vmatprep.subr.mxu0 %v2383
  %v2385 = vand.u32 %v1558, 4294901760
  %2386 = vmatpush1.msra.mxu0 %v2385
  %v2387 = vand.u32 %v1561, 4294901760
  %2388 = vmatprep.subr.mxu0 %v2387
  %v2389 = vand.u32 %v1560, 4294901760
  %2390 = vmatpush1.msra.mxu0 %v2389
  %v2391 = vand.u32 %v1563, 4294901760
  %2392 = vmatprep.subr.mxu0 %v2391
  %v2393 = vand.u32 %v1562, 4294901760
  %2394 = vmatpush1.msra.mxu0 %v2393
  %v2395 = vand.u32 %v1565, 4294901760
  %2396 = vmatprep.subr.mxu0 %v2395
  %v2397 = vand.u32 %v1564, 4294901760
  %2398 = vmatpush1.msra.mxu0 %v2397
  %v2399 = vand.u32 %v1567, 4294901760
  %2400 = vmatprep.subr.mxu0 %v2399
  %v2401 = vand.u32 %v1566, 4294901760
  %2402 = vmatpush1.msra.mxu0 %v2401
  %v2403 = vand.u32 %v1569, 4294901760
  %2404 = vmatprep.subr.mxu0 %v2403
  %v2405 = vand.u32 %v1568, 4294901760
  %2406 = vmatpush1.msra.mxu0 %v2405
  %v2407 = vand.u32 %v1571, 4294901760
  %2408 = vmatprep.subr.mxu0 %v2407
  %v2409 = vand.u32 %v1570, 4294901760
  %2410 = vmatpush1.msra.mxu0 %v2409
  %v2411 = vand.u32 %v1573, 4294901760
  %2412 = vmatprep.subr.mxu0 %v2411
  %v2413 = vand.u32 %v1572, 4294901760
  %2414 = vmatpush1.msra.mxu0 %v2413
  %v2415 = vand.u32 %v1575, 4294901760
  %2416 = vmatprep.subr.mxu0 %v2415
  %v2417 = vand.u32 %v1574, 4294901760
  %2418 = vmatpush1.msra.mxu0 %v2417
  %v2419 = vand.u32 %v1577, 4294901760
  %2420 = vmatprep.subr.mxu0 %v2419
  %v2421 = vand.u32 %v1576, 4294901760
  %2422 = vmatpush1.msra.mxu0 %v2421
  %v2423 = vand.u32 %v1579, 4294901760
  %2424 = vmatprep.subr.mxu0 %v2423
  %v2425 = vand.u32 %v1578, 4294901760
  %2426 = vmatpush1.msra.mxu0 %v2425
  %v2427 = vand.u32 %v1581, 4294901760
  %2428 = vmatprep.subr.mxu0 %v2427
  %v2429 = vand.u32 %v1580, 4294901760
  %2430 = vmatpush1.msra.mxu0 %v2429
  %v2431 = vand.u32 %v1583, 4294901760
  %2432 = vmatprep.subr.mxu0 %v2431
  %v2433 = vand.u32 %v1582, 4294901760
  %2434 = vmatpush1.msra.mxu0 %v2433
  %v2435 = vand.u32 %v1585, 4294901760
  %2436 = vmatprep.subr.mxu0 %v2435
  %v2437 = vand.u32 %v1584, 4294901760
  %2438 = vmatpush1.msra.mxu0 %v2437
  %v2439 = vand.u32 %v1587, 4294901760
  %2440 = vmatprep.subr.mxu0 %v2439
  %v2441 = vand.u32 %v1586, 4294901760
  %2442 = vmatpush1.msra.mxu0 %v2441
  %v2443 = vand.u32 %v1589, 4294901760
  %2444 = vmatprep.subr.mxu0 %v2443
  %v2445 = vand.u32 %v1588, 4294901760
  %2446 = vmatpush1.msra.mxu0 %v2445
  %v2447 = vand.u32 %v1591, 4294901760
  %2448 = vmatprep.subr.mxu0 %v2447
  %v2449 = vand.u32 %v1590, 4294901760
  %2450 = vmatpush1.msra.mxu0 %v2449
  %v2451 = vand.u32 %v1593, 4294901760
  %2452 = vmatprep.subr.mxu0 %v2451
  %v2453 = vand.u32 %v1592, 4294901760
  %2454 = vmatpush1.msra.mxu0 %v2453
  %v2455 = vand.u32 %v1595, 4294901760
  %2456 = vmatprep.subr.mxu0 %v2455
  %v2457 = vand.u32 %v1594, 4294901760
  %2458 = vmatpush1.msra.mxu0 %v2457
  %v2459 = vand.u32 %v1597, 4294901760
  %2460 = vmatprep.subr.mxu0 %v2459
  %v2461 = vand.u32 %v1596, 4294901760
  %2462 = vmatpush1.msra.mxu0 %v2461
  %v2463 = vand.u32 %v1599, 4294901760
  %2464 = vmatprep.subr.mxu0 %v2463
  %v2465 = vand.u32 %v1598, 4294901760
  %2466 = vmatpush1.msra.mxu0 %v2465
  %v2467 = vand.u32 %v1601, 4294901760
  %2468 = vmatprep.subr.mxu0 %v2467
  %v2469 = vand.u32 %v1600, 4294901760
  %2470 = vmatpush1.msra.mxu0 %v2469
  %v2471 = vand.u32 %v1537, 4294901760
  %v2472 = vsub.f32 %v1537, %v2471
  %v2473 = vand.u32 %v2472, 4294901760
  %2474 = vmatprep.mubr.f32.mxu0 %v2473
  %v2475 = vand.u32 %v1429, 4294901760
  %v2476 = vsub.f32 %v1429, %v2475
  %v2477 = vand.u32 %v2476, 4294901760
  %2478 = vmatmul.mubr.f32.gmra.mrb[0].mxu0 %v2477
  %v2479 = vpop.f32.mrb[0].mxu0
  %v2480 = vadd.f32 %v2339, %v2479
  %v2481 = vpop.f32.mrb[0].mxu0
  %v2482 = vadd.f32 %v2341, %v2481
  %2483 = vdwg.mxu0
  %v2484 = vand.u32 %v1539, 4294901760
  %v2485 = vsub.f32 %v1539, %v2484
  %v2486 = vand.u32 %v2485, 4294901760
  %2487 = vmatprep.subr.mxu0 %v2486
  %v2488 = vand.u32 %v1538, 4294901760
  %v2489 = vsub.f32 %v1538, %v2488
  %v2490 = vand.u32 %v2489, 4294901760
  %2491 = vmatpush1.msra.mxu0 %v2490
  %v2492 = vand.u32 %v1541, 4294901760
  %v2493 = vsub.f32 %v1541, %v2492
  %v2494 = vand.u32 %v2493, 4294901760
  %2495 = vmatprep.subr.mxu0 %v2494
  %v2496 = vand.u32 %v1540, 4294901760
  %v2497 = vsub.f32 %v1540, %v2496
  %v2498 = vand.u32 %v2497, 4294901760
  %2499 = vmatpush1.msra.mxu0 %v2498
  %v2500 = vand.u32 %v1543, 4294901760
  %v2501 = vsub.f32 %v1543, %v2500
  %v2502 = vand.u32 %v2501, 4294901760
  %2503 = vmatprep.subr.mxu0 %v2502
  %v2504 = vand.u32 %v1542, 4294901760
  %v2505 = vsub.f32 %v1542, %v2504
  %v2506 = vand.u32 %v2505, 4294901760
  %2507 = vmatpush1.msra.mxu0 %v2506
  %v2508 = vand.u32 %v1545, 4294901760
  %v2509 = vsub.f32 %v1545, %v2508
  %v2510 = vand.u32 %v2509, 4294901760
  %2511 = vmatprep.subr.mxu0 %v2510
  %v2512 = vand.u32 %v1544, 4294901760
  %v2513 = vsub.f32 %v1544, %v2512
  %v2514 = vand.u32 %v2513, 4294901760
  %2515 = vmatpush1.msra.mxu0 %v2514
  %v2516 = vand.u32 %v1547, 4294901760
  %v2517 = vsub.f32 %v1547, %v2516
  %v2518 = vand.u32 %v2517, 4294901760
  %2519 = vmatprep.subr.mxu0 %v2518
  %v2520 = vand.u32 %v1546, 4294901760
  %v2521 = vsub.f32 %v1546, %v2520
  %v2522 = vand.u32 %v2521, 4294901760
  %2523 = vmatpush1.msra.mxu0 %v2522
  %v2524 = vand.u32 %v1549, 4294901760
  %v2525 = vsub.f32 %v1549, %v2524
  %v2526 = vand.u32 %v2525, 4294901760
  %2527 = vmatprep.subr.mxu0 %v2526
  %v2528 = vand.u32 %v1548, 4294901760
  %v2529 = vsub.f32 %v1548, %v2528
  %v2530 = vand.u32 %v2529, 4294901760
  %2531 = vmatpush1.msra.mxu0 %v2530
  %v2532 = vand.u32 %v1551, 4294901760
  %v2533 = vsub.f32 %v1551, %v2532
  %v2534 = vand.u32 %v2533, 4294901760
  %2535 = vmatprep.subr.mxu0 %v2534
  %v2536 = vand.u32 %v1550, 4294901760
  %v2537 = vsub.f32 %v1550, %v2536
  %v2538 = vand.u32 %v2537, 4294901760
  %2539 = vmatpush1.msra.mxu0 %v2538
  %v2540 = vand.u32 %v1553, 4294901760
  %v2541 = vsub.f32 %v1553, %v2540
  %v2542 = vand.u32 %v2541, 4294901760
  %2543 = vmatprep.subr.mxu0 %v2542
  %v2544 = vand.u32 %v1552, 4294901760
  %v2545 = vsub.f32 %v1552, %v2544
  %v2546 = vand.u32 %v2545, 4294901760
  %2547 = vmatpush1.msra.mxu0 %v2546
  %v2548 = vand.u32 %v1555, 4294901760
  %v2549 = vsub.f32 %v1555, %v2548
  %v2550 = vand.u32 %v2549, 4294901760
  %2551 = vmatprep.subr.mxu0 %v2550
  %v2552 = vand.u32 %v1554, 4294901760
  %v2553 = vsub.f32 %v1554, %v2552
  %v2554 = vand.u32 %v2553, 4294901760
  %2555 = vmatpush1.msra.mxu0 %v2554
  %v2556 = vand.u32 %v1557, 4294901760
  %v2557 = vsub.f32 %v1557, %v2556
  %v2558 = vand.u32 %v2557, 4294901760
  %2559 = vmatprep.subr.mxu0 %v2558
  %v2560 = vand.u32 %v1556, 4294901760
  %v2561 = vsub.f32 %v1556, %v2560
  %v2562 = vand.u32 %v2561, 4294901760
  %2563 = vmatpush1.msra.mxu0 %v2562
  %v2564 = vand.u32 %v1559, 4294901760
  %v2565 = vsub.f32 %v1559, %v2564
  %v2566 = vand.u32 %v2565, 4294901760
  %2567 = vmatprep.subr.mxu0 %v2566
  %v2568 = vand.u32 %v1558, 4294901760
  %v2569 = vsub.f32 %v1558, %v2568
  %v2570 = vand.u32 %v2569, 4294901760
  %2571 = vmatpush1.msra.mxu0 %v2570
  %v2572 = vand.u32 %v1561, 4294901760
  %v2573 = vsub.f32 %v1561, %v2572
  %v2574 = vand.u32 %v2573, 4294901760
  %2575 = vmatprep.subr.mxu0 %v2574
  %v2576 = vand.u32 %v1560, 4294901760
  %v2577 = vsub.f32 %v1560, %v2576
  %v2578 = vand.u32 %v2577, 4294901760
  %2579 = vmatpush1.msra.mxu0 %v2578
  %v2580 = vand.u32 %v1563, 4294901760
  %v2581 = vsub.f32 %v1563, %v2580
  %v2582 = vand.u32 %v2581, 4294901760
  %2583 = vmatprep.subr.mxu0 %v2582
  %v2584 = vand.u32 %v1562, 4294901760
  %v2585 = vsub.f32 %v1562, %v2584
  %v2586 = vand.u32 %v2585, 4294901760
  %2587 = vmatpush1.msra.mxu0 %v2586
  %v2588 = vand.u32 %v1565, 4294901760
  %v2589 = vsub.f32 %v1565, %v2588
  %v2590 = vand.u32 %v2589, 4294901760
  %2591 = vmatprep.subr.mxu0 %v2590
  %v2592 = vand.u32 %v1564, 4294901760
  %v2593 = vsub.f32 %v1564, %v2592
  %v2594 = vand.u32 %v2593, 4294901760
  %2595 = vmatpush1.msra.mxu0 %v2594
  %v2596 = vand.u32 %v1567, 4294901760
  %v2597 = vsub.f32 %v1567, %v2596
  %v2598 = vand.u32 %v2597, 4294901760
  %2599 = vmatprep.subr.mxu0 %v2598
  %v2600 = vand.u32 %v1566, 4294901760
  %v2601 = vsub.f32 %v1566, %v2600
  %v2602 = vand.u32 %v2601, 4294901760
  %2603 = vmatpush1.msra.mxu0 %v2602
  %v2604 = vand.u32 %v1569, 4294901760
  %v2605 = vsub.f32 %v1569, %v2604
  %v2606 = vand.u32 %v2605, 4294901760
  %2607 = vmatprep.subr.mxu0 %v2606
  %v2608 = vand.u32 %v1568, 4294901760
  %v2609 = vsub.f32 %v1568, %v2608
  %v2610 = vand.u32 %v2609, 4294901760
  %2611 = vmatpush1.msra.mxu0 %v2610
  %v2612 = vand.u32 %v1571, 4294901760
  %v2613 = vsub.f32 %v1571, %v2612
  %v2614 = vand.u32 %v2613, 4294901760
  %2615 = vmatprep.subr.mxu0 %v2614
  %v2616 = vand.u32 %v1570, 4294901760
  %v2617 = vsub.f32 %v1570, %v2616
  %v2618 = vand.u32 %v2617, 4294901760
  %2619 = vmatpush1.msra.mxu0 %v2618
  %v2620 = vand.u32 %v1573, 4294901760
  %v2621 = vsub.f32 %v1573, %v2620
  %v2622 = vand.u32 %v2621, 4294901760
  %2623 = vmatprep.subr.mxu0 %v2622
  %v2624 = vand.u32 %v1572, 4294901760
  %v2625 = vsub.f32 %v1572, %v2624
  %v2626 = vand.u32 %v2625, 4294901760
  %2627 = vmatpush1.msra.mxu0 %v2626
  %v2628 = vand.u32 %v1575, 4294901760
  %v2629 = vsub.f32 %v1575, %v2628
  %v2630 = vand.u32 %v2629, 4294901760
  %2631 = vmatprep.subr.mxu0 %v2630
  %v2632 = vand.u32 %v1574, 4294901760
  %v2633 = vsub.f32 %v1574, %v2632
  %v2634 = vand.u32 %v2633, 4294901760
  %2635 = vmatpush1.msra.mxu0 %v2634
  %v2636 = vand.u32 %v1577, 4294901760
  %v2637 = vsub.f32 %v1577, %v2636
  %v2638 = vand.u32 %v2637, 4294901760
  %2639 = vmatprep.subr.mxu0 %v2638
  %v2640 = vand.u32 %v1576, 4294901760
  %v2641 = vsub.f32 %v1576, %v2640
  %v2642 = vand.u32 %v2641, 4294901760
  %2643 = vmatpush1.msra.mxu0 %v2642
  %v2644 = vand.u32 %v1579, 4294901760
  %v2645 = vsub.f32 %v1579, %v2644
  %v2646 = vand.u32 %v2645, 4294901760
  %2647 = vmatprep.subr.mxu0 %v2646
  %v2648 = vand.u32 %v1578, 4294901760
  %v2649 = vsub.f32 %v1578, %v2648
  %v2650 = vand.u32 %v2649, 4294901760
  %2651 = vmatpush1.msra.mxu0 %v2650
  %v2652 = vand.u32 %v1581, 4294901760
  %v2653 = vsub.f32 %v1581, %v2652
  %v2654 = vand.u32 %v2653, 4294901760
  %2655 = vmatprep.subr.mxu0 %v2654
  %v2656 = vand.u32 %v1580, 4294901760
  %v2657 = vsub.f32 %v1580, %v2656
  %v2658 = vand.u32 %v2657, 4294901760
  %2659 = vmatpush1.msra.mxu0 %v2658
  %v2660 = vand.u32 %v1583, 4294901760
  %v2661 = vsub.f32 %v1583, %v2660
  %v2662 = vand.u32 %v2661, 4294901760
  %2663 = vmatprep.subr.mxu0 %v2662
  %v2664 = vand.u32 %v1582, 4294901760
  %v2665 = vsub.f32 %v1582, %v2664
  %v2666 = vand.u32 %v2665, 4294901760
  %2667 = vmatpush1.msra.mxu0 %v2666
  %v2668 = vand.u32 %v1585, 4294901760
  %v2669 = vsub.f32 %v1585, %v2668
  %v2670 = vand.u32 %v2669, 4294901760
  %2671 = vmatprep.subr.mxu0 %v2670
  %v2672 = vand.u32 %v1584, 4294901760
  %v2673 = vsub.f32 %v1584, %v2672
  %v2674 = vand.u32 %v2673, 4294901760
  %2675 = vmatpush1.msra.mxu0 %v2674
  %v2676 = vand.u32 %v1587, 4294901760
  %v2677 = vsub.f32 %v1587, %v2676
  %v2678 = vand.u32 %v2677, 4294901760
  %2679 = vmatprep.subr.mxu0 %v2678
  %v2680 = vand.u32 %v1586, 4294901760
  %v2681 = vsub.f32 %v1586, %v2680
  %v2682 = vand.u32 %v2681, 4294901760
  %2683 = vmatpush1.msra.mxu0 %v2682
  %v2684 = vand.u32 %v1589, 4294901760
  %v2685 = vsub.f32 %v1589, %v2684
  %v2686 = vand.u32 %v2685, 4294901760
  %2687 = vmatprep.subr.mxu0 %v2686
  %v2688 = vand.u32 %v1588, 4294901760
  %v2689 = vsub.f32 %v1588, %v2688
  %v2690 = vand.u32 %v2689, 4294901760
  %2691 = vmatpush1.msra.mxu0 %v2690
  %v2692 = vand.u32 %v1591, 4294901760
  %v2693 = vsub.f32 %v1591, %v2692
  %v2694 = vand.u32 %v2693, 4294901760
  %2695 = vmatprep.subr.mxu0 %v2694
  %v2696 = vand.u32 %v1590, 4294901760
  %v2697 = vsub.f32 %v1590, %v2696
  %v2698 = vand.u32 %v2697, 4294901760
  %2699 = vmatpush1.msra.mxu0 %v2698
  %v2700 = vand.u32 %v1593, 4294901760
  %v2701 = vsub.f32 %v1593, %v2700
  %v2702 = vand.u32 %v2701, 4294901760
  %2703 = vmatprep.subr.mxu0 %v2702
  %v2704 = vand.u32 %v1592, 4294901760
  %v2705 = vsub.f32 %v1592, %v2704
  %v2706 = vand.u32 %v2705, 4294901760
  %2707 = vmatpush1.msra.mxu0 %v2706
  %v2708 = vand.u32 %v1595, 4294901760
  %v2709 = vsub.f32 %v1595, %v2708
  %v2710 = vand.u32 %v2709, 4294901760
  %2711 = vmatprep.subr.mxu0 %v2710
  %v2712 = vand.u32 %v1594, 4294901760
  %v2713 = vsub.f32 %v1594, %v2712
  %v2714 = vand.u32 %v2713, 4294901760
  %2715 = vmatpush1.msra.mxu0 %v2714
  %v2716 = vand.u32 %v1597, 4294901760
  %v2717 = vsub.f32 %v1597, %v2716
  %v2718 = vand.u32 %v2717, 4294901760
  %2719 = vmatprep.subr.mxu0 %v2718
  %v2720 = vand.u32 %v1596, 4294901760
  %v2721 = vsub.f32 %v1596, %v2720
  %v2722 = vand.u32 %v2721, 4294901760
  %2723 = vmatpush1.msra.mxu0 %v2722
  %v2724 = vand.u32 %v1599, 4294901760
  %v2725 = vsub.f32 %v1599, %v2724
  %v2726 = vand.u32 %v2725, 4294901760
  %2727 = vmatprep.subr.mxu0 %v2726
  %v2728 = vand.u32 %v1598, 4294901760
  %v2729 = vsub.f32 %v1598, %v2728
  %v2730 = vand.u32 %v2729, 4294901760
  %2731 = vmatpush1.msra.mxu0 %v2730
  %v2732 = vand.u32 %v1601, 4294901760
  %v2733 = vsub.f32 %v1601, %v2732
  %v2734 = vand.u32 %v2733, 4294901760
  %2735 = vmatprep.subr.mxu0 %v2734
  %v2736 = vand.u32 %v1600, 4294901760
  %v2737 = vsub.f32 %v1600, %v2736
  %v2738 = vand.u32 %v2737, 4294901760
  %2739 = vmatpush1.msra.mxu0 %v2738
  %v2740 = vand.u32 %v1537, 4294901760
  %2741 = vmatprep.mubr.f32.mxu0 %v2740
  %v2742 = vand.u32 %v1429, 4294901760
  %2743 = vmatmul.mubr.f32.gmra.mrb[0].mxu0 %v2742
  %v2744 = vpop.f32.mrb[0].mxu0
  %v2745 = vadd.f32 %v2480, %v2744
  %v2746 = vpop.f32.mrb[0].mxu0
  %v2747 = vadd.f32 %v2482, %v2746
  %2748 = vdwg.mxu0
  %v2749 = vand.u32 %v1539, 4294901760
  %2750 = vmatprep.subr.mxu0 %v2749
  %v2751 = vand.u32 %v1538, 4294901760
  %2752 = vmatpush1.msra.mxu0 %v2751
  %v2753 = vand.u32 %v1541, 4294901760
  %2754 = vmatprep.subr.mxu0 %v2753
  %v2755 = vand.u32 %v1540, 4294901760
  %2756 = vmatpush1.msra.mxu0 %v2755
  %v2757 = vand.u32 %v1543, 4294901760
  %2758 = vmatprep.subr.mxu0 %v2757
  %v2759 = vand.u32 %v1542, 4294901760
  %2760 = vmatpush1.msra.mxu0 %v2759
  %v2761 = vand.u32 %v1545, 4294901760
  %2762 = vmatprep.subr.mxu0 %v2761
  %v2763 = vand.u32 %v1544, 4294901760
  %2764 = vmatpush1.msra.mxu0 %v2763
  %v2765 = vand.u32 %v1547, 4294901760
  %2766 = vmatprep.subr.mxu0 %v2765
  %v2767 = vand.u32 %v1546, 4294901760
  %2768 = vmatpush1.msra.mxu0 %v2767
  %v2769 = vand.u32 %v1549, 4294901760
  %2770 = vmatprep.subr.mxu0 %v2769
  %v2771 = vand.u32 %v1548, 4294901760
  %2772 = vmatpush1.msra.mxu0 %v2771
  %v2773 = vand.u32 %v1551, 4294901760
  %2774 = vmatprep.subr.mxu0 %v2773
  %v2775 = vand.u32 %v1550, 4294901760
  %2776 = vmatpush1.msra.mxu0 %v2775
  %v2777 = vand.u32 %v1553, 4294901760
  %2778 = vmatprep.subr.mxu0 %v2777
  %v2779 = vand.u32 %v1552, 4294901760
  %2780 = vmatpush1.msra.mxu0 %v2779
  %v2781 = vand.u32 %v1555, 4294901760
  %2782 = vmatprep.subr.mxu0 %v2781
  %v2783 = vand.u32 %v1554, 4294901760
  %2784 = vmatpush1.msra.mxu0 %v2783
  %v2785 = vand.u32 %v1557, 4294901760
  %2786 = vmatprep.subr.mxu0 %v2785
  %v2787 = vand.u32 %v1556, 4294901760
  %2788 = vmatpush1.msra.mxu0 %v2787
  %v2789 = vand.u32 %v1559, 4294901760
  %2790 = vmatprep.subr.mxu0 %v2789
  %v2791 = vand.u32 %v1558, 4294901760
  %2792 = vmatpush1.msra.mxu0 %v2791
  %v2793 = vand.u32 %v1561, 4294901760
  %2794 = vmatprep.subr.mxu0 %v2793
  %v2795 = vand.u32 %v1560, 4294901760
  %2796 = vmatpush1.msra.mxu0 %v2795
  %v2797 = vand.u32 %v1563, 4294901760
  %2798 = vmatprep.subr.mxu0 %v2797
  %v2799 = vand.u32 %v1562, 4294901760
  %2800 = vmatpush1.msra.mxu0 %v2799
  %v2801 = vand.u32 %v1565, 4294901760
  %2802 = vmatprep.subr.mxu0 %v2801
  %v2803 = vand.u32 %v1564, 4294901760
  %2804 = vmatpush1.msra.mxu0 %v2803
  %v2805 = vand.u32 %v1567, 4294901760
  %2806 = vmatprep.subr.mxu0 %v2805
  %v2807 = vand.u32 %v1566, 4294901760
  %2808 = vmatpush1.msra.mxu0 %v2807
  %v2809 = vand.u32 %v1569, 4294901760
  %2810 = vmatprep.subr.mxu0 %v2809
  %v2811 = vand.u32 %v1568, 4294901760
  %2812 = vmatpush1.msra.mxu0 %v2811
  %v2813 = vand.u32 %v1571, 4294901760
  %2814 = vmatprep.subr.mxu0 %v2813
  %v2815 = vand.u32 %v1570, 4294901760
  %2816 = vmatpush1.msra.mxu0 %v2815
  %v2817 = vand.u32 %v1573, 4294901760
  %2818 = vmatprep.subr.mxu0 %v2817
  %v2819 = vand.u32 %v1572, 4294901760
  %2820 = vmatpush1.msra.mxu0 %v2819
  %v2821 = vand.u32 %v1575, 4294901760
  %2822 = vmatprep.subr.mxu0 %v2821
  %v2823 = vand.u32 %v1574, 4294901760
  %2824 = vmatpush1.msra.mxu0 %v2823
  %v2825 = vand.u32 %v1577, 4294901760
  %2826 = vmatprep.subr.mxu0 %v2825
  %v2827 = vand.u32 %v1576, 4294901760
  %2828 = vmatpush1.msra.mxu0 %v2827
  %v2829 = vand.u32 %v1579, 4294901760
  %2830 = vmatprep.subr.mxu0 %v2829
  %v2831 = vand.u32 %v1578, 4294901760
  %2832 = vmatpush1.msra.mxu0 %v2831
  %v2833 = vand.u32 %v1581, 4294901760
  %2834 = vmatprep.subr.mxu0 %v2833
  %v2835 = vand.u32 %v1580, 4294901760
  %2836 = vmatpush1.msra.mxu0 %v2835
  %v2837 = vand.u32 %v1583, 4294901760
  %2838 = vmatprep.subr.mxu0 %v2837
  %v2839 = vand.u32 %v1582, 4294901760
  %2840 = vmatpush1.msra.mxu0 %v2839
  %v2841 = vand.u32 %v1585, 4294901760
  %2842 = vmatprep.subr.mxu0 %v2841
  %v2843 = vand.u32 %v1584, 4294901760
  %2844 = vmatpush1.msra.mxu0 %v2843
  %v2845 = vand.u32 %v1587, 4294901760
  %2846 = vmatprep.subr.mxu0 %v2845
  %v2847 = vand.u32 %v1586, 4294901760
  %2848 = vmatpush1.msra.mxu0 %v2847
  %v2849 = vand.u32 %v1589, 4294901760
  %2850 = vmatprep.subr.mxu0 %v2849
  %v2851 = vand.u32 %v1588, 4294901760
  %2852 = vmatpush1.msra.mxu0 %v2851
  %v2853 = vand.u32 %v1591, 4294901760
  %2854 = vmatprep.subr.mxu0 %v2853
  %v2855 = vand.u32 %v1590, 4294901760
  %2856 = vmatpush1.msra.mxu0 %v2855
  %v2857 = vand.u32 %v1593, 4294901760
  %2858 = vmatprep.subr.mxu0 %v2857
  %v2859 = vand.u32 %v1592, 4294901760
  %2860 = vmatpush1.msra.mxu0 %v2859
  %v2861 = vand.u32 %v1595, 4294901760
  %2862 = vmatprep.subr.mxu0 %v2861
  %v2863 = vand.u32 %v1594, 4294901760
  %2864 = vmatpush1.msra.mxu0 %v2863
  %v2865 = vand.u32 %v1597, 4294901760
  %2866 = vmatprep.subr.mxu0 %v2865
  %v2867 = vand.u32 %v1596, 4294901760
  %2868 = vmatpush1.msra.mxu0 %v2867
  %v2869 = vand.u32 %v1599, 4294901760
  %2870 = vmatprep.subr.mxu0 %v2869
  %v2871 = vand.u32 %v1598, 4294901760
  %2872 = vmatpush1.msra.mxu0 %v2871
  %v2873 = vand.u32 %v1601, 4294901760
  %2874 = vmatprep.subr.mxu0 %v2873
  %v2875 = vand.u32 %v1600, 4294901760
  %2876 = vmatpush1.msra.mxu0 %v2875
  %v2877 = vand.u32 %v1537, 4294901760
  %2878 = vmatprep.mubr.f32.mxu0 %v2877
  %v2879 = vand.u32 %v1429, 4294901760
  %2880 = vmatmul.mubr.f32.gmra.mrb[0].mxu0 %v2879
  %v2881 = vpop.f32.mrb[0].mxu0
  %v2882 = vadd.f32 %v2745, %v2881
  %v2883 = vpop.f32.mrb[0].mxu0
  %v2884 = vadd.f32 %v2747, %v2883
  %2885 = vdwg.mxu0
  %v2886 = vmul.f32 %v2882, %v2882
  %v2887 = vmul.f32 %v2884, %v2884
  %v2888 = vadd.f32 %v2886, %v2887
  %v2889 = vrsqrt.pop %v2888
  %v2890 = vmul.f32 %v2888, %v2889
  %vm2891 = vcmp.eq.f32.partialorder %v2888, inf
  %v2892 = vsel %vm2891, %v2888, %v2890
  %vm2893 = vcmp.eq.f32.partialorder %v2888, 0.0
  %v2894 = vand.u32 %v2888, 2147483648
  %v2895 = vsel %vm2893, %v2894, %v2892
  %v2896 = vmul.f32 %v2895, 0.015625
  %v2897 = vsub.f32 %v2896, %v1314
  %v2898 = vsel %vm73, %v2897, 0.0
  %v2899 = vrot.slane %v2898, 4
  %v2900 = vadd.f32 %v2898, %v2899
  %v2901 = vrot.slane %v2900, 2
  %v2902 = vadd.f32 %v2900, %v2901
  %v2903 = vrot.slane %v2902, 1
  %v2904 = vadd.f32 %v2902, %v2903
  %v2905 = vrcp.pop 4.0
  %v2906 = vmul.f32 %v2904, %v2905
  %v2907 = vsel %vm73, %v2897, -inf
  %v2908 = vrot.slane %v2907, 4
  %v2909 = vmax.f32 %v2907, %v2908
  %v2910 = vrot.slane %v2909, 2
  %v2911 = vmax.f32 %v2909, %v2910
  %v2912 = vrot.slane %v2911, 1
  %v2913 = vmax.f32 %v2911, %v2912
  %vm2914 = vcmask 1040384
  %v2915 = vsel %vm2914, %v2906, %v2913
  %2916 = vrot.lane.b32.xlu0 %v2915, 1
  %v2917 = vpop.permute.xlu0 %2916
  %v2918 = vmul.f32 %v2917, %v58
  %2919 = vrot.lane.b32.xlu0 %v2915, 127
  %v2920 = vpop.permute.xlu0 %2919
  %v2921 = vmul.f32 %v2920, %v68
  %v2923 = vrot.slane %v2915, 6
  %v2926 = vrot.slane %v2921, 4
  %vm2928 = vcmask 1041408
  %v2929 = vsel %vm2928, %v2918, %v2923
  %v2930 = vsel %vm73, %v2929, %v2926
  %vm2931 = vcmask 48128
  %v2933 = vsel %vm2931, %v48, 0
  %vm2935 = vcmask 1045504
  %v2937 = vsel %vm2935, %v2930, 0
  %2939 = vmatprep.subr.mxu0 0.0
  %v2940 = vand.u32 %v2937, 4294901760
  %2941 = vmatpush1.msra.mxu0 %v2940
  %2942 = vmatprep.subr.mxu0 0.0
  %2943 = vmatpush1.msra.mxu0 0.0
  %2944 = vmatprep.subr.mxu0 0.0
  %2945 = vmatpush1.msra.mxu0 0.0
  %2946 = vmatprep.subr.mxu0 0.0
  %2947 = vmatpush1.msra.mxu0 0.0
  %2948 = vmatprep.subr.mxu0 0.0
  %2949 = vmatpush1.msra.mxu0 0.0
  %2950 = vmatprep.subr.mxu0 0.0
  %2951 = vmatpush1.msra.mxu0 0.0
  %2952 = vmatprep.subr.mxu0 0.0
  %2953 = vmatpush1.msra.mxu0 0.0
  %2954 = vmatprep.subr.mxu0 0.0
  %2955 = vmatpush1.msra.mxu0 0.0
  %2956 = vmatprep.subr.mxu0 0.0
  %2957 = vmatpush1.msra.mxu0 0.0
  %2958 = vmatprep.subr.mxu0 0.0
  %2959 = vmatpush1.msra.mxu0 0.0
  %2960 = vmatprep.subr.mxu0 0.0
  %2961 = vmatpush1.msra.mxu0 0.0
  %2962 = vmatprep.subr.mxu0 0.0
  %2963 = vmatpush1.msra.mxu0 0.0
  %2964 = vmatprep.subr.mxu0 0.0
  %2965 = vmatpush1.msra.mxu0 0.0
  %2966 = vmatprep.subr.mxu0 0.0
  %2967 = vmatpush1.msra.mxu0 0.0
  %2968 = vmatprep.subr.mxu0 0.0
  %2969 = vmatpush1.msra.mxu0 0.0
  %2970 = vmatprep.subr.mxu0 0.0
  %2971 = vmatpush1.msra.mxu0 0.0
  %2972 = vmatprep.subr.mxu0 0.0
  %2973 = vmatpush1.msra.mxu0 0.0
  %2974 = vmatprep.subr.mxu0 0.0
  %2975 = vmatpush1.msra.mxu0 0.0
  %2976 = vmatprep.subr.mxu0 0.0
  %2977 = vmatpush1.msra.mxu0 0.0
  %2978 = vmatprep.subr.mxu0 0.0
  %2979 = vmatpush1.msra.mxu0 0.0
  %2980 = vmatprep.subr.mxu0 0.0
  %2981 = vmatpush1.msra.mxu0 0.0
  %2982 = vmatprep.subr.mxu0 0.0
  %2983 = vmatpush1.msra.mxu0 0.0
  %2984 = vmatprep.subr.mxu0 0.0
  %2985 = vmatpush1.msra.mxu0 0.0
  %2986 = vmatprep.subr.mxu0 0.0
  %2987 = vmatpush1.msra.mxu0 0.0
  %2988 = vmatprep.subr.mxu0 0.0
  %2989 = vmatpush1.msra.mxu0 0.0
  %2990 = vmatprep.subr.mxu0 0.0
  %2991 = vmatpush1.msra.mxu0 0.0
  %2992 = vmatprep.subr.mxu0 0.0
  %2993 = vmatpush1.msra.mxu0 0.0
  %2994 = vmatprep.subr.mxu0 0.0
  %2995 = vmatpush1.msra.mxu0 0.0
  %2996 = vmatprep.subr.mxu0 0.0
  %2997 = vmatpush1.msra.mxu0 0.0
  %2998 = vmatprep.subr.mxu0 0.0
  %2999 = vmatpush1.msra.mxu0 0.0
  %3000 = vmatprep.subr.mxu0 0.0
  %3001 = vmatpush1.msra.mxu0 0.0
  %3002 = vmatprep.subr.mxu0 0.0
  %3003 = vmatpush1.msra.mxu0 0.0
  %3004 = vmatprep.mubr.f32.mxu0 0.0
  %v3005 = vand.u32 %v2933, 4294901760
  %v3006 = vsub.f32 %v2933, %v3005
  %v3007 = vand.u32 %v3006, 4294901760
  %v3008 = vsub.f32 %v3006, %v3007
  %v3009 = vand.u32 %v3008, 4294901760
  %3010 = vmatmul.mubr.f32.gmra.mrb[0].mxu0 %v3009
  %v3011 = vpop.f32.mrb[0].mxu0
  %v3012 = vadd.f32 0.0, %v3011
  %v3013 = vpop.f32.mrb[0].mxu0
  %3014 = vdwg.mxu0
  %3015 = vmatprep.subr.mxu0 0.0
  %v3016 = vand.u32 %v2937, 4294901760
  %v3017 = vsub.f32 %v2937, %v3016
  %v3018 = vand.u32 %v3017, 4294901760
  %v3019 = vsub.f32 %v3017, %v3018
  %v3020 = vand.u32 %v3019, 4294901760
  %3021 = vmatpush1.msra.mxu0 %v3020
  %3022 = vmatprep.subr.mxu0 0.0
  %3023 = vmatpush1.msra.mxu0 0.0
  %3024 = vmatprep.subr.mxu0 0.0
  %3025 = vmatpush1.msra.mxu0 0.0
  %3026 = vmatprep.subr.mxu0 0.0
  %3027 = vmatpush1.msra.mxu0 0.0
  %3028 = vmatprep.subr.mxu0 0.0
  %3029 = vmatpush1.msra.mxu0 0.0
  %3030 = vmatprep.subr.mxu0 0.0
  %3031 = vmatpush1.msra.mxu0 0.0
  %3032 = vmatprep.subr.mxu0 0.0
  %3033 = vmatpush1.msra.mxu0 0.0
  %3034 = vmatprep.subr.mxu0 0.0
  %3035 = vmatpush1.msra.mxu0 0.0
  %3036 = vmatprep.subr.mxu0 0.0
  %3037 = vmatpush1.msra.mxu0 0.0
  %3038 = vmatprep.subr.mxu0 0.0
  %3039 = vmatpush1.msra.mxu0 0.0
  %3040 = vmatprep.subr.mxu0 0.0
  %3041 = vmatpush1.msra.mxu0 0.0
  %3042 = vmatprep.subr.mxu0 0.0
  %3043 = vmatpush1.msra.mxu0 0.0
  %3044 = vmatprep.subr.mxu0 0.0
  %3045 = vmatpush1.msra.mxu0 0.0
  %3046 = vmatprep.subr.mxu0 0.0
  %3047 = vmatpush1.msra.mxu0 0.0
  %3048 = vmatprep.subr.mxu0 0.0
  %3049 = vmatpush1.msra.mxu0 0.0
  %3050 = vmatprep.subr.mxu0 0.0
  %3051 = vmatpush1.msra.mxu0 0.0
  %3052 = vmatprep.subr.mxu0 0.0
  %3053 = vmatpush1.msra.mxu0 0.0
  %3054 = vmatprep.subr.mxu0 0.0
  %3055 = vmatpush1.msra.mxu0 0.0
  %3056 = vmatprep.subr.mxu0 0.0
  %3057 = vmatpush1.msra.mxu0 0.0
  %3058 = vmatprep.subr.mxu0 0.0
  %3059 = vmatpush1.msra.mxu0 0.0
  %3060 = vmatprep.subr.mxu0 0.0
  %3061 = vmatpush1.msra.mxu0 0.0
  %3062 = vmatprep.subr.mxu0 0.0
  %3063 = vmatpush1.msra.mxu0 0.0
  %3064 = vmatprep.subr.mxu0 0.0
  %3065 = vmatpush1.msra.mxu0 0.0
  %3066 = vmatprep.subr.mxu0 0.0
  %3067 = vmatpush1.msra.mxu0 0.0
  %3068 = vmatprep.subr.mxu0 0.0
  %3069 = vmatpush1.msra.mxu0 0.0
  %3070 = vmatprep.subr.mxu0 0.0
  %3071 = vmatpush1.msra.mxu0 0.0
  %3072 = vmatprep.subr.mxu0 0.0
  %3073 = vmatpush1.msra.mxu0 0.0
  %3074 = vmatprep.subr.mxu0 0.0
  %3075 = vmatpush1.msra.mxu0 0.0
  %3076 = vmatprep.subr.mxu0 0.0
  %3077 = vmatpush1.msra.mxu0 0.0
  %3078 = vmatprep.subr.mxu0 0.0
  %3079 = vmatpush1.msra.mxu0 0.0
  %3080 = vmatprep.subr.mxu0 0.0
  %3081 = vmatpush1.msra.mxu0 0.0
  %3082 = vmatprep.subr.mxu0 0.0
  %3083 = vmatpush1.msra.mxu0 0.0
  %3084 = vmatprep.mubr.f32.mxu0 0.0
  %v3085 = vand.u32 %v2933, 4294901760
  %3086 = vmatmul.mubr.f32.gmra.mrb[0].mxu0 %v3085
  %v3087 = vpop.f32.mrb[0].mxu0
  %v3088 = vadd.f32 %v3012, %v3087
  %v3089 = vpop.f32.mrb[0].mxu0
  %3090 = vdwg.mxu0
  %3091 = vmatprep.subr.mxu0 0.0
  %v3092 = vand.u32 %v2937, 4294901760
  %v3093 = vsub.f32 %v2937, %v3092
  %3094 = vmatpush1.msra.mxu0 %v3093
  %3095 = vmatprep.subr.mxu0 0.0
  %3096 = vmatpush1.msra.mxu0 0.0
  %3097 = vmatprep.subr.mxu0 0.0
  %3098 = vmatpush1.msra.mxu0 0.0
  %3099 = vmatprep.subr.mxu0 0.0
  %3100 = vmatpush1.msra.mxu0 0.0
  %3101 = vmatprep.subr.mxu0 0.0
  %3102 = vmatpush1.msra.mxu0 0.0
  %3103 = vmatprep.subr.mxu0 0.0
  %3104 = vmatpush1.msra.mxu0 0.0
  %3105 = vmatprep.subr.mxu0 0.0
  %3106 = vmatpush1.msra.mxu0 0.0
  %3107 = vmatprep.subr.mxu0 0.0
  %3108 = vmatpush1.msra.mxu0 0.0
  %3109 = vmatprep.subr.mxu0 0.0
  %3110 = vmatpush1.msra.mxu0 0.0
  %3111 = vmatprep.subr.mxu0 0.0
  %3112 = vmatpush1.msra.mxu0 0.0
  %3113 = vmatprep.subr.mxu0 0.0
  %3114 = vmatpush1.msra.mxu0 0.0
  %3115 = vmatprep.subr.mxu0 0.0
  %3116 = vmatpush1.msra.mxu0 0.0
  %3117 = vmatprep.subr.mxu0 0.0
  %3118 = vmatpush1.msra.mxu0 0.0
  %3119 = vmatprep.subr.mxu0 0.0
  %3120 = vmatpush1.msra.mxu0 0.0
  %3121 = vmatprep.subr.mxu0 0.0
  %3122 = vmatpush1.msra.mxu0 0.0
  %3123 = vmatprep.subr.mxu0 0.0
  %3124 = vmatpush1.msra.mxu0 0.0
  %3125 = vmatprep.subr.mxu0 0.0
  %3126 = vmatpush1.msra.mxu0 0.0
  %3127 = vmatprep.subr.mxu0 0.0
  %3128 = vmatpush1.msra.mxu0 0.0
  %3129 = vmatprep.subr.mxu0 0.0
  %3130 = vmatpush1.msra.mxu0 0.0
  %3131 = vmatprep.subr.mxu0 0.0
  %3132 = vmatpush1.msra.mxu0 0.0
  %3133 = vmatprep.subr.mxu0 0.0
  %3134 = vmatpush1.msra.mxu0 0.0
  %3135 = vmatprep.subr.mxu0 0.0
  %3136 = vmatpush1.msra.mxu0 0.0
  %3137 = vmatprep.subr.mxu0 0.0
  %3138 = vmatpush1.msra.mxu0 0.0
  %3139 = vmatprep.subr.mxu0 0.0
  %3140 = vmatpush1.msra.mxu0 0.0
  %3141 = vmatprep.subr.mxu0 0.0
  %3142 = vmatpush1.msra.mxu0 0.0
  %3143 = vmatprep.subr.mxu0 0.0
  %3144 = vmatpush1.msra.mxu0 0.0
  %3145 = vmatprep.subr.mxu0 0.0
  %3146 = vmatpush1.msra.mxu0 0.0
  %3147 = vmatprep.subr.mxu0 0.0
  %3148 = vmatpush1.msra.mxu0 0.0
  %3149 = vmatprep.subr.mxu0 0.0
  %3150 = vmatpush1.msra.mxu0 0.0
  %3151 = vmatprep.subr.mxu0 0.0
  %3152 = vmatpush1.msra.mxu0 0.0
  %3153 = vmatprep.subr.mxu0 0.0
  %3154 = vmatpush1.msra.mxu0 0.0
  %3155 = vmatprep.subr.mxu0 0.0
  %3156 = vmatpush1.msra.mxu0 0.0
  %3157 = vmatprep.mubr.f32.mxu0 0.0
  %v3158 = vand.u32 %v2933, 4294901760
  %v3159 = vsub.f32 %v2933, %v3158
  %3160 = vmatmul.mubr.f32.gmra.mrb[0].mxu0 %v3159
  %v3161 = vpop.f32.mrb[0].mxu0
  %v3162 = vadd.f32 %v3088, %v3161
  %v3163 = vpop.f32.mrb[0].mxu0
  %3164 = vdwg.mxu0
  %3165 = vmatprep.subr.mxu0 0.0
  %v3166 = vand.u32 %v2937, 4294901760
  %3167 = vmatpush1.msra.mxu0 %v3166
  %3168 = vmatprep.subr.mxu0 0.0
  %3169 = vmatpush1.msra.mxu0 0.0
  %3170 = vmatprep.subr.mxu0 0.0
  %3171 = vmatpush1.msra.mxu0 0.0
  %3172 = vmatprep.subr.mxu0 0.0
  %3173 = vmatpush1.msra.mxu0 0.0
  %3174 = vmatprep.subr.mxu0 0.0
  %3175 = vmatpush1.msra.mxu0 0.0
  %3176 = vmatprep.subr.mxu0 0.0
  %3177 = vmatpush1.msra.mxu0 0.0
  %3178 = vmatprep.subr.mxu0 0.0
  %3179 = vmatpush1.msra.mxu0 0.0
  %3180 = vmatprep.subr.mxu0 0.0
  %3181 = vmatpush1.msra.mxu0 0.0
  %3182 = vmatprep.subr.mxu0 0.0
  %3183 = vmatpush1.msra.mxu0 0.0
  %3184 = vmatprep.subr.mxu0 0.0
  %3185 = vmatpush1.msra.mxu0 0.0
  %3186 = vmatprep.subr.mxu0 0.0
  %3187 = vmatpush1.msra.mxu0 0.0
  %3188 = vmatprep.subr.mxu0 0.0
  %3189 = vmatpush1.msra.mxu0 0.0
  %3190 = vmatprep.subr.mxu0 0.0
  %3191 = vmatpush1.msra.mxu0 0.0
  %3192 = vmatprep.subr.mxu0 0.0
  %3193 = vmatpush1.msra.mxu0 0.0
  %3194 = vmatprep.subr.mxu0 0.0
  %3195 = vmatpush1.msra.mxu0 0.0
  %3196 = vmatprep.subr.mxu0 0.0
  %3197 = vmatpush1.msra.mxu0 0.0
  %3198 = vmatprep.subr.mxu0 0.0
  %3199 = vmatpush1.msra.mxu0 0.0
  %3200 = vmatprep.subr.mxu0 0.0
  %3201 = vmatpush1.msra.mxu0 0.0
  %3202 = vmatprep.subr.mxu0 0.0
  %3203 = vmatpush1.msra.mxu0 0.0
  %3204 = vmatprep.subr.mxu0 0.0
  %3205 = vmatpush1.msra.mxu0 0.0
  %3206 = vmatprep.subr.mxu0 0.0
  %3207 = vmatpush1.msra.mxu0 0.0
  %3208 = vmatprep.subr.mxu0 0.0
  %3209 = vmatpush1.msra.mxu0 0.0
  %3210 = vmatprep.subr.mxu0 0.0
  %3211 = vmatpush1.msra.mxu0 0.0
  %3212 = vmatprep.subr.mxu0 0.0
  %3213 = vmatpush1.msra.mxu0 0.0
  %3214 = vmatprep.subr.mxu0 0.0
  %3215 = vmatpush1.msra.mxu0 0.0
  %3216 = vmatprep.subr.mxu0 0.0
  %3217 = vmatpush1.msra.mxu0 0.0
  %3218 = vmatprep.subr.mxu0 0.0
  %3219 = vmatpush1.msra.mxu0 0.0
  %3220 = vmatprep.subr.mxu0 0.0
  %3221 = vmatpush1.msra.mxu0 0.0
  %3222 = vmatprep.subr.mxu0 0.0
  %3223 = vmatpush1.msra.mxu0 0.0
  %3224 = vmatprep.subr.mxu0 0.0
  %3225 = vmatpush1.msra.mxu0 0.0
  %3226 = vmatprep.subr.mxu0 0.0
  %3227 = vmatpush1.msra.mxu0 0.0
  %3228 = vmatprep.subr.mxu0 0.0
  %3229 = vmatpush1.msra.mxu0 0.0
  %3230 = vmatprep.mubr.f32.mxu0 0.0
  %v3231 = vand.u32 %v2933, 4294901760
  %v3232 = vsub.f32 %v2933, %v3231
  %v3233 = vand.u32 %v3232, 4294901760
  %3234 = vmatmul.mubr.f32.gmra.mrb[0].mxu0 %v3233
  %v3235 = vpop.f32.mrb[0].mxu0
  %v3236 = vadd.f32 %v3162, %v3235
  %v3237 = vpop.f32.mrb[0].mxu0
  %3238 = vdwg.mxu0
  %3239 = vmatprep.subr.mxu0 0.0
  %v3240 = vand.u32 %v2937, 4294901760
  %v3241 = vsub.f32 %v2937, %v3240
  %v3242 = vand.u32 %v3241, 4294901760
  %3243 = vmatpush1.msra.mxu0 %v3242
  %3244 = vmatprep.subr.mxu0 0.0
  %3245 = vmatpush1.msra.mxu0 0.0
  %3246 = vmatprep.subr.mxu0 0.0
  %3247 = vmatpush1.msra.mxu0 0.0
  %3248 = vmatprep.subr.mxu0 0.0
  %3249 = vmatpush1.msra.mxu0 0.0
  %3250 = vmatprep.subr.mxu0 0.0
  %3251 = vmatpush1.msra.mxu0 0.0
  %3252 = vmatprep.subr.mxu0 0.0
  %3253 = vmatpush1.msra.mxu0 0.0
  %3254 = vmatprep.subr.mxu0 0.0
  %3255 = vmatpush1.msra.mxu0 0.0
  %3256 = vmatprep.subr.mxu0 0.0
  %3257 = vmatpush1.msra.mxu0 0.0
  %3258 = vmatprep.subr.mxu0 0.0
  %3259 = vmatpush1.msra.mxu0 0.0
  %3260 = vmatprep.subr.mxu0 0.0
  %3261 = vmatpush1.msra.mxu0 0.0
  %3262 = vmatprep.subr.mxu0 0.0
  %3263 = vmatpush1.msra.mxu0 0.0
  %3264 = vmatprep.subr.mxu0 0.0
  %3265 = vmatpush1.msra.mxu0 0.0
  %3266 = vmatprep.subr.mxu0 0.0
  %3267 = vmatpush1.msra.mxu0 0.0
  %3268 = vmatprep.subr.mxu0 0.0
  %3269 = vmatpush1.msra.mxu0 0.0
  %3270 = vmatprep.subr.mxu0 0.0
  %3271 = vmatpush1.msra.mxu0 0.0
  %3272 = vmatprep.subr.mxu0 0.0
  %3273 = vmatpush1.msra.mxu0 0.0
  %3274 = vmatprep.subr.mxu0 0.0
  %3275 = vmatpush1.msra.mxu0 0.0
  %3276 = vmatprep.subr.mxu0 0.0
  %3277 = vmatpush1.msra.mxu0 0.0
  %3278 = vmatprep.subr.mxu0 0.0
  %3279 = vmatpush1.msra.mxu0 0.0
  %3280 = vmatprep.subr.mxu0 0.0
  %3281 = vmatpush1.msra.mxu0 0.0
  %3282 = vmatprep.subr.mxu0 0.0
  %3283 = vmatpush1.msra.mxu0 0.0
  %3284 = vmatprep.subr.mxu0 0.0
  %3285 = vmatpush1.msra.mxu0 0.0
  %3286 = vmatprep.subr.mxu0 0.0
  %3287 = vmatpush1.msra.mxu0 0.0
  %3288 = vmatprep.subr.mxu0 0.0
  %3289 = vmatpush1.msra.mxu0 0.0
  %3290 = vmatprep.subr.mxu0 0.0
  %3291 = vmatpush1.msra.mxu0 0.0
  %3292 = vmatprep.subr.mxu0 0.0
  %3293 = vmatpush1.msra.mxu0 0.0
  %3294 = vmatprep.subr.mxu0 0.0
  %3295 = vmatpush1.msra.mxu0 0.0
  %3296 = vmatprep.subr.mxu0 0.0
  %3297 = vmatpush1.msra.mxu0 0.0
  %3298 = vmatprep.subr.mxu0 0.0
  %3299 = vmatpush1.msra.mxu0 0.0
  %3300 = vmatprep.subr.mxu0 0.0
  %3301 = vmatpush1.msra.mxu0 0.0
  %3302 = vmatprep.subr.mxu0 0.0
  %3303 = vmatpush1.msra.mxu0 0.0
  %3304 = vmatprep.subr.mxu0 0.0
  %3305 = vmatpush1.msra.mxu0 0.0
  %3306 = vmatprep.mubr.f32.mxu0 0.0
  %v3307 = vand.u32 %v2933, 4294901760
  %3308 = vmatmul.mubr.f32.gmra.mrb[0].mxu0 %v3307
  %v3309 = vpop.f32.mrb[0].mxu0
  %v3310 = vadd.f32 %v3236, %v3309
  %v3311 = vpop.f32.mrb[0].mxu0
  %3312 = vdwg.mxu0
  %3313 = vmatprep.subr.mxu0 0.0
  %v3314 = vand.u32 %v2937, 4294901760
  %3315 = vmatpush1.msra.mxu0 %v3314
  %3316 = vmatprep.subr.mxu0 0.0
  %3317 = vmatpush1.msra.mxu0 0.0
  %3318 = vmatprep.subr.mxu0 0.0
  %3319 = vmatpush1.msra.mxu0 0.0
  %3320 = vmatprep.subr.mxu0 0.0
  %3321 = vmatpush1.msra.mxu0 0.0
  %3322 = vmatprep.subr.mxu0 0.0
  %3323 = vmatpush1.msra.mxu0 0.0
  %3324 = vmatprep.subr.mxu0 0.0
  %3325 = vmatpush1.msra.mxu0 0.0
  %3326 = vmatprep.subr.mxu0 0.0
  %3327 = vmatpush1.msra.mxu0 0.0
  %3328 = vmatprep.subr.mxu0 0.0
  %3329 = vmatpush1.msra.mxu0 0.0
  %3330 = vmatprep.subr.mxu0 0.0
  %3331 = vmatpush1.msra.mxu0 0.0
  %3332 = vmatprep.subr.mxu0 0.0
  %3333 = vmatpush1.msra.mxu0 0.0
  %3334 = vmatprep.subr.mxu0 0.0
  %3335 = vmatpush1.msra.mxu0 0.0
  %3336 = vmatprep.subr.mxu0 0.0
  %3337 = vmatpush1.msra.mxu0 0.0
  %3338 = vmatprep.subr.mxu0 0.0
  %3339 = vmatpush1.msra.mxu0 0.0
  %3340 = vmatprep.subr.mxu0 0.0
  %3341 = vmatpush1.msra.mxu0 0.0
  %3342 = vmatprep.subr.mxu0 0.0
  %3343 = vmatpush1.msra.mxu0 0.0
  %3344 = vmatprep.subr.mxu0 0.0
  %3345 = vmatpush1.msra.mxu0 0.0
  %3346 = vmatprep.subr.mxu0 0.0
  %3347 = vmatpush1.msra.mxu0 0.0
  %3348 = vmatprep.subr.mxu0 0.0
  %3349 = vmatpush1.msra.mxu0 0.0
  %3350 = vmatprep.subr.mxu0 0.0
  %3351 = vmatpush1.msra.mxu0 0.0
  %3352 = vmatprep.subr.mxu0 0.0
  %3353 = vmatpush1.msra.mxu0 0.0
  %3354 = vmatprep.subr.mxu0 0.0
  %3355 = vmatpush1.msra.mxu0 0.0
  %3356 = vmatprep.subr.mxu0 0.0
  %3357 = vmatpush1.msra.mxu0 0.0
  %3358 = vmatprep.subr.mxu0 0.0
  %3359 = vmatpush1.msra.mxu0 0.0
  %3360 = vmatprep.subr.mxu0 0.0
  %3361 = vmatpush1.msra.mxu0 0.0
  %3362 = vmatprep.subr.mxu0 0.0
  %3363 = vmatpush1.msra.mxu0 0.0
  %3364 = vmatprep.subr.mxu0 0.0
  %3365 = vmatpush1.msra.mxu0 0.0
  %3366 = vmatprep.subr.mxu0 0.0
  %3367 = vmatpush1.msra.mxu0 0.0
  %3368 = vmatprep.subr.mxu0 0.0
  %3369 = vmatpush1.msra.mxu0 0.0
  %3370 = vmatprep.subr.mxu0 0.0
  %3371 = vmatpush1.msra.mxu0 0.0
  %3372 = vmatprep.subr.mxu0 0.0
  %3373 = vmatpush1.msra.mxu0 0.0
  %3374 = vmatprep.subr.mxu0 0.0
  %3375 = vmatpush1.msra.mxu0 0.0
  %3376 = vmatprep.subr.mxu0 0.0
  %3377 = vmatpush1.msra.mxu0 0.0
  %3378 = vmatprep.mubr.f32.mxu0 0.0
  %v3379 = vand.u32 %v2933, 4294901760
  %3380 = vmatmul.mubr.f32.gmra.mrb[0].mxu0 %v3379
  %v3381 = vpop.f32.mrb[0].mxu0
  %v3382 = vadd.f32 %v3310, %v3381
  %v3383 = vpop.f32.mrb[0].mxu0
  %3384 = vdwg.mxu0
  %v3385 = vxor.u32 %v3382, 2147483648
  %v3386 = vmul.f32 %v3385, 1.442695
  %v3387 = vpow.pop %v3386
  %v3388 = vadd.f32 %v3387, 1.0
  %v3389 = vrcp.pop %v3388
  %v3390 = vmul.f32 1.0, %v3389
  %v3391 = vlaneseq
  %v3392 = vshrl.u32 %v3391, 7
  %v3393 = vsub.s32 0, %v3392
  %v3394 = vrot.slane %v3390, %v3393
  %v3395 = vmul.f32 %v3394, %v2897
  %v3396 = vadd.f32 %v1314, %v3395
  %3397 = vmatprep.subr.mxu0 0.0
  %v3398 = vand.u32 %v22, 4294901760
  %3399 = vmatpush1.msra.mxu0 %v3398
  %3400 = vmatprep.subr.mxu0 0.0
  %v3401 = vand.u32 %v23, 4294901760
  %3402 = vmatpush1.msra.mxu0 %v3401
  %3403 = vmatprep.subr.mxu0 0.0
  %v3404 = vand.u32 %v24, 4294901760
  %3405 = vmatpush1.msra.mxu0 %v3404
  %3406 = vmatprep.subr.mxu0 0.0
  %v3407 = vand.u32 %v25, 4294901760
  %3408 = vmatpush1.msra.mxu0 %v3407
  %3409 = vmatprep.subr.mxu0 0.0
  %v3410 = vand.u32 %v26, 4294901760
  %3411 = vmatpush1.msra.mxu0 %v3410
  %3412 = vmatprep.subr.mxu0 0.0
  %v3413 = vand.u32 %v27, 4294901760
  %3414 = vmatpush1.msra.mxu0 %v3413
  %3415 = vmatprep.subr.mxu0 0.0
  %v3416 = vand.u32 %v28, 4294901760
  %3417 = vmatpush1.msra.mxu0 %v3416
  %3418 = vmatprep.subr.mxu0 0.0
  %v3419 = vand.u32 %v29, 4294901760
  %3420 = vmatpush1.msra.mxu0 %v3419
  %3421 = vmatprep.subr.mxu0 0.0
  %v3422 = vand.u32 %v30, 4294901760
  %3423 = vmatpush1.msra.mxu0 %v3422
  %3424 = vmatprep.subr.mxu0 0.0
  %v3425 = vand.u32 %v31, 4294901760
  %3426 = vmatpush1.msra.mxu0 %v3425
  %3427 = vmatprep.subr.mxu0 0.0
  %v3428 = vand.u32 %v32, 4294901760
  %3429 = vmatpush1.msra.mxu0 %v3428
  %3430 = vmatprep.subr.mxu0 0.0
  %v3431 = vand.u32 %v33, 4294901760
  %3432 = vmatpush1.msra.mxu0 %v3431
  %3433 = vmatprep.subr.mxu0 0.0
  %v3434 = vand.u32 %v34, 4294901760
  %3435 = vmatpush1.msra.mxu0 %v3434
  %3436 = vmatprep.subr.mxu0 0.0
  %v3437 = vand.u32 %v35, 4294901760
  %3438 = vmatpush1.msra.mxu0 %v3437
  %3439 = vmatprep.subr.mxu0 0.0
  %v3440 = vand.u32 %v36, 4294901760
  %3441 = vmatpush1.msra.mxu0 %v3440
  %3442 = vmatprep.subr.mxu0 0.0
  %v3443 = vand.u32 %v37, 4294901760
  %3444 = vmatpush1.msra.mxu0 %v3443
  %3445 = vmatprep.subr.mxu0 0.0
  %3446 = vmatpush1.msra.mxu0 0.0
  %3447 = vmatprep.subr.mxu0 0.0
  %3448 = vmatpush1.msra.mxu0 0.0
  %3449 = vmatprep.subr.mxu0 0.0
  %3450 = vmatpush1.msra.mxu0 0.0
  %3451 = vmatprep.subr.mxu0 0.0
  %3452 = vmatpush1.msra.mxu0 0.0
  %3453 = vmatprep.subr.mxu0 0.0
  %3454 = vmatpush1.msra.mxu0 0.0
  %3455 = vmatprep.subr.mxu0 0.0
  %3456 = vmatpush1.msra.mxu0 0.0
  %3457 = vmatprep.subr.mxu0 0.0
  %3458 = vmatpush1.msra.mxu0 0.0
  %3459 = vmatprep.subr.mxu0 0.0
  %3460 = vmatpush1.msra.mxu0 0.0
  %3461 = vmatprep.subr.mxu0 0.0
  %3462 = vmatpush1.msra.mxu0 0.0
  %3463 = vmatprep.subr.mxu0 0.0
  %3464 = vmatpush1.msra.mxu0 0.0
  %3465 = vmatprep.subr.mxu0 0.0
  %3466 = vmatpush1.msra.mxu0 0.0
  %3467 = vmatprep.subr.mxu0 0.0
  %3468 = vmatpush1.msra.mxu0 0.0
  %3469 = vmatprep.subr.mxu0 0.0
  %3470 = vmatpush1.msra.mxu0 0.0
  %3471 = vmatprep.subr.mxu0 0.0
  %3472 = vmatpush1.msra.mxu0 0.0
  %3473 = vmatprep.subr.mxu0 0.0
  %3474 = vmatpush1.msra.mxu0 0.0
  %3475 = vmatprep.subr.mxu0 0.0
  %3476 = vmatpush1.msra.mxu0 0.0
  %3477 = vmatprep.mubr.f32.mxu0 0.0
  %v3478 = vand.u32 %v3396, 4294901760
  %v3479 = vsub.f32 %v3396, %v3478
  %v3480 = vand.u32 %v3479, 4294901760
  %v3481 = vsub.f32 %v3479, %v3480
  %v3482 = vand.u32 %v3481, 4294901760
  %3483 = vmatmul.mubr.f32.gmra.mrb[0].mxu0 %v3482
  %v3484 = vpop.f32.mrb[0].mxu0
  %v3485 = vadd.f32 0.0, %v3484
  %v3486 = vpop.f32.mrb[0].mxu0
  %3487 = vdwg.mxu0
  %3488 = vmatprep.subr.mxu0 0.0
  %v3489 = vand.u32 %v22, 4294901760
  %v3490 = vsub.f32 %v22, %v3489
  %v3491 = vand.u32 %v3490, 4294901760
  %v3492 = vsub.f32 %v3490, %v3491
  %v3493 = vand.u32 %v3492, 4294901760
  %3494 = vmatpush1.msra.mxu0 %v3493
  %3495 = vmatprep.subr.mxu0 0.0
  %v3496 = vand.u32 %v23, 4294901760
  %v3497 = vsub.f32 %v23, %v3496
  %v3498 = vand.u32 %v3497, 4294901760
  %v3499 = vsub.f32 %v3497, %v3498
  %v3500 = vand.u32 %v3499, 4294901760
  %3501 = vmatpush1.msra.mxu0 %v3500
  %3502 = vmatprep.subr.mxu0 0.0
  %v3503 = vand.u32 %v24, 4294901760
  %v3504 = vsub.f32 %v24, %v3503
  %v3505 = vand.u32 %v3504, 4294901760
  %v3506 = vsub.f32 %v3504, %v3505
  %v3507 = vand.u32 %v3506, 4294901760
  %3508 = vmatpush1.msra.mxu0 %v3507
  %3509 = vmatprep.subr.mxu0 0.0
  %v3510 = vand.u32 %v25, 4294901760
  %v3511 = vsub.f32 %v25, %v3510
  %v3512 = vand.u32 %v3511, 4294901760
  %v3513 = vsub.f32 %v3511, %v3512
  %v3514 = vand.u32 %v3513, 4294901760
  %3515 = vmatpush1.msra.mxu0 %v3514
  %3516 = vmatprep.subr.mxu0 0.0
  %v3517 = vand.u32 %v26, 4294901760
  %v3518 = vsub.f32 %v26, %v3517
  %v3519 = vand.u32 %v3518, 4294901760
  %v3520 = vsub.f32 %v3518, %v3519
  %v3521 = vand.u32 %v3520, 4294901760
  %3522 = vmatpush1.msra.mxu0 %v3521
  %3523 = vmatprep.subr.mxu0 0.0
  %v3524 = vand.u32 %v27, 4294901760
  %v3525 = vsub.f32 %v27, %v3524
  %v3526 = vand.u32 %v3525, 4294901760
  %v3527 = vsub.f32 %v3525, %v3526
  %v3528 = vand.u32 %v3527, 4294901760
  %3529 = vmatpush1.msra.mxu0 %v3528
  %3530 = vmatprep.subr.mxu0 0.0
  %v3531 = vand.u32 %v28, 4294901760
  %v3532 = vsub.f32 %v28, %v3531
  %v3533 = vand.u32 %v3532, 4294901760
  %v3534 = vsub.f32 %v3532, %v3533
  %v3535 = vand.u32 %v3534, 4294901760
  %3536 = vmatpush1.msra.mxu0 %v3535
  %3537 = vmatprep.subr.mxu0 0.0
  %v3538 = vand.u32 %v29, 4294901760
  %v3539 = vsub.f32 %v29, %v3538
  %v3540 = vand.u32 %v3539, 4294901760
  %v3541 = vsub.f32 %v3539, %v3540
  %v3542 = vand.u32 %v3541, 4294901760
  %3543 = vmatpush1.msra.mxu0 %v3542
  %3544 = vmatprep.subr.mxu0 0.0
  %v3545 = vand.u32 %v30, 4294901760
  %v3546 = vsub.f32 %v30, %v3545
  %v3547 = vand.u32 %v3546, 4294901760
  %v3548 = vsub.f32 %v3546, %v3547
  %v3549 = vand.u32 %v3548, 4294901760
  %3550 = vmatpush1.msra.mxu0 %v3549
  %3551 = vmatprep.subr.mxu0 0.0
  %v3552 = vand.u32 %v31, 4294901760
  %v3553 = vsub.f32 %v31, %v3552
  %v3554 = vand.u32 %v3553, 4294901760
  %v3555 = vsub.f32 %v3553, %v3554
  %v3556 = vand.u32 %v3555, 4294901760
  %3557 = vmatpush1.msra.mxu0 %v3556
  %3558 = vmatprep.subr.mxu0 0.0
  %v3559 = vand.u32 %v32, 4294901760
  %v3560 = vsub.f32 %v32, %v3559
  %v3561 = vand.u32 %v3560, 4294901760
  %v3562 = vsub.f32 %v3560, %v3561
  %v3563 = vand.u32 %v3562, 4294901760
  %3564 = vmatpush1.msra.mxu0 %v3563
  %3565 = vmatprep.subr.mxu0 0.0
  %v3566 = vand.u32 %v33, 4294901760
  %v3567 = vsub.f32 %v33, %v3566
  %v3568 = vand.u32 %v3567, 4294901760
  %v3569 = vsub.f32 %v3567, %v3568
  %v3570 = vand.u32 %v3569, 4294901760
  %3571 = vmatpush1.msra.mxu0 %v3570
  %3572 = vmatprep.subr.mxu0 0.0
  %v3573 = vand.u32 %v34, 4294901760
  %v3574 = vsub.f32 %v34, %v3573
  %v3575 = vand.u32 %v3574, 4294901760
  %v3576 = vsub.f32 %v3574, %v3575
  %v3577 = vand.u32 %v3576, 4294901760
  %3578 = vmatpush1.msra.mxu0 %v3577
  %3579 = vmatprep.subr.mxu0 0.0
  %v3580 = vand.u32 %v35, 4294901760
  %v3581 = vsub.f32 %v35, %v3580
  %v3582 = vand.u32 %v3581, 4294901760
  %v3583 = vsub.f32 %v3581, %v3582
  %v3584 = vand.u32 %v3583, 4294901760
  %3585 = vmatpush1.msra.mxu0 %v3584
  %3586 = vmatprep.subr.mxu0 0.0
  %v3587 = vand.u32 %v36, 4294901760
  %v3588 = vsub.f32 %v36, %v3587
  %v3589 = vand.u32 %v3588, 4294901760
  %v3590 = vsub.f32 %v3588, %v3589
  %v3591 = vand.u32 %v3590, 4294901760
  %3592 = vmatpush1.msra.mxu0 %v3591
  %3593 = vmatprep.subr.mxu0 0.0
  %v3594 = vand.u32 %v37, 4294901760
  %v3595 = vsub.f32 %v37, %v3594
  %v3596 = vand.u32 %v3595, 4294901760
  %v3597 = vsub.f32 %v3595, %v3596
  %v3598 = vand.u32 %v3597, 4294901760
  %3599 = vmatpush1.msra.mxu0 %v3598
  %3600 = vmatprep.subr.mxu0 0.0
  %3601 = vmatpush1.msra.mxu0 0.0
  %3602 = vmatprep.subr.mxu0 0.0
  %3603 = vmatpush1.msra.mxu0 0.0
  %3604 = vmatprep.subr.mxu0 0.0
  %3605 = vmatpush1.msra.mxu0 0.0
  %3606 = vmatprep.subr.mxu0 0.0
  %3607 = vmatpush1.msra.mxu0 0.0
  %3608 = vmatprep.subr.mxu0 0.0
  %3609 = vmatpush1.msra.mxu0 0.0
  %3610 = vmatprep.subr.mxu0 0.0
  %3611 = vmatpush1.msra.mxu0 0.0
  %3612 = vmatprep.subr.mxu0 0.0
  %3613 = vmatpush1.msra.mxu0 0.0
  %3614 = vmatprep.subr.mxu0 0.0
  %3615 = vmatpush1.msra.mxu0 0.0
  %3616 = vmatprep.subr.mxu0 0.0
  %3617 = vmatpush1.msra.mxu0 0.0
  %3618 = vmatprep.subr.mxu0 0.0
  %3619 = vmatpush1.msra.mxu0 0.0
  %3620 = vmatprep.subr.mxu0 0.0
  %3621 = vmatpush1.msra.mxu0 0.0
  %3622 = vmatprep.subr.mxu0 0.0
  %3623 = vmatpush1.msra.mxu0 0.0
  %3624 = vmatprep.subr.mxu0 0.0
  %3625 = vmatpush1.msra.mxu0 0.0
  %3626 = vmatprep.subr.mxu0 0.0
  %3627 = vmatpush1.msra.mxu0 0.0
  %3628 = vmatprep.subr.mxu0 0.0
  %3629 = vmatpush1.msra.mxu0 0.0
  %3630 = vmatprep.subr.mxu0 0.0
  %3631 = vmatpush1.msra.mxu0 0.0
  %3632 = vmatprep.mubr.f32.mxu0 0.0
  %v3633 = vand.u32 %v3396, 4294901760
  %3634 = vmatmul.mubr.f32.gmra.mrb[0].mxu0 %v3633
  %v3635 = vpop.f32.mrb[0].mxu0
  %v3636 = vadd.f32 %v3485, %v3635
  %v3637 = vpop.f32.mrb[0].mxu0
  %3638 = vdwg.mxu0
  %3639 = vmatprep.subr.mxu0 0.0
  %v3640 = vand.u32 %v22, 4294901760
  %v3641 = vsub.f32 %v22, %v3640
  %3642 = vmatpush1.msra.mxu0 %v3641
  %3643 = vmatprep.subr.mxu0 0.0
  %v3644 = vand.u32 %v23, 4294901760
  %v3645 = vsub.f32 %v23, %v3644
  %3646 = vmatpush1.msra.mxu0 %v3645
  %3647 = vmatprep.subr.mxu0 0.0
  %v3648 = vand.u32 %v24, 4294901760
  %v3649 = vsub.f32 %v24, %v3648
  %3650 = vmatpush1.msra.mxu0 %v3649
  %3651 = vmatprep.subr.mxu0 0.0
  %v3652 = vand.u32 %v25, 4294901760
  %v3653 = vsub.f32 %v25, %v3652
  %3654 = vmatpush1.msra.mxu0 %v3653
  %3655 = vmatprep.subr.mxu0 0.0
  %v3656 = vand.u32 %v26, 4294901760
  %v3657 = vsub.f32 %v26, %v3656
  %3658 = vmatpush1.msra.mxu0 %v3657
  %3659 = vmatprep.subr.mxu0 0.0
  %v3660 = vand.u32 %v27, 4294901760
  %v3661 = vsub.f32 %v27, %v3660
  %3662 = vmatpush1.msra.mxu0 %v3661
  %3663 = vmatprep.subr.mxu0 0.0
  %v3664 = vand.u32 %v28, 4294901760
  %v3665 = vsub.f32 %v28, %v3664
  %3666 = vmatpush1.msra.mxu0 %v3665
  %3667 = vmatprep.subr.mxu0 0.0
  %v3668 = vand.u32 %v29, 4294901760
  %v3669 = vsub.f32 %v29, %v3668
  %3670 = vmatpush1.msra.mxu0 %v3669
  %3671 = vmatprep.subr.mxu0 0.0
  %v3672 = vand.u32 %v30, 4294901760
  %v3673 = vsub.f32 %v30, %v3672
  %3674 = vmatpush1.msra.mxu0 %v3673
  %3675 = vmatprep.subr.mxu0 0.0
  %v3676 = vand.u32 %v31, 4294901760
  %v3677 = vsub.f32 %v31, %v3676
  %3678 = vmatpush1.msra.mxu0 %v3677
  %3679 = vmatprep.subr.mxu0 0.0
  %v3680 = vand.u32 %v32, 4294901760
  %v3681 = vsub.f32 %v32, %v3680
  %3682 = vmatpush1.msra.mxu0 %v3681
  %3683 = vmatprep.subr.mxu0 0.0
  %v3684 = vand.u32 %v33, 4294901760
  %v3685 = vsub.f32 %v33, %v3684
  %3686 = vmatpush1.msra.mxu0 %v3685
  %3687 = vmatprep.subr.mxu0 0.0
  %v3688 = vand.u32 %v34, 4294901760
  %v3689 = vsub.f32 %v34, %v3688
  %3690 = vmatpush1.msra.mxu0 %v3689
  %3691 = vmatprep.subr.mxu0 0.0
  %v3692 = vand.u32 %v35, 4294901760
  %v3693 = vsub.f32 %v35, %v3692
  %3694 = vmatpush1.msra.mxu0 %v3693
  %3695 = vmatprep.subr.mxu0 0.0
  %v3696 = vand.u32 %v36, 4294901760
  %v3697 = vsub.f32 %v36, %v3696
  %3698 = vmatpush1.msra.mxu0 %v3697
  %3699 = vmatprep.subr.mxu0 0.0
  %v3700 = vand.u32 %v37, 4294901760
  %v3701 = vsub.f32 %v37, %v3700
  %3702 = vmatpush1.msra.mxu0 %v3701
  %3703 = vmatprep.subr.mxu0 0.0
  %3704 = vmatpush1.msra.mxu0 0.0
  %3705 = vmatprep.subr.mxu0 0.0
  %3706 = vmatpush1.msra.mxu0 0.0
  %3707 = vmatprep.subr.mxu0 0.0
  %3708 = vmatpush1.msra.mxu0 0.0
  %3709 = vmatprep.subr.mxu0 0.0
  %3710 = vmatpush1.msra.mxu0 0.0
  %3711 = vmatprep.subr.mxu0 0.0
  %3712 = vmatpush1.msra.mxu0 0.0
  %3713 = vmatprep.subr.mxu0 0.0
  %3714 = vmatpush1.msra.mxu0 0.0
  %3715 = vmatprep.subr.mxu0 0.0
  %3716 = vmatpush1.msra.mxu0 0.0
  %3717 = vmatprep.subr.mxu0 0.0
  %3718 = vmatpush1.msra.mxu0 0.0
  %3719 = vmatprep.subr.mxu0 0.0
  %3720 = vmatpush1.msra.mxu0 0.0
  %3721 = vmatprep.subr.mxu0 0.0
  %3722 = vmatpush1.msra.mxu0 0.0
  %3723 = vmatprep.subr.mxu0 0.0
  %3724 = vmatpush1.msra.mxu0 0.0
  %3725 = vmatprep.subr.mxu0 0.0
  %3726 = vmatpush1.msra.mxu0 0.0
  %3727 = vmatprep.subr.mxu0 0.0
  %3728 = vmatpush1.msra.mxu0 0.0
  %3729 = vmatprep.subr.mxu0 0.0
  %3730 = vmatpush1.msra.mxu0 0.0
  %3731 = vmatprep.subr.mxu0 0.0
  %3732 = vmatpush1.msra.mxu0 0.0
  %3733 = vmatprep.subr.mxu0 0.0
  %3734 = vmatpush1.msra.mxu0 0.0
  %3735 = vmatprep.mubr.f32.mxu0 0.0
  %v3736 = vand.u32 %v3396, 4294901760
  %v3737 = vsub.f32 %v3396, %v3736
  %3738 = vmatmul.mubr.f32.gmra.mrb[0].mxu0 %v3737
  %v3739 = vpop.f32.mrb[0].mxu0
  %v3740 = vadd.f32 %v3636, %v3739
  %v3741 = vpop.f32.mrb[0].mxu0
  %3742 = vdwg.mxu0
  %3743 = vmatprep.subr.mxu0 0.0
  %v3744 = vand.u32 %v22, 4294901760
  %3745 = vmatpush1.msra.mxu0 %v3744
  %3746 = vmatprep.subr.mxu0 0.0
  %v3747 = vand.u32 %v23, 4294901760
  %3748 = vmatpush1.msra.mxu0 %v3747
  %3749 = vmatprep.subr.mxu0 0.0
  %v3750 = vand.u32 %v24, 4294901760
  %3751 = vmatpush1.msra.mxu0 %v3750
  %3752 = vmatprep.subr.mxu0 0.0
  %v3753 = vand.u32 %v25, 4294901760
  %3754 = vmatpush1.msra.mxu0 %v3753
  %3755 = vmatprep.subr.mxu0 0.0
  %v3756 = vand.u32 %v26, 4294901760
  %3757 = vmatpush1.msra.mxu0 %v3756
  %3758 = vmatprep.subr.mxu0 0.0
  %v3759 = vand.u32 %v27, 4294901760
  %3760 = vmatpush1.msra.mxu0 %v3759
  %3761 = vmatprep.subr.mxu0 0.0
  %v3762 = vand.u32 %v28, 4294901760
  %3763 = vmatpush1.msra.mxu0 %v3762
  %3764 = vmatprep.subr.mxu0 0.0
  %v3765 = vand.u32 %v29, 4294901760
  %3766 = vmatpush1.msra.mxu0 %v3765
  %3767 = vmatprep.subr.mxu0 0.0
  %v3768 = vand.u32 %v30, 4294901760
  %3769 = vmatpush1.msra.mxu0 %v3768
  %3770 = vmatprep.subr.mxu0 0.0
  %v3771 = vand.u32 %v31, 4294901760
  %3772 = vmatpush1.msra.mxu0 %v3771
  %3773 = vmatprep.subr.mxu0 0.0
  %v3774 = vand.u32 %v32, 4294901760
  %3775 = vmatpush1.msra.mxu0 %v3774
  %3776 = vmatprep.subr.mxu0 0.0
  %v3777 = vand.u32 %v33, 4294901760
  %3778 = vmatpush1.msra.mxu0 %v3777
  %3779 = vmatprep.subr.mxu0 0.0
  %v3780 = vand.u32 %v34, 4294901760
  %3781 = vmatpush1.msra.mxu0 %v3780
  %3782 = vmatprep.subr.mxu0 0.0
  %v3783 = vand.u32 %v35, 4294901760
  %3784 = vmatpush1.msra.mxu0 %v3783
  %3785 = vmatprep.subr.mxu0 0.0
  %v3786 = vand.u32 %v36, 4294901760
  %3787 = vmatpush1.msra.mxu0 %v3786
  %3788 = vmatprep.subr.mxu0 0.0
  %v3789 = vand.u32 %v37, 4294901760
  %3790 = vmatpush1.msra.mxu0 %v3789
  %3791 = vmatprep.subr.mxu0 0.0
  %3792 = vmatpush1.msra.mxu0 0.0
  %3793 = vmatprep.subr.mxu0 0.0
  %3794 = vmatpush1.msra.mxu0 0.0
  %3795 = vmatprep.subr.mxu0 0.0
  %3796 = vmatpush1.msra.mxu0 0.0
  %3797 = vmatprep.subr.mxu0 0.0
  %3798 = vmatpush1.msra.mxu0 0.0
  %3799 = vmatprep.subr.mxu0 0.0
  %3800 = vmatpush1.msra.mxu0 0.0
  %3801 = vmatprep.subr.mxu0 0.0
  %3802 = vmatpush1.msra.mxu0 0.0
  %3803 = vmatprep.subr.mxu0 0.0
  %3804 = vmatpush1.msra.mxu0 0.0
  %3805 = vmatprep.subr.mxu0 0.0
  %3806 = vmatpush1.msra.mxu0 0.0
  %3807 = vmatprep.subr.mxu0 0.0
  %3808 = vmatpush1.msra.mxu0 0.0
  %3809 = vmatprep.subr.mxu0 0.0
  %3810 = vmatpush1.msra.mxu0 0.0
  %3811 = vmatprep.subr.mxu0 0.0
  %3812 = vmatpush1.msra.mxu0 0.0
  %3813 = vmatprep.subr.mxu0 0.0
  %3814 = vmatpush1.msra.mxu0 0.0
  %3815 = vmatprep.subr.mxu0 0.0
  %3816 = vmatpush1.msra.mxu0 0.0
  %3817 = vmatprep.subr.mxu0 0.0
  %3818 = vmatpush1.msra.mxu0 0.0
  %3819 = vmatprep.subr.mxu0 0.0
  %3820 = vmatpush1.msra.mxu0 0.0
  %3821 = vmatprep.subr.mxu0 0.0
  %3822 = vmatpush1.msra.mxu0 0.0
  %3823 = vmatprep.mubr.f32.mxu0 0.0
  %v3824 = vand.u32 %v3396, 4294901760
  %v3825 = vsub.f32 %v3396, %v3824
  %v3826 = vand.u32 %v3825, 4294901760
  %3827 = vmatmul.mubr.f32.gmra.mrb[0].mxu0 %v3826
  %v3828 = vpop.f32.mrb[0].mxu0
  %v3829 = vadd.f32 %v3740, %v3828
  %v3830 = vpop.f32.mrb[0].mxu0
  %3831 = vdwg.mxu0
  %3832 = vmatprep.subr.mxu0 0.0
  %v3833 = vand.u32 %v22, 4294901760
  %v3834 = vsub.f32 %v22, %v3833
  %v3835 = vand.u32 %v3834, 4294901760
  %3836 = vmatpush1.msra.mxu0 %v3835
  %3837 = vmatprep.subr.mxu0 0.0
  %v3838 = vand.u32 %v23, 4294901760
  %v3839 = vsub.f32 %v23, %v3838
  %v3840 = vand.u32 %v3839, 4294901760
  %3841 = vmatpush1.msra.mxu0 %v3840
  %3842 = vmatprep.subr.mxu0 0.0
  %v3843 = vand.u32 %v24, 4294901760
  %v3844 = vsub.f32 %v24, %v3843
  %v3845 = vand.u32 %v3844, 4294901760
  %3846 = vmatpush1.msra.mxu0 %v3845
  %3847 = vmatprep.subr.mxu0 0.0
  %v3848 = vand.u32 %v25, 4294901760
  %v3849 = vsub.f32 %v25, %v3848
  %v3850 = vand.u32 %v3849, 4294901760
  %3851 = vmatpush1.msra.mxu0 %v3850
  %3852 = vmatprep.subr.mxu0 0.0
  %v3853 = vand.u32 %v26, 4294901760
  %v3854 = vsub.f32 %v26, %v3853
  %v3855 = vand.u32 %v3854, 4294901760
  %3856 = vmatpush1.msra.mxu0 %v3855
  %3857 = vmatprep.subr.mxu0 0.0
  %v3858 = vand.u32 %v27, 4294901760
  %v3859 = vsub.f32 %v27, %v3858
  %v3860 = vand.u32 %v3859, 4294901760
  %3861 = vmatpush1.msra.mxu0 %v3860
  %3862 = vmatprep.subr.mxu0 0.0
  %v3863 = vand.u32 %v28, 4294901760
  %v3864 = vsub.f32 %v28, %v3863
  %v3865 = vand.u32 %v3864, 4294901760
  %3866 = vmatpush1.msra.mxu0 %v3865
  %3867 = vmatprep.subr.mxu0 0.0
  %v3868 = vand.u32 %v29, 4294901760
  %v3869 = vsub.f32 %v29, %v3868
  %v3870 = vand.u32 %v3869, 4294901760
  %3871 = vmatpush1.msra.mxu0 %v3870
  %3872 = vmatprep.subr.mxu0 0.0
  %v3873 = vand.u32 %v30, 4294901760
  %v3874 = vsub.f32 %v30, %v3873
  %v3875 = vand.u32 %v3874, 4294901760
  %3876 = vmatpush1.msra.mxu0 %v3875
  %3877 = vmatprep.subr.mxu0 0.0
  %v3878 = vand.u32 %v31, 4294901760
  %v3879 = vsub.f32 %v31, %v3878
  %v3880 = vand.u32 %v3879, 4294901760
  %3881 = vmatpush1.msra.mxu0 %v3880
  %3882 = vmatprep.subr.mxu0 0.0
  %v3883 = vand.u32 %v32, 4294901760
  %v3884 = vsub.f32 %v32, %v3883
  %v3885 = vand.u32 %v3884, 4294901760
  %3886 = vmatpush1.msra.mxu0 %v3885
  %3887 = vmatprep.subr.mxu0 0.0
  %v3888 = vand.u32 %v33, 4294901760
  %v3889 = vsub.f32 %v33, %v3888
  %v3890 = vand.u32 %v3889, 4294901760
  %3891 = vmatpush1.msra.mxu0 %v3890
  %3892 = vmatprep.subr.mxu0 0.0
  %v3893 = vand.u32 %v34, 4294901760
  %v3894 = vsub.f32 %v34, %v3893
  %v3895 = vand.u32 %v3894, 4294901760
  %3896 = vmatpush1.msra.mxu0 %v3895
  %3897 = vmatprep.subr.mxu0 0.0
  %v3898 = vand.u32 %v35, 4294901760
  %v3899 = vsub.f32 %v35, %v3898
  %v3900 = vand.u32 %v3899, 4294901760
  %3901 = vmatpush1.msra.mxu0 %v3900
  %3902 = vmatprep.subr.mxu0 0.0
  %v3903 = vand.u32 %v36, 4294901760
  %v3904 = vsub.f32 %v36, %v3903
  %v3905 = vand.u32 %v3904, 4294901760
  %3906 = vmatpush1.msra.mxu0 %v3905
  %3907 = vmatprep.subr.mxu0 0.0
  %v3908 = vand.u32 %v37, 4294901760
  %v3909 = vsub.f32 %v37, %v3908
  %v3910 = vand.u32 %v3909, 4294901760
  %3911 = vmatpush1.msra.mxu0 %v3910
  %3912 = vmatprep.subr.mxu0 0.0
  %3913 = vmatpush1.msra.mxu0 0.0
  %3914 = vmatprep.subr.mxu0 0.0
  %3915 = vmatpush1.msra.mxu0 0.0
  %3916 = vmatprep.subr.mxu0 0.0
  %3917 = vmatpush1.msra.mxu0 0.0
  %3918 = vmatprep.subr.mxu0 0.0
  %3919 = vmatpush1.msra.mxu0 0.0
  %3920 = vmatprep.subr.mxu0 0.0
  %3921 = vmatpush1.msra.mxu0 0.0
  %3922 = vmatprep.subr.mxu0 0.0
  %3923 = vmatpush1.msra.mxu0 0.0
  %3924 = vmatprep.subr.mxu0 0.0
  %3925 = vmatpush1.msra.mxu0 0.0
  %3926 = vmatprep.subr.mxu0 0.0
  %3927 = vmatpush1.msra.mxu0 0.0
  %3928 = vmatprep.subr.mxu0 0.0
  %3929 = vmatpush1.msra.mxu0 0.0
  %3930 = vmatprep.subr.mxu0 0.0
  %3931 = vmatpush1.msra.mxu0 0.0
  %3932 = vmatprep.subr.mxu0 0.0
  %3933 = vmatpush1.msra.mxu0 0.0
  %3934 = vmatprep.subr.mxu0 0.0
  %3935 = vmatpush1.msra.mxu0 0.0
  %3936 = vmatprep.subr.mxu0 0.0
  %3937 = vmatpush1.msra.mxu0 0.0
  %3938 = vmatprep.subr.mxu0 0.0
  %3939 = vmatpush1.msra.mxu0 0.0
  %3940 = vmatprep.subr.mxu0 0.0
  %3941 = vmatpush1.msra.mxu0 0.0
  %3942 = vmatprep.subr.mxu0 0.0
  %3943 = vmatpush1.msra.mxu0 0.0
  %3944 = vmatprep.mubr.f32.mxu0 0.0
  %v3945 = vand.u32 %v3396, 4294901760
  %3946 = vmatmul.mubr.f32.gmra.mrb[0].mxu0 %v3945
  %v3947 = vpop.f32.mrb[0].mxu0
  %v3948 = vadd.f32 %v3829, %v3947
  %v3949 = vpop.f32.mrb[0].mxu0
  %3950 = vdwg.mxu0
  %3951 = vmatprep.subr.mxu0 0.0
  %v3952 = vand.u32 %v22, 4294901760
  %3953 = vmatpush1.msra.mxu0 %v3952
  %3954 = vmatprep.subr.mxu0 0.0
  %v3955 = vand.u32 %v23, 4294901760
  %3956 = vmatpush1.msra.mxu0 %v3955
  %3957 = vmatprep.subr.mxu0 0.0
  %v3958 = vand.u32 %v24, 4294901760
  %3959 = vmatpush1.msra.mxu0 %v3958
  %3960 = vmatprep.subr.mxu0 0.0
  %v3961 = vand.u32 %v25, 4294901760
  %3962 = vmatpush1.msra.mxu0 %v3961
  %3963 = vmatprep.subr.mxu0 0.0
  %v3964 = vand.u32 %v26, 4294901760
  %3965 = vmatpush1.msra.mxu0 %v3964
  %3966 = vmatprep.subr.mxu0 0.0
  %v3967 = vand.u32 %v27, 4294901760
  %3968 = vmatpush1.msra.mxu0 %v3967
  %3969 = vmatprep.subr.mxu0 0.0
  %v3970 = vand.u32 %v28, 4294901760
  %3971 = vmatpush1.msra.mxu0 %v3970
  %3972 = vmatprep.subr.mxu0 0.0
  %v3973 = vand.u32 %v29, 4294901760
  %3974 = vmatpush1.msra.mxu0 %v3973
  %3975 = vmatprep.subr.mxu0 0.0
  %v3976 = vand.u32 %v30, 4294901760
  %3977 = vmatpush1.msra.mxu0 %v3976
  %3978 = vmatprep.subr.mxu0 0.0
  %v3979 = vand.u32 %v31, 4294901760
  %3980 = vmatpush1.msra.mxu0 %v3979
  %3981 = vmatprep.subr.mxu0 0.0
  %v3982 = vand.u32 %v32, 4294901760
  %3983 = vmatpush1.msra.mxu0 %v3982
  %3984 = vmatprep.subr.mxu0 0.0
  %v3985 = vand.u32 %v33, 4294901760
  %3986 = vmatpush1.msra.mxu0 %v3985
  %3987 = vmatprep.subr.mxu0 0.0
  %v3988 = vand.u32 %v34, 4294901760
  %3989 = vmatpush1.msra.mxu0 %v3988
  %3990 = vmatprep.subr.mxu0 0.0
  %v3991 = vand.u32 %v35, 4294901760
  %3992 = vmatpush1.msra.mxu0 %v3991
  %3993 = vmatprep.subr.mxu0 0.0
  %v3994 = vand.u32 %v36, 4294901760
  %3995 = vmatpush1.msra.mxu0 %v3994
  %3996 = vmatprep.subr.mxu0 0.0
  %v3997 = vand.u32 %v37, 4294901760
  %3998 = vmatpush1.msra.mxu0 %v3997
  %3999 = vmatprep.subr.mxu0 0.0
  %4000 = vmatpush1.msra.mxu0 0.0
  %4001 = vmatprep.subr.mxu0 0.0
  %4002 = vmatpush1.msra.mxu0 0.0
  %4003 = vmatprep.subr.mxu0 0.0
  %4004 = vmatpush1.msra.mxu0 0.0
  %4005 = vmatprep.subr.mxu0 0.0
  %4006 = vmatpush1.msra.mxu0 0.0
  %4007 = vmatprep.subr.mxu0 0.0
  %4008 = vmatpush1.msra.mxu0 0.0
  %4009 = vmatprep.subr.mxu0 0.0
  %4010 = vmatpush1.msra.mxu0 0.0
  %4011 = vmatprep.subr.mxu0 0.0
  %4012 = vmatpush1.msra.mxu0 0.0
  %4013 = vmatprep.subr.mxu0 0.0
  %4014 = vmatpush1.msra.mxu0 0.0
  %4015 = vmatprep.subr.mxu0 0.0
  %4016 = vmatpush1.msra.mxu0 0.0
  %4017 = vmatprep.subr.mxu0 0.0
  %4018 = vmatpush1.msra.mxu0 0.0
  %4019 = vmatprep.subr.mxu0 0.0
  %4020 = vmatpush1.msra.mxu0 0.0
  %4021 = vmatprep.subr.mxu0 0.0
  %4022 = vmatpush1.msra.mxu0 0.0
  %4023 = vmatprep.subr.mxu0 0.0
  %4024 = vmatpush1.msra.mxu0 0.0
  %4025 = vmatprep.subr.mxu0 0.0
  %4026 = vmatpush1.msra.mxu0 0.0
  %4027 = vmatprep.subr.mxu0 0.0
  %4028 = vmatpush1.msra.mxu0 0.0
  %4029 = vmatprep.subr.mxu0 0.0
  %4030 = vmatpush1.msra.mxu0 0.0
  %4031 = vmatprep.mubr.f32.mxu0 0.0
  %v4032 = vand.u32 %v3396, 4294901760
  %4033 = vmatmul.mubr.f32.gmra.mrb[0].mxu0 %v4032
  %v4034 = vpop.f32.mrb[0].mxu0
  %v4035 = vadd.f32 %v3948, %v4034
  %v4036 = vpop.f32.mrb[0].mxu0
  %4037 = vdwg.mxu0
  %vm4038 = vcmp.gt.f32.partialorder %v21, 0.5
  %v4039 = vsel %vm4038, 1, 0
  %v4040 = vlaneseq
  %v4041 = vshrl.u32 %v4040, 7
  %v4042 = vsub.s32 0, %v4041
  %v4043 = vrot.slane %v4039, %v4042
  %vm4044 = vcmp.eq.s32.totalorder %v4043, 1
  %v4045 = vsel %vm4044, %v3396, -1e+30
  %v4046 = vsel %vm73, %v4045, -inf
  %4047 = vmax.xlane.f32.xlu0 %v4046
  %v4048 = vpop.xlane.xlu0 %4047
  %v4049 = vlaneseq
  %v4050 = vshrl.u32 %v4049, 7
  %v4051 = vsub.s32 1, %v4050
  %v4052 = vrot.slane %v4039, %v4051
  %vm4053 = vcmp.eq.s32.totalorder %v4052, 1
  %v4054 = vsel %vm4053, %v3396, -1e+30
  %v4055 = vsel %vm73, %v4054, -inf
  %4056 = vmax.xlane.f32.xlu0 %v4055
  %v4057 = vpop.xlane.xlu0 %4056
  %vm4058 = vcmask 7168
  %v4059 = vsel %vm4058, %v4048, %v4057
  %4061 = vrot.lane.b32.xlu0 %v4059, 2
  %v4062 = vpop.permute.xlu0 %4061
  %vm4064 = vcmask 15360
  %v4065 = vsel %vm4064, %v4035, %v4062
  %vm4066 = vcmask 31744
  %v4068 = vsel %vm4066, %v49, 0
  %v4071 = vsel %vm73, %v4065, 0
  %4073 = vmatprep.subr.mxu0 0.0
  %v4074 = vand.u32 %v4071, 4294901760
  %4075 = vmatpush1.msra.mxu0 %v4074
  %4076 = vmatprep.subr.mxu0 0.0
  %4077 = vmatpush1.msra.mxu0 0.0
  %4078 = vmatprep.subr.mxu0 0.0
  %4079 = vmatpush1.msra.mxu0 0.0
  %4080 = vmatprep.subr.mxu0 0.0
  %4081 = vmatpush1.msra.mxu0 0.0
  %4082 = vmatprep.subr.mxu0 0.0
  %4083 = vmatpush1.msra.mxu0 0.0
  %4084 = vmatprep.subr.mxu0 0.0
  %4085 = vmatpush1.msra.mxu0 0.0
  %4086 = vmatprep.subr.mxu0 0.0
  %4087 = vmatpush1.msra.mxu0 0.0
  %4088 = vmatprep.subr.mxu0 0.0
  %4089 = vmatpush1.msra.mxu0 0.0
  %4090 = vmatprep.subr.mxu0 0.0
  %4091 = vmatpush1.msra.mxu0 0.0
  %4092 = vmatprep.subr.mxu0 0.0
  %4093 = vmatpush1.msra.mxu0 0.0
  %4094 = vmatprep.subr.mxu0 0.0
  %4095 = vmatpush1.msra.mxu0 0.0
  %4096 = vmatprep.subr.mxu0 0.0
  %4097 = vmatpush1.msra.mxu0 0.0
  %4098 = vmatprep.subr.mxu0 0.0
  %4099 = vmatpush1.msra.mxu0 0.0
  %4100 = vmatprep.subr.mxu0 0.0
  %4101 = vmatpush1.msra.mxu0 0.0
  %4102 = vmatprep.subr.mxu0 0.0
  %4103 = vmatpush1.msra.mxu0 0.0
  %4104 = vmatprep.subr.mxu0 0.0
  %4105 = vmatpush1.msra.mxu0 0.0
  %4106 = vmatprep.subr.mxu0 0.0
  %4107 = vmatpush1.msra.mxu0 0.0
  %4108 = vmatprep.subr.mxu0 0.0
  %4109 = vmatpush1.msra.mxu0 0.0
  %4110 = vmatprep.subr.mxu0 0.0
  %4111 = vmatpush1.msra.mxu0 0.0
  %4112 = vmatprep.subr.mxu0 0.0
  %4113 = vmatpush1.msra.mxu0 0.0
  %4114 = vmatprep.subr.mxu0 0.0
  %4115 = vmatpush1.msra.mxu0 0.0
  %4116 = vmatprep.subr.mxu0 0.0
  %4117 = vmatpush1.msra.mxu0 0.0
  %4118 = vmatprep.subr.mxu0 0.0
  %4119 = vmatpush1.msra.mxu0 0.0
  %4120 = vmatprep.subr.mxu0 0.0
  %4121 = vmatpush1.msra.mxu0 0.0
  %4122 = vmatprep.subr.mxu0 0.0
  %4123 = vmatpush1.msra.mxu0 0.0
  %4124 = vmatprep.subr.mxu0 0.0
  %4125 = vmatpush1.msra.mxu0 0.0
  %4126 = vmatprep.subr.mxu0 0.0
  %4127 = vmatpush1.msra.mxu0 0.0
  %4128 = vmatprep.subr.mxu0 0.0
  %4129 = vmatpush1.msra.mxu0 0.0
  %4130 = vmatprep.subr.mxu0 0.0
  %4131 = vmatpush1.msra.mxu0 0.0
  %4132 = vmatprep.subr.mxu0 0.0
  %4133 = vmatpush1.msra.mxu0 0.0
  %4134 = vmatprep.subr.mxu0 0.0
  %4135 = vmatpush1.msra.mxu0 0.0
  %4136 = vmatprep.subr.mxu0 0.0
  %4137 = vmatpush1.msra.mxu0 0.0
  %4138 = vmatprep.mubr.f32.mxu0 0.0
  %v4139 = vand.u32 %v4068, 4294901760
  %v4140 = vsub.f32 %v4068, %v4139
  %v4141 = vand.u32 %v4140, 4294901760
  %v4142 = vsub.f32 %v4140, %v4141
  %v4143 = vand.u32 %v4142, 4294901760
  %4144 = vmatmul.mubr.f32.gmra.mrb[0].mxu0 %v4143
  %v4145 = vpop.f32.mrb[0].mxu0
  %v4146 = vadd.f32 0.0, %v4145
  %v4147 = vpop.f32.mrb[0].mxu0
  %4148 = vdwg.mxu0
  %4149 = vmatprep.subr.mxu0 0.0
  %v4150 = vand.u32 %v4071, 4294901760
  %v4151 = vsub.f32 %v4071, %v4150
  %v4152 = vand.u32 %v4151, 4294901760
  %v4153 = vsub.f32 %v4151, %v4152
  %v4154 = vand.u32 %v4153, 4294901760
  %4155 = vmatpush1.msra.mxu0 %v4154
  %4156 = vmatprep.subr.mxu0 0.0
  %4157 = vmatpush1.msra.mxu0 0.0
  %4158 = vmatprep.subr.mxu0 0.0
  %4159 = vmatpush1.msra.mxu0 0.0
  %4160 = vmatprep.subr.mxu0 0.0
  %4161 = vmatpush1.msra.mxu0 0.0
  %4162 = vmatprep.subr.mxu0 0.0
  %4163 = vmatpush1.msra.mxu0 0.0
  %4164 = vmatprep.subr.mxu0 0.0
  %4165 = vmatpush1.msra.mxu0 0.0
  %4166 = vmatprep.subr.mxu0 0.0
  %4167 = vmatpush1.msra.mxu0 0.0
  %4168 = vmatprep.subr.mxu0 0.0
  %4169 = vmatpush1.msra.mxu0 0.0
  %4170 = vmatprep.subr.mxu0 0.0
  %4171 = vmatpush1.msra.mxu0 0.0
  %4172 = vmatprep.subr.mxu0 0.0
  %4173 = vmatpush1.msra.mxu0 0.0
  %4174 = vmatprep.subr.mxu0 0.0
  %4175 = vmatpush1.msra.mxu0 0.0
  %4176 = vmatprep.subr.mxu0 0.0
  %4177 = vmatpush1.msra.mxu0 0.0
  %4178 = vmatprep.subr.mxu0 0.0
  %4179 = vmatpush1.msra.mxu0 0.0
  %4180 = vmatprep.subr.mxu0 0.0
  %4181 = vmatpush1.msra.mxu0 0.0
  %4182 = vmatprep.subr.mxu0 0.0
  %4183 = vmatpush1.msra.mxu0 0.0
  %4184 = vmatprep.subr.mxu0 0.0
  %4185 = vmatpush1.msra.mxu0 0.0
  %4186 = vmatprep.subr.mxu0 0.0
  %4187 = vmatpush1.msra.mxu0 0.0
  %4188 = vmatprep.subr.mxu0 0.0
  %4189 = vmatpush1.msra.mxu0 0.0
  %4190 = vmatprep.subr.mxu0 0.0
  %4191 = vmatpush1.msra.mxu0 0.0
  %4192 = vmatprep.subr.mxu0 0.0
  %4193 = vmatpush1.msra.mxu0 0.0
  %4194 = vmatprep.subr.mxu0 0.0
  %4195 = vmatpush1.msra.mxu0 0.0
  %4196 = vmatprep.subr.mxu0 0.0
  %4197 = vmatpush1.msra.mxu0 0.0
  %4198 = vmatprep.subr.mxu0 0.0
  %4199 = vmatpush1.msra.mxu0 0.0
  %4200 = vmatprep.subr.mxu0 0.0
  %4201 = vmatpush1.msra.mxu0 0.0
  %4202 = vmatprep.subr.mxu0 0.0
  %4203 = vmatpush1.msra.mxu0 0.0
  %4204 = vmatprep.subr.mxu0 0.0
  %4205 = vmatpush1.msra.mxu0 0.0
  %4206 = vmatprep.subr.mxu0 0.0
  %4207 = vmatpush1.msra.mxu0 0.0
  %4208 = vmatprep.subr.mxu0 0.0
  %4209 = vmatpush1.msra.mxu0 0.0
  %4210 = vmatprep.subr.mxu0 0.0
  %4211 = vmatpush1.msra.mxu0 0.0
  %4212 = vmatprep.subr.mxu0 0.0
  %4213 = vmatpush1.msra.mxu0 0.0
  %4214 = vmatprep.subr.mxu0 0.0
  %4215 = vmatpush1.msra.mxu0 0.0
  %4216 = vmatprep.subr.mxu0 0.0
  %4217 = vmatpush1.msra.mxu0 0.0
  %4218 = vmatprep.mubr.f32.mxu0 0.0
  %v4219 = vand.u32 %v4068, 4294901760
  %4220 = vmatmul.mubr.f32.gmra.mrb[0].mxu0 %v4219
  %v4221 = vpop.f32.mrb[0].mxu0
  %v4222 = vadd.f32 %v4146, %v4221
  %v4223 = vpop.f32.mrb[0].mxu0
  %4224 = vdwg.mxu0
  %4225 = vmatprep.subr.mxu0 0.0
  %v4226 = vand.u32 %v4071, 4294901760
  %v4227 = vsub.f32 %v4071, %v4226
  %4228 = vmatpush1.msra.mxu0 %v4227
  %4229 = vmatprep.subr.mxu0 0.0
  %4230 = vmatpush1.msra.mxu0 0.0
  %4231 = vmatprep.subr.mxu0 0.0
  %4232 = vmatpush1.msra.mxu0 0.0
  %4233 = vmatprep.subr.mxu0 0.0
  %4234 = vmatpush1.msra.mxu0 0.0
  %4235 = vmatprep.subr.mxu0 0.0
  %4236 = vmatpush1.msra.mxu0 0.0
  %4237 = vmatprep.subr.mxu0 0.0
  %4238 = vmatpush1.msra.mxu0 0.0
  %4239 = vmatprep.subr.mxu0 0.0
  %4240 = vmatpush1.msra.mxu0 0.0
  %4241 = vmatprep.subr.mxu0 0.0
  %4242 = vmatpush1.msra.mxu0 0.0
  %4243 = vmatprep.subr.mxu0 0.0
  %4244 = vmatpush1.msra.mxu0 0.0
  %4245 = vmatprep.subr.mxu0 0.0
  %4246 = vmatpush1.msra.mxu0 0.0
  %4247 = vmatprep.subr.mxu0 0.0
  %4248 = vmatpush1.msra.mxu0 0.0
  %4249 = vmatprep.subr.mxu0 0.0
  %4250 = vmatpush1.msra.mxu0 0.0
  %4251 = vmatprep.subr.mxu0 0.0
  %4252 = vmatpush1.msra.mxu0 0.0
  %4253 = vmatprep.subr.mxu0 0.0
  %4254 = vmatpush1.msra.mxu0 0.0
  %4255 = vmatprep.subr.mxu0 0.0
  %4256 = vmatpush1.msra.mxu0 0.0
  %4257 = vmatprep.subr.mxu0 0.0
  %4258 = vmatpush1.msra.mxu0 0.0
  %4259 = vmatprep.subr.mxu0 0.0
  %4260 = vmatpush1.msra.mxu0 0.0
  %4261 = vmatprep.subr.mxu0 0.0
  %4262 = vmatpush1.msra.mxu0 0.0
  %4263 = vmatprep.subr.mxu0 0.0
  %4264 = vmatpush1.msra.mxu0 0.0
  %4265 = vmatprep.subr.mxu0 0.0
  %4266 = vmatpush1.msra.mxu0 0.0
  %4267 = vmatprep.subr.mxu0 0.0
  %4268 = vmatpush1.msra.mxu0 0.0
  %4269 = vmatprep.subr.mxu0 0.0
  %4270 = vmatpush1.msra.mxu0 0.0
  %4271 = vmatprep.subr.mxu0 0.0
  %4272 = vmatpush1.msra.mxu0 0.0
  %4273 = vmatprep.subr.mxu0 0.0
  %4274 = vmatpush1.msra.mxu0 0.0
  %4275 = vmatprep.subr.mxu0 0.0
  %4276 = vmatpush1.msra.mxu0 0.0
  %4277 = vmatprep.subr.mxu0 0.0
  %4278 = vmatpush1.msra.mxu0 0.0
  %4279 = vmatprep.subr.mxu0 0.0
  %4280 = vmatpush1.msra.mxu0 0.0
  %4281 = vmatprep.subr.mxu0 0.0
  %4282 = vmatpush1.msra.mxu0 0.0
  %4283 = vmatprep.subr.mxu0 0.0
  %4284 = vmatpush1.msra.mxu0 0.0
  %4285 = vmatprep.subr.mxu0 0.0
  %4286 = vmatpush1.msra.mxu0 0.0
  %4287 = vmatprep.subr.mxu0 0.0
  %4288 = vmatpush1.msra.mxu0 0.0
  %4289 = vmatprep.subr.mxu0 0.0
  %4290 = vmatpush1.msra.mxu0 0.0
  %4291 = vmatprep.mubr.f32.mxu0 0.0
  %v4292 = vand.u32 %v4068, 4294901760
  %v4293 = vsub.f32 %v4068, %v4292
  %4294 = vmatmul.mubr.f32.gmra.mrb[0].mxu0 %v4293
  %v4295 = vpop.f32.mrb[0].mxu0
  %v4296 = vadd.f32 %v4222, %v4295
  %v4297 = vpop.f32.mrb[0].mxu0
  %4298 = vdwg.mxu0
  %4299 = vmatprep.subr.mxu0 0.0
  %v4300 = vand.u32 %v4071, 4294901760
  %4301 = vmatpush1.msra.mxu0 %v4300
  %4302 = vmatprep.subr.mxu0 0.0
  %4303 = vmatpush1.msra.mxu0 0.0
  %4304 = vmatprep.subr.mxu0 0.0
  %4305 = vmatpush1.msra.mxu0 0.0
  %4306 = vmatprep.subr.mxu0 0.0
  %4307 = vmatpush1.msra.mxu0 0.0
  %4308 = vmatprep.subr.mxu0 0.0
  %4309 = vmatpush1.msra.mxu0 0.0
  %4310 = vmatprep.subr.mxu0 0.0
  %4311 = vmatpush1.msra.mxu0 0.0
  %4312 = vmatprep.subr.mxu0 0.0
  %4313 = vmatpush1.msra.mxu0 0.0
  %4314 = vmatprep.subr.mxu0 0.0
  %4315 = vmatpush1.msra.mxu0 0.0
  %4316 = vmatprep.subr.mxu0 0.0
  %4317 = vmatpush1.msra.mxu0 0.0
  %4318 = vmatprep.subr.mxu0 0.0
  %4319 = vmatpush1.msra.mxu0 0.0
  %4320 = vmatprep.subr.mxu0 0.0
  %4321 = vmatpush1.msra.mxu0 0.0
  %4322 = vmatprep.subr.mxu0 0.0
  %4323 = vmatpush1.msra.mxu0 0.0
  %4324 = vmatprep.subr.mxu0 0.0
  %4325 = vmatpush1.msra.mxu0 0.0
  %4326 = vmatprep.subr.mxu0 0.0
  %4327 = vmatpush1.msra.mxu0 0.0
  %4328 = vmatprep.subr.mxu0 0.0
  %4329 = vmatpush1.msra.mxu0 0.0
  %4330 = vmatprep.subr.mxu0 0.0
  %4331 = vmatpush1.msra.mxu0 0.0
  %4332 = vmatprep.subr.mxu0 0.0
  %4333 = vmatpush1.msra.mxu0 0.0
  %4334 = vmatprep.subr.mxu0 0.0
  %4335 = vmatpush1.msra.mxu0 0.0
  %4336 = vmatprep.subr.mxu0 0.0
  %4337 = vmatpush1.msra.mxu0 0.0
  %4338 = vmatprep.subr.mxu0 0.0
  %4339 = vmatpush1.msra.mxu0 0.0
  %4340 = vmatprep.subr.mxu0 0.0
  %4341 = vmatpush1.msra.mxu0 0.0
  %4342 = vmatprep.subr.mxu0 0.0
  %4343 = vmatpush1.msra.mxu0 0.0
  %4344 = vmatprep.subr.mxu0 0.0
  %4345 = vmatpush1.msra.mxu0 0.0
  %4346 = vmatprep.subr.mxu0 0.0
  %4347 = vmatpush1.msra.mxu0 0.0
  %4348 = vmatprep.subr.mxu0 0.0
  %4349 = vmatpush1.msra.mxu0 0.0
  %4350 = vmatprep.subr.mxu0 0.0
  %4351 = vmatpush1.msra.mxu0 0.0
  %4352 = vmatprep.subr.mxu0 0.0
  %4353 = vmatpush1.msra.mxu0 0.0
  %4354 = vmatprep.subr.mxu0 0.0
  %4355 = vmatpush1.msra.mxu0 0.0
  %4356 = vmatprep.subr.mxu0 0.0
  %4357 = vmatpush1.msra.mxu0 0.0
  %4358 = vmatprep.subr.mxu0 0.0
  %4359 = vmatpush1.msra.mxu0 0.0
  %4360 = vmatprep.subr.mxu0 0.0
  %4361 = vmatpush1.msra.mxu0 0.0
  %4362 = vmatprep.subr.mxu0 0.0
  %4363 = vmatpush1.msra.mxu0 0.0
  %4364 = vmatprep.mubr.f32.mxu0 0.0
  %v4365 = vand.u32 %v4068, 4294901760
  %v4366 = vsub.f32 %v4068, %v4365
  %v4367 = vand.u32 %v4366, 4294901760
  %4368 = vmatmul.mubr.f32.gmra.mrb[0].mxu0 %v4367
  %v4369 = vpop.f32.mrb[0].mxu0
  %v4370 = vadd.f32 %v4296, %v4369
  %v4371 = vpop.f32.mrb[0].mxu0
  %4372 = vdwg.mxu0
  %4373 = vmatprep.subr.mxu0 0.0
  %v4374 = vand.u32 %v4071, 4294901760
  %v4375 = vsub.f32 %v4071, %v4374
  %v4376 = vand.u32 %v4375, 4294901760
  %4377 = vmatpush1.msra.mxu0 %v4376
  %4378 = vmatprep.subr.mxu0 0.0
  %4379 = vmatpush1.msra.mxu0 0.0
  %4380 = vmatprep.subr.mxu0 0.0
  %4381 = vmatpush1.msra.mxu0 0.0
  %4382 = vmatprep.subr.mxu0 0.0
  %4383 = vmatpush1.msra.mxu0 0.0
  %4384 = vmatprep.subr.mxu0 0.0
  %4385 = vmatpush1.msra.mxu0 0.0
  %4386 = vmatprep.subr.mxu0 0.0
  %4387 = vmatpush1.msra.mxu0 0.0
  %4388 = vmatprep.subr.mxu0 0.0
  %4389 = vmatpush1.msra.mxu0 0.0
  %4390 = vmatprep.subr.mxu0 0.0
  %4391 = vmatpush1.msra.mxu0 0.0
  %4392 = vmatprep.subr.mxu0 0.0
  %4393 = vmatpush1.msra.mxu0 0.0
  %4394 = vmatprep.subr.mxu0 0.0
  %4395 = vmatpush1.msra.mxu0 0.0
  %4396 = vmatprep.subr.mxu0 0.0
  %4397 = vmatpush1.msra.mxu0 0.0
  %4398 = vmatprep.subr.mxu0 0.0
  %4399 = vmatpush1.msra.mxu0 0.0
  %4400 = vmatprep.subr.mxu0 0.0
  %4401 = vmatpush1.msra.mxu0 0.0
  %4402 = vmatprep.subr.mxu0 0.0
  %4403 = vmatpush1.msra.mxu0 0.0
  %4404 = vmatprep.subr.mxu0 0.0
  %4405 = vmatpush1.msra.mxu0 0.0
  %4406 = vmatprep.subr.mxu0 0.0
  %4407 = vmatpush1.msra.mxu0 0.0
  %4408 = vmatprep.subr.mxu0 0.0
  %4409 = vmatpush1.msra.mxu0 0.0
  %4410 = vmatprep.subr.mxu0 0.0
  %4411 = vmatpush1.msra.mxu0 0.0
  %4412 = vmatprep.subr.mxu0 0.0
  %4413 = vmatpush1.msra.mxu0 0.0
  %4414 = vmatprep.subr.mxu0 0.0
  %4415 = vmatpush1.msra.mxu0 0.0
  %4416 = vmatprep.subr.mxu0 0.0
  %4417 = vmatpush1.msra.mxu0 0.0
  %4418 = vmatprep.subr.mxu0 0.0
  %4419 = vmatpush1.msra.mxu0 0.0
  %4420 = vmatprep.subr.mxu0 0.0
  %4421 = vmatpush1.msra.mxu0 0.0
  %4422 = vmatprep.subr.mxu0 0.0
  %4423 = vmatpush1.msra.mxu0 0.0
  %4424 = vmatprep.subr.mxu0 0.0
  %4425 = vmatpush1.msra.mxu0 0.0
  %4426 = vmatprep.subr.mxu0 0.0
  %4427 = vmatpush1.msra.mxu0 0.0
  %4428 = vmatprep.subr.mxu0 0.0
  %4429 = vmatpush1.msra.mxu0 0.0
  %4430 = vmatprep.subr.mxu0 0.0
  %4431 = vmatpush1.msra.mxu0 0.0
  %4432 = vmatprep.subr.mxu0 0.0
  %4433 = vmatpush1.msra.mxu0 0.0
  %4434 = vmatprep.subr.mxu0 0.0
  %4435 = vmatpush1.msra.mxu0 0.0
  %4436 = vmatprep.subr.mxu0 0.0
  %4437 = vmatpush1.msra.mxu0 0.0
  %4438 = vmatprep.subr.mxu0 0.0
  %4439 = vmatpush1.msra.mxu0 0.0
  %4440 = vmatprep.mubr.f32.mxu0 0.0
  %v4441 = vand.u32 %v4068, 4294901760
  %4442 = vmatmul.mubr.f32.gmra.mrb[0].mxu0 %v4441
  %v4443 = vpop.f32.mrb[0].mxu0
  %v4444 = vadd.f32 %v4370, %v4443
  %v4445 = vpop.f32.mrb[0].mxu0
  %4446 = vdwg.mxu0
  %4447 = vmatprep.subr.mxu0 0.0
  %v4448 = vand.u32 %v4071, 4294901760
  %4449 = vmatpush1.msra.mxu0 %v4448
  %4450 = vmatprep.subr.mxu0 0.0
  %4451 = vmatpush1.msra.mxu0 0.0
  %4452 = vmatprep.subr.mxu0 0.0
  %4453 = vmatpush1.msra.mxu0 0.0
  %4454 = vmatprep.subr.mxu0 0.0
  %4455 = vmatpush1.msra.mxu0 0.0
  %4456 = vmatprep.subr.mxu0 0.0
  %4457 = vmatpush1.msra.mxu0 0.0
  %4458 = vmatprep.subr.mxu0 0.0
  %4459 = vmatpush1.msra.mxu0 0.0
  %4460 = vmatprep.subr.mxu0 0.0
  %4461 = vmatpush1.msra.mxu0 0.0
  %4462 = vmatprep.subr.mxu0 0.0
  %4463 = vmatpush1.msra.mxu0 0.0
  %4464 = vmatprep.subr.mxu0 0.0
  %4465 = vmatpush1.msra.mxu0 0.0
  %4466 = vmatprep.subr.mxu0 0.0
  %4467 = vmatpush1.msra.mxu0 0.0
  %4468 = vmatprep.subr.mxu0 0.0
  %4469 = vmatpush1.msra.mxu0 0.0
  %4470 = vmatprep.subr.mxu0 0.0
  %4471 = vmatpush1.msra.mxu0 0.0
  %4472 = vmatprep.subr.mxu0 0.0
  %4473 = vmatpush1.msra.mxu0 0.0
  %4474 = vmatprep.subr.mxu0 0.0
  %4475 = vmatpush1.msra.mxu0 0.0
  %4476 = vmatprep.subr.mxu0 0.0
  %4477 = vmatpush1.msra.mxu0 0.0
  %4478 = vmatprep.subr.mxu0 0.0
  %4479 = vmatpush1.msra.mxu0 0.0
  %4480 = vmatprep.subr.mxu0 0.0
  %4481 = vmatpush1.msra.mxu0 0.0
  %4482 = vmatprep.subr.mxu0 0.0
  %4483 = vmatpush1.msra.mxu0 0.0
  %4484 = vmatprep.subr.mxu0 0.0
  %4485 = vmatpush1.msra.mxu0 0.0
  %4486 = vmatprep.subr.mxu0 0.0
  %4487 = vmatpush1.msra.mxu0 0.0
  %4488 = vmatprep.subr.mxu0 0.0
  %4489 = vmatpush1.msra.mxu0 0.0
  %4490 = vmatprep.subr.mxu0 0.0
  %4491 = vmatpush1.msra.mxu0 0.0
  %4492 = vmatprep.subr.mxu0 0.0
  %4493 = vmatpush1.msra.mxu0 0.0
  %4494 = vmatprep.subr.mxu0 0.0
  %4495 = vmatpush1.msra.mxu0 0.0
  %4496 = vmatprep.subr.mxu0 0.0
  %4497 = vmatpush1.msra.mxu0 0.0
  %4498 = vmatprep.subr.mxu0 0.0
  %4499 = vmatpush1.msra.mxu0 0.0
  %4500 = vmatprep.subr.mxu0 0.0
  %4501 = vmatpush1.msra.mxu0 0.0
  %4502 = vmatprep.subr.mxu0 0.0
  %4503 = vmatpush1.msra.mxu0 0.0
  %4504 = vmatprep.subr.mxu0 0.0
  %4505 = vmatpush1.msra.mxu0 0.0
  %4506 = vmatprep.subr.mxu0 0.0
  %4507 = vmatpush1.msra.mxu0 0.0
  %4508 = vmatprep.subr.mxu0 0.0
  %4509 = vmatpush1.msra.mxu0 0.0
  %4510 = vmatprep.subr.mxu0 0.0
  %4511 = vmatpush1.msra.mxu0 0.0
  %4512 = vmatprep.mubr.f32.mxu0 0.0
  %v4513 = vand.u32 %v4068, 4294901760
  %4514 = vmatmul.mubr.f32.gmra.mrb[0].mxu0 %v4513
  %v4515 = vpop.f32.mrb[0].mxu0
  %v4516 = vadd.f32 %v4444, %v4515
  %v4517 = vpop.f32.mrb[0].mxu0
  %4518 = vdwg.mxu0
  %v4519 = vmax.f32 %v4516, 0.0
  %v4521 = vsel %vm4064, %v50, 0
  %v4524 = vsel %vm2928, %v4519, 0
  %4526 = vmatprep.subr.mxu0 0.0
  %v4527 = vand.u32 %v4524, 4294901760
  %4528 = vmatpush1.msra.mxu0 %v4527
  %4529 = vmatprep.subr.mxu0 0.0
  %4530 = vmatpush1.msra.mxu0 0.0
  %4531 = vmatprep.subr.mxu0 0.0
  %4532 = vmatpush1.msra.mxu0 0.0
  %4533 = vmatprep.subr.mxu0 0.0
  %4534 = vmatpush1.msra.mxu0 0.0
  %4535 = vmatprep.subr.mxu0 0.0
  %4536 = vmatpush1.msra.mxu0 0.0
  %4537 = vmatprep.subr.mxu0 0.0
  %4538 = vmatpush1.msra.mxu0 0.0
  %4539 = vmatprep.subr.mxu0 0.0
  %4540 = vmatpush1.msra.mxu0 0.0
  %4541 = vmatprep.subr.mxu0 0.0
  %4542 = vmatpush1.msra.mxu0 0.0
  %4543 = vmatprep.subr.mxu0 0.0
  %4544 = vmatpush1.msra.mxu0 0.0
  %4545 = vmatprep.subr.mxu0 0.0
  %4546 = vmatpush1.msra.mxu0 0.0
  %4547 = vmatprep.subr.mxu0 0.0
  %4548 = vmatpush1.msra.mxu0 0.0
  %4549 = vmatprep.subr.mxu0 0.0
  %4550 = vmatpush1.msra.mxu0 0.0
  %4551 = vmatprep.subr.mxu0 0.0
  %4552 = vmatpush1.msra.mxu0 0.0
  %4553 = vmatprep.subr.mxu0 0.0
  %4554 = vmatpush1.msra.mxu0 0.0
  %4555 = vmatprep.subr.mxu0 0.0
  %4556 = vmatpush1.msra.mxu0 0.0
  %4557 = vmatprep.subr.mxu0 0.0
  %4558 = vmatpush1.msra.mxu0 0.0
  %4559 = vmatprep.subr.mxu0 0.0
  %4560 = vmatpush1.msra.mxu0 0.0
  %4561 = vmatprep.subr.mxu0 0.0
  %4562 = vmatpush1.msra.mxu0 0.0
  %4563 = vmatprep.subr.mxu0 0.0
  %4564 = vmatpush1.msra.mxu0 0.0
  %4565 = vmatprep.subr.mxu0 0.0
  %4566 = vmatpush1.msra.mxu0 0.0
  %4567 = vmatprep.subr.mxu0 0.0
  %4568 = vmatpush1.msra.mxu0 0.0
  %4569 = vmatprep.subr.mxu0 0.0
  %4570 = vmatpush1.msra.mxu0 0.0
  %4571 = vmatprep.subr.mxu0 0.0
  %4572 = vmatpush1.msra.mxu0 0.0
  %4573 = vmatprep.subr.mxu0 0.0
  %4574 = vmatpush1.msra.mxu0 0.0
  %4575 = vmatprep.subr.mxu0 0.0
  %4576 = vmatpush1.msra.mxu0 0.0
  %4577 = vmatprep.subr.mxu0 0.0
  %4578 = vmatpush1.msra.mxu0 0.0
  %4579 = vmatprep.subr.mxu0 0.0
  %4580 = vmatpush1.msra.mxu0 0.0
  %4581 = vmatprep.subr.mxu0 0.0
  %4582 = vmatpush1.msra.mxu0 0.0
  %4583 = vmatprep.subr.mxu0 0.0
  %4584 = vmatpush1.msra.mxu0 0.0
  %4585 = vmatprep.subr.mxu0 0.0
  %4586 = vmatpush1.msra.mxu0 0.0
  %4587 = vmatprep.subr.mxu0 0.0
  %4588 = vmatpush1.msra.mxu0 0.0
  %4589 = vmatprep.subr.mxu0 0.0
  %4590 = vmatpush1.msra.mxu0 0.0
  %4591 = vmatprep.mubr.f32.mxu0 0.0
  %v4592 = vand.u32 %v4521, 4294901760
  %v4593 = vsub.f32 %v4521, %v4592
  %v4594 = vand.u32 %v4593, 4294901760
  %v4595 = vsub.f32 %v4593, %v4594
  %v4596 = vand.u32 %v4595, 4294901760
  %4597 = vmatmul.mubr.f32.gmra.mrb[0].mxu0 %v4596
  %v4598 = vpop.f32.mrb[0].mxu0
  %v4599 = vadd.f32 0.0, %v4598
  %v4600 = vpop.f32.mrb[0].mxu0
  %4601 = vdwg.mxu0
  %4602 = vmatprep.subr.mxu0 0.0
  %v4603 = vand.u32 %v4524, 4294901760
  %v4604 = vsub.f32 %v4524, %v4603
  %v4605 = vand.u32 %v4604, 4294901760
  %v4606 = vsub.f32 %v4604, %v4605
  %v4607 = vand.u32 %v4606, 4294901760
  %4608 = vmatpush1.msra.mxu0 %v4607
  %4609 = vmatprep.subr.mxu0 0.0
  %4610 = vmatpush1.msra.mxu0 0.0
  %4611 = vmatprep.subr.mxu0 0.0
  %4612 = vmatpush1.msra.mxu0 0.0
  %4613 = vmatprep.subr.mxu0 0.0
  %4614 = vmatpush1.msra.mxu0 0.0
  %4615 = vmatprep.subr.mxu0 0.0
  %4616 = vmatpush1.msra.mxu0 0.0
  %4617 = vmatprep.subr.mxu0 0.0
  %4618 = vmatpush1.msra.mxu0 0.0
  %4619 = vmatprep.subr.mxu0 0.0
  %4620 = vmatpush1.msra.mxu0 0.0
  %4621 = vmatprep.subr.mxu0 0.0
  %4622 = vmatpush1.msra.mxu0 0.0
  %4623 = vmatprep.subr.mxu0 0.0
  %4624 = vmatpush1.msra.mxu0 0.0
  %4625 = vmatprep.subr.mxu0 0.0
  %4626 = vmatpush1.msra.mxu0 0.0
  %4627 = vmatprep.subr.mxu0 0.0
  %4628 = vmatpush1.msra.mxu0 0.0
  %4629 = vmatprep.subr.mxu0 0.0
  %4630 = vmatpush1.msra.mxu0 0.0
  %4631 = vmatprep.subr.mxu0 0.0
  %4632 = vmatpush1.msra.mxu0 0.0
  %4633 = vmatprep.subr.mxu0 0.0
  %4634 = vmatpush1.msra.mxu0 0.0
  %4635 = vmatprep.subr.mxu0 0.0
  %4636 = vmatpush1.msra.mxu0 0.0
  %4637 = vmatprep.subr.mxu0 0.0
  %4638 = vmatpush1.msra.mxu0 0.0
  %4639 = vmatprep.subr.mxu0 0.0
  %4640 = vmatpush1.msra.mxu0 0.0
  %4641 = vmatprep.subr.mxu0 0.0
  %4642 = vmatpush1.msra.mxu0 0.0
  %4643 = vmatprep.subr.mxu0 0.0
  %4644 = vmatpush1.msra.mxu0 0.0
  %4645 = vmatprep.subr.mxu0 0.0
  %4646 = vmatpush1.msra.mxu0 0.0
  %4647 = vmatprep.subr.mxu0 0.0
  %4648 = vmatpush1.msra.mxu0 0.0
  %4649 = vmatprep.subr.mxu0 0.0
  %4650 = vmatpush1.msra.mxu0 0.0
  %4651 = vmatprep.subr.mxu0 0.0
  %4652 = vmatpush1.msra.mxu0 0.0
  %4653 = vmatprep.subr.mxu0 0.0
  %4654 = vmatpush1.msra.mxu0 0.0
  %4655 = vmatprep.subr.mxu0 0.0
  %4656 = vmatpush1.msra.mxu0 0.0
  %4657 = vmatprep.subr.mxu0 0.0
  %4658 = vmatpush1.msra.mxu0 0.0
  %4659 = vmatprep.subr.mxu0 0.0
  %4660 = vmatpush1.msra.mxu0 0.0
  %4661 = vmatprep.subr.mxu0 0.0
  %4662 = vmatpush1.msra.mxu0 0.0
  %4663 = vmatprep.subr.mxu0 0.0
  %4664 = vmatpush1.msra.mxu0 0.0
  %4665 = vmatprep.subr.mxu0 0.0
  %4666 = vmatpush1.msra.mxu0 0.0
  %4667 = vmatprep.subr.mxu0 0.0
  %4668 = vmatpush1.msra.mxu0 0.0
  %4669 = vmatprep.subr.mxu0 0.0
  %4670 = vmatpush1.msra.mxu0 0.0
  %4671 = vmatprep.mubr.f32.mxu0 0.0
  %v4672 = vand.u32 %v4521, 4294901760
  %4673 = vmatmul.mubr.f32.gmra.mrb[0].mxu0 %v4672
  %v4674 = vpop.f32.mrb[0].mxu0
  %v4675 = vadd.f32 %v4599, %v4674
  %v4676 = vpop.f32.mrb[0].mxu0
  %4677 = vdwg.mxu0
  %4678 = vmatprep.subr.mxu0 0.0
  %v4679 = vand.u32 %v4524, 4294901760
  %v4680 = vsub.f32 %v4524, %v4679
  %4681 = vmatpush1.msra.mxu0 %v4680
  %4682 = vmatprep.subr.mxu0 0.0
  %4683 = vmatpush1.msra.mxu0 0.0
  %4684 = vmatprep.subr.mxu0 0.0
  %4685 = vmatpush1.msra.mxu0 0.0
  %4686 = vmatprep.subr.mxu0 0.0
  %4687 = vmatpush1.msra.mxu0 0.0
  %4688 = vmatprep.subr.mxu0 0.0
  %4689 = vmatpush1.msra.mxu0 0.0
  %4690 = vmatprep.subr.mxu0 0.0
  %4691 = vmatpush1.msra.mxu0 0.0
  %4692 = vmatprep.subr.mxu0 0.0
  %4693 = vmatpush1.msra.mxu0 0.0
  %4694 = vmatprep.subr.mxu0 0.0
  %4695 = vmatpush1.msra.mxu0 0.0
  %4696 = vmatprep.subr.mxu0 0.0
  %4697 = vmatpush1.msra.mxu0 0.0
  %4698 = vmatprep.subr.mxu0 0.0
  %4699 = vmatpush1.msra.mxu0 0.0
  %4700 = vmatprep.subr.mxu0 0.0
  %4701 = vmatpush1.msra.mxu0 0.0
  %4702 = vmatprep.subr.mxu0 0.0
  %4703 = vmatpush1.msra.mxu0 0.0
  %4704 = vmatprep.subr.mxu0 0.0
  %4705 = vmatpush1.msra.mxu0 0.0
  %4706 = vmatprep.subr.mxu0 0.0
  %4707 = vmatpush1.msra.mxu0 0.0
  %4708 = vmatprep.subr.mxu0 0.0
  %4709 = vmatpush1.msra.mxu0 0.0
  %4710 = vmatprep.subr.mxu0 0.0
  %4711 = vmatpush1.msra.mxu0 0.0
  %4712 = vmatprep.subr.mxu0 0.0
  %4713 = vmatpush1.msra.mxu0 0.0
  %4714 = vmatprep.subr.mxu0 0.0
  %4715 = vmatpush1.msra.mxu0 0.0
  %4716 = vmatprep.subr.mxu0 0.0
  %4717 = vmatpush1.msra.mxu0 0.0
  %4718 = vmatprep.subr.mxu0 0.0
  %4719 = vmatpush1.msra.mxu0 0.0
  %4720 = vmatprep.subr.mxu0 0.0
  %4721 = vmatpush1.msra.mxu0 0.0
  %4722 = vmatprep.subr.mxu0 0.0
  %4723 = vmatpush1.msra.mxu0 0.0
  %4724 = vmatprep.subr.mxu0 0.0
  %4725 = vmatpush1.msra.mxu0 0.0
  %4726 = vmatprep.subr.mxu0 0.0
  %4727 = vmatpush1.msra.mxu0 0.0
  %4728 = vmatprep.subr.mxu0 0.0
  %4729 = vmatpush1.msra.mxu0 0.0
  %4730 = vmatprep.subr.mxu0 0.0
  %4731 = vmatpush1.msra.mxu0 0.0
  %4732 = vmatprep.subr.mxu0 0.0
  %4733 = vmatpush1.msra.mxu0 0.0
  %4734 = vmatprep.subr.mxu0 0.0
  %4735 = vmatpush1.msra.mxu0 0.0
  %4736 = vmatprep.subr.mxu0 0.0
  %4737 = vmatpush1.msra.mxu0 0.0
  %4738 = vmatprep.subr.mxu0 0.0
  %4739 = vmatpush1.msra.mxu0 0.0
  %4740 = vmatprep.subr.mxu0 0.0
  %4741 = vmatpush1.msra.mxu0 0.0
  %4742 = vmatprep.subr.mxu0 0.0
  %4743 = vmatpush1.msra.mxu0 0.0
  %4744 = vmatprep.mubr.f32.mxu0 0.0
  %v4745 = vand.u32 %v4521, 4294901760
  %v4746 = vsub.f32 %v4521, %v4745
  %4747 = vmatmul.mubr.f32.gmra.mrb[0].mxu0 %v4746
  %v4748 = vpop.f32.mrb[0].mxu0
  %v4749 = vadd.f32 %v4675, %v4748
  %v4750 = vpop.f32.mrb[0].mxu0
  %4751 = vdwg.mxu0
  %4752 = vmatprep.subr.mxu0 0.0
  %v4753 = vand.u32 %v4524, 4294901760
  %4754 = vmatpush1.msra.mxu0 %v4753
  %4755 = vmatprep.subr.mxu0 0.0
  %4756 = vmatpush1.msra.mxu0 0.0
  %4757 = vmatprep.subr.mxu0 0.0
  %4758 = vmatpush1.msra.mxu0 0.0
  %4759 = vmatprep.subr.mxu0 0.0
  %4760 = vmatpush1.msra.mxu0 0.0
  %4761 = vmatprep.subr.mxu0 0.0
  %4762 = vmatpush1.msra.mxu0 0.0
  %4763 = vmatprep.subr.mxu0 0.0
  %4764 = vmatpush1.msra.mxu0 0.0
  %4765 = vmatprep.subr.mxu0 0.0
  %4766 = vmatpush1.msra.mxu0 0.0
  %4767 = vmatprep.subr.mxu0 0.0
  %4768 = vmatpush1.msra.mxu0 0.0
  %4769 = vmatprep.subr.mxu0 0.0
  %4770 = vmatpush1.msra.mxu0 0.0
  %4771 = vmatprep.subr.mxu0 0.0
  %4772 = vmatpush1.msra.mxu0 0.0
  %4773 = vmatprep.subr.mxu0 0.0
  %4774 = vmatpush1.msra.mxu0 0.0
  %4775 = vmatprep.subr.mxu0 0.0
  %4776 = vmatpush1.msra.mxu0 0.0
  %4777 = vmatprep.subr.mxu0 0.0
  %4778 = vmatpush1.msra.mxu0 0.0
  %4779 = vmatprep.subr.mxu0 0.0
  %4780 = vmatpush1.msra.mxu0 0.0
  %4781 = vmatprep.subr.mxu0 0.0
  %4782 = vmatpush1.msra.mxu0 0.0
  %4783 = vmatprep.subr.mxu0 0.0
  %4784 = vmatpush1.msra.mxu0 0.0
  %4785 = vmatprep.subr.mxu0 0.0
  %4786 = vmatpush1.msra.mxu0 0.0
  %4787 = vmatprep.subr.mxu0 0.0
  %4788 = vmatpush1.msra.mxu0 0.0
  %4789 = vmatprep.subr.mxu0 0.0
  %4790 = vmatpush1.msra.mxu0 0.0
  %4791 = vmatprep.subr.mxu0 0.0
  %4792 = vmatpush1.msra.mxu0 0.0
  %4793 = vmatprep.subr.mxu0 0.0
  %4794 = vmatpush1.msra.mxu0 0.0
  %4795 = vmatprep.subr.mxu0 0.0
  %4796 = vmatpush1.msra.mxu0 0.0
  %4797 = vmatprep.subr.mxu0 0.0
  %4798 = vmatpush1.msra.mxu0 0.0
  %4799 = vmatprep.subr.mxu0 0.0
  %4800 = vmatpush1.msra.mxu0 0.0
  %4801 = vmatprep.subr.mxu0 0.0
  %4802 = vmatpush1.msra.mxu0 0.0
  %4803 = vmatprep.subr.mxu0 0.0
  %4804 = vmatpush1.msra.mxu0 0.0
  %4805 = vmatprep.subr.mxu0 0.0
  %4806 = vmatpush1.msra.mxu0 0.0
  %4807 = vmatprep.subr.mxu0 0.0
  %4808 = vmatpush1.msra.mxu0 0.0
  %4809 = vmatprep.subr.mxu0 0.0
  %4810 = vmatpush1.msra.mxu0 0.0
  %4811 = vmatprep.subr.mxu0 0.0
  %4812 = vmatpush1.msra.mxu0 0.0
  %4813 = vmatprep.subr.mxu0 0.0
  %4814 = vmatpush1.msra.mxu0 0.0
  %4815 = vmatprep.subr.mxu0 0.0
  %4816 = vmatpush1.msra.mxu0 0.0
  %4817 = vmatprep.mubr.f32.mxu0 0.0
  %v4818 = vand.u32 %v4521, 4294901760
  %v4819 = vsub.f32 %v4521, %v4818
  %v4820 = vand.u32 %v4819, 4294901760
  %4821 = vmatmul.mubr.f32.gmra.mrb[0].mxu0 %v4820
  %v4822 = vpop.f32.mrb[0].mxu0
  %v4823 = vadd.f32 %v4749, %v4822
  %v4824 = vpop.f32.mrb[0].mxu0
  %4825 = vdwg.mxu0
  %4826 = vmatprep.subr.mxu0 0.0
  %v4827 = vand.u32 %v4524, 4294901760
  %v4828 = vsub.f32 %v4524, %v4827
  %v4829 = vand.u32 %v4828, 4294901760
  %4830 = vmatpush1.msra.mxu0 %v4829
  %4831 = vmatprep.subr.mxu0 0.0
  %4832 = vmatpush1.msra.mxu0 0.0
  %4833 = vmatprep.subr.mxu0 0.0
  %4834 = vmatpush1.msra.mxu0 0.0
  %4835 = vmatprep.subr.mxu0 0.0
  %4836 = vmatpush1.msra.mxu0 0.0
  %4837 = vmatprep.subr.mxu0 0.0
  %4838 = vmatpush1.msra.mxu0 0.0
  %4839 = vmatprep.subr.mxu0 0.0
  %4840 = vmatpush1.msra.mxu0 0.0
  %4841 = vmatprep.subr.mxu0 0.0
  %4842 = vmatpush1.msra.mxu0 0.0
  %4843 = vmatprep.subr.mxu0 0.0
  %4844 = vmatpush1.msra.mxu0 0.0
  %4845 = vmatprep.subr.mxu0 0.0
  %4846 = vmatpush1.msra.mxu0 0.0
  %4847 = vmatprep.subr.mxu0 0.0
  %4848 = vmatpush1.msra.mxu0 0.0
  %4849 = vmatprep.subr.mxu0 0.0
  %4850 = vmatpush1.msra.mxu0 0.0
  %4851 = vmatprep.subr.mxu0 0.0
  %4852 = vmatpush1.msra.mxu0 0.0
  %4853 = vmatprep.subr.mxu0 0.0
  %4854 = vmatpush1.msra.mxu0 0.0
  %4855 = vmatprep.subr.mxu0 0.0
  %4856 = vmatpush1.msra.mxu0 0.0
  %4857 = vmatprep.subr.mxu0 0.0
  %4858 = vmatpush1.msra.mxu0 0.0
  %4859 = vmatprep.subr.mxu0 0.0
  %4860 = vmatpush1.msra.mxu0 0.0
  %4861 = vmatprep.subr.mxu0 0.0
  %4862 = vmatpush1.msra.mxu0 0.0
  %4863 = vmatprep.subr.mxu0 0.0
  %4864 = vmatpush1.msra.mxu0 0.0
  %4865 = vmatprep.subr.mxu0 0.0
  %4866 = vmatpush1.msra.mxu0 0.0
  %4867 = vmatprep.subr.mxu0 0.0
  %4868 = vmatpush1.msra.mxu0 0.0
  %4869 = vmatprep.subr.mxu0 0.0
  %4870 = vmatpush1.msra.mxu0 0.0
  %4871 = vmatprep.subr.mxu0 0.0
  %4872 = vmatpush1.msra.mxu0 0.0
  %4873 = vmatprep.subr.mxu0 0.0
  %4874 = vmatpush1.msra.mxu0 0.0
  %4875 = vmatprep.subr.mxu0 0.0
  %4876 = vmatpush1.msra.mxu0 0.0
  %4877 = vmatprep.subr.mxu0 0.0
  %4878 = vmatpush1.msra.mxu0 0.0
  %4879 = vmatprep.subr.mxu0 0.0
  %4880 = vmatpush1.msra.mxu0 0.0
  %4881 = vmatprep.subr.mxu0 0.0
  %4882 = vmatpush1.msra.mxu0 0.0
  %4883 = vmatprep.subr.mxu0 0.0
  %4884 = vmatpush1.msra.mxu0 0.0
  %4885 = vmatprep.subr.mxu0 0.0
  %4886 = vmatpush1.msra.mxu0 0.0
  %4887 = vmatprep.subr.mxu0 0.0
  %4888 = vmatpush1.msra.mxu0 0.0
  %4889 = vmatprep.subr.mxu0 0.0
  %4890 = vmatpush1.msra.mxu0 0.0
  %4891 = vmatprep.subr.mxu0 0.0
  %4892 = vmatpush1.msra.mxu0 0.0
  %4893 = vmatprep.mubr.f32.mxu0 0.0
  %v4894 = vand.u32 %v4521, 4294901760
  %4895 = vmatmul.mubr.f32.gmra.mrb[0].mxu0 %v4894
  %v4896 = vpop.f32.mrb[0].mxu0
  %v4897 = vadd.f32 %v4823, %v4896
  %v4898 = vpop.f32.mrb[0].mxu0
  %4899 = vdwg.mxu0
  %4900 = vmatprep.subr.mxu0 0.0
  %v4901 = vand.u32 %v4524, 4294901760
  %4902 = vmatpush1.msra.mxu0 %v4901
  %4903 = vmatprep.subr.mxu0 0.0
  %4904 = vmatpush1.msra.mxu0 0.0
  %4905 = vmatprep.subr.mxu0 0.0
  %4906 = vmatpush1.msra.mxu0 0.0
  %4907 = vmatprep.subr.mxu0 0.0
  %4908 = vmatpush1.msra.mxu0 0.0
  %4909 = vmatprep.subr.mxu0 0.0
  %4910 = vmatpush1.msra.mxu0 0.0
  %4911 = vmatprep.subr.mxu0 0.0
  %4912 = vmatpush1.msra.mxu0 0.0
  %4913 = vmatprep.subr.mxu0 0.0
  %4914 = vmatpush1.msra.mxu0 0.0
  %4915 = vmatprep.subr.mxu0 0.0
  %4916 = vmatpush1.msra.mxu0 0.0
  %4917 = vmatprep.subr.mxu0 0.0
  %4918 = vmatpush1.msra.mxu0 0.0
  %4919 = vmatprep.subr.mxu0 0.0
  %4920 = vmatpush1.msra.mxu0 0.0
  %4921 = vmatprep.subr.mxu0 0.0
  %4922 = vmatpush1.msra.mxu0 0.0
  %4923 = vmatprep.subr.mxu0 0.0
  %4924 = vmatpush1.msra.mxu0 0.0
  %4925 = vmatprep.subr.mxu0 0.0
  %4926 = vmatpush1.msra.mxu0 0.0
  %4927 = vmatprep.subr.mxu0 0.0
  %4928 = vmatpush1.msra.mxu0 0.0
  %4929 = vmatprep.subr.mxu0 0.0
  %4930 = vmatpush1.msra.mxu0 0.0
  %4931 = vmatprep.subr.mxu0 0.0
  %4932 = vmatpush1.msra.mxu0 0.0
  %4933 = vmatprep.subr.mxu0 0.0
  %4934 = vmatpush1.msra.mxu0 0.0
  %4935 = vmatprep.subr.mxu0 0.0
  %4936 = vmatpush1.msra.mxu0 0.0
  %4937 = vmatprep.subr.mxu0 0.0
  %4938 = vmatpush1.msra.mxu0 0.0
  %4939 = vmatprep.subr.mxu0 0.0
  %4940 = vmatpush1.msra.mxu0 0.0
  %4941 = vmatprep.subr.mxu0 0.0
  %4942 = vmatpush1.msra.mxu0 0.0
  %4943 = vmatprep.subr.mxu0 0.0
  %4944 = vmatpush1.msra.mxu0 0.0
  %4945 = vmatprep.subr.mxu0 0.0
  %4946 = vmatpush1.msra.mxu0 0.0
  %4947 = vmatprep.subr.mxu0 0.0
  %4948 = vmatpush1.msra.mxu0 0.0
  %4949 = vmatprep.subr.mxu0 0.0
  %4950 = vmatpush1.msra.mxu0 0.0
  %4951 = vmatprep.subr.mxu0 0.0
  %4952 = vmatpush1.msra.mxu0 0.0
  %4953 = vmatprep.subr.mxu0 0.0
  %4954 = vmatpush1.msra.mxu0 0.0
  %4955 = vmatprep.subr.mxu0 0.0
  %4956 = vmatpush1.msra.mxu0 0.0
  %4957 = vmatprep.subr.mxu0 0.0
  %4958 = vmatpush1.msra.mxu0 0.0
  %4959 = vmatprep.subr.mxu0 0.0
  %4960 = vmatpush1.msra.mxu0 0.0
  %4961 = vmatprep.subr.mxu0 0.0
  %4962 = vmatpush1.msra.mxu0 0.0
  %4963 = vmatprep.subr.mxu0 0.0
  %4964 = vmatpush1.msra.mxu0 0.0
  %4965 = vmatprep.mubr.f32.mxu0 0.0
  %v4966 = vand.u32 %v4521, 4294901760
  %4967 = vmatmul.mubr.f32.gmra.mrb[0].mxu0 %v4966
  %v4968 = vpop.f32.mrb[0].mxu0
  %v4969 = vadd.f32 %v4897, %v4968
  %v4970 = vpop.f32.mrb[0].mxu0
  %4971 = vdwg.mxu0
  %4973 = vrot.lane.b32.xlu0 %v4969, 126
  %v4974 = vpop.permute.xlu0 %4973
  %v4976 = vadd.f32 %v4969, %v4974
  %v4977 = vxor.u32 %v4976, 2147483648
  %v4978 = vmul.f32 %v4977, 1.442695
  %v4979 = vpow.pop %v4978
  %v4980 = vadd.f32 %v4979, 1.0
  %v4981 = vrcp.pop %v4980
  %v4982 = vmul.f32 1.0, %v4981
  %v4984 = vsel %vm4064, %v4982, 0
  %v4987 = vsel %vm2928, %v21, 0
  %4989 = vmatprep.subr.mxu0 0.0
  %v4990 = vand.u32 %v4987, 4294901760
  %4991 = vmatpush1.msra.mxu0 %v4990
  %4992 = vmatprep.subr.mxu0 0.0
  %4993 = vmatpush1.msra.mxu0 0.0
  %4994 = vmatprep.subr.mxu0 0.0
  %4995 = vmatpush1.msra.mxu0 0.0
  %4996 = vmatprep.subr.mxu0 0.0
  %4997 = vmatpush1.msra.mxu0 0.0
  %4998 = vmatprep.subr.mxu0 0.0
  %4999 = vmatpush1.msra.mxu0 0.0
  %5000 = vmatprep.subr.mxu0 0.0
  %5001 = vmatpush1.msra.mxu0 0.0
  %5002 = vmatprep.subr.mxu0 0.0
  %5003 = vmatpush1.msra.mxu0 0.0
  %5004 = vmatprep.subr.mxu0 0.0
  %5005 = vmatpush1.msra.mxu0 0.0
  %5006 = vmatprep.subr.mxu0 0.0
  %5007 = vmatpush1.msra.mxu0 0.0
  %5008 = vmatprep.subr.mxu0 0.0
  %5009 = vmatpush1.msra.mxu0 0.0
  %5010 = vmatprep.subr.mxu0 0.0
  %5011 = vmatpush1.msra.mxu0 0.0
  %5012 = vmatprep.subr.mxu0 0.0
  %5013 = vmatpush1.msra.mxu0 0.0
  %5014 = vmatprep.subr.mxu0 0.0
  %5015 = vmatpush1.msra.mxu0 0.0
  %5016 = vmatprep.subr.mxu0 0.0
  %5017 = vmatpush1.msra.mxu0 0.0
  %5018 = vmatprep.subr.mxu0 0.0
  %5019 = vmatpush1.msra.mxu0 0.0
  %5020 = vmatprep.subr.mxu0 0.0
  %5021 = vmatpush1.msra.mxu0 0.0
  %5022 = vmatprep.subr.mxu0 0.0
  %5023 = vmatpush1.msra.mxu0 0.0
  %5024 = vmatprep.subr.mxu0 0.0
  %5025 = vmatpush1.msra.mxu0 0.0
  %5026 = vmatprep.subr.mxu0 0.0
  %5027 = vmatpush1.msra.mxu0 0.0
  %5028 = vmatprep.subr.mxu0 0.0
  %5029 = vmatpush1.msra.mxu0 0.0
  %5030 = vmatprep.subr.mxu0 0.0
  %5031 = vmatpush1.msra.mxu0 0.0
  %5032 = vmatprep.subr.mxu0 0.0
  %5033 = vmatpush1.msra.mxu0 0.0
  %5034 = vmatprep.subr.mxu0 0.0
  %5035 = vmatpush1.msra.mxu0 0.0
  %5036 = vmatprep.subr.mxu0 0.0
  %5037 = vmatpush1.msra.mxu0 0.0
  %5038 = vmatprep.subr.mxu0 0.0
  %5039 = vmatpush1.msra.mxu0 0.0
  %5040 = vmatprep.subr.mxu0 0.0
  %5041 = vmatpush1.msra.mxu0 0.0
  %5042 = vmatprep.subr.mxu0 0.0
  %5043 = vmatpush1.msra.mxu0 0.0
  %5044 = vmatprep.subr.mxu0 0.0
  %5045 = vmatpush1.msra.mxu0 0.0
  %5046 = vmatprep.subr.mxu0 0.0
  %5047 = vmatpush1.msra.mxu0 0.0
  %5048 = vmatprep.subr.mxu0 0.0
  %5049 = vmatpush1.msra.mxu0 0.0
  %5050 = vmatprep.subr.mxu0 0.0
  %5051 = vmatpush1.msra.mxu0 0.0
  %5052 = vmatprep.subr.mxu0 0.0
  %5053 = vmatpush1.msra.mxu0 0.0
  %5054 = vmatprep.mubr.f32.mxu0 0.0
  %v5055 = vand.u32 %v4984, 4294901760
  %v5056 = vsub.f32 %v4984, %v5055
  %v5057 = vand.u32 %v5056, 4294901760
  %v5058 = vsub.f32 %v5056, %v5057
  %v5059 = vand.u32 %v5058, 4294901760
  %5060 = vmatmul.mubr.f32.gmra.mrb[0].mxu0 %v5059
  %v5061 = vpop.f32.mrb[0].mxu0
  %v5062 = vadd.f32 0.0, %v5061
  %v5063 = vpop.f32.mrb[0].mxu0
  %5064 = vdwg.mxu0
  %5065 = vmatprep.subr.mxu0 0.0
  %v5066 = vand.u32 %v4987, 4294901760
  %v5067 = vsub.f32 %v4987, %v5066
  %v5068 = vand.u32 %v5067, 4294901760
  %v5069 = vsub.f32 %v5067, %v5068
  %v5070 = vand.u32 %v5069, 4294901760
  %5071 = vmatpush1.msra.mxu0 %v5070
  %5072 = vmatprep.subr.mxu0 0.0
  %5073 = vmatpush1.msra.mxu0 0.0
  %5074 = vmatprep.subr.mxu0 0.0
  %5075 = vmatpush1.msra.mxu0 0.0
  %5076 = vmatprep.subr.mxu0 0.0
  %5077 = vmatpush1.msra.mxu0 0.0
  %5078 = vmatprep.subr.mxu0 0.0
  %5079 = vmatpush1.msra.mxu0 0.0
  %5080 = vmatprep.subr.mxu0 0.0
  %5081 = vmatpush1.msra.mxu0 0.0
  %5082 = vmatprep.subr.mxu0 0.0
  %5083 = vmatpush1.msra.mxu0 0.0
  %5084 = vmatprep.subr.mxu0 0.0
  %5085 = vmatpush1.msra.mxu0 0.0
  %5086 = vmatprep.subr.mxu0 0.0
  %5087 = vmatpush1.msra.mxu0 0.0
  %5088 = vmatprep.subr.mxu0 0.0
  %5089 = vmatpush1.msra.mxu0 0.0
  %5090 = vmatprep.subr.mxu0 0.0
  %5091 = vmatpush1.msra.mxu0 0.0
  %5092 = vmatprep.subr.mxu0 0.0
  %5093 = vmatpush1.msra.mxu0 0.0
  %5094 = vmatprep.subr.mxu0 0.0
  %5095 = vmatpush1.msra.mxu0 0.0
  %5096 = vmatprep.subr.mxu0 0.0
  %5097 = vmatpush1.msra.mxu0 0.0
  %5098 = vmatprep.subr.mxu0 0.0
  %5099 = vmatpush1.msra.mxu0 0.0
  %5100 = vmatprep.subr.mxu0 0.0
  %5101 = vmatpush1.msra.mxu0 0.0
  %5102 = vmatprep.subr.mxu0 0.0
  %5103 = vmatpush1.msra.mxu0 0.0
  %5104 = vmatprep.subr.mxu0 0.0
  %5105 = vmatpush1.msra.mxu0 0.0
  %5106 = vmatprep.subr.mxu0 0.0
  %5107 = vmatpush1.msra.mxu0 0.0
  %5108 = vmatprep.subr.mxu0 0.0
  %5109 = vmatpush1.msra.mxu0 0.0
  %5110 = vmatprep.subr.mxu0 0.0
  %5111 = vmatpush1.msra.mxu0 0.0
  %5112 = vmatprep.subr.mxu0 0.0
  %5113 = vmatpush1.msra.mxu0 0.0
  %5114 = vmatprep.subr.mxu0 0.0
  %5115 = vmatpush1.msra.mxu0 0.0
  %5116 = vmatprep.subr.mxu0 0.0
  %5117 = vmatpush1.msra.mxu0 0.0
  %5118 = vmatprep.subr.mxu0 0.0
  %5119 = vmatpush1.msra.mxu0 0.0
  %5120 = vmatprep.subr.mxu0 0.0
  %5121 = vmatpush1.msra.mxu0 0.0
  %5122 = vmatprep.subr.mxu0 0.0
  %5123 = vmatpush1.msra.mxu0 0.0
  %5124 = vmatprep.subr.mxu0 0.0
  %5125 = vmatpush1.msra.mxu0 0.0
  %5126 = vmatprep.subr.mxu0 0.0
  %5127 = vmatpush1.msra.mxu0 0.0
  %5128 = vmatprep.subr.mxu0 0.0
  %5129 = vmatpush1.msra.mxu0 0.0
  %5130 = vmatprep.subr.mxu0 0.0
  %5131 = vmatpush1.msra.mxu0 0.0
  %5132 = vmatprep.subr.mxu0 0.0
  %5133 = vmatpush1.msra.mxu0 0.0
  %5134 = vmatprep.mubr.f32.mxu0 0.0
  %v5135 = vand.u32 %v4984, 4294901760
  %5136 = vmatmul.mubr.f32.gmra.mrb[0].mxu0 %v5135
  %v5137 = vpop.f32.mrb[0].mxu0
  %v5138 = vadd.f32 %v5062, %v5137
  %v5139 = vpop.f32.mrb[0].mxu0
  %5140 = vdwg.mxu0
  %5141 = vmatprep.subr.mxu0 0.0
  %v5142 = vand.u32 %v4987, 4294901760
  %v5143 = vsub.f32 %v4987, %v5142
  %5144 = vmatpush1.msra.mxu0 %v5143
  %5145 = vmatprep.subr.mxu0 0.0
  %5146 = vmatpush1.msra.mxu0 0.0
  %5147 = vmatprep.subr.mxu0 0.0
  %5148 = vmatpush1.msra.mxu0 0.0
  %5149 = vmatprep.subr.mxu0 0.0
  %5150 = vmatpush1.msra.mxu0 0.0
  %5151 = vmatprep.subr.mxu0 0.0
  %5152 = vmatpush1.msra.mxu0 0.0
  %5153 = vmatprep.subr.mxu0 0.0
  %5154 = vmatpush1.msra.mxu0 0.0
  %5155 = vmatprep.subr.mxu0 0.0
  %5156 = vmatpush1.msra.mxu0 0.0
  %5157 = vmatprep.subr.mxu0 0.0
  %5158 = vmatpush1.msra.mxu0 0.0
  %5159 = vmatprep.subr.mxu0 0.0
  %5160 = vmatpush1.msra.mxu0 0.0
  %5161 = vmatprep.subr.mxu0 0.0
  %5162 = vmatpush1.msra.mxu0 0.0
  %5163 = vmatprep.subr.mxu0 0.0
  %5164 = vmatpush1.msra.mxu0 0.0
  %5165 = vmatprep.subr.mxu0 0.0
  %5166 = vmatpush1.msra.mxu0 0.0
  %5167 = vmatprep.subr.mxu0 0.0
  %5168 = vmatpush1.msra.mxu0 0.0
  %5169 = vmatprep.subr.mxu0 0.0
  %5170 = vmatpush1.msra.mxu0 0.0
  %5171 = vmatprep.subr.mxu0 0.0
  %5172 = vmatpush1.msra.mxu0 0.0
  %5173 = vmatprep.subr.mxu0 0.0
  %5174 = vmatpush1.msra.mxu0 0.0
  %5175 = vmatprep.subr.mxu0 0.0
  %5176 = vmatpush1.msra.mxu0 0.0
  %5177 = vmatprep.subr.mxu0 0.0
  %5178 = vmatpush1.msra.mxu0 0.0
  %5179 = vmatprep.subr.mxu0 0.0
  %5180 = vmatpush1.msra.mxu0 0.0
  %5181 = vmatprep.subr.mxu0 0.0
  %5182 = vmatpush1.msra.mxu0 0.0
  %5183 = vmatprep.subr.mxu0 0.0
  %5184 = vmatpush1.msra.mxu0 0.0
  %5185 = vmatprep.subr.mxu0 0.0
  %5186 = vmatpush1.msra.mxu0 0.0
  %5187 = vmatprep.subr.mxu0 0.0
  %5188 = vmatpush1.msra.mxu0 0.0
  %5189 = vmatprep.subr.mxu0 0.0
  %5190 = vmatpush1.msra.mxu0 0.0
  %5191 = vmatprep.subr.mxu0 0.0
  %5192 = vmatpush1.msra.mxu0 0.0
  %5193 = vmatprep.subr.mxu0 0.0
  %5194 = vmatpush1.msra.mxu0 0.0
  %5195 = vmatprep.subr.mxu0 0.0
  %5196 = vmatpush1.msra.mxu0 0.0
  %5197 = vmatprep.subr.mxu0 0.0
  %5198 = vmatpush1.msra.mxu0 0.0
  %5199 = vmatprep.subr.mxu0 0.0
  %5200 = vmatpush1.msra.mxu0 0.0
  %5201 = vmatprep.subr.mxu0 0.0
  %5202 = vmatpush1.msra.mxu0 0.0
  %5203 = vmatprep.subr.mxu0 0.0
  %5204 = vmatpush1.msra.mxu0 0.0
  %5205 = vmatprep.subr.mxu0 0.0
  %5206 = vmatpush1.msra.mxu0 0.0
  %5207 = vmatprep.mubr.f32.mxu0 0.0
  %v5208 = vand.u32 %v4984, 4294901760
  %v5209 = vsub.f32 %v4984, %v5208
  %5210 = vmatmul.mubr.f32.gmra.mrb[0].mxu0 %v5209
  %v5211 = vpop.f32.mrb[0].mxu0
  %v5212 = vadd.f32 %v5138, %v5211
  %v5213 = vpop.f32.mrb[0].mxu0
  %5214 = vdwg.mxu0
  %5215 = vmatprep.subr.mxu0 0.0
  %v5216 = vand.u32 %v4987, 4294901760
  %5217 = vmatpush1.msra.mxu0 %v5216
  %5218 = vmatprep.subr.mxu0 0.0
  %5219 = vmatpush1.msra.mxu0 0.0
  %5220 = vmatprep.subr.mxu0 0.0
  %5221 = vmatpush1.msra.mxu0 0.0
  %5222 = vmatprep.subr.mxu0 0.0
  %5223 = vmatpush1.msra.mxu0 0.0
  %5224 = vmatprep.subr.mxu0 0.0
  %5225 = vmatpush1.msra.mxu0 0.0
  %5226 = vmatprep.subr.mxu0 0.0
  %5227 = vmatpush1.msra.mxu0 0.0
  %5228 = vmatprep.subr.mxu0 0.0
  %5229 = vmatpush1.msra.mxu0 0.0
  %5230 = vmatprep.subr.mxu0 0.0
  %5231 = vmatpush1.msra.mxu0 0.0
  %5232 = vmatprep.subr.mxu0 0.0
  %5233 = vmatpush1.msra.mxu0 0.0
  %5234 = vmatprep.subr.mxu0 0.0
  %5235 = vmatpush1.msra.mxu0 0.0
  %5236 = vmatprep.subr.mxu0 0.0
  %5237 = vmatpush1.msra.mxu0 0.0
  %5238 = vmatprep.subr.mxu0 0.0
  %5239 = vmatpush1.msra.mxu0 0.0
  %5240 = vmatprep.subr.mxu0 0.0
  %5241 = vmatpush1.msra.mxu0 0.0
  %5242 = vmatprep.subr.mxu0 0.0
  %5243 = vmatpush1.msra.mxu0 0.0
  %5244 = vmatprep.subr.mxu0 0.0
  %5245 = vmatpush1.msra.mxu0 0.0
  %5246 = vmatprep.subr.mxu0 0.0
  %5247 = vmatpush1.msra.mxu0 0.0
  %5248 = vmatprep.subr.mxu0 0.0
  %5249 = vmatpush1.msra.mxu0 0.0
  %5250 = vmatprep.subr.mxu0 0.0
  %5251 = vmatpush1.msra.mxu0 0.0
  %5252 = vmatprep.subr.mxu0 0.0
  %5253 = vmatpush1.msra.mxu0 0.0
  %5254 = vmatprep.subr.mxu0 0.0
  %5255 = vmatpush1.msra.mxu0 0.0
  %5256 = vmatprep.subr.mxu0 0.0
  %5257 = vmatpush1.msra.mxu0 0.0
  %5258 = vmatprep.subr.mxu0 0.0
  %5259 = vmatpush1.msra.mxu0 0.0
  %5260 = vmatprep.subr.mxu0 0.0
  %5261 = vmatpush1.msra.mxu0 0.0
  %5262 = vmatprep.subr.mxu0 0.0
  %5263 = vmatpush1.msra.mxu0 0.0
  %5264 = vmatprep.subr.mxu0 0.0
  %5265 = vmatpush1.msra.mxu0 0.0
  %5266 = vmatprep.subr.mxu0 0.0
  %5267 = vmatpush1.msra.mxu0 0.0
  %5268 = vmatprep.subr.mxu0 0.0
  %5269 = vmatpush1.msra.mxu0 0.0
  %5270 = vmatprep.subr.mxu0 0.0
  %5271 = vmatpush1.msra.mxu0 0.0
  %5272 = vmatprep.subr.mxu0 0.0
  %5273 = vmatpush1.msra.mxu0 0.0
  %5274 = vmatprep.subr.mxu0 0.0
  %5275 = vmatpush1.msra.mxu0 0.0
  %5276 = vmatprep.subr.mxu0 0.0
  %5277 = vmatpush1.msra.mxu0 0.0
  %5278 = vmatprep.subr.mxu0 0.0
  %5279 = vmatpush1.msra.mxu0 0.0
  %5280 = vmatprep.mubr.f32.mxu0 0.0
  %v5281 = vand.u32 %v4984, 4294901760
  %v5282 = vsub.f32 %v4984, %v5281
  %v5283 = vand.u32 %v5282, 4294901760
  %5284 = vmatmul.mubr.f32.gmra.mrb[0].mxu0 %v5283
  %v5285 = vpop.f32.mrb[0].mxu0
  %v5286 = vadd.f32 %v5212, %v5285
  %v5287 = vpop.f32.mrb[0].mxu0
  %5288 = vdwg.mxu0
  %5289 = vmatprep.subr.mxu0 0.0
  %v5290 = vand.u32 %v4987, 4294901760
  %v5291 = vsub.f32 %v4987, %v5290
  %v5292 = vand.u32 %v5291, 4294901760
  %5293 = vmatpush1.msra.mxu0 %v5292
  %5294 = vmatprep.subr.mxu0 0.0
  %5295 = vmatpush1.msra.mxu0 0.0
  %5296 = vmatprep.subr.mxu0 0.0
  %5297 = vmatpush1.msra.mxu0 0.0
  %5298 = vmatprep.subr.mxu0 0.0
  %5299 = vmatpush1.msra.mxu0 0.0
  %5300 = vmatprep.subr.mxu0 0.0
  %5301 = vmatpush1.msra.mxu0 0.0
  %5302 = vmatprep.subr.mxu0 0.0
  %5303 = vmatpush1.msra.mxu0 0.0
  %5304 = vmatprep.subr.mxu0 0.0
  %5305 = vmatpush1.msra.mxu0 0.0
  %5306 = vmatprep.subr.mxu0 0.0
  %5307 = vmatpush1.msra.mxu0 0.0
  %5308 = vmatprep.subr.mxu0 0.0
  %5309 = vmatpush1.msra.mxu0 0.0
  %5310 = vmatprep.subr.mxu0 0.0
  %5311 = vmatpush1.msra.mxu0 0.0
  %5312 = vmatprep.subr.mxu0 0.0
  %5313 = vmatpush1.msra.mxu0 0.0
  %5314 = vmatprep.subr.mxu0 0.0
  %5315 = vmatpush1.msra.mxu0 0.0
  %5316 = vmatprep.subr.mxu0 0.0
  %5317 = vmatpush1.msra.mxu0 0.0
  %5318 = vmatprep.subr.mxu0 0.0
  %5319 = vmatpush1.msra.mxu0 0.0
  %5320 = vmatprep.subr.mxu0 0.0
  %5321 = vmatpush1.msra.mxu0 0.0
  %5322 = vmatprep.subr.mxu0 0.0
  %5323 = vmatpush1.msra.mxu0 0.0
  %5324 = vmatprep.subr.mxu0 0.0
  %5325 = vmatpush1.msra.mxu0 0.0
  %5326 = vmatprep.subr.mxu0 0.0
  %5327 = vmatpush1.msra.mxu0 0.0
  %5328 = vmatprep.subr.mxu0 0.0
  %5329 = vmatpush1.msra.mxu0 0.0
  %5330 = vmatprep.subr.mxu0 0.0
  %5331 = vmatpush1.msra.mxu0 0.0
  %5332 = vmatprep.subr.mxu0 0.0
  %5333 = vmatpush1.msra.mxu0 0.0
  %5334 = vmatprep.subr.mxu0 0.0
  %5335 = vmatpush1.msra.mxu0 0.0
  %5336 = vmatprep.subr.mxu0 0.0
  %5337 = vmatpush1.msra.mxu0 0.0
  %5338 = vmatprep.subr.mxu0 0.0
  %5339 = vmatpush1.msra.mxu0 0.0
  %5340 = vmatprep.subr.mxu0 0.0
  %5341 = vmatpush1.msra.mxu0 0.0
  %5342 = vmatprep.subr.mxu0 0.0
  %5343 = vmatpush1.msra.mxu0 0.0
  %5344 = vmatprep.subr.mxu0 0.0
  %5345 = vmatpush1.msra.mxu0 0.0
  %5346 = vmatprep.subr.mxu0 0.0
  %5347 = vmatpush1.msra.mxu0 0.0
  %5348 = vmatprep.subr.mxu0 0.0
  %5349 = vmatpush1.msra.mxu0 0.0
  %5350 = vmatprep.subr.mxu0 0.0
  %5351 = vmatpush1.msra.mxu0 0.0
  %5352 = vmatprep.subr.mxu0 0.0
  %5353 = vmatpush1.msra.mxu0 0.0
  %5354 = vmatprep.subr.mxu0 0.0
  %5355 = vmatpush1.msra.mxu0 0.0
  %5356 = vmatprep.mubr.f32.mxu0 0.0
  %v5357 = vand.u32 %v4984, 4294901760
  %5358 = vmatmul.mubr.f32.gmra.mrb[0].mxu0 %v5357
  %v5359 = vpop.f32.mrb[0].mxu0
  %v5360 = vadd.f32 %v5286, %v5359
  %v5361 = vpop.f32.mrb[0].mxu0
  %5362 = vdwg.mxu0
  %5363 = vmatprep.subr.mxu0 0.0
  %v5364 = vand.u32 %v4987, 4294901760
  %5365 = vmatpush1.msra.mxu0 %v5364
  %5366 = vmatprep.subr.mxu0 0.0
  %5367 = vmatpush1.msra.mxu0 0.0
  %5368 = vmatprep.subr.mxu0 0.0
  %5369 = vmatpush1.msra.mxu0 0.0
  %5370 = vmatprep.subr.mxu0 0.0
  %5371 = vmatpush1.msra.mxu0 0.0
  %5372 = vmatprep.subr.mxu0 0.0
  %5373 = vmatpush1.msra.mxu0 0.0
  %5374 = vmatprep.subr.mxu0 0.0
  %5375 = vmatpush1.msra.mxu0 0.0
  %5376 = vmatprep.subr.mxu0 0.0
  %5377 = vmatpush1.msra.mxu0 0.0
  %5378 = vmatprep.subr.mxu0 0.0
  %5379 = vmatpush1.msra.mxu0 0.0
  %5380 = vmatprep.subr.mxu0 0.0
  %5381 = vmatpush1.msra.mxu0 0.0
  %5382 = vmatprep.subr.mxu0 0.0
  %5383 = vmatpush1.msra.mxu0 0.0
  %5384 = vmatprep.subr.mxu0 0.0
  %5385 = vmatpush1.msra.mxu0 0.0
  %5386 = vmatprep.subr.mxu0 0.0
  %5387 = vmatpush1.msra.mxu0 0.0
  %5388 = vmatprep.subr.mxu0 0.0
  %5389 = vmatpush1.msra.mxu0 0.0
  %5390 = vmatprep.subr.mxu0 0.0
  %5391 = vmatpush1.msra.mxu0 0.0
  %5392 = vmatprep.subr.mxu0 0.0
  %5393 = vmatpush1.msra.mxu0 0.0
  %5394 = vmatprep.subr.mxu0 0.0
  %5395 = vmatpush1.msra.mxu0 0.0
  %5396 = vmatprep.subr.mxu0 0.0
  %5397 = vmatpush1.msra.mxu0 0.0
  %5398 = vmatprep.subr.mxu0 0.0
  %5399 = vmatpush1.msra.mxu0 0.0
  %5400 = vmatprep.subr.mxu0 0.0
  %5401 = vmatpush1.msra.mxu0 0.0
  %5402 = vmatprep.subr.mxu0 0.0
  %5403 = vmatpush1.msra.mxu0 0.0
  %5404 = vmatprep.subr.mxu0 0.0
  %5405 = vmatpush1.msra.mxu0 0.0
  %5406 = vmatprep.subr.mxu0 0.0
  %5407 = vmatpush1.msra.mxu0 0.0
  %5408 = vmatprep.subr.mxu0 0.0
  %5409 = vmatpush1.msra.mxu0 0.0
  %5410 = vmatprep.subr.mxu0 0.0
  %5411 = vmatpush1.msra.mxu0 0.0
  %5412 = vmatprep.subr.mxu0 0.0
  %5413 = vmatpush1.msra.mxu0 0.0
  %5414 = vmatprep.subr.mxu0 0.0
  %5415 = vmatpush1.msra.mxu0 0.0
  %5416 = vmatprep.subr.mxu0 0.0
  %5417 = vmatpush1.msra.mxu0 0.0
  %5418 = vmatprep.subr.mxu0 0.0
  %5419 = vmatpush1.msra.mxu0 0.0
  %5420 = vmatprep.subr.mxu0 0.0
  %5421 = vmatpush1.msra.mxu0 0.0
  %5422 = vmatprep.subr.mxu0 0.0
  %5423 = vmatpush1.msra.mxu0 0.0
  %5424 = vmatprep.subr.mxu0 0.0
  %5425 = vmatpush1.msra.mxu0 0.0
  %5426 = vmatprep.subr.mxu0 0.0
  %5427 = vmatpush1.msra.mxu0 0.0
  %5428 = vmatprep.mubr.f32.mxu0 0.0
  %v5429 = vand.u32 %v4984, 4294901760
  %5430 = vmatmul.mubr.f32.gmra.mrb[0].mxu0 %v5429
  %v5431 = vpop.f32.mrb[0].mxu0
  %v5432 = vadd.f32 %v5360, %v5431
  %v5433 = vpop.f32.mrb[0].mxu0
  %5434 = vdwg.mxu0
  %v5435 = vmul.f32 %v5432, %v3396
  %v5436 = vadd.f32 %v5435, %v17
  %5437 = vst [vmem:[%s4] sm:$0xf] %v5436
  // Predicated region
  $region18: #{sffnet_pallas.2} parent=0 // pred_check
    _
  $region19: #{sffnet_pallas.2} parent=0 // pred_check_branch
    %5439 = sbr.rel (0) target = $region21
  $region20: #{sffnet_pallas.2} parent=0 // pred_region
    _
  $region21: #{sffnet_pallas.2} parent=0 // pred_fallthru
    _
  // Predicated region
  $region22: #{sffnet_pallas.2} parent=0 // pred_check
    _
  $region23: #{sffnet_pallas.2} parent=0 // pred_check_branch
    %5441 = sbr.rel (0) target = $region25
  $region24: #{sffnet_pallas.2} parent=0 // pred_region
    _
  $region25: #{sffnet_pallas.2} parent=0 // pred_fallthru
    _

// kernel: sffnet_pallas.3
$region0: #{sffnet_pallas.3}
  #allocation0 [shape = 'u32[]', space=smem, size = 0x4, offset = 0x4, fixed_abs, tag = 'smem constant byte address 0x4 - core index']
  #allocation1 [shape = 'u32[144,128]{1,0:T(1,128)}', space=vmem, size = 0x12000, scoped, tag = 'internal scratch']
  %s0 = inlined_call_operand.vmem [shape: f32[12,128], index: 0, kind: input, shape index: {}]
  %s1 = inlined_call_operand.vmem [shape: f32[88,128], index: 1, kind: input, shape index: {}]
  %s2 = inlined_call_operand.vmem [shape: f32[128,4], index: 2, kind: input, shape index: {}]
  %s3 = inlined_call_operand.vmem [shape: f32[256,256], index: 3, kind: input, shape index: {}]
  %s4 = inlined_call_operand.hbm [shape: f32[1,2], index: 4, kind: output, shape index: {}]
  %s5 = sld [smem:[#allocation0]]
  $region26: #{sffnet_pallas.3} parent=0
    _
  %s7 = ssub.s32 1, %s5
  %s8 = scalar_select 0, %s7, %s5
  $region1: #{sffnet_pallas.3} parent=0
    #allocation2 [shape = 'u8[512]{0}', space=vmem, size = 0x400, scoped, tag = 'output window, operand 0, single buffered']
    #allocation3 [shape = 's32[1]{0}', space=sflag, size = 0x4, scoped, tag = 'scoped memory for sffnet_pallas.3']
    %9 = vsyncpa [#allocation3], 0
    // Predicated region
    $region2: #{sffnet_pallas.3} parent=1 // pred_check
      _
    $region3: #{sffnet_pallas.3} parent=1 // pred_check_branch
      %11 = sbr.rel (0) target = $region5
    $region4: #{sffnet_pallas.3} parent=1 // pred_region
      _
    $region5: #{sffnet_pallas.3} parent=1 // pred_fallthru
      _
    // Predicated region
    $region6: #{sffnet_pallas.3} parent=1 // pred_check
      _
    $region7: #{sffnet_pallas.3} parent=1 // pred_check_branch
      %13 = sbr.rel (0) target = $region9
    $region8: #{sffnet_pallas.3} parent=1 // pred_region
      _
    $region9: #{sffnet_pallas.3} parent=1 // pred_fallthru
      _
    // Predicated region
    $region10: #{sffnet_pallas.3} parent=1 // pred_check
      _
    $region11: #{sffnet_pallas.3} parent=1 // pred_check_branch
      %15 = sbr.rel (0) target = $region13
    $region12: #{sffnet_pallas.3} parent=1 // pred_region
      _
    $region13: #{sffnet_pallas.3} parent=1 // pred_fallthru
      _
    // Predicated region
    $region14: #{sffnet_pallas.3} parent=1 // pred_check
      _
    $region15: #{sffnet_pallas.3} parent=1 // pred_check_branch
      %17 = sbr.rel (0) target = $region17
    $region16: #{sffnet_pallas.3} parent=1 // pred_region
      _
    $region17: #{sffnet_pallas.3} parent=1 // pred_fallthru
      _
    %v18 = vld [vmem:[%s0] sm:$0xff]
    %v19 = vld [vmem:[%s0 + $0x8] sm:$0xf]
    %v20 = vld [vmem:[%s1 + $0x51] sm:$0x1]
    %v21 = vld [vmem:[%s1 + $0x52] sm:$0x1]
    %v22 = vld [vmem:[%s1 + $0x53] sm:$0x3]
    %v23 = vld [vmem:[%s2] sm:$0xff]
    %v24 = vld [vmem:[%s2 + $0x8] sm:$0xff]
    %v25 = vld [vmem:[%s2 + $0x10] sm:$0xff]
    %v26 = vld [vmem:[%s2 + $0x18] sm:$0xff]
    %v27 = vld [vmem:[%s2 + $0x20] sm:$0xff]
    %v28 = vld [vmem:[%s2 + $0x28] sm:$0xff]
    %v29 = vld [vmem:[%s2 + $0x30] sm:$0xff]
    %v30 = vld [vmem:[%s2 + $0x38] sm:$0xff]
    %v31 = vld [vmem:[%s2 + $0x40] sm:$0xff]
    %v32 = vld [vmem:[%s2 + $0x48] sm:$0xff]
    %v33 = vld [vmem:[%s2 + $0x50] sm:$0xff]
    %v34 = vld [vmem:[%s2 + $0x58] sm:$0xff]
    %v35 = vld [vmem:[%s2 + $0x60] sm:$0xff]
    %v36 = vld [vmem:[%s2 + $0x68] sm:$0xff]
    %v37 = vld [vmem:[%s2 + $0x70] sm:$0xff]
    %v38 = vld [vmem:[%s2 + $0x78] sm:$0xff]
    %v39 = vld [vmem:[%s1] sm:$0xff]
    %v40 = vld [vmem:[%s1 + $0x8] sm:$0xff]
    %v41 = vld [vmem:[%s1 + $0x10] sm:$0xff]
    %v42 = vld [vmem:[%s1 + $0x24] sm:$0xff]
    %v43 = vld [vmem:[%s1 + $0x2c] sm:$0xff]
    %v44 = vld [vmem:[%s1 + $0x34] sm:$0xff]
    %v45 = vld [vmem:[%s1 + $0x18] sm:$0xff]
    %v46 = vld [vmem:[%s1 + $0x20] sm:$0xf]
    %v47 = vld [vmem:[%s1 + $0x3c] sm:$0xff]
    %v48 = vld [vmem:[%s1 + $0x44] sm:$0xf]
    %v49 = vld [vmem:[%s1 + $0x48] sm:$0x1]
    %v50 = vld [vmem:[%s1 + $0x49] sm:$0x3]
    %v51 = vld [vmem:[%s1 + $0x4b] sm:$0xf]
    %52 = vrot.lane.b32.xlu0 %v18, 1
    %v53 = vpop.permute.xlu0 %52
    %54 = vrot.lane.b32.xlu0 %v19, 1
    %v55 = vpop.permute.xlu0 %54
    %v56 = vlaneseq
    %v57 = vshrl.u32 %v56, 7
    %v58 = vsub.s32 0, %v57
    %v59 = vrot.slane %v20, %v58
    %v60 = vmul.f32 %v53, %v59
    %v61 = vmul.f32 %v55, %v59
    %62 = vrot.lane.b32.xlu0 %v18, 127
    %v63 = vpop.permute.xlu0 %62
    %64 = vrot.lane.b32.xlu0 %v19, 127
    %v65 = vpop.permute.xlu0 %64
    %v66 = vlaneseq
    %v67 = vshrl.u32 %v66, 7
    %v68 = vsub.s32 0, %v67
    %v69 = vrot.slane %v21, %v68
    %v70 = vmul.f32 %v63, %v69
    %v71 = vmul.f32 %v65, %v69
    %vm74 = vcmask 1043456
    %v75 = vrot.slane %v18, 4
    %v76 = vrot.slane %v19, 4
    %v77 = vsel %vm74, %v75, %v76
    %v80 = vsel %vm74, %v61, %v75
    %82 = vset.pattern.permute.xlu0 0
    %83 = vperm.xlu0 %82, %v42
    %v84 = vpop.permute.xlu0 %83
    %87 = vset.pattern.permute.xlu0 0
    %88 = vperm.xlu0 %87, %v43
    %v89 = vpop.permute.xlu0 %88
    %92 = vset.pattern.permute.xlu0 0
    %93 = vperm.xlu0 %92, %v44
    %v94 = vpop.permute.xlu0 %93
    %vm96 = vcmask 293888
    %v98 = vsel %vm96, %v39, 0
    %v101 = vsel %vm96, %v40, 0
    %v104 = vsel %vm96, %v41, 0
    %v107 = vsel %vm74, %v71, 0
    %109 = vmatprep.subr.mxu0 0.0
    %v110 = vand.u32 %v60, 4294901760
    %111 = vmatpush1.msra.mxu0 %v110
    %112 = vmatprep.subr.mxu0 0.0
    %v113 = vand.u32 %v80, 4294901760
    %114 = vmatpush1.msra.mxu0 %v113
    %115 = vmatprep.subr.mxu0 0.0
    %v116 = vand.u32 %v77, 4294901760
    %117 = vmatpush1.msra.mxu0 %v116
    %118 = vmatprep.subr.mxu0 0.0
    %v119 = vand.u32 %v70, 4294901760
    %120 = vmatpush1.msra.mxu0 %v119
    %121 = vmatprep.subr.mxu0 0.0
    %v122 = vand.u32 %v107, 4294901760
    %123 = vmatpush1.msra.mxu0 %v122
    %124 = vmatprep.subr.mxu0 0.0
    %125 = vmatpush1.msra.mxu0 0.0
    %126 = vmatprep.subr.mxu0 0.0
    %127 = vmatpush1.msra.mxu0 0.0
    %128 = vmatprep.subr.mxu0 0.0
    %129 = vmatpush1.msra.mxu0 0.0
    %130 = vmatprep.subr.mxu0 0.0
    %131 = vmatpush1.msra.mxu0 0.0
    %132 = vmatprep.subr.mxu0 0.0
    %133 = vmatpush1.msra.mxu0 0.0
    %134 = vmatprep.subr.mxu0 0.0
    %135 = vmatpush1.msra.mxu0 0.0
    %136 = vmatprep.subr.mxu0 0.0
    %137 = vmatpush1.msra.mxu0 0.0
    %138 = vmatprep.subr.mxu0 0.0
    %139 = vmatpush1.msra.mxu0 0.0
    %140 = vmatprep.subr.mxu0 0.0
    %141 = vmatpush1.msra.mxu0 0.0
    %142 = vmatprep.subr.mxu0 0.0
    %143 = vmatpush1.msra.mxu0 0.0
    %144 = vmatprep.subr.mxu0 0.0
    %145 = vmatpush1.msra.mxu0 0.0
    %146 = vmatprep.subr.mxu0 0.0
    %147 = vmatpush1.msra.mxu0 0.0
    %148 = vmatprep.subr.mxu0 0.0
    %149 = vmatpush1.msra.mxu0 0.0
    %150 = vmatprep.subr.mxu0 0.0
    %151 = vmatpush1.msra.mxu0 0.0
    %152 = vmatprep.subr.mxu0 0.0
    %153 = vmatpush1.msra.mxu0 0.0
    %154 = vmatprep.subr.mxu0 0.0
    %155 = vmatpush1.msra.mxu0 0.0
    %156 = vmatprep.subr.mxu0 0.0
    %157 = vmatpush1.msra.mxu0 0.0
    %158 = vmatprep.subr.mxu0 0.0
    %159 = vmatpush1.msra.mxu0 0.0
    %160 = vmatprep.subr.mxu0 0.0
    %161 = vmatpush1.msra.mxu0 0.0
    %162 = vmatprep.subr.mxu0 0.0
    %163 = vmatpush1.msra.mxu0 0.0
    %164 = vmatprep.subr.mxu0 0.0
    %165 = vmatpush1.msra.mxu0 0.0
    %166 = vmatprep.subr.mxu0 0.0
    %167 = vmatpush1.msra.mxu0 0.0
    %168 = vmatprep.subr.mxu0 0.0
    %169 = vmatpush1.msra.mxu0 0.0
    %170 = vmatprep.subr.mxu0 0.0
    %171 = vmatpush1.msra.mxu0 0.0
    %172 = vmatprep.subr.mxu0 0.0
    %173 = vmatpush1.msra.mxu0 0.0
    %174 = vmatprep.subr.mxu0 0.0
    %175 = vmatpush1.msra.mxu0 0.0
    %176 = vmatprep.subr.mxu0 0.0
    %177 = vmatpush1.msra.mxu0 0.0
    %178 = vmatprep.mubr.f32.mxu0 0.0
    %v179 = vand.u32 %v98, 4294901760
    %v180 = vsub.f32 %v98, %v179
    %v181 = vand.u32 %v180, 4294901760
    %v182 = vsub.f32 %v180, %v181
    %v183 = vand.u32 %v182, 4294901760
    %184 = vmatmul.mubr.f32.gmra.mrb[0].mxu0 %v183
    %v185 = vpop.f32.mrb[0].mxu0
    %v186 = vadd.f32 %v84, %v185
    %v187 = vpop.f32.mrb[0].mxu0
    %188 = vmatprep.mubr.f32.mxu0 0.0
    %v189 = vand.u32 %v101, 4294901760
    %v190 = vsub.f32 %v101, %v189
    %v191 = vand.u32 %v190, 4294901760
    %v192 = vsub.f32 %v190, %v191
    %v193 = vand.u32 %v192, 4294901760
    %194 = vmatmul.mubr.f32.gmra.mrb[0].mxu0 %v193
    %v195 = vpop.f32.mrb[0].mxu0
    %v196 = vadd.f32 %v89, %v195
    %v197 = vpop.f32.mrb[0].mxu0
    %198 = vmatprep.mubr.f32.mxu0 0.0
    %v199 = vand.u32 %v104, 4294901760
    %v200 = vsub.f32 %v104, %v199
    %v201 = vand.u32 %v200, 4294901760
    %v202 = vsub.f32 %v200, %v201
    %v203 = vand.u32 %v202, 4294901760
    %204 = vmatmul.mubr.f32.gmra.mrb[0].mxu0 %v203
    %v205 = vpop.f32.mrb[0].mxu0
    %v206 = vadd.f32 %v94, %v205
    %v207 = vpop.f32.mrb[0].mxu0
    %208 = vdwg.mxu0
    %209 = vmatprep.subr.mxu0 0.0
    %v210 = vand.u32 %v60, 4294901760
    %v211 = vsub.f32 %v60, %v210
    %v212 = vand.u32 %v211, 4294901760
    %v213 = vsub.f32 %v211, %v212
    %v214 = vand.u32 %v213, 4294901760
    %215 = vmatpush1.msra.mxu0 %v214
    %216 = vmatprep.subr.mxu0 0.0
    %v217 = vand.u32 %v80, 4294901760
    %v218 = vsub.f32 %v80, %v217
    %v219 = vand.u32 %v218, 4294901760
    %v220 = vsub.f32 %v218, %v219
    %v221 = vand.u32 %v220, 4294901760
    %222 = vmatpush1.msra.mxu0 %v221
    %223 = vmatprep.subr.mxu0 0.0
    %v224 = vand.u32 %v77, 4294901760
    %v225 = vsub.f32 %v77, %v224
    %v226 = vand.u32 %v225, 4294901760
    %v227 = vsub.f32 %v225, %v226
    %v228 = vand.u32 %v227, 4294901760
    %229 = vmatpush1.msra.mxu0 %v228
    %230 = vmatprep.subr.mxu0 0.0
    %v231 = vand.u32 %v70, 4294901760
    %v232 = vsub.f32 %v70, %v231
    %v233 = vand.u32 %v232, 4294901760
    %v234 = vsub.f32 %v232, %v233
    %v235 = vand.u32 %v234, 4294901760
    %236 = vmatpush1.msra.mxu0 %v235
    %237 = vmatprep.subr.mxu0 0.0
    %v238 = vand.u32 %v107, 4294901760
    %v239 = vsub.f32 %v107, %v238
    %v240 = vand.u32 %v239, 4294901760
    %v241 = vsub.f32 %v239, %v240
    %v242 = vand.u32 %v241, 4294901760
    %243 = vmatpush1.msra.mxu0 %v242
    %244 = vmatprep.subr.mxu0 0.0
    %245 = vmatpush1.msra.mxu0 0.0
    %246 = vmatprep.subr.mxu0 0.0
    %247 = vmatpush1.msra.mxu0 0.0
    %248 = vmatprep.subr.mxu0 0.0
    %249 = vmatpush1.msra.mxu0 0.0
    %250 = vmatprep.subr.mxu0 0.0
    %251 = vmatpush1.msra.mxu0 0.0
    %252 = vmatprep.subr.mxu0 0.0
    %253 = vmatpush1.msra.mxu0 0.0
    %254 = vmatprep.subr.mxu0 0.0
    %255 = vmatpush1.msra.mxu0 0.0
    %256 = vmatprep.subr.mxu0 0.0
    %257 = vmatpush1.msra.mxu0 0.0
    %258 = vmatprep.subr.mxu0 0.0
    %259 = vmatpush1.msra.mxu0 0.0
    %260 = vmatprep.subr.mxu0 0.0
    %261 = vmatpush1.msra.mxu0 0.0
    %262 = vmatprep.subr.mxu0 0.0
    %263 = vmatpush1.msra.mxu0 0.0
    %264 = vmatprep.subr.mxu0 0.0
    %265 = vmatpush1.msra.mxu0 0.0
    %266 = vmatprep.subr.mxu0 0.0
    %267 = vmatpush1.msra.mxu0 0.0
    %268 = vmatprep.subr.mxu0 0.0
    %269 = vmatpush1.msra.mxu0 0.0
    %270 = vmatprep.subr.mxu0 0.0
    %271 = vmatpush1.msra.mxu0 0.0
    %272 = vmatprep.subr.mxu0 0.0
    %273 = vmatpush1.msra.mxu0 0.0
    %274 = vmatprep.subr.mxu0 0.0
    %275 = vmatpush1.msra.mxu0 0.0
    %276 = vmatprep.subr.mxu0 0.0
    %277 = vmatpush1.msra.mxu0 0.0
    %278 = vmatprep.subr.mxu0 0.0
    %279 = vmatpush1.msra.mxu0 0.0
    %280 = vmatprep.subr.mxu0 0.0
    %281 = vmatpush1.msra.mxu0 0.0
    %282 = vmatprep.subr.mxu0 0.0
    %283 = vmatpush1.msra.mxu0 0.0
    %284 = vmatprep.subr.mxu0 0.0
    %285 = vmatpush1.msra.mxu0 0.0
    %286 = vmatprep.subr.mxu0 0.0
    %287 = vmatpush1.msra.mxu0 0.0
    %288 = vmatprep.subr.mxu0 0.0
    %289 = vmatpush1.msra.mxu0 0.0
    %290 = vmatprep.subr.mxu0 0.0
    %291 = vmatpush1.msra.mxu0 0.0
    %292 = vmatprep.subr.mxu0 0.0
    %293 = vmatpush1.msra.mxu0 0.0
    %294 = vmatprep.subr.mxu0 0.0
    %295 = vmatpush1.msra.mxu0 0.0
    %296 = vmatprep.subr.mxu0 0.0
    %297 = vmatpush1.msra.mxu0 0.0
    %298 = vmatprep.mubr.f32.mxu0 0.0
    %v299 = vand.u32 %v98, 4294901760
    %300 = vmatmul.mubr.f32.gmra.mrb[0].mxu0 %v299
    %v301 = vpop.f32.mrb[0].mxu0
    %v302 = vadd.f32 %v186, %v301
    %v303 = vpop.f32.mrb[0].mxu0
    %304 = vmatprep.mubr.f32.mxu0 0.0
    %v305 = vand.u32 %v101, 4294901760
    %306 = vmatmul.mubr.f32.gmra.mrb[0].mxu0 %v305
    %v307 = vpop.f32.mrb[0].mxu0
    %v308 = vadd.f32 %v196, %v307
    %v309 = vpop.f32.mrb[0].mxu0
    %310 = vmatprep.mubr.f32.mxu0 0.0
    %v311 = vand.u32 %v104, 4294901760
    %312 = vmatmul.mubr.f32.gmra.mrb[0].mxu0 %v311
    %v313 = vpop.f32.mrb[0].mxu0
    %v314 = vadd.f32 %v206, %v313
    %v315 = vpop.f32.mrb[0].mxu0
    %316 = vdwg.mxu0
    %317 = vmatprep.subr.mxu0 0.0
    %v318 = vand.u32 %v60, 4294901760
    %v319 = vsub.f32 %v60, %v318
    %320 = vmatpush1.msra.mxu0 %v319
    %321 = vmatprep.subr.mxu0 0.0
    %v322 = vand.u32 %v80, 4294901760
    %v323 = vsub.f32 %v80, %v322
    %324 = vmatpush1.msra.mxu0 %v323
    %325 = vmatprep.subr.mxu0 0.0
    %v326 = vand.u32 %v77, 4294901760
    %v327 = vsub.f32 %v77, %v326
    %328 = vmatpush1.msra.mxu0 %v327
    %329 = vmatprep.subr.mxu0 0.0
    %v330 = vand.u32 %v70, 4294901760
    %v331 = vsub.f32 %v70, %v330
    %332 = vmatpush1.msra.mxu0 %v331
    %333 = vmatprep.subr.mxu0 0.0
    %v334 = vand.u32 %v107, 4294901760
    %v335 = vsub.f32 %v107, %v334
    %336 = vmatpush1.msra.mxu0 %v335
    %337 = vmatprep.subr.mxu0 0.0
    %338 = vmatpush1.msra.mxu0 0.0
    %339 = vmatprep.subr.mxu0 0.0
    %340 = vmatpush1.msra.mxu0 0.0
    %341 = vmatprep.subr.mxu0 0.0
    %342 = vmatpush1.msra.mxu0 0.0
    %343 = vmatprep.subr.mxu0 0.0
    %344 = vmatpush1.msra.mxu0 0.0
    %345 = vmatprep.subr.mxu0 0.0
    %346 = vmatpush1.msra.mxu0 0.0
    %347 = vmatprep.subr.mxu0 0.0
    %348 = vmatpush1.msra.mxu0 0.0
    %349 = vmatprep.subr.mxu0 0.0
    %350 = vmatpush1.msra.mxu0 0.0
    %351 = vmatprep.subr.mxu0 0.0
    %352 = vmatpush1.msra.mxu0 0.0
    %353 = vmatprep.subr.mxu0 0.0
    %354 = vmatpush1.msra.mxu0 0.0
    %355 = vmatprep.subr.mxu0 0.0
    %356 = vmatpush1.msra.mxu0 0.0
    %357 = vmatprep.subr.mxu0 0.0
    %358 = vmatpush1.msra.mxu0 0.0
    %359 = vmatprep.subr.mxu0 0.0
    %360 = vmatpush1.msra.mxu0 0.0
    %361 = vmatprep.subr.mxu0 0.0
    %362 = vmatpush1.msra.mxu0 0.0
    %363 = vmatprep.subr.mxu0 0.0
    %364 = vmatpush1.msra.mxu0 0.0
    %365 = vmatprep.subr.mxu0 0.0
    %366 = vmatpush1.msra.mxu0 0.0
    %367 = vmatprep.subr.mxu0 0.0
    %368 = vmatpush1.msra.mxu0 0.0
    %369 = vmatprep.subr.mxu0 0.0
    %370 = vmatpush1.msra.mxu0 0.0
    %371 = vmatprep.subr.mxu0 0.0
    %372 = vmatpush1.msra.mxu0 0.0
    %373 = vmatprep.subr.mxu0 0.0
    %374 = vmatpush1.msra.mxu0 0.0
    %375 = vmatprep.subr.mxu0 0.0
    %376 = vmatpush1.msra.mxu0 0.0
    %377 = vmatprep.subr.mxu0 0.0
    %378 = vmatpush1.msra.mxu0 0.0
    %379 = vmatprep.subr.mxu0 0.0
    %380 = vmatpush1.msra.mxu0 0.0
    %381 = vmatprep.subr.mxu0 0.0
    %382 = vmatpush1.msra.mxu0 0.0
    %383 = vmatprep.subr.mxu0 0.0
    %384 = vmatpush1.msra.mxu0 0.0
    %385 = vmatprep.subr.mxu0 0.0
    %386 = vmatpush1.msra.mxu0 0.0
    %387 = vmatprep.subr.mxu0 0.0
    %388 = vmatpush1.msra.mxu0 0.0
    %389 = vmatprep.subr.mxu0 0.0
    %390 = vmatpush1.msra.mxu0 0.0
    %391 = vmatprep.mubr.f32.mxu0 0.0
    %v392 = vand.u32 %v98, 4294901760
    %v393 = vsub.f32 %v98, %v392
    %394 = vmatmul.mubr.f32.gmra.mrb[0].mxu0 %v393
    %v395 = vpop.f32.mrb[0].mxu0
    %v396 = vadd.f32 %v302, %v395
    %v397 = vpop.f32.mrb[0].mxu0
    %398 = vmatprep.mubr.f32.mxu0 0.0
    %v399 = vand.u32 %v101, 4294901760
    %v400 = vsub.f32 %v101, %v399
    %401 = vmatmul.mubr.f32.gmra.mrb[0].mxu0 %v400
    %v402 = vpop.f32.mrb[0].mxu0
    %v403 = vadd.f32 %v308, %v402
    %v404 = vpop.f32.mrb[0].mxu0
    %405 = vmatprep.mubr.f32.mxu0 0.0
    %v406 = vand.u32 %v104, 4294901760
    %v407 = vsub.f32 %v104, %v406
    %408 = vmatmul.mubr.f32.gmra.mrb[0].mxu0 %v407
    %v409 = vpop.f32.mrb[0].mxu0
    %v410 = vadd.f32 %v314, %v409
    %v411 = vpop.f32.mrb[0].mxu0
    %412 = vdwg.mxu0
    %413 = vmatprep.subr.mxu0 0.0
    %v414 = vand.u32 %v60, 4294901760
    %415 = vmatpush1.msra.mxu0 %v414
    %416 = vmatprep.subr.mxu0 0.0
    %v417 = vand.u32 %v80, 4294901760
    %418 = vmatpush1.msra.mxu0 %v417
    %419 = vmatprep.subr.mxu0 0.0
    %v420 = vand.u32 %v77, 4294901760
    %421 = vmatpush1.msra.mxu0 %v420
    %422 = vmatprep.subr.mxu0 0.0
    %v423 = vand.u32 %v70, 4294901760
    %424 = vmatpush1.msra.mxu0 %v423
    %425 = vmatprep.subr.mxu0 0.0
    %v426 = vand.u32 %v107, 4294901760
    %427 = vmatpush1.msra.mxu0 %v426
    %428 = vmatprep.subr.mxu0 0.0
    %429 = vmatpush1.msra.mxu0 0.0
    %430 = vmatprep.subr.mxu0 0.0
    %431 = vmatpush1.msra.mxu0 0.0
    %432 = vmatprep.subr.mxu0 0.0
    %433 = vmatpush1.msra.mxu0 0.0
    %434 = vmatprep.subr.mxu0 0.0
    %435 = vmatpush1.msra.mxu0 0.0
    %436 = vmatprep.subr.mxu0 0.0
    %437 = vmatpush1.msra.mxu0 0.0
    %438 = vmatprep.subr.mxu0 0.0
    %439 = vmatpush1.msra.mxu0 0.0
    %440 = vmatprep.subr.mxu0 0.0
    %441 = vmatpush1.msra.mxu0 0.0
    %442 = vmatprep.subr.mxu0 0.0
    %443 = vmatpush1.msra.mxu0 0.0
    %444 = vmatprep.subr.mxu0 0.0
    %445 = vmatpush1.msra.mxu0 0.0
    %446 = vmatprep.subr.mxu0 0.0
    %447 = vmatpush1.msra.mxu0 0.0
    %448 = vmatprep.subr.mxu0 0.0
    %449 = vmatpush1.msra.mxu0 0.0
    %450 = vmatprep.subr.mxu0 0.0
    %451 = vmatpush1.msra.mxu0 0.0
    %452 = vmatprep.subr.mxu0 0.0
    %453 = vmatpush1.msra.mxu0 0.0
    %454 = vmatprep.subr.mxu0 0.0
    %455 = vmatpush1.msra.mxu0 0.0
    %456 = vmatprep.subr.mxu0 0.0
    %457 = vmatpush1.msra.mxu0 0.0
    %458 = vmatprep.subr.mxu0 0.0
    %459 = vmatpush1.msra.mxu0 0.0
    %460 = vmatprep.subr.mxu0 0.0
    %461 = vmatpush1.msra.mxu0 0.0
    %462 = vmatprep.subr.mxu0 0.0
    %463 = vmatpush1.msra.mxu0 0.0
    %464 = vmatprep.subr.mxu0 0.0
    %465 = vmatpush1.msra.mxu0 0.0
    %466 = vmatprep.subr.mxu0 0.0
    %467 = vmatpush1.msra.mxu0 0.0
    %468 = vmatprep.subr.mxu0 0.0
    %469 = vmatpush1.msra.mxu0 0.0
    %470 = vmatprep.subr.mxu0 0.0
    %471 = vmatpush1.msra.mxu0 0.0
    %472 = vmatprep.subr.mxu0 0.0
    %473 = vmatpush1.msra.mxu0 0.0
    %474 = vmatprep.subr.mxu0 0.0
    %475 = vmatpush1.msra.mxu0 0.0
    %476 = vmatprep.subr.mxu0 0.0
    %477 = vmatpush1.msra.mxu0 0.0
    %478 = vmatprep.subr.mxu0 0.0
    %479 = vmatpush1.msra.mxu0 0.0
    %480 = vmatprep.subr.mxu0 0.0
    %481 = vmatpush1.msra.mxu0 0.0
    %482 = vmatprep.mubr.f32.mxu0 0.0
    %v483 = vand.u32 %v98, 4294901760
    %v484 = vsub.f32 %v98, %v483
    %v485 = vand.u32 %v484, 4294901760
    %486 = vmatmul.mubr.f32.gmra.mrb[0].mxu0 %v485
    %v487 = vpop.f32.mrb[0].mxu0
    %v488 = vadd.f32 %v396, %v487
    %v489 = vpop.f32.mrb[0].mxu0
    %490 = vmatprep.mubr.f32.mxu0 0.0
    %v491 = vand.u32 %v101, 4294901760
    %v492 = vsub.f32 %v101, %v491
    %v493 = vand.u32 %v492, 4294901760
    %494 = vmatmul.mubr.f32.gmra.mrb[0].mxu0 %v493
    %v495 = vpop.f32.mrb[0].mxu0
    %v496 = vadd.f32 %v403, %v495
    %v497 = vpop.f32.mrb[0].mxu0
    %498 = vmatprep.mubr.f32.mxu0 0.0
    %v499 = vand.u32 %v104, 4294901760
    %v500 = vsub.f32 %v104, %v499
    %v501 = vand.u32 %v500, 4294901760
    %502 = vmatmul.mubr.f32.gmra.mrb[0].mxu0 %v501
    %v503 = vpop.f32.mrb[0].mxu0
    %v504 = vadd.f32 %v410, %v503
    %v505 = vpop.f32.mrb[0].mxu0
    %506 = vdwg.mxu0
    %507 = vmatprep.subr.mxu0 0.0
    %v508 = vand.u32 %v60, 4294901760
    %v509 = vsub.f32 %v60, %v508
    %v510 = vand.u32 %v509, 4294901760
    %511 = vmatpush1.msra.mxu0 %v510
    %512 = vmatprep.subr.mxu0 0.0
    %v513 = vand.u32 %v80, 4294901760
    %v514 = vsub.f32 %v80, %v513
    %v515 = vand.u32 %v514, 4294901760
    %516 = vmatpush1.msra.mxu0 %v515
    %517 = vmatprep.subr.mxu0 0.0
    %v518 = vand.u32 %v77, 4294901760
    %v519 = vsub.f32 %v77, %v518
    %v520 = vand.u32 %v519, 4294901760
    %521 = vmatpush1.msra.mxu0 %v520
    %522 = vmatprep.subr.mxu0 0.0
    %v523 = vand.u32 %v70, 4294901760
    %v524 = vsub.f32 %v70, %v523
    %v525 = vand.u32 %v524, 4294901760
    %526 = vmatpush1.msra.mxu0 %v525
    %527 = vmatprep.subr.mxu0 0.0
    %v528 = vand.u32 %v107, 4294901760
    %v529 = vsub.f32 %v107, %v528
    %v530 = vand.u32 %v529, 4294901760
    %531 = vmatpush1.msra.mxu0 %v530
    %532 = vmatprep.subr.mxu0 0.0
    %533 = vmatpush1.msra.mxu0 0.0
    %534 = vmatprep.subr.mxu0 0.0
    %535 = vmatpush1.msra.mxu0 0.0
    %536 = vmatprep.subr.mxu0 0.0
    %537 = vmatpush1.msra.mxu0 0.0
    %538 = vmatprep.subr.mxu0 0.0
    %539 = vmatpush1.msra.mxu0 0.0
    %540 = vmatprep.subr.mxu0 0.0
    %541 = vmatpush1.msra.mxu0 0.0
    %542 = vmatprep.subr.mxu0 0.0
    %543 = vmatpush1.msra.mxu0 0.0
    %544 = vmatprep.subr.mxu0 0.0
    %545 = vmatpush1.msra.mxu0 0.0
    %546 = vmatprep.subr.mxu0 0.0
    %547 = vmatpush1.msra.mxu0 0.0
    %548 = vmatprep.subr.mxu0 0.0
    %549 = vmatpush1.msra.mxu0 0.0
    %550 = vmatprep.subr.mxu0 0.0
    %551 = vmatpush1.msra.mxu0 0.0
    %552 = vmatprep.subr.mxu0 0.0
    %553 = vmatpush1.msra.mxu0 0.0
    %554 = vmatprep.subr.mxu0 0.0
    %555 = vmatpush1.msra.mxu0 0.0
    %556 = vmatprep.subr.mxu0 0.0
    %557 = vmatpush1.msra.mxu0 0.0
    %558 = vmatprep.subr.mxu0 0.0
    %559 = vmatpush1.msra.mxu0 0.0
    %560 = vmatprep.subr.mxu0 0.0
    %561 = vmatpush1.msra.mxu0 0.0
    %562 = vmatprep.subr.mxu0 0.0
    %563 = vmatpush1.msra.mxu0 0.0
    %564 = vmatprep.subr.mxu0 0.0
    %565 = vmatpush1.msra.mxu0 0.0
    %566 = vmatprep.subr.mxu0 0.0
    %567 = vmatpush1.msra.mxu0 0.0
    %568 = vmatprep.subr.mxu0 0.0
    %569 = vmatpush1.msra.mxu0 0.0
    %570 = vmatprep.subr.mxu0 0.0
    %571 = vmatpush1.msra.mxu0 0.0
    %572 = vmatprep.subr.mxu0 0.0
    %573 = vmatpush1.msra.mxu0 0.0
    %574 = vmatprep.subr.mxu0 0.0
    %575 = vmatpush1.msra.mxu0 0.0
    %576 = vmatprep.subr.mxu0 0.0
    %577 = vmatpush1.msra.mxu0 0.0
    %578 = vmatprep.subr.mxu0 0.0
    %579 = vmatpush1.msra.mxu0 0.0
    %580 = vmatprep.subr.mxu0 0.0
    %581 = vmatpush1.msra.mxu0 0.0
    %582 = vmatprep.subr.mxu0 0.0
    %583 = vmatpush1.msra.mxu0 0.0
    %584 = vmatprep.subr.mxu0 0.0
    %585 = vmatpush1.msra.mxu0 0.0
    %586 = vmatprep.mubr.f32.mxu0 0.0
    %v587 = vand.u32 %v98, 4294901760
    %588 = vmatmul.mubr.f32.gmra.mrb[0].mxu0 %v587
    %v589 = vpop.f32.mrb[0].mxu0
    %v590 = vadd.f32 %v488, %v589
    %v591 = vpop.f32.mrb[0].mxu0
    %592 = vmatprep.mubr.f32.mxu0 0.0
    %v593 = vand.u32 %v101, 4294901760
    %594 = vmatmul.mubr.f32.gmra.mrb[0].mxu0 %v593
    %v595 = vpop.f32.mrb[0].mxu0
    %v596 = vadd.f32 %v496, %v595
    %v597 = vpop.f32.mrb[0].mxu0
    %598 = vmatprep.mubr.f32.mxu0 0.0
    %v599 = vand.u32 %v104, 4294901760
    %600 = vmatmul.mubr.f32.gmra.mrb[0].mxu0 %v599
    %v601 = vpop.f32.mrb[0].mxu0
    %v602 = vadd.f32 %v504, %v601
    %v603 = vpop.f32.mrb[0].mxu0
    %604 = vdwg.mxu0
    %605 = vmatprep.subr.mxu0 0.0
    %v606 = vand.u32 %v60, 4294901760
    %607 = vmatpush1.msra.mxu0 %v606
    %608 = vmatprep.subr.mxu0 0.0
    %v609 = vand.u32 %v80, 4294901760
    %610 = vmatpush1.msra.mxu0 %v609
    %611 = vmatprep.subr.mxu0 0.0
    %v612 = vand.u32 %v77, 4294901760
    %613 = vmatpush1.msra.mxu0 %v612
    %614 = vmatprep.subr.mxu0 0.0
    %v615 = vand.u32 %v70, 4294901760
    %616 = vmatpush1.msra.mxu0 %v615
    %617 = vmatprep.subr.mxu0 0.0
    %v618 = vand.u32 %v107, 4294901760
    %619 = vmatpush1.msra.mxu0 %v618
    %620 = vmatprep.subr.mxu0 0.0
    %621 = vmatpush1.msra.mxu0 0.0
    %622 = vmatprep.subr.mxu0 0.0
    %623 = vmatpush1.msra.mxu0 0.0
    %624 = vmatprep.subr.mxu0 0.0
    %625 = vmatpush1.msra.mxu0 0.0
    %626 = vmatprep.subr.mxu0 0.0
    %627 = vmatpush1.msra.mxu0 0.0
    %628 = vmatprep.subr.mxu0 0.0
    %629 = vmatpush1.msra.mxu0 0.0
    %630 = vmatprep.subr.mxu0 0.0
    %631 = vmatpush1.msra.mxu0 0.0
    %632 = vmatprep.subr.mxu0 0.0
    %633 = vmatpush1.msra.mxu0 0.0
    %634 = vmatprep.subr.mxu0 0.0
    %635 = vmatpush1.msra.mxu0 0.0
    %636 = vmatprep.subr.mxu0 0.0
    %637 = vmatpush1.msra.mxu0 0.0
    %638 = vmatprep.subr.mxu0 0.0
    %639 = vmatpush1.msra.mxu0 0.0
    %640 = vmatprep.subr.mxu0 0.0
    %641 = vmatpush1.msra.mxu0 0.0
    %642 = vmatprep.subr.mxu0 0.0
    %643 = vmatpush1.msra.mxu0 0.0
    %644 = vmatprep.subr.mxu0 0.0
    %645 = vmatpush1.msra.mxu0 0.0
    %646 = vmatprep.subr.mxu0 0.0
    %647 = vmatpush1.msra.mxu0 0.0
    %648 = vmatprep.subr.mxu0 0.0
    %649 = vmatpush1.msra.mxu0 0.0
    %650 = vmatprep.subr.mxu0 0.0
    %651 = vmatpush1.msra.mxu0 0.0
    %652 = vmatprep.subr.mxu0 0.0
    %653 = vmatpush1.msra.mxu0 0.0
    %654 = vmatprep.subr.mxu0 0.0
    %655 = vmatpush1.msra.mxu0 0.0
    %656 = vmatprep.subr.mxu0 0.0
    %657 = vmatpush1.msra.mxu0 0.0
    %658 = vmatprep.subr.mxu0 0.0
    %659 = vmatpush1.msra.mxu0 0.0
    %660 = vmatprep.subr.mxu0 0.0
    %661 = vmatpush1.msra.mxu0 0.0
    %662 = vmatprep.subr.mxu0 0.0
    %663 = vmatpush1.msra.mxu0 0.0
    %664 = vmatprep.subr.mxu0 0.0
    %665 = vmatpush1.msra.mxu0 0.0
    %666 = vmatprep.subr.mxu0 0.0
    %667 = vmatpush1.msra.mxu0 0.0
    %668 = vmatprep.subr.mxu0 0.0
    %669 = vmatpush1.msra.mxu0 0.0
    %670 = vmatprep.subr.mxu0 0.0
    %671 = vmatpush1.msra.mxu0 0.0
    %672 = vmatprep.subr.mxu0 0.0
    %673 = vmatpush1.msra.mxu0 0.0
    %674 = vmatprep.mubr.f32.mxu0 0.0
    %v675 = vand.u32 %v98, 4294901760
    %676 = vmatmul.mubr.f32.gmra.mrb[0].mxu0 %v675
    %v677 = vpop.f32.mrb[0].mxu0
    %v678 = vadd.f32 %v590, %v677
    %v679 = vpop.f32.mrb[0].mxu0
    %680 = vmatprep.mubr.f32.mxu0 0.0
    %v681 = vand.u32 %v101, 4294901760
    %682 = vmatmul.mubr.f32.gmra.mrb[0].mxu0 %v681
    %v683 = vpop.f32.mrb[0].mxu0
    %v684 = vadd.f32 %v596, %v683
    %v685 = vpop.f32.mrb[0].mxu0
    %686 = vmatprep.mubr.f32.mxu0 0.0
    %v687 = vand.u32 %v104, 4294901760
    %688 = vmatmul.mubr.f32.gmra.mrb[0].mxu0 %v687
    %v689 = vpop.f32.mrb[0].mxu0
    %v690 = vadd.f32 %v602, %v689
    %v691 = vpop.f32.mrb[0].mxu0
    %692 = vdwg.mxu0
    %v693 = vmax.f32 %v678, 0.0
    %v694 = vmax.f32 %v684, 0.0
    %v695 = vmax.f32 %v690, 0.0
    %696 = vrot.lane.b32.xlu0 %v693, 1
    %v697 = vpop.permute.xlu0 %696
    %698 = vrot.lane.b32.xlu0 %v694, 1
    %v699 = vpop.permute.xlu0 %698
    %700 = vrot.lane.b32.xlu0 %v695, 1
    %v701 = vpop.permute.xlu0 %700
    %v702 = vmul.f32 %v697, %v59
    %v703 = vmul.f32 %v699, %v59
    %v704 = vmul.f32 %v701, %v59
    %705 = vrot.lane.b32.xlu0 %v693, 127
    %v706 = vpop.permute.xlu0 %705
    %707 = vrot.lane.b32.xlu0 %v694, 127
    %v708 = vpop.permute.xlu0 %707
    %709 = vrot.lane.b32.xlu0 %v695, 127
    %v710 = vpop.permute.xlu0 %709
    %v711 = vmul.f32 %v706, %v69
    %v712 = vmul.f32 %v708, %v69
    %v713 = vmul.f32 %v710, %v69
    %715 = vset.pattern.permute.xlu0 0
    %716 = vperm.xlu0 %715, %v47
    %v717 = vpop.permute.xlu0 %716
    %720 = vset.pattern.permute.xlu0 0
    %721 = vperm.xlu0 %720, %v48
    %v722 = vpop.permute.xlu0 %721
    %vm724 = vcmask 588800
    %v726 = vsel %vm724, %v45, 0
    %v729 = vsel %vm724, %v46, 0
    %731 = vmatprep.subr.mxu0 0.0
    %v732 = vand.u32 %v702, 4294901760
    %733 = vmatpush1.msra.mxu0 %v732
    %734 = vmatprep.subr.mxu0 0.0
    %v735 = vand.u32 %v703, 4294901760
    %736 = vmatpush1.msra.mxu0 %v735
    %737 = vmatprep.subr.mxu0 0.0
    %v738 = vand.u32 %v704, 4294901760
    %739 = vmatpush1.msra.mxu0 %v738
    %740 = vmatprep.subr.mxu0 0.0
    %v741 = vand.u32 %v693, 4294901760
    %742 = vmatpush1.msra.mxu0 %v741
    %743 = vmatprep.subr.mxu0 0.0
    %v744 = vand.u32 %v694, 4294901760
    %745 = vmatpush1.msra.mxu0 %v744
    %746 = vmatprep.subr.mxu0 0.0
    %v747 = vand.u32 %v695, 4294901760
    %748 = vmatpush1.msra.mxu0 %v747
    %749 = vmatprep.subr.mxu0 0.0
    %v750 = vand.u32 %v711, 4294901760
    %751 = vmatpush1.msra.mxu0 %v750
    %752 = vmatprep.subr.mxu0 0.0
    %v753 = vand.u32 %v712, 4294901760
    %754 = vmatpush1.msra.mxu0 %v753
    %755 = vmatprep.subr.mxu0 0.0
    %v756 = vand.u32 %v713, 4294901760
    %757 = vmatpush1.msra.mxu0 %v756
    %758 = vmatprep.subr.mxu0 0.0
    %759 = vmatpush1.msra.mxu0 0.0
    %760 = vmatprep.subr.mxu0 0.0
    %761 = vmatpush1.msra.mxu0 0.0
    %762 = vmatprep.subr.mxu0 0.0
    %763 = vmatpush1.msra.mxu0 0.0
    %764 = vmatprep.subr.mxu0 0.0
    %765 = vmatpush1.msra.mxu0 0.0
    %766 = vmatprep.subr.mxu0 0.0
    %767 = vmatpush1.msra.mxu0 0.0
    %768 = vmatprep.subr.mxu0 0.0
    %769 = vmatpush1.msra.mxu0 0.0
    %770 = vmatprep.subr.mxu0 0.0
    %771 = vmatpush1.msra.mxu0 0.0
    %772 = vmatprep.subr.mxu0 0.0
    %773 = vmatpush1.msra.mxu0 0.0
    %774 = vmatprep.subr.mxu0 0.0
    %775 = vmatpush1.msra.mxu0 0.0
    %776 = vmatprep.subr.mxu0 0.0
    %777 = vmatpush1.msra.mxu0 0.0
    %778 = vmatprep.subr.mxu0 0.0
    %779 = vmatpush1.msra.mxu0 0.0
    %780 = vmatprep.subr.mxu0 0.0
    %781 = vmatpush1.msra.mxu0 0.0
    %782 = vmatprep.subr.mxu0 0.0
    %783 = vmatpush1.msra.mxu0 0.0
    %784 = vmatprep.subr.mxu0 0.0
    %785 = vmatpush1.msra.mxu0 0.0
    %786 = vmatprep.subr.mxu0 0.0
    %787 = vmatpush1.msra.mxu0 0.0
    %788 = vmatprep.subr.mxu0 0.0
    %789 = vmatpush1.msra.mxu0 0.0
    %790 = vmatprep.subr.mxu0 0.0
    %791 = vmatpush1.msra.mxu0 0.0
    %792 = vmatprep.subr.mxu0 0.0
    %793 = vmatpush1.msra.mxu0 0.0
    %794 = vmatprep.subr.mxu0 0.0
    %795 = vmatpush1.msra.mxu0 0.0
    %796 = vmatprep.subr.mxu0 0.0
    %797 = vmatpush1.msra.mxu0 0.0
    %798 = vmatprep.subr.mxu0 0.0
    %799 = vmatpush1.msra.mxu0 0.0
    %800 = vmatprep.subr.mxu0 0.0
    %801 = vmatpush1.msra.mxu0 0.0
    %802 = vmatprep.subr.mxu0 0.0
    %803 = vmatpush1.msra.mxu0 0.0
    %804 = vmatprep.mubr.f32.mxu0 0.0
    %v805 = vand.u32 %v726, 4294901760
    %v806 = vsub.f32 %v726, %v805
    %v807 = vand.u32 %v806, 4294901760
    %v808 = vsub.f32 %v806, %v807
    %v809 = vand.u32 %v808, 4294901760
    %810 = vmatmul.mubr.f32.gmra.mrb[0].mxu0 %v809
    %v811 = vpop.f32.mrb[0].mxu0
    %v812 = vadd.f32 %v717, %v811
    %v813 = vpop.f32.mrb[0].mxu0
    %814 = vmatprep.mubr.f32.mxu0 0.0
    %v815 = vand.u32 %v729, 4294901760
    %v816 = vsub.f32 %v729, %v815
    %v817 = vand.u32 %v816, 4294901760
    %v818 = vsub.f32 %v816, %v817
    %v819 = vand.u32 %v818, 4294901760
    %820 = vmatmul.mubr.f32.gmra.mrb[0].mxu0 %v819
    %v821 = vpop.f32.mrb[0].mxu0
    %v822 = vadd.f32 %v722, %v821
    %v823 = vpop.f32.mrb[0].mxu0
    %824 = vdwg.mxu0
    %825 = vmatprep.subr.mxu0 0.0
    %v826 = vand.u32 %v702, 4294901760
    %v827 = vsub.f32 %v702, %v826
    %v828 = vand.u32 %v827, 4294901760
    %v829 = vsub.f32 %v827, %v828
    %v830 = vand.u32 %v829, 4294901760
    %831 = vmatpush1.msra.mxu0 %v830
    %832 = vmatprep.subr.mxu0 0.0
    %v833 = vand.u32 %v703, 4294901760
    %v834 = vsub.f32 %v703, %v833
    %v835 = vand.u32 %v834, 4294901760
    %v836 = vsub.f32 %v834, %v835
    %v837 = vand.u32 %v836, 4294901760
    %838 = vmatpush1.msra.mxu0 %v837
    %839 = vmatprep.subr.mxu0 0.0
    %v840 = vand.u32 %v704, 4294901760
    %v841 = vsub.f32 %v704, %v840
    %v842 = vand.u32 %v841, 4294901760
    %v843 = vsub.f32 %v841, %v842
    %v844 = vand.u32 %v843, 4294901760
    %845 = vmatpush1.msra.mxu0 %v844
    %846 = vmatprep.subr.mxu0 0.0
    %v847 = vand.u32 %v693, 4294901760
    %v848 = vsub.f32 %v693, %v847
    %v849 = vand.u32 %v848, 4294901760
    %v850 = vsub.f32 %v848, %v849
    %v851 = vand.u32 %v850, 4294901760
    %852 = vmatpush1.msra.mxu0 %v851
    %853 = vmatprep.subr.mxu0 0.0
    %v854 = vand.u32 %v694, 4294901760
    %v855 = vsub.f32 %v694, %v854
    %v856 = vand.u32 %v855, 4294901760
    %v857 = vsub.f32 %v855, %v856
    %v858 = vand.u32 %v857, 4294901760
    %859 = vmatpush1.msra.mxu0 %v858
    %860 = vmatprep.subr.mxu0 0.0
    %v861 = vand.u32 %v695, 4294901760
    %v862 = vsub.f32 %v695, %v861
    %v863 = vand.u32 %v862, 4294901760
    %v864 = vsub.f32 %v862, %v863
    %v865 = vand.u32 %v864, 4294901760
    %866 = vmatpush1.msra.mxu0 %v865
    %867 = vmatprep.subr.mxu0 0.0
    %v868 = vand.u32 %v711, 4294901760
    %v869 = vsub.f32 %v711, %v868
    %v870 = vand.u32 %v869, 4294901760
    %v871 = vsub.f32 %v869, %v870
    %v872 = vand.u32 %v871, 4294901760
    %873 = vmatpush1.msra.mxu0 %v872
    %874 = vmatprep.subr.mxu0 0.0
    %v875 = vand.u32 %v712, 4294901760
    %v876 = vsub.f32 %v712, %v875
    %v877 = vand.u32 %v876, 4294901760
    %v878 = vsub.f32 %v876, %v877
    %v879 = vand.u32 %v878, 4294901760
    %880 = vmatpush1.msra.mxu0 %v879
    %881 = vmatprep.subr.mxu0 0.0
    %v882 = vand.u32 %v713, 4294901760
    %v883 = vsub.f32 %v713, %v882
    %v884 = vand.u32 %v883, 4294901760
    %v885 = vsub.f32 %v883, %v884
    %v886 = vand.u32 %v885, 4294901760
    %887 = vmatpush1.msra.mxu0 %v886
    %888 = vmatprep.subr.mxu0 0.0
    %889 = vmatpush1.msra.mxu0 0.0
    %890 = vmatprep.subr.mxu0 0.0
    %891 = vmatpush1.msra.mxu0 0.0
    %892 = vmatprep.subr.mxu0 0.0
    %893 = vmatpush1.msra.mxu0 0.0
    %894 = vmatprep.subr.mxu0 0.0
    %895 = vmatpush1.msra.mxu0 0.0
    %896 = vmatprep.subr.mxu0 0.0
    %897 = vmatpush1.msra.mxu0 0.0
    %898 = vmatprep.subr.mxu0 0.0
    %899 = vmatpush1.msra.mxu0 0.0
    %900 = vmatprep.subr.mxu0 0.0
    %901 = vmatpush1.msra.mxu0 0.0
    %902 = vmatprep.subr.mxu0 0.0
    %903 = vmatpush1.msra.mxu0 0.0
    %904 = vmatprep.subr.mxu0 0.0
    %905 = vmatpush1.msra.mxu0 0.0
    %906 = vmatprep.subr.mxu0 0.0
    %907 = vmatpush1.msra.mxu0 0.0
    %908 = vmatprep.subr.mxu0 0.0
    %909 = vmatpush1.msra.mxu0 0.0
    %910 = vmatprep.subr.mxu0 0.0
    %911 = vmatpush1.msra.mxu0 0.0
    %912 = vmatprep.subr.mxu0 0.0
    %913 = vmatpush1.msra.mxu0 0.0
    %914 = vmatprep.subr.mxu0 0.0
    %915 = vmatpush1.msra.mxu0 0.0
    %916 = vmatprep.subr.mxu0 0.0
    %917 = vmatpush1.msra.mxu0 0.0
    %918 = vmatprep.subr.mxu0 0.0
    %919 = vmatpush1.msra.mxu0 0.0
    %920 = vmatprep.subr.mxu0 0.0
    %921 = vmatpush1.msra.mxu0 0.0
    %922 = vmatprep.subr.mxu0 0.0
    %923 = vmatpush1.msra.mxu0 0.0
    %924 = vmatprep.subr.mxu0 0.0
    %925 = vmatpush1.msra.mxu0 0.0
    %926 = vmatprep.subr.mxu0 0.0
    %927 = vmatpush1.msra.mxu0 0.0
    %928 = vmatprep.subr.mxu0 0.0
    %929 = vmatpush1.msra.mxu0 0.0
    %930 = vmatprep.subr.mxu0 0.0
    %931 = vmatpush1.msra.mxu0 0.0
    %932 = vmatprep.subr.mxu0 0.0
    %933 = vmatpush1.msra.mxu0 0.0
    %934 = vmatprep.mubr.f32.mxu0 0.0
    %v935 = vand.u32 %v726, 4294901760
    %936 = vmatmul.mubr.f32.gmra.mrb[0].mxu0 %v935
    %v937 = vpop.f32.mrb[0].mxu0
    %v938 = vadd.f32 %v812, %v937
    %v939 = vpop.f32.mrb[0].mxu0
    %940 = vmatprep.mubr.f32.mxu0 0.0
    %v941 = vand.u32 %v729, 4294901760
    %942 = vmatmul.mubr.f32.gmra.mrb[0].mxu0 %v941
    %v943 = vpop.f32.mrb[0].mxu0
    %v944 = vadd.f32 %v822, %v943
    %v945 = vpop.f32.mrb[0].mxu0
    %946 = vdwg.mxu0
    %947 = vmatprep.subr.mxu0 0.0
    %v948 = vand.u32 %v702, 4294901760
    %v949 = vsub.f32 %v702, %v948
    %950 = vmatpush1.msra.mxu0 %v949
    %951 = vmatprep.subr.mxu0 0.0
    %v952 = vand.u32 %v703, 4294901760
    %v953 = vsub.f32 %v703, %v952
    %954 = vmatpush1.msra.mxu0 %v953
    %955 = vmatprep.subr.mxu0 0.0
    %v956 = vand.u32 %v704, 4294901760
    %v957 = vsub.f32 %v704, %v956
    %958 = vmatpush1.msra.mxu0 %v957
    %959 = vmatprep.subr.mxu0 0.0
    %v960 = vand.u32 %v693, 4294901760
    %v961 = vsub.f32 %v693, %v960
    %962 = vmatpush1.msra.mxu0 %v961
    %963 = vmatprep.subr.mxu0 0.0
    %v964 = vand.u32 %v694, 4294901760
    %v965 = vsub.f32 %v694, %v964
    %966 = vmatpush1.msra.mxu0 %v965
    %967 = vmatprep.subr.mxu0 0.0
    %v968 = vand.u32 %v695, 4294901760
    %v969 = vsub.f32 %v695, %v968
    %970 = vmatpush1.msra.mxu0 %v969
    %971 = vmatprep.subr.mxu0 0.0
    %v972 = vand.u32 %v711, 4294901760
    %v973 = vsub.f32 %v711, %v972
    %974 = vmatpush1.msra.mxu0 %v973
    %975 = vmatprep.subr.mxu0 0.0
    %v976 = vand.u32 %v712, 4294901760
    %v977 = vsub.f32 %v712, %v976
    %978 = vmatpush1.msra.mxu0 %v977
    %979 = vmatprep.subr.mxu0 0.0
    %v980 = vand.u32 %v713, 4294901760
    %v981 = vsub.f32 %v713, %v980
    %982 = vmatpush1.msra.mxu0 %v981
    %983 = vmatprep.subr.mxu0 0.0
    %984 = vmatpush1.msra.mxu0 0.0
    %985 = vmatprep.subr.mxu0 0.0
    %986 = vmatpush1.msra.mxu0 0.0
    %987 = vmatprep.subr.mxu0 0.0
    %988 = vmatpush1.msra.mxu0 0.0
    %989 = vmatprep.subr.mxu0 0.0
    %990 = vmatpush1.msra.mxu0 0.0
    %991 = vmatprep.subr.mxu0 0.0
    %992 = vmatpush1.msra.mxu0 0.0
    %993 = vmatprep.subr.mxu0 0.0
    %994 = vmatpush1.msra.mxu0 0.0
    %995 = vmatprep.subr.mxu0 0.0
    %996 = vmatpush1.msra.mxu0 0.0
    %997 = vmatprep.subr.mxu0 0.0
    %998 = vmatpush1.msra.mxu0 0.0
    %999 = vmatprep.subr.mxu0 0.0
    %1000 = vmatpush1.msra.mxu0 0.0
    %1001 = vmatprep.subr.mxu0 0.0
    %1002 = vmatpush1.msra.mxu0 0.0
    %1003 = vmatprep.subr.mxu0 0.0
    %1004 = vmatpush1.msra.mxu0 0.0
    %1005 = vmatprep.subr.mxu0 0.0
    %1006 = vmatpush1.msra.mxu0 0.0
    %1007 = vmatprep.subr.mxu0 0.0
    %1008 = vmatpush1.msra.mxu0 0.0
    %1009 = vmatprep.subr.mxu0 0.0
    %1010 = vmatpush1.msra.mxu0 0.0
    %1011 = vmatprep.subr.mxu0 0.0
    %1012 = vmatpush1.msra.mxu0 0.0
    %1013 = vmatprep.subr.mxu0 0.0
    %1014 = vmatpush1.msra.mxu0 0.0
    %1015 = vmatprep.subr.mxu0 0.0
    %1016 = vmatpush1.msra.mxu0 0.0
    %1017 = vmatprep.subr.mxu0 0.0
    %1018 = vmatpush1.msra.mxu0 0.0
    %1019 = vmatprep.subr.mxu0 0.0
    %1020 = vmatpush1.msra.mxu0 0.0
    %1021 = vmatprep.subr.mxu0 0.0
    %1022 = vmatpush1.msra.mxu0 0.0
    %1023 = vmatprep.subr.mxu0 0.0
    %1024 = vmatpush1.msra.mxu0 0.0
    %1025 = vmatprep.subr.mxu0 0.0
    %1026 = vmatpush1.msra.mxu0 0.0
    %1027 = vmatprep.subr.mxu0 0.0
    %1028 = vmatpush1.msra.mxu0 0.0
    %1029 = vmatprep.mubr.f32.mxu0 0.0
    %v1030 = vand.u32 %v726, 4294901760
    %v1031 = vsub.f32 %v726, %v1030
    %1032 = vmatmul.mubr.f32.gmra.mrb[0].mxu0 %v1031
    %v1033 = vpop.f32.mrb[0].mxu0
    %v1034 = vadd.f32 %v938, %v1033
    %v1035 = vpop.f32.mrb[0].mxu0
    %1036 = vmatprep.mubr.f32.mxu0 0.0
    %v1037 = vand.u32 %v729, 4294901760
    %v1038 = vsub.f32 %v729, %v1037
    %1039 = vmatmul.mubr.f32.gmra.mrb[0].mxu0 %v1038
    %v1040 = vpop.f32.mrb[0].mxu0
    %v1041 = vadd.f32 %v944, %v1040
    %v1042 = vpop.f32.mrb[0].mxu0
    %1043 = vdwg.mxu0
    %1044 = vmatprep.subr.mxu0 0.0
    %v1045 = vand.u32 %v702, 4294901760
    %1046 = vmatpush1.msra.mxu0 %v1045
    %1047 = vmatprep.subr.mxu0 0.0
    %v1048 = vand.u32 %v703, 4294901760
    %1049 = vmatpush1.msra.mxu0 %v1048
    %1050 = vmatprep.subr.mxu0 0.0
    %v1051 = vand.u32 %v704, 4294901760
    %1052 = vmatpush1.msra.mxu0 %v1051
    %1053 = vmatprep.subr.mxu0 0.0
    %v1054 = vand.u32 %v693, 4294901760
    %1055 = vmatpush1.msra.mxu0 %v1054
    %1056 = vmatprep.subr.mxu0 0.0
    %v1057 = vand.u32 %v694, 4294901760
    %1058 = vmatpush1.msra.mxu0 %v1057
    %1059 = vmatprep.subr.mxu0 0.0
    %v1060 = vand.u32 %v695, 4294901760
    %1061 = vmatpush1.msra.mxu0 %v1060
    %1062 = vmatprep.subr.mxu0 0.0
    %v1063 = vand.u32 %v711, 4294901760
    %1064 = vmatpush1.msra.mxu0 %v1063
    %1065 = vmatprep.subr.mxu0 0.0
    %v1066 = vand.u32 %v712, 4294901760
    %1067 = vmatpush1.msra.mxu0 %v1066
    %1068 = vmatprep.subr.mxu0 0.0
    %v1069 = vand.u32 %v713, 4294901760
    %1070 = vmatpush1.msra.mxu0 %v1069
    %1071 = vmatprep.subr.mxu0 0.0
    %1072 = vmatpush1.msra.mxu0 0.0
    %1073 = vmatprep.subr.mxu0 0.0
    %1074 = vmatpush1.msra.mxu0 0.0
    %1075 = vmatprep.subr.mxu0 0.0
    %1076 = vmatpush1.msra.mxu0 0.0
    %1077 = vmatprep.subr.mxu0 0.0
    %1078 = vmatpush1.msra.mxu0 0.0
    %1079 = vmatprep.subr.mxu0 0.0
    %1080 = vmatpush1.msra.mxu0 0.0
    %1081 = vmatprep.subr.mxu0 0.0
    %1082 = vmatpush1.msra.mxu0 0.0
    %1083 = vmatprep.subr.mxu0 0.0
    %1084 = vmatpush1.msra.mxu0 0.0
    %1085 = vmatprep.subr.mxu0 0.0
    %1086 = vmatpush1.msra.mxu0 0.0
    %1087 = vmatprep.subr.mxu0 0.0
    %1088 = vmatpush1.msra.mxu0 0.0
    %1089 = vmatprep.subr.mxu0 0.0
    %1090 = vmatpush1.msra.mxu0 0.0
    %1091 = vmatprep.subr.mxu0 0.0
    %1092 = vmatpush1.msra.mxu0 0.0
    %1093 = vmatprep.subr.mxu0 0.0
    %1094 = vmatpush1.msra.mxu0 0.0
    %1095 = vmatprep.subr.mxu0 0.0
    %1096 = vmatpush1.msra.mxu0 0.0
    %1097 = vmatprep.subr.mxu0 0.0
    %1098 = vmatpush1.msra.mxu0 0.0
    %1099 = vmatprep.subr.mxu0 0.0
    %1100 = vmatpush1.msra.mxu0 0.0
    %1101 = vmatprep.subr.mxu0 0.0
    %1102 = vmatpush1.msra.mxu0 0.0
    %1103 = vmatprep.subr.mxu0 0.0
    %1104 = vmatpush1.msra.mxu0 0.0
    %1105 = vmatprep.subr.mxu0 0.0
    %1106 = vmatpush1.msra.mxu0 0.0
    %1107 = vmatprep.subr.mxu0 0.0
    %1108 = vmatpush1.msra.mxu0 0.0
    %1109 = vmatprep.subr.mxu0 0.0
    %1110 = vmatpush1.msra.mxu0 0.0
    %1111 = vmatprep.subr.mxu0 0.0
    %1112 = vmatpush1.msra.mxu0 0.0
    %1113 = vmatprep.subr.mxu0 0.0
    %1114 = vmatpush1.msra.mxu0 0.0
    %1115 = vmatprep.subr.mxu0 0.0
    %1116 = vmatpush1.msra.mxu0 0.0
    %1117 = vmatprep.mubr.f32.mxu0 0.0
    %v1118 = vand.u32 %v726, 4294901760
    %v1119 = vsub.f32 %v726, %v1118
    %v1120 = vand.u32 %v1119, 4294901760
    %1121 = vmatmul.mubr.f32.gmra.mrb[0].mxu0 %v1120
    %v1122 = vpop.f32.mrb[0].mxu0
    %v1123 = vadd.f32 %v1034, %v1122
    %v1124 = vpop.f32.mrb[0].mxu0
    %1125 = vmatprep.mubr.f32.mxu0 0.0
    %v1126 = vand.u32 %v729, 4294901760
    %v1127 = vsub.f32 %v729, %v1126
    %v1128 = vand.u32 %v1127, 4294901760
    %1129 = vmatmul.mubr.f32.gmra.mrb[0].mxu0 %v1128
    %v1130 = vpop.f32.mrb[0].mxu0
    %v1131 = vadd.f32 %v1041, %v1130
    %v1132 = vpop.f32.mrb[0].mxu0
    %1133 = vdwg.mxu0
    %1134 = vmatprep.subr.mxu0 0.0
    %v1135 = vand.u32 %v702, 4294901760
    %v1136 = vsub.f32 %v702, %v1135
    %v1137 = vand.u32 %v1136, 4294901760
    %1138 = vmatpush1.msra.mxu0 %v1137
    %1139 = vmatprep.subr.mxu0 0.0
    %v1140 = vand.u32 %v703, 4294901760
    %v1141 = vsub.f32 %v703, %v1140
    %v1142 = vand.u32 %v1141, 4294901760
    %1143 = vmatpush1.msra.mxu0 %v1142
    %1144 = vmatprep.subr.mxu0 0.0
    %v1145 = vand.u32 %v704, 4294901760
    %v1146 = vsub.f32 %v704, %v1145
    %v1147 = vand.u32 %v1146, 4294901760
    %1148 = vmatpush1.msra.mxu0 %v1147
    %1149 = vmatprep.subr.mxu0 0.0
    %v1150 = vand.u32 %v693, 4294901760
    %v1151 = vsub.f32 %v693, %v1150
    %v1152 = vand.u32 %v1151, 4294901760
    %1153 = vmatpush1.msra.mxu0 %v1152
    %1154 = vmatprep.subr.mxu0 0.0
    %v1155 = vand.u32 %v694, 4294901760
    %v1156 = vsub.f32 %v694, %v1155
    %v1157 = vand.u32 %v1156, 4294901760
    %1158 = vmatpush1.msra.mxu0 %v1157
    %1159 = vmatprep.subr.mxu0 0.0
    %v1160 = vand.u32 %v695, 4294901760
    %v1161 = vsub.f32 %v695, %v1160
    %v1162 = vand.u32 %v1161, 4294901760
    %1163 = vmatpush1.msra.mxu0 %v1162
    %1164 = vmatprep.subr.mxu0 0.0
    %v1165 = vand.u32 %v711, 4294901760
    %v1166 = vsub.f32 %v711, %v1165
    %v1167 = vand.u32 %v1166, 4294901760
    %1168 = vmatpush1.msra.mxu0 %v1167
    %1169 = vmatprep.subr.mxu0 0.0
    %v1170 = vand.u32 %v712, 4294901760
    %v1171 = vsub.f32 %v712, %v1170
    %v1172 = vand.u32 %v1171, 4294901760
    %1173 = vmatpush1.msra.mxu0 %v1172
    %1174 = vmatprep.subr.mxu0 0.0
    %v1175 = vand.u32 %v713, 4294901760
    %v1176 = vsub.f32 %v713, %v1175
    %v1177 = vand.u32 %v1176, 4294901760
    %1178 = vmatpush1.msra.mxu0 %v1177
    %1179 = vmatprep.subr.mxu0 0.0
    %1180 = vmatpush1.msra.mxu0 0.0
    %1181 = vmatprep.subr.mxu0 0.0
    %1182 = vmatpush1.msra.mxu0 0.0
    %1183 = vmatprep.subr.mxu0 0.0
    %1184 = vmatpush1.msra.mxu0 0.0
    %1185 = vmatprep.subr.mxu0 0.0
    %1186 = vmatpush1.msra.mxu0 0.0
    %1187 = vmatprep.subr.mxu0 0.0
    %1188 = vmatpush1.msra.mxu0 0.0
    %1189 = vmatprep.subr.mxu0 0.0
    %1190 = vmatpush1.msra.mxu0 0.0
    %1191 = vmatprep.subr.mxu0 0.0
    %1192 = vmatpush1.msra.mxu0 0.0
    %1193 = vmatprep.subr.mxu0 0.0
    %1194 = vmatpush1.msra.mxu0 0.0
    %1195 = vmatprep.subr.mxu0 0.0
    %1196 = vmatpush1.msra.mxu0 0.0
    %1197 = vmatprep.subr.mxu0 0.0
    %1198 = vmatpush1.msra.mxu0 0.0
    %1199 = vmatprep.subr.mxu0 0.0
    %1200 = vmatpush1.msra.mxu0 0.0
    %1201 = vmatprep.subr.mxu0 0.0
    %1202 = vmatpush1.msra.mxu0 0.0
    %1203 = vmatprep.subr.mxu0 0.0
    %1204 = vmatpush1.msra.mxu0 0.0
    %1205 = vmatprep.subr.mxu0 0.0
    %1206 = vmatpush1.msra.mxu0 0.0
    %1207 = vmatprep.subr.mxu0 0.0
    %1208 = vmatpush1.msra.mxu0 0.0
    %1209 = vmatprep.subr.mxu0 0.0
    %1210 = vmatpush1.msra.mxu0 0.0
    %1211 = vmatprep.subr.mxu0 0.0
    %1212 = vmatpush1.msra.mxu0 0.0
    %1213 = vmatprep.subr.mxu0 0.0
    %1214 = vmatpush1.msra.mxu0 0.0
    %1215 = vmatprep.subr.mxu0 0.0
    %1216 = vmatpush1.msra.mxu0 0.0
    %1217 = vmatprep.subr.mxu0 0.0
    %1218 = vmatpush1.msra.mxu0 0.0
    %1219 = vmatprep.subr.mxu0 0.0
    %1220 = vmatpush1.msra.mxu0 0.0
    %1221 = vmatprep.subr.mxu0 0.0
    %1222 = vmatpush1.msra.mxu0 0.0
    %1223 = vmatprep.subr.mxu0 0.0
    %1224 = vmatpush1.msra.mxu0 0.0
    %1225 = vmatprep.mubr.f32.mxu0 0.0
    %v1226 = vand.u32 %v726, 4294901760
    %1227 = vmatmul.mubr.f32.gmra.mrb[0].mxu0 %v1226
    %v1228 = vpop.f32.mrb[0].mxu0
    %v1229 = vadd.f32 %v1123, %v1228
    %v1230 = vpop.f32.mrb[0].mxu0
    %1231 = vmatprep.mubr.f32.mxu0 0.0
    %v1232 = vand.u32 %v729, 4294901760
    %1233 = vmatmul.mubr.f32.gmra.mrb[0].mxu0 %v1232
    %v1234 = vpop.f32.mrb[0].mxu0
    %v1235 = vadd.f32 %v1131, %v1234
    %v1236 = vpop.f32.mrb[0].mxu0
    %1237 = vdwg.mxu0
    %1238 = vmatprep.subr.mxu0 0.0
    %v1239 = vand.u32 %v702, 4294901760
    %1240 = vmatpush1.msra.mxu0 %v1239
    %1241 = vmatprep.subr.mxu0 0.0
    %v1242 = vand.u32 %v703, 4294901760
    %1243 = vmatpush1.msra.mxu0 %v1242
    %1244 = vmatprep.subr.mxu0 0.0
    %v1245 = vand.u32 %v704, 4294901760
    %1246 = vmatpush1.msra.mxu0 %v1245
    %1247 = vmatprep.subr.mxu0 0.0
    %v1248 = vand.u32 %v693, 4294901760
    %1249 = vmatpush1.msra.mxu0 %v1248
    %1250 = vmatprep.subr.mxu0 0.0
    %v1251 = vand.u32 %v694, 4294901760
    %1252 = vmatpush1.msra.mxu0 %v1251
    %1253 = vmatprep.subr.mxu0 0.0
    %v1254 = vand.u32 %v695, 4294901760
    %1255 = vmatpush1.msra.mxu0 %v1254
    %1256 = vmatprep.subr.mxu0 0.0
    %v1257 = vand.u32 %v711, 4294901760
    %1258 = vmatpush1.msra.mxu0 %v1257
    %1259 = vmatprep.subr.mxu0 0.0
    %v1260 = vand.u32 %v712, 4294901760
    %1261 = vmatpush1.msra.mxu0 %v1260
    %1262 = vmatprep.subr.mxu0 0.0
    %v1263 = vand.u32 %v713, 4294901760
    %1264 = vmatpush1.msra.mxu0 %v1263
    %1265 = vmatprep.subr.mxu0 0.0
    %1266 = vmatpush1.msra.mxu0 0.0
    %1267 = vmatprep.subr.mxu0 0.0
    %1268 = vmatpush1.msra.mxu0 0.0
    %1269 = vmatprep.subr.mxu0 0.0
    %1270 = vmatpush1.msra.mxu0 0.0
    %1271 = vmatprep.subr.mxu0 0.0
    %1272 = vmatpush1.msra.mxu0 0.0
    %1273 = vmatprep.subr.mxu0 0.0
    %1274 = vmatpush1.msra.mxu0 0.0
    %1275 = vmatprep.subr.mxu0 0.0
    %1276 = vmatpush1.msra.mxu0 0.0
    %1277 = vmatprep.subr.mxu0 0.0
    %1278 = vmatpush1.msra.mxu0 0.0
    %1279 = vmatprep.subr.mxu0 0.0
    %1280 = vmatpush1.msra.mxu0 0.0
    %1281 = vmatprep.subr.mxu0 0.0
    %1282 = vmatpush1.msra.mxu0 0.0
    %1283 = vmatprep.subr.mxu0 0.0
    %1284 = vmatpush1.msra.mxu0 0.0
    %1285 = vmatprep.subr.mxu0 0.0
    %1286 = vmatpush1.msra.mxu0 0.0
    %1287 = vmatprep.subr.mxu0 0.0
    %1288 = vmatpush1.msra.mxu0 0.0
    %1289 = vmatprep.subr.mxu0 0.0
    %1290 = vmatpush1.msra.mxu0 0.0
    %1291 = vmatprep.subr.mxu0 0.0
    %1292 = vmatpush1.msra.mxu0 0.0
    %1293 = vmatprep.subr.mxu0 0.0
    %1294 = vmatpush1.msra.mxu0 0.0
    %1295 = vmatprep.subr.mxu0 0.0
    %1296 = vmatpush1.msra.mxu0 0.0
    %1297 = vmatprep.subr.mxu0 0.0
    %1298 = vmatpush1.msra.mxu0 0.0
    %1299 = vmatprep.subr.mxu0 0.0
    %1300 = vmatpush1.msra.mxu0 0.0
    %1301 = vmatprep.subr.mxu0 0.0
    %1302 = vmatpush1.msra.mxu0 0.0
    %1303 = vmatprep.subr.mxu0 0.0
    %1304 = vmatpush1.msra.mxu0 0.0
    %1305 = vmatprep.subr.mxu0 0.0
    %1306 = vmatpush1.msra.mxu0 0.0
    %1307 = vmatprep.subr.mxu0 0.0
    %1308 = vmatpush1.msra.mxu0 0.0
    %1309 = vmatprep.subr.mxu0 0.0
    %1310 = vmatpush1.msra.mxu0 0.0
    %1311 = vmatprep.mubr.f32.mxu0 0.0
    %v1312 = vand.u32 %v726, 4294901760
    %1313 = vmatmul.mubr.f32.gmra.mrb[0].mxu0 %v1312
    %v1314 = vpop.f32.mrb[0].mxu0
    %v1315 = vadd.f32 %v1229, %v1314
    %v1316 = vpop.f32.mrb[0].mxu0
    %1317 = vmatprep.mubr.f32.mxu0 0.0
    %v1318 = vand.u32 %v729, 4294901760
    %1319 = vmatmul.mubr.f32.gmra.mrb[0].mxu0 %v1318
    %v1320 = vpop.f32.mrb[0].mxu0
    %v1321 = vadd.f32 %v1235, %v1320
    %v1322 = vpop.f32.mrb[0].mxu0
    %1323 = vdwg.mxu0
    %v1324 = vand.u32 2147483647, %v1315
    %vm1325 = vcmp.le.f32.partialorder %v1324, 0.7853982
    %vm1326 = vcmp.lt.s32.totalorder %v1315, 0
    %v1327 = vand.u32 %v1315, 2139095040
    %v1328 = vshrl.u32 %v1327, 23
    %v1329 = vsub.s32 %v1328, 127
    %v1330 = vand.u32 2147483647, %v1315
    %v1331 = vand.u32 %v1330, 8388607
    %v1332 = vor.u32 %v1331, 8388608
    %v1333 = vsub.s32 0, %v1332
    %v1334 = vadd.s32 %v1329, 1
    %vm1335 = vcmp.gt.s32.totalorder %v1334, 0
    %v1336 = vsel %vm1335, %v1334, 0
    %v1337 = vshrl.u32 %v1336, 5
    %v1338 = vand.u32 %v1336, 31
    %v1339 = vsub.s32 32, %v1338
    %v1340 = vshrl.u32 683565275, %v1339
    %v1341 = vshll.u32 683565275, %v1338
    %v1342 = vshrl.u32 2475754826, %v1339
    %v1343 = vor.u32 %v1341, %v1342
    %v1344 = vshll.u32 2475754826, %v1338
    %v1345 = vshrl.u32 2131351028, %v1339
    %v1346 = vor.u32 %v1344, %v1345
    %v1347 = vshll.u32 2131351028, %v1338
    %v1348 = vshrl.u32 2102212464, %v1339
    %v1349 = vor.u32 %v1347, %v1348
    %v1350 = vshll.u32 2102212464, %v1338
    %v1351 = vshrl.u32 920167782, %v1339
    %v1352 = vor.u32 %v1350, %v1351
    %v1353 = vshll.u32 920167782, %v1338
    %v1354 = vshrl.u32 1326507024, %v1339
    %v1355 = vor.u32 %v1353, %v1354
    %vm1356 = vcmp.lt.s32.totalorder %v1337, 1
    %vm1357 = vcmp.lt.s32.totalorder %v1337, 2
    %vm1358 = vcmp.lt.s32.totalorder %v1337, 3
    %vm1359 = vcmp.lt.s32.totalorder %v1337, 4
    %v1360 = vsel %vm1356, %v1340, %v1343
    %v1361 = vsel %vm1359, %v1349, 2102212464
    %v1362 = vsel %vm1358, %v1346, %v1361
    %v1363 = vsel %vm1357, %v1360, %v1362
    %v1364 = vsel %vm1356, %v1343, %v1346
    %v1365 = vsel %vm1359, %v1352, 920167782
    %v1366 = vsel %vm1358, %v1349, %v1365
    %v1367 = vsel %vm1357, %v1364, %v1366
    %v1368 = vsel %vm1356, %v1346, %v1349
    %v1369 = vsel %vm1359, %v1355, 1326507024
    %v1370 = vsel %vm1358, %v1352, %v1369
    %v1371 = vsel %vm1357, %v1368, %v1370
    %v1372 = vshll.u32 %v1332, 8
    %v1373 = vmul.u32.u64.compose %v1372, %v1371
    %v1374 = vextract.low.u32 %v1373
    %v1375 = vextract.high.u32 %v1373
    %v1376 = vmul.u32.u64.compose %v1372, %v1367
    %v1377 = vextract.low.u32 %v1376
    %v1378 = vextract.high.u32 %v1376
    %v1379 = vmul.u32 %v1372, %v1363
    %v1380 = vadd.s32 %v1375, %v1377
    %vm1381 = vc.u32 %v1375, %v1377
    %v1382 = vadd.s32 %v1378, 1
    %v1383 = vsel %vm1381, %v1382, %v1378
    %v1384 = vadd.s32 %v1379, %v1383
    %v1385 = vadd.s32 %v1384, 536870912
    %v1386 = vshrl.u32 %v1385, 30
    %v1387 = vshll.u32 %v1386, 30
    %v1388 = vsub.s32 %v1384, %v1387
    %vm1389 = vcmp.lt.s32.totalorder %v1388, 0
    %v1390 = vsub.s32 0, %v1388
    %v1391 = vsel %vm1389, %v1390, %v1388
    %v1392 = vclz %v1391
    %v1393 = vsub.s32 %v1392, 2
    %vm1394 = vcmp.gt.s32.totalorder 0, %v1393
    %v1395 = vsel %vm1394, 0, %v1393
    %v1396 = vsub.s32 32, %v1395
    %v1397 = vshll.u32 %v1388, %v1395
    %v1398 = vshrl.u32 %v1380, %v1396
    %v1399 = vor.u32 %v1397, %v1398
    %v1400 = vsub.s32 4294967266, %v1395
    %v1401 = vadd.s32 %v1400, 127
    %v1402 = vshll.u32 %v1401, 23
    %v1403 = vor.u32 4788187, %v1402
    %v1404 = vand.u32 2147483647, %v1403
    %v1406 = vcvt.s32.f32 %v1399
    %v1407 = vmul.f32 %v1406, %v1404
    %v1408 = vxor.u32 %v1407, 2147483648
    %v1409 = vsel %vm1326, %v1408, %v1407
    %v1410 = vsub.s32 4, %v1386
    %v1411 = vsel %vm1326, %v1410, %v1386
    %v1412 = vsel %vm1325, %v1315, %v1409
    %v1413 = vsel %vm1325, 0, %v1411
    %v1414 = vcosq.f32.pop %v1412
    %v1415 = vsinq.f32.pop %v1412
    %vm1416 = vweird.f32 %v1315
    %v1417 = vand.u32 %v1413, 3
    %vm1418 = vcmp.lt.s32.totalorder %v1417, 2
    %vm1419 = vcmp.eq.s32.totalorder %v1417, 0
    %v1420 = vxor.u32 %v1415, 2147483648
    %v1421 = vsel %vm1419, %v1414, %v1420
    %vm1422 = vcmp.eq.s32.totalorder %v1417, 2
    %v1423 = vxor.u32 %v1414, 2147483648
    %v1424 = vsel %vm1422, %v1423, %v1415
    %v1425 = vsel %vm1418, %v1421, %v1424
    %v1426 = vsel %vm1416, nan, %v1425
    %v1428 = vrot.slane %v1426, 4
    %v1430 = vmul.f32 %v1321, %v1428
    %v1431 = vand.u32 2147483647, %v1315
    %vm1432 = vcmp.le.f32.partialorder %v1431, 0.7853982
    %vm1433 = vcmp.lt.s32.totalorder %v1315, 0
    %v1434 = vand.u32 %v1315, 2139095040
    %v1435 = vshrl.u32 %v1434, 23
    %v1436 = vsub.s32 %v1435, 127
    %v1437 = vand.u32 2147483647, %v1315
    %v1438 = vand.u32 %v1437, 8388607
    %v1439 = vor.u32 %v1438, 8388608
    %v1440 = vsub.s32 0, %v1439
    %v1441 = vadd.s32 %v1436, 1
    %vm1442 = vcmp.gt.s32.totalorder %v1441, 0
    %v1443 = vsel %vm1442, %v1441, 0
    %v1444 = vshrl.u32 %v1443, 5
    %v1445 = vand.u32 %v1443, 31
    %v1446 = vsub.s32 32, %v1445
    %v1447 = vshrl.u32 683565275, %v1446
    %v1448 = vshll.u32 683565275, %v1445
    %v1449 = vshrl.u32 2475754826, %v1446
    %v1450 = vor.u32 %v1448, %v1449
    %v1451 = vshll.u32 2475754826, %v1445
    %v1452 = vshrl.u32 2131351028, %v1446
    %v1453 = vor.u32 %v1451, %v1452
    %v1454 = vshll.u32 2131351028, %v1445
    %v1455 = vshrl.u32 2102212464, %v1446
    %v1456 = vor.u32 %v1454, %v1455
    %v1457 = vshll.u32 2102212464, %v1445
    %v1458 = vshrl.u32 920167782, %v1446
    %v1459 = vor.u32 %v1457, %v1458
    %v1460 = vshll.u32 920167782, %v1445
    %v1461 = vshrl.u32 1326507024, %v1446
    %v1462 = vor.u32 %v1460, %v1461
    %vm1463 = vcmp.lt.s32.totalorder %v1444, 1
    %vm1464 = vcmp.lt.s32.totalorder %v1444, 2
    %vm1465 = vcmp.lt.s32.totalorder %v1444, 3
    %vm1466 = vcmp.lt.s32.totalorder %v1444, 4
    %v1467 = vsel %vm1463, %v1447, %v1450
    %v1468 = vsel %vm1466, %v1456, 2102212464
    %v1469 = vsel %vm1465, %v1453, %v1468
    %v1470 = vsel %vm1464, %v1467, %v1469
    %v1471 = vsel %vm1463, %v1450, %v1453
    %v1472 = vsel %vm1466, %v1459, 920167782
    %v1473 = vsel %vm1465, %v1456, %v1472
    %v1474 = vsel %vm1464, %v1471, %v1473
    %v1475 = vsel %vm1463, %v1453, %v1456
    %v1476 = vsel %vm1466, %v1462, 1326507024
    %v1477 = vsel %vm1465, %v1459, %v1476
    %v1478 = vsel %vm1464, %v1475, %v1477
    %v1479 = vshll.u32 %v1439, 8
    %v1480 = vmul.u32.u64.compose %v1479, %v1478
    %v1481 = vextract.low.u32 %v1480
    %v1482 = vextract.high.u32 %v1480
    %v1483 = vmul.u32.u64.compose %v1479, %v1474
    %v1484 = vextract.low.u32 %v1483
    %v1485 = vextract.high.u32 %v1483
    %v1486 = vmul.u32 %v1479, %v1470
    %v1487 = vadd.s32 %v1482, %v1484
    %vm1488 = vc.u32 %v1482, %v1484
    %v1489 = vadd.s32 %v1485, 1
    %v1490 = vsel %vm1488, %v1489, %v1485
    %v1491 = vadd.s32 %v1486, %v1490
    %v1492 = vadd.s32 %v1491, 536870912
    %v1493 = vshrl.u32 %v1492, 30
    %v1494 = vshll.u32 %v1493, 30
    %v1495 = vsub.s32 %v1491, %v1494
    %vm1496 = vcmp.lt.s32.totalorder %v1495, 0
    %v1497 = vsub.s32 0, %v1495
    %v1498 = vsel %vm1496, %v1497, %v1495
    %v1499 = vclz %v1498
    %v1500 = vsub.s32 %v1499, 2
    %vm1501 = vcmp.gt.s32.totalorder 0, %v1500
    %v1502 = vsel %vm1501, 0, %v1500
    %v1503 = vsub.s32 32, %v1502
    %v1504 = vshll.u32 %v1495, %v1502
    %v1505 = vshrl.u32 %v1487, %v1503
    %v1506 = vor.u32 %v1504, %v1505
    %v1507 = vsub.s32 4294967266, %v1502
    %v1508 = vadd.s32 %v1507, 127
    %v1509 = vshll.u32 %v1508, 23
    %v1510 = vor.u32 4788187, %v1509
    %v1511 = vand.u32 2147483647, %v1510
    %v1513 = vcvt.s32.f32 %v1506
    %v1514 = vmul.f32 %v1513, %v1511
    %v1515 = vxor.u32 %v1514, 2147483648
    %v1516 = vsel %vm1433, %v1515, %v1514
    %v1517 = vsub.s32 4, %v1493
    %v1518 = vsel %vm1433, %v1517, %v1493
    %v1519 = vsel %vm1432, %v1315, %v1516
    %v1520 = vsel %vm1432, 0, %v1518
    %v1521 = vcosq.f32.pop %v1519
    %v1522 = vsinq.f32.pop %v1519
    %vm1523 = vweird.f32 %v1315
    %v1524 = vadd.s32 %v1520, 3
    %v1525 = vand.u32 %v1524, 3
    %vm1526 = vcmp.lt.s32.totalorder %v1525, 2
    %vm1527 = vcmp.eq.s32.totalorder %v1525, 0
    %v1528 = vxor.u32 %v1522, 2147483648
    %v1529 = vsel %vm1527, %v1521, %v1528
    %vm1530 = vcmp.eq.s32.totalorder %v1525, 2
    %v1531 = vxor.u32 %v1521, 2147483648
    %v1532 = vsel %vm1530, %v1531, %v1522
    %v1533 = vsel %vm1526, %v1529, %v1532
    %v1534 = vsel %vm1523, nan, %v1533
    %v1536 = vrot.slane %v1534, 4
    %v1538 = vmul.f32 %v1321, %v1536
    %v1539 = vld [vmem:[%s3] sm:$0xff]
    %v1540 = vld [vmem:[%s3 + $0x8] sm:$0xff]
    %v1541 = vld [vmem:[%s3 + $0x10] sm:$0xff]
    %v1542 = vld [vmem:[%s3 + $0x18] sm:$0xff]
    %v1543 = vld [vmem:[%s3 + $0x20] sm:$0xff]
    %v1544 = vld [vmem:[%s3 + $0x28] sm:$0xff]
    %v1545 = vld [vmem:[%s3 + $0x30] sm:$0xff]
    %v1546 = vld [vmem:[%s3 + $0x38] sm:$0xff]
    %v1547 = vld [vmem:[%s3 + $0x40] sm:$0xff]
    %v1548 = vld [vmem:[%s3 + $0x48] sm:$0xff]
    %v1549 = vld [vmem:[%s3 + $0x50] sm:$0xff]
    %v1550 = vld [vmem:[%s3 + $0x58] sm:$0xff]
    %v1551 = vld [vmem:[%s3 + $0x60] sm:$0xff]
    %v1552 = vld [vmem:[%s3 + $0x68] sm:$0xff]
    %v1553 = vld [vmem:[%s3 + $0x70] sm:$0xff]
    %v1554 = vld [vmem:[%s3 + $0x78] sm:$0xff]
    %v1555 = vld [vmem:[%s3 + $0x80] sm:$0xff]
    %v1556 = vld [vmem:[%s3 + $0x88] sm:$0xff]
    %v1557 = vld [vmem:[%s3 + $0x90] sm:$0xff]
    %v1558 = vld [vmem:[%s3 + $0x98] sm:$0xff]
    %v1559 = vld [vmem:[%s3 + $0xa0] sm:$0xff]
    %v1560 = vld [vmem:[%s3 + $0xa8] sm:$0xff]
    %v1561 = vld [vmem:[%s3 + $0xb0] sm:$0xff]
    %v1562 = vld [vmem:[%s3 + $0xb8] sm:$0xff]
    %v1563 = vld [vmem:[%s3 + $0xc0] sm:$0xff]
    %v1564 = vld [vmem:[%s3 + $0xc8] sm:$0xff]
    %v1565 = vld [vmem:[%s3 + $0xd0] sm:$0xff]
    %v1566 = vld [vmem:[%s3 + $0xd8] sm:$0xff]
    %v1567 = vld [vmem:[%s3 + $0xe0] sm:$0xff]
    %v1568 = vld [vmem:[%s3 + $0xe8] sm:$0xff]
    %v1569 = vld [vmem:[%s3 + $0xf0] sm:$0xff]
    %v1570 = vld [vmem:[%s3 + $0xf8] sm:$0xff]
    %v1571 = vld [vmem:[%s3 + $0x100] sm:$0xff]
    %v1572 = vld [vmem:[%s3 + $0x108] sm:$0xff]
    %v1573 = vld [vmem:[%s3 + $0x110] sm:$0xff]
    %v1574 = vld [vmem:[%s3 + $0x118] sm:$0xff]
    %v1575 = vld [vmem:[%s3 + $0x120] sm:$0xff]
    %v1576 = vld [vmem:[%s3 + $0x128] sm:$0xff]
    %v1577 = vld [vmem:[%s3 + $0x130] sm:$0xff]
    %v1578 = vld [vmem:[%s3 + $0x138] sm:$0xff]
    %v1579 = vld [vmem:[%s3 + $0x140] sm:$0xff]
    %v1580 = vld [vmem:[%s3 + $0x148] sm:$0xff]
    %v1581 = vld [vmem:[%s3 + $0x150] sm:$0xff]
    %v1582 = vld [vmem:[%s3 + $0x158] sm:$0xff]
    %v1583 = vld [vmem:[%s3 + $0x160] sm:$0xff]
    %v1584 = vld [vmem:[%s3 + $0x168] sm:$0xff]
    %v1585 = vld [vmem:[%s3 + $0x170] sm:$0xff]
    %v1586 = vld [vmem:[%s3 + $0x178] sm:$0xff]
    %v1587 = vld [vmem:[%s3 + $0x180] sm:$0xff]
    %v1588 = vld [vmem:[%s3 + $0x188] sm:$0xff]
    %v1589 = vld [vmem:[%s3 + $0x190] sm:$0xff]
    %v1590 = vld [vmem:[%s3 + $0x198] sm:$0xff]
    %v1591 = vld [vmem:[%s3 + $0x1a0] sm:$0xff]
    %v1592 = vld [vmem:[%s3 + $0x1a8] sm:$0xff]
    %v1593 = vld [vmem:[%s3 + $0x1b0] sm:$0xff]
    %v1594 = vld [vmem:[%s3 + $0x1b8] sm:$0xff]
    %v1595 = vld [vmem:[%s3 + $0x1c0] sm:$0xff]
    %v1596 = vld [vmem:[%s3 + $0x1c8] sm:$0xff]
    %v1597 = vld [vmem:[%s3 + $0x1d0] sm:$0xff]
    %v1598 = vld [vmem:[%s3 + $0x1d8] sm:$0xff]
    %v1599 = vld [vmem:[%s3 + $0x1e0] sm:$0xff]
    %v1600 = vld [vmem:[%s3 + $0x1e8] sm:$0xff]
    %v1601 = vld [vmem:[%s3 + $0x1f0] sm:$0xff]
    %v1602 = vld [vmem:[%s3 + $0x1f8] sm:$0xff]
    %v1603 = vand.u32 %v1540, 4294901760
    %1604 = vmatprep.subr.mxu0 %v1603
    %v1605 = vand.u32 %v1539, 4294901760
    %1606 = vmatpush1.msra.mxu0 %v1605
    %v1607 = vand.u32 %v1542, 4294901760
    %1608 = vmatprep.subr.mxu0 %v1607
    %v1609 = vand.u32 %v1541, 4294901760
    %1610 = vmatpush1.msra.mxu0 %v1609
    %v1611 = vand.u32 %v1544, 4294901760
    %1612 = vmatprep.subr.mxu0 %v1611
    %v1613 = vand.u32 %v1543, 4294901760
    %1614 = vmatpush1.msra.mxu0 %v1613
    %v1615 = vand.u32 %v1546, 4294901760
    %1616 = vmatprep.subr.mxu0 %v1615
    %v1617 = vand.u32 %v1545, 4294901760
    %1618 = vmatpush1.msra.mxu0 %v1617
    %v1619 = vand.u32 %v1548, 4294901760
    %1620 = vmatprep.subr.mxu0 %v1619
    %v1621 = vand.u32 %v1547, 4294901760
    %1622 = vmatpush1.msra.mxu0 %v1621
    %v1623 = vand.u32 %v1550, 4294901760
    %1624 = vmatprep.subr.mxu0 %v1623
    %v1625 = vand.u32 %v1549, 4294901760
    %1626 = vmatpush1.msra.mxu0 %v1625
    %v1627 = vand.u32 %v1552, 4294901760
    %1628 = vmatprep.subr.mxu0 %v1627
    %v1629 = vand.u32 %v1551, 4294901760
    %1630 = vmatpush1.msra.mxu0 %v1629
    %v1631 = vand.u32 %v1554, 4294901760
    %1632 = vmatprep.subr.mxu0 %v1631
    %v1633 = vand.u32 %v1553, 4294901760
    %1634 = vmatpush1.msra.mxu0 %v1633
    %v1635 = vand.u32 %v1556, 4294901760
    %1636 = vmatprep.subr.mxu0 %v1635
    %v1637 = vand.u32 %v1555, 4294901760
    %1638 = vmatpush1.msra.mxu0 %v1637
    %v1639 = vand.u32 %v1558, 4294901760
    %1640 = vmatprep.subr.mxu0 %v1639
    %v1641 = vand.u32 %v1557, 4294901760
    %1642 = vmatpush1.msra.mxu0 %v1641
    %v1643 = vand.u32 %v1560, 4294901760
    %1644 = vmatprep.subr.mxu0 %v1643
    %v1645 = vand.u32 %v1559, 4294901760
    %1646 = vmatpush1.msra.mxu0 %v1645
    %v1647 = vand.u32 %v1562, 4294901760
    %1648 = vmatprep.subr.mxu0 %v1647
    %v1649 = vand.u32 %v1561, 4294901760
    %1650 = vmatpush1.msra.mxu0 %v1649
    %v1651 = vand.u32 %v1564, 4294901760
    %1652 = vmatprep.subr.mxu0 %v1651
    %v1653 = vand.u32 %v1563, 4294901760
    %1654 = vmatpush1.msra.mxu0 %v1653
    %v1655 = vand.u32 %v1566, 4294901760
    %1656 = vmatprep.subr.mxu0 %v1655
    %v1657 = vand.u32 %v1565, 4294901760
    %1658 = vmatpush1.msra.mxu0 %v1657
    %v1659 = vand.u32 %v1568, 4294901760
    %1660 = vmatprep.subr.mxu0 %v1659
    %v1661 = vand.u32 %v1567, 4294901760
    %1662 = vmatpush1.msra.mxu0 %v1661
    %v1663 = vand.u32 %v1570, 4294901760
    %1664 = vmatprep.subr.mxu0 %v1663
    %v1665 = vand.u32 %v1569, 4294901760
    %1666 = vmatpush1.msra.mxu0 %v1665
    %v1667 = vand.u32 %v1572, 4294901760
    %1668 = vmatprep.subr.mxu0 %v1667
    %v1669 = vand.u32 %v1571, 4294901760
    %1670 = vmatpush1.msra.mxu0 %v1669
    %v1671 = vand.u32 %v1574, 4294901760
    %1672 = vmatprep.subr.mxu0 %v1671
    %v1673 = vand.u32 %v1573, 4294901760
    %1674 = vmatpush1.msra.mxu0 %v1673
    %v1675 = vand.u32 %v1576, 4294901760
    %1676 = vmatprep.subr.mxu0 %v1675
    %v1677 = vand.u32 %v1575, 4294901760
    %1678 = vmatpush1.msra.mxu0 %v1677
    %v1679 = vand.u32 %v1578, 4294901760
    %1680 = vmatprep.subr.mxu0 %v1679
    %v1681 = vand.u32 %v1577, 4294901760
    %1682 = vmatpush1.msra.mxu0 %v1681
    %v1683 = vand.u32 %v1580, 4294901760
    %1684 = vmatprep.subr.mxu0 %v1683
    %v1685 = vand.u32 %v1579, 4294901760
    %1686 = vmatpush1.msra.mxu0 %v1685
    %v1687 = vand.u32 %v1582, 4294901760
    %1688 = vmatprep.subr.mxu0 %v1687
    %v1689 = vand.u32 %v1581, 4294901760
    %1690 = vmatpush1.msra.mxu0 %v1689
    %v1691 = vand.u32 %v1584, 4294901760
    %1692 = vmatprep.subr.mxu0 %v1691
    %v1693 = vand.u32 %v1583, 4294901760
    %1694 = vmatpush1.msra.mxu0 %v1693
    %v1695 = vand.u32 %v1586, 4294901760
    %1696 = vmatprep.subr.mxu0 %v1695
    %v1697 = vand.u32 %v1585, 4294901760
    %1698 = vmatpush1.msra.mxu0 %v1697
    %v1699 = vand.u32 %v1588, 4294901760
    %1700 = vmatprep.subr.mxu0 %v1699
    %v1701 = vand.u32 %v1587, 4294901760
    %1702 = vmatpush1.msra.mxu0 %v1701
    %v1703 = vand.u32 %v1590, 4294901760
    %1704 = vmatprep.subr.mxu0 %v1703
    %v1705 = vand.u32 %v1589, 4294901760
    %1706 = vmatpush1.msra.mxu0 %v1705
    %v1707 = vand.u32 %v1592, 4294901760
    %1708 = vmatprep.subr.mxu0 %v1707
    %v1709 = vand.u32 %v1591, 4294901760
    %1710 = vmatpush1.msra.mxu0 %v1709
    %v1711 = vand.u32 %v1594, 4294901760
    %1712 = vmatprep.subr.mxu0 %v1711
    %v1713 = vand.u32 %v1593, 4294901760
    %1714 = vmatpush1.msra.mxu0 %v1713
    %v1715 = vand.u32 %v1596, 4294901760
    %1716 = vmatprep.subr.mxu0 %v1715
    %v1717 = vand.u32 %v1595, 4294901760
    %1718 = vmatpush1.msra.mxu0 %v1717
    %v1719 = vand.u32 %v1598, 4294901760
    %1720 = vmatprep.subr.mxu0 %v1719
    %v1721 = vand.u32 %v1597, 4294901760
    %1722 = vmatpush1.msra.mxu0 %v1721
    %v1723 = vand.u32 %v1600, 4294901760
    %1724 = vmatprep.subr.mxu0 %v1723
    %v1725 = vand.u32 %v1599, 4294901760
    %1726 = vmatpush1.msra.mxu0 %v1725
    %v1727 = vand.u32 %v1602, 4294901760
    %1728 = vmatprep.subr.mxu0 %v1727
    %v1729 = vand.u32 %v1601, 4294901760
    %1730 = vmatpush1.msra.mxu0 %v1729
    %v1731 = vand.u32 %v1538, 4294901760
    %v1732 = vsub.f32 %v1538, %v1731
    %v1733 = vand.u32 %v1732, 4294901760
    %v1734 = vsub.f32 %v1732, %v1733
    %v1735 = vand.u32 %v1734, 4294901760
    %1736 = vmatprep.mubr.f32.mxu0 %v1735
    %v1737 = vand.u32 %v1430, 4294901760
    %v1738 = vsub.f32 %v1430, %v1737
    %v1739 = vand.u32 %v1738, 4294901760
    %v1740 = vsub.f32 %v1738, %v1739
    %v1741 = vand.u32 %v1740, 4294901760
    %1742 = vmatmul.mubr.f32.gmra.mrb[0].mxu0 %v1741
    %v1743 = vpop.f32.mrb[0].mxu0
    %v1744 = vadd.f32 0.0, %v1743
    %v1745 = vpop.f32.mrb[0].mxu0
    %v1746 = vadd.f32 0.0, %v1745
    %1747 = vdwg.mxu0
    %v1748 = vand.u32 %v1540, 4294901760
    %v1749 = vsub.f32 %v1540, %v1748
    %v1750 = vand.u32 %v1749, 4294901760
    %v1751 = vsub.f32 %v1749, %v1750
    %v1752 = vand.u32 %v1751, 4294901760
    %1753 = vmatprep.subr.mxu0 %v1752
    %v1754 = vand.u32 %v1539, 4294901760
    %v1755 = vsub.f32 %v1539, %v1754
    %v1756 = vand.u32 %v1755, 4294901760
    %v1757 = vsub.f32 %v1755, %v1756
    %v1758 = vand.u32 %v1757, 4294901760
    %1759 = vmatpush1.msra.mxu0 %v1758
    %v1760 = vand.u32 %v1542, 4294901760
    %v1761 = vsub.f32 %v1542, %v1760
    %v1762 = vand.u32 %v1761, 4294901760
    %v1763 = vsub.f32 %v1761, %v1762
    %v1764 = vand.u32 %v1763, 4294901760
    %1765 = vmatprep.subr.mxu0 %v1764
    %v1766 = vand.u32 %v1541, 4294901760
    %v1767 = vsub.f32 %v1541, %v1766
    %v1768 = vand.u32 %v1767, 4294901760
    %v1769 = vsub.f32 %v1767, %v1768
    %v1770 = vand.u32 %v1769, 4294901760
    %1771 = vmatpush1.msra.mxu0 %v1770
    %v1772 = vand.u32 %v1544, 4294901760
    %v1773 = vsub.f32 %v1544, %v1772
    %v1774 = vand.u32 %v1773, 4294901760
    %v1775 = vsub.f32 %v1773, %v1774
    %v1776 = vand.u32 %v1775, 4294901760
    %1777 = vmatprep.subr.mxu0 %v1776
    %v1778 = vand.u32 %v1543, 4294901760
    %v1779 = vsub.f32 %v1543, %v1778
    %v1780 = vand.u32 %v1779, 4294901760
    %v1781 = vsub.f32 %v1779, %v1780
    %v1782 = vand.u32 %v1781, 4294901760
    %1783 = vmatpush1.msra.mxu0 %v1782
    %v1784 = vand.u32 %v1546, 4294901760
    %v1785 = vsub.f32 %v1546, %v1784
    %v1786 = vand.u32 %v1785, 4294901760
    %v1787 = vsub.f32 %v1785, %v1786
    %v1788 = vand.u32 %v1787, 4294901760
    %1789 = vmatprep.subr.mxu0 %v1788
    %v1790 = vand.u32 %v1545, 4294901760
    %v1791 = vsub.f32 %v1545, %v1790
    %v1792 = vand.u32 %v1791, 4294901760
    %v1793 = vsub.f32 %v1791, %v1792
    %v1794 = vand.u32 %v1793, 4294901760
    %1795 = vmatpush1.msra.mxu0 %v1794
    %v1796 = vand.u32 %v1548, 4294901760
    %v1797 = vsub.f32 %v1548, %v1796
    %v1798 = vand.u32 %v1797, 4294901760
    %v1799 = vsub.f32 %v1797, %v1798
    %v1800 = vand.u32 %v1799, 4294901760
    %1801 = vmatprep.subr.mxu0 %v1800
    %v1802 = vand.u32 %v1547, 4294901760
    %v1803 = vsub.f32 %v1547, %v1802
    %v1804 = vand.u32 %v1803, 4294901760
    %v1805 = vsub.f32 %v1803, %v1804
    %v1806 = vand.u32 %v1805, 4294901760
    %1807 = vmatpush1.msra.mxu0 %v1806
    %v1808 = vand.u32 %v1550, 4294901760
    %v1809 = vsub.f32 %v1550, %v1808
    %v1810 = vand.u32 %v1809, 4294901760
    %v1811 = vsub.f32 %v1809, %v1810
    %v1812 = vand.u32 %v1811, 4294901760
    %1813 = vmatprep.subr.mxu0 %v1812
    %v1814 = vand.u32 %v1549, 4294901760
    %v1815 = vsub.f32 %v1549, %v1814
    %v1816 = vand.u32 %v1815, 4294901760
    %v1817 = vsub.f32 %v1815, %v1816
    %v1818 = vand.u32 %v1817, 4294901760
    %1819 = vmatpush1.msra.mxu0 %v1818
    %v1820 = vand.u32 %v1552, 4294901760
    %v1821 = vsub.f32 %v1552, %v1820
    %v1822 = vand.u32 %v1821, 4294901760
    %v1823 = vsub.f32 %v1821, %v1822
    %v1824 = vand.u32 %v1823, 4294901760
    %1825 = vmatprep.subr.mxu0 %v1824
    %v1826 = vand.u32 %v1551, 4294901760
    %v1827 = vsub.f32 %v1551, %v1826
    %v1828 = vand.u32 %v1827, 4294901760
    %v1829 = vsub.f32 %v1827, %v1828
    %v1830 = vand.u32 %v1829, 4294901760
    %1831 = vmatpush1.msra.mxu0 %v1830
    %v1832 = vand.u32 %v1554, 4294901760
    %v1833 = vsub.f32 %v1554, %v1832
    %v1834 = vand.u32 %v1833, 4294901760
    %v1835 = vsub.f32 %v1833, %v1834
    %v1836 = vand.u32 %v1835, 4294901760
    %1837 = vmatprep.subr.mxu0 %v1836
    %v1838 = vand.u32 %v1553, 4294901760
    %v1839 = vsub.f32 %v1553, %v1838
    %v1840 = vand.u32 %v1839, 4294901760
    %v1841 = vsub.f32 %v1839, %v1840
    %v1842 = vand.u32 %v1841, 4294901760
    %1843 = vmatpush1.msra.mxu0 %v1842
    %v1844 = vand.u32 %v1556, 4294901760
    %v1845 = vsub.f32 %v1556, %v1844
    %v1846 = vand.u32 %v1845, 4294901760
    %v1847 = vsub.f32 %v1845, %v1846
    %v1848 = vand.u32 %v1847, 4294901760
    %1849 = vmatprep.subr.mxu0 %v1848
    %v1850 = vand.u32 %v1555, 4294901760
    %v1851 = vsub.f32 %v1555, %v1850
    %v1852 = vand.u32 %v1851, 4294901760
    %v1853 = vsub.f32 %v1851, %v1852
    %v1854 = vand.u32 %v1853, 4294901760
    %1855 = vmatpush1.msra.mxu0 %v1854
    %v1856 = vand.u32 %v1558, 4294901760
    %v1857 = vsub.f32 %v1558, %v1856
    %v1858 = vand.u32 %v1857, 4294901760
    %v1859 = vsub.f32 %v1857, %v1858
    %v1860 = vand.u32 %v1859, 4294901760
    %1861 = vmatprep.subr.mxu0 %v1860
    %v1862 = vand.u32 %v1557, 4294901760
    %v1863 = vsub.f32 %v1557, %v1862
    %v1864 = vand.u32 %v1863, 4294901760
    %v1865 = vsub.f32 %v1863, %v1864
    %v1866 = vand.u32 %v1865, 4294901760
    %1867 = vmatpush1.msra.mxu0 %v1866
    %v1868 = vand.u32 %v1560, 4294901760
    %v1869 = vsub.f32 %v1560, %v1868
    %v1870 = vand.u32 %v1869, 4294901760
    %v1871 = vsub.f32 %v1869, %v1870
    %v1872 = vand.u32 %v1871, 4294901760
    %1873 = vmatprep.subr.mxu0 %v1872
    %v1874 = vand.u32 %v1559, 4294901760
    %v1875 = vsub.f32 %v1559, %v1874
    %v1876 = vand.u32 %v1875, 4294901760
    %v1877 = vsub.f32 %v1875, %v1876
    %v1878 = vand.u32 %v1877, 4294901760
    %1879 = vmatpush1.msra.mxu0 %v1878
    %v1880 = vand.u32 %v1562, 4294901760
    %v1881 = vsub.f32 %v1562, %v1880
    %v1882 = vand.u32 %v1881, 4294901760
    %v1883 = vsub.f32 %v1881, %v1882
    %v1884 = vand.u32 %v1883, 4294901760
    %1885 = vmatprep.subr.mxu0 %v1884
    %v1886 = vand.u32 %v1561, 4294901760
    %v1887 = vsub.f32 %v1561, %v1886
    %v1888 = vand.u32 %v1887, 4294901760
    %v1889 = vsub.f32 %v1887, %v1888
    %v1890 = vand.u32 %v1889, 4294901760
    %1891 = vmatpush1.msra.mxu0 %v1890
    %v1892 = vand.u32 %v1564, 4294901760
    %v1893 = vsub.f32 %v1564, %v1892
    %v1894 = vand.u32 %v1893, 4294901760
    %v1895 = vsub.f32 %v1893, %v1894
    %v1896 = vand.u32 %v1895, 4294901760
    %1897 = vmatprep.subr.mxu0 %v1896
    %v1898 = vand.u32 %v1563, 4294901760
    %v1899 = vsub.f32 %v1563, %v1898
    %v1900 = vand.u32 %v1899, 4294901760
    %v1901 = vsub.f32 %v1899, %v1900
    %v1902 = vand.u32 %v1901, 4294901760
    %1903 = vmatpush1.msra.mxu0 %v1902
    %v1904 = vand.u32 %v1566, 4294901760
    %v1905 = vsub.f32 %v1566, %v1904
    %v1906 = vand.u32 %v1905, 4294901760
    %v1907 = vsub.f32 %v1905, %v1906
    %v1908 = vand.u32 %v1907, 4294901760
    %1909 = vmatprep.subr.mxu0 %v1908
    %v1910 = vand.u32 %v1565, 4294901760
    %v1911 = vsub.f32 %v1565, %v1910
    %v1912 = vand.u32 %v1911, 4294901760
    %v1913 = vsub.f32 %v1911, %v1912
    %v1914 = vand.u32 %v1913, 4294901760
    %1915 = vmatpush1.msra.mxu0 %v1914
    %v1916 = vand.u32 %v1568, 4294901760
    %v1917 = vsub.f32 %v1568, %v1916
    %v1918 = vand.u32 %v1917, 4294901760
    %v1919 = vsub.f32 %v1917, %v1918
    %v1920 = vand.u32 %v1919, 4294901760
    %1921 = vmatprep.subr.mxu0 %v1920
    %v1922 = vand.u32 %v1567, 4294901760
    %v1923 = vsub.f32 %v1567, %v1922
    %v1924 = vand.u32 %v1923, 4294901760
    %v1925 = vsub.f32 %v1923, %v1924
    %v1926 = vand.u32 %v1925, 4294901760
    %1927 = vmatpush1.msra.mxu0 %v1926
    %v1928 = vand.u32 %v1570, 4294901760
    %v1929 = vsub.f32 %v1570, %v1928
    %v1930 = vand.u32 %v1929, 4294901760
    %v1931 = vsub.f32 %v1929, %v1930
    %v1932 = vand.u32 %v1931, 4294901760
    %1933 = vmatprep.subr.mxu0 %v1932
    %v1934 = vand.u32 %v1569, 4294901760
    %v1935 = vsub.f32 %v1569, %v1934
    %v1936 = vand.u32 %v1935, 4294901760
    %v1937 = vsub.f32 %v1935, %v1936
    %v1938 = vand.u32 %v1937, 4294901760
    %1939 = vmatpush1.msra.mxu0 %v1938
    %v1940 = vand.u32 %v1572, 4294901760
    %v1941 = vsub.f32 %v1572, %v1940
    %v1942 = vand.u32 %v1941, 4294901760
    %v1943 = vsub.f32 %v1941, %v1942
    %v1944 = vand.u32 %v1943, 4294901760
    %1945 = vmatprep.subr.mxu0 %v1944
    %v1946 = vand.u32 %v1571, 4294901760
    %v1947 = vsub.f32 %v1571, %v1946
    %v1948 = vand.u32 %v1947, 4294901760
    %v1949 = vsub.f32 %v1947, %v1948
    %v1950 = vand.u32 %v1949, 4294901760
    %1951 = vmatpush1.msra.mxu0 %v1950
    %v1952 = vand.u32 %v1574, 4294901760
    %v1953 = vsub.f32 %v1574, %v1952
    %v1954 = vand.u32 %v1953, 4294901760
    %v1955 = vsub.f32 %v1953, %v1954
    %v1956 = vand.u32 %v1955, 4294901760
    %1957 = vmatprep.subr.mxu0 %v1956
    %v1958 = vand.u32 %v1573, 4294901760
    %v1959 = vsub.f32 %v1573, %v1958
    %v1960 = vand.u32 %v1959, 4294901760
    %v1961 = vsub.f32 %v1959, %v1960
    %v1962 = vand.u32 %v1961, 4294901760
    %1963 = vmatpush1.msra.mxu0 %v1962
    %v1964 = vand.u32 %v1576, 4294901760
    %v1965 = vsub.f32 %v1576, %v1964
    %v1966 = vand.u32 %v1965, 4294901760
    %v1967 = vsub.f32 %v1965, %v1966
    %v1968 = vand.u32 %v1967, 4294901760
    %1969 = vmatprep.subr.mxu0 %v1968
    %v1970 = vand.u32 %v1575, 4294901760
    %v1971 = vsub.f32 %v1575, %v1970
    %v1972 = vand.u32 %v1971, 4294901760
    %v1973 = vsub.f32 %v1971, %v1972
    %v1974 = vand.u32 %v1973, 4294901760
    %1975 = vmatpush1.msra.mxu0 %v1974
    %v1976 = vand.u32 %v1578, 4294901760
    %v1977 = vsub.f32 %v1578, %v1976
    %v1978 = vand.u32 %v1977, 4294901760
    %v1979 = vsub.f32 %v1977, %v1978
    %v1980 = vand.u32 %v1979, 4294901760
    %1981 = vmatprep.subr.mxu0 %v1980
    %v1982 = vand.u32 %v1577, 4294901760
    %v1983 = vsub.f32 %v1577, %v1982
    %v1984 = vand.u32 %v1983, 4294901760
    %v1985 = vsub.f32 %v1983, %v1984
    %v1986 = vand.u32 %v1985, 4294901760
    %1987 = vmatpush1.msra.mxu0 %v1986
    %v1988 = vand.u32 %v1580, 4294901760
    %v1989 = vsub.f32 %v1580, %v1988
    %v1990 = vand.u32 %v1989, 4294901760
    %v1991 = vsub.f32 %v1989, %v1990
    %v1992 = vand.u32 %v1991, 4294901760
    %1993 = vmatprep.subr.mxu0 %v1992
    %v1994 = vand.u32 %v1579, 4294901760
    %v1995 = vsub.f32 %v1579, %v1994
    %v1996 = vand.u32 %v1995, 4294901760
    %v1997 = vsub.f32 %v1995, %v1996
    %v1998 = vand.u32 %v1997, 4294901760
    %1999 = vmatpush1.msra.mxu0 %v1998
    %v2000 = vand.u32 %v1582, 4294901760
    %v2001 = vsub.f32 %v1582, %v2000
    %v2002 = vand.u32 %v2001, 4294901760
    %v2003 = vsub.f32 %v2001, %v2002
    %v2004 = vand.u32 %v2003, 4294901760
    %2005 = vmatprep.subr.mxu0 %v2004
    %v2006 = vand.u32 %v1581, 4294901760
    %v2007 = vsub.f32 %v1581, %v2006
    %v2008 = vand.u32 %v2007, 4294901760
    %v2009 = vsub.f32 %v2007, %v2008
    %v2010 = vand.u32 %v2009, 4294901760
    %2011 = vmatpush1.msra.mxu0 %v2010
    %v2012 = vand.u32 %v1584, 4294901760
    %v2013 = vsub.f32 %v1584, %v2012
    %v2014 = vand.u32 %v2013, 4294901760
    %v2015 = vsub.f32 %v2013, %v2014
    %v2016 = vand.u32 %v2015, 4294901760
    %2017 = vmatprep.subr.mxu0 %v2016
    %v2018 = vand.u32 %v1583, 4294901760
    %v2019 = vsub.f32 %v1583, %v2018
    %v2020 = vand.u32 %v2019, 4294901760
    %v2021 = vsub.f32 %v2019, %v2020
    %v2022 = vand.u32 %v2021, 4294901760
    %2023 = vmatpush1.msra.mxu0 %v2022
    %v2024 = vand.u32 %v1586, 4294901760
    %v2025 = vsub.f32 %v1586, %v2024
    %v2026 = vand.u32 %v2025, 4294901760
    %v2027 = vsub.f32 %v2025, %v2026
    %v2028 = vand.u32 %v2027, 4294901760
    %2029 = vmatprep.subr.mxu0 %v2028
    %v2030 = vand.u32 %v1585, 4294901760
    %v2031 = vsub.f32 %v1585, %v2030
    %v2032 = vand.u32 %v2031, 4294901760
    %v2033 = vsub.f32 %v2031, %v2032
    %v2034 = vand.u32 %v2033, 4294901760
    %2035 = vmatpush1.msra.mxu0 %v2034
    %v2036 = vand.u32 %v1588, 4294901760
    %v2037 = vsub.f32 %v1588, %v2036
    %v2038 = vand.u32 %v2037, 4294901760
    %v2039 = vsub.f32 %v2037, %v2038
    %v2040 = vand.u32 %v2039, 4294901760
    %2041 = vmatprep.subr.mxu0 %v2040
    %v2042 = vand.u32 %v1587, 4294901760
    %v2043 = vsub.f32 %v1587, %v2042
    %v2044 = vand.u32 %v2043, 4294901760
    %v2045 = vsub.f32 %v2043, %v2044
    %v2046 = vand.u32 %v2045, 4294901760
    %2047 = vmatpush1.msra.mxu0 %v2046
    %v2048 = vand.u32 %v1590, 4294901760
    %v2049 = vsub.f32 %v1590, %v2048
    %v2050 = vand.u32 %v2049, 4294901760
    %v2051 = vsub.f32 %v2049, %v2050
    %v2052 = vand.u32 %v2051, 4294901760
    %2053 = vmatprep.subr.mxu0 %v2052
    %v2054 = vand.u32 %v1589, 4294901760
    %v2055 = vsub.f32 %v1589, %v2054
    %v2056 = vand.u32 %v2055, 4294901760
    %v2057 = vsub.f32 %v2055, %v2056
    %v2058 = vand.u32 %v2057, 4294901760
    %2059 = vmatpush1.msra.mxu0 %v2058
    %v2060 = vand.u32 %v1592, 4294901760
    %v2061 = vsub.f32 %v1592, %v2060
    %v2062 = vand.u32 %v2061, 4294901760
    %v2063 = vsub.f32 %v2061, %v2062
    %v2064 = vand.u32 %v2063, 4294901760
    %2065 = vmatprep.subr.mxu0 %v2064
    %v2066 = vand.u32 %v1591, 4294901760
    %v2067 = vsub.f32 %v1591, %v2066
    %v2068 = vand.u32 %v2067, 4294901760
    %v2069 = vsub.f32 %v2067, %v2068
    %v2070 = vand.u32 %v2069, 4294901760
    %2071 = vmatpush1.msra.mxu0 %v2070
    %v2072 = vand.u32 %v1594, 4294901760
    %v2073 = vsub.f32 %v1594, %v2072
    %v2074 = vand.u32 %v2073, 4294901760
    %v2075 = vsub.f32 %v2073, %v2074
    %v2076 = vand.u32 %v2075, 4294901760
    %2077 = vmatprep.subr.mxu0 %v2076
    %v2078 = vand.u32 %v1593, 4294901760
    %v2079 = vsub.f32 %v1593, %v2078
    %v2080 = vand.u32 %v2079, 4294901760
    %v2081 = vsub.f32 %v2079, %v2080
    %v2082 = vand.u32 %v2081, 4294901760
    %2083 = vmatpush1.msra.mxu0 %v2082
    %v2084 = vand.u32 %v1596, 4294901760
    %v2085 = vsub.f32 %v1596, %v2084
    %v2086 = vand.u32 %v2085, 4294901760
    %v2087 = vsub.f32 %v2085, %v2086
    %v2088 = vand.u32 %v2087, 4294901760
    %2089 = vmatprep.subr.mxu0 %v2088
    %v2090 = vand.u32 %v1595, 4294901760
    %v2091 = vsub.f32 %v1595, %v2090
    %v2092 = vand.u32 %v2091, 4294901760
    %v2093 = vsub.f32 %v2091, %v2092
    %v2094 = vand.u32 %v2093, 4294901760
    %2095 = vmatpush1.msra.mxu0 %v2094
    %v2096 = vand.u32 %v1598, 4294901760
    %v2097 = vsub.f32 %v1598, %v2096
    %v2098 = vand.u32 %v2097, 4294901760
    %v2099 = vsub.f32 %v2097, %v2098
    %v2100 = vand.u32 %v2099, 4294901760
    %2101 = vmatprep.subr.mxu0 %v2100
    %v2102 = vand.u32 %v1597, 4294901760
    %v2103 = vsub.f32 %v1597, %v2102
    %v2104 = vand.u32 %v2103, 4294901760
    %v2105 = vsub.f32 %v2103, %v2104
    %v2106 = vand.u32 %v2105, 4294901760
    %2107 = vmatpush1.msra.mxu0 %v2106
    %v2108 = vand.u32 %v1600, 4294901760
    %v2109 = vsub.f32 %v1600, %v2108
    %v2110 = vand.u32 %v2109, 4294901760
    %v2111 = vsub.f32 %v2109, %v2110
    %v2112 = vand.u32 %v2111, 4294901760
    %2113 = vmatprep.subr.mxu0 %v2112
    %v2114 = vand.u32 %v1599, 4294901760
    %v2115 = vsub.f32 %v1599, %v2114
    %v2116 = vand.u32 %v2115, 4294901760
    %v2117 = vsub.f32 %v2115, %v2116
    %v2118 = vand.u32 %v2117, 4294901760
    %2119 = vmatpush1.msra.mxu0 %v2118
    %v2120 = vand.u32 %v1602, 4294901760
    %v2121 = vsub.f32 %v1602, %v2120
    %v2122 = vand.u32 %v2121, 4294901760
    %v2123 = vsub.f32 %v2121, %v2122
    %v2124 = vand.u32 %v2123, 4294901760
    %2125 = vmatprep.subr.mxu0 %v2124
    %v2126 = vand.u32 %v1601, 4294901760
    %v2127 = vsub.f32 %v1601, %v2126
    %v2128 = vand.u32 %v2127, 4294901760
    %v2129 = vsub.f32 %v2127, %v2128
    %v2130 = vand.u32 %v2129, 4294901760
    %2131 = vmatpush1.msra.mxu0 %v2130
    %v2132 = vand.u32 %v1538, 4294901760
    %2133 = vmatprep.mubr.f32.mxu0 %v2132
    %v2134 = vand.u32 %v1430, 4294901760
    %2135 = vmatmul.mubr.f32.gmra.mrb[0].mxu0 %v2134
    %v2136 = vpop.f32.mrb[0].mxu0
    %v2137 = vadd.f32 %v1744, %v2136
    %v2138 = vpop.f32.mrb[0].mxu0
    %v2139 = vadd.f32 %v1746, %v2138
    %2140 = vdwg.mxu0
    %v2141 = vand.u32 %v1540, 4294901760
    %v2142 = vsub.f32 %v1540, %v2141
    %2143 = vmatprep.subr.mxu0 %v2142
    %v2144 = vand.u32 %v1539, 4294901760
    %v2145 = vsub.f32 %v1539, %v2144
    %2146 = vmatpush1.msra.mxu0 %v2145
    %v2147 = vand.u32 %v1542, 4294901760
    %v2148 = vsub.f32 %v1542, %v2147
    %2149 = vmatprep.subr.mxu0 %v2148
    %v2150 = vand.u32 %v1541, 4294901760
    %v2151 = vsub.f32 %v1541, %v2150
    %2152 = vmatpush1.msra.mxu0 %v2151
    %v2153 = vand.u32 %v1544, 4294901760
    %v2154 = vsub.f32 %v1544, %v2153
    %2155 = vmatprep.subr.mxu0 %v2154
    %v2156 = vand.u32 %v1543, 4294901760
    %v2157 = vsub.f32 %v1543, %v2156
    %2158 = vmatpush1.msra.mxu0 %v2157
    %v2159 = vand.u32 %v1546, 4294901760
    %v2160 = vsub.f32 %v1546, %v2159
    %2161 = vmatprep.subr.mxu0 %v2160
    %v2162 = vand.u32 %v1545, 4294901760
    %v2163 = vsub.f32 %v1545, %v2162
    %2164 = vmatpush1.msra.mxu0 %v2163
    %v2165 = vand.u32 %v1548, 4294901760
    %v2166 = vsub.f32 %v1548, %v2165
    %2167 = vmatprep.subr.mxu0 %v2166
    %v2168 = vand.u32 %v1547, 4294901760
    %v2169 = vsub.f32 %v1547, %v2168
    %2170 = vmatpush1.msra.mxu0 %v2169
    %v2171 = vand.u32 %v1550, 4294901760
    %v2172 = vsub.f32 %v1550, %v2171
    %2173 = vmatprep.subr.mxu0 %v2172
    %v2174 = vand.u32 %v1549, 4294901760
    %v2175 = vsub.f32 %v1549, %v2174
    %2176 = vmatpush1.msra.mxu0 %v2175
    %v2177 = vand.u32 %v1552, 4294901760
    %v2178 = vsub.f32 %v1552, %v2177
    %2179 = vmatprep.subr.mxu0 %v2178
    %v2180 = vand.u32 %v1551, 4294901760
    %v2181 = vsub.f32 %v1551, %v2180
    %2182 = vmatpush1.msra.mxu0 %v2181
    %v2183 = vand.u32 %v1554, 4294901760
    %v2184 = vsub.f32 %v1554, %v2183
    %2185 = vmatprep.subr.mxu0 %v2184
    %v2186 = vand.u32 %v1553, 4294901760
    %v2187 = vsub.f32 %v1553, %v2186
    %2188 = vmatpush1.msra.mxu0 %v2187
    %v2189 = vand.u32 %v1556, 4294901760
    %v2190 = vsub.f32 %v1556, %v2189
    %2191 = vmatprep.subr.mxu0 %v2190
    %v2192 = vand.u32 %v1555, 4294901760
    %v2193 = vsub.f32 %v1555, %v2192
    %2194 = vmatpush1.msra.mxu0 %v2193
    %v2195 = vand.u32 %v1558, 4294901760
    %v2196 = vsub.f32 %v1558, %v2195
    %2197 = vmatprep.subr.mxu0 %v2196
    %v2198 = vand.u32 %v1557, 4294901760
    %v2199 = vsub.f32 %v1557, %v2198
    %2200 = vmatpush1.msra.mxu0 %v2199
    %v2201 = vand.u32 %v1560, 4294901760
    %v2202 = vsub.f32 %v1560, %v2201
    %2203 = vmatprep.subr.mxu0 %v2202
    %v2204 = vand.u32 %v1559, 4294901760
    %v2205 = vsub.f32 %v1559, %v2204
    %2206 = vmatpush1.msra.mxu0 %v2205
    %v2207 = vand.u32 %v1562, 4294901760
    %v2208 = vsub.f32 %v1562, %v2207
    %2209 = vmatprep.subr.mxu0 %v2208
    %v2210 = vand.u32 %v1561, 4294901760
    %v2211 = vsub.f32 %v1561, %v2210
    %2212 = vmatpush1.msra.mxu0 %v2211
    %v2213 = vand.u32 %v1564, 4294901760
    %v2214 = vsub.f32 %v1564, %v2213
    %2215 = vmatprep.subr.mxu0 %v2214
    %v2216 = vand.u32 %v1563, 4294901760
    %v2217 = vsub.f32 %v1563, %v2216
    %2218 = vmatpush1.msra.mxu0 %v2217
    %v2219 = vand.u32 %v1566, 4294901760
    %v2220 = vsub.f32 %v1566, %v2219
    %2221 = vmatprep.subr.mxu0 %v2220
    %v2222 = vand.u32 %v1565, 4294901760
    %v2223 = vsub.f32 %v1565, %v2222
    %2224 = vmatpush1.msra.mxu0 %v2223
    %v2225 = vand.u32 %v1568, 4294901760
    %v2226 = vsub.f32 %v1568, %v2225
    %2227 = vmatprep.subr.mxu0 %v2226
    %v2228 = vand.u32 %v1567, 4294901760
    %v2229 = vsub.f32 %v1567, %v2228
    %2230 = vmatpush1.msra.mxu0 %v2229
    %v2231 = vand.u32 %v1570, 4294901760
    %v2232 = vsub.f32 %v1570, %v2231
    %2233 = vmatprep.subr.mxu0 %v2232
    %v2234 = vand.u32 %v1569, 4294901760
    %v2235 = vsub.f32 %v1569, %v2234
    %2236 = vmatpush1.msra.mxu0 %v2235
    %v2237 = vand.u32 %v1572, 4294901760
    %v2238 = vsub.f32 %v1572, %v2237
    %2239 = vmatprep.subr.mxu0 %v2238
    %v2240 = vand.u32 %v1571, 4294901760
    %v2241 = vsub.f32 %v1571, %v2240
    %2242 = vmatpush1.msra.mxu0 %v2241
    %v2243 = vand.u32 %v1574, 4294901760
    %v2244 = vsub.f32 %v1574, %v2243
    %2245 = vmatprep.subr.mxu0 %v2244
    %v2246 = vand.u32 %v1573, 4294901760
    %v2247 = vsub.f32 %v1573, %v2246
    %2248 = vmatpush1.msra.mxu0 %v2247
    %v2249 = vand.u32 %v1576, 4294901760
    %v2250 = vsub.f32 %v1576, %v2249
    %2251 = vmatprep.subr.mxu0 %v2250
    %v2252 = vand.u32 %v1575, 4294901760
    %v2253 = vsub.f32 %v1575, %v2252
    %2254 = vmatpush1.msra.mxu0 %v2253
    %v2255 = vand.u32 %v1578, 4294901760
    %v2256 = vsub.f32 %v1578, %v2255
    %2257 = vmatprep.subr.mxu0 %v2256
    %v2258 = vand.u32 %v1577, 4294901760
    %v2259 = vsub.f32 %v1577, %v2258
    %2260 = vmatpush1.msra.mxu0 %v2259
    %v2261 = vand.u32 %v1580, 4294901760
    %v2262 = vsub.f32 %v1580, %v2261
    %2263 = vmatprep.subr.mxu0 %v2262
    %v2264 = vand.u32 %v1579, 4294901760
    %v2265 = vsub.f32 %v1579, %v2264
    %2266 = vmatpush1.msra.mxu0 %v2265
    %v2267 = vand.u32 %v1582, 4294901760
    %v2268 = vsub.f32 %v1582, %v2267
    %2269 = vmatprep.subr.mxu0 %v2268
    %v2270 = vand.u32 %v1581, 4294901760
    %v2271 = vsub.f32 %v1581, %v2270
    %2272 = vmatpush1.msra.mxu0 %v2271
    %v2273 = vand.u32 %v1584, 4294901760
    %v2274 = vsub.f32 %v1584, %v2273
    %2275 = vmatprep.subr.mxu0 %v2274
    %v2276 = vand.u32 %v1583, 4294901760
    %v2277 = vsub.f32 %v1583, %v2276
    %2278 = vmatpush1.msra.mxu0 %v2277
    %v2279 = vand.u32 %v1586, 4294901760
    %v2280 = vsub.f32 %v1586, %v2279
    %2281 = vmatprep.subr.mxu0 %v2280
    %v2282 = vand.u32 %v1585, 4294901760
    %v2283 = vsub.f32 %v1585, %v2282
    %2284 = vmatpush1.msra.mxu0 %v2283
    %v2285 = vand.u32 %v1588, 4294901760
    %v2286 = vsub.f32 %v1588, %v2285
    %2287 = vmatprep.subr.mxu0 %v2286
    %v2288 = vand.u32 %v1587, 4294901760
    %v2289 = vsub.f32 %v1587, %v2288
    %2290 = vmatpush1.msra.mxu0 %v2289
    %v2291 = vand.u32 %v1590, 4294901760
    %v2292 = vsub.f32 %v1590, %v2291
    %2293 = vmatprep.subr.mxu0 %v2292
    %v2294 = vand.u32 %v1589, 4294901760
    %v2295 = vsub.f32 %v1589, %v2294
    %2296 = vmatpush1.msra.mxu0 %v2295
    %v2297 = vand.u32 %v1592, 4294901760
    %v2298 = vsub.f32 %v1592, %v2297
    %2299 = vmatprep.subr.mxu0 %v2298
    %v2300 = vand.u32 %v1591, 4294901760
    %v2301 = vsub.f32 %v1591, %v2300
    %2302 = vmatpush1.msra.mxu0 %v2301
    %v2303 = vand.u32 %v1594, 4294901760
    %v2304 = vsub.f32 %v1594, %v2303
    %2305 = vmatprep.subr.mxu0 %v2304
    %v2306 = vand.u32 %v1593, 4294901760
    %v2307 = vsub.f32 %v1593, %v2306
    %2308 = vmatpush1.msra.mxu0 %v2307
    %v2309 = vand.u32 %v1596, 4294901760
    %v2310 = vsub.f32 %v1596, %v2309
    %2311 = vmatprep.subr.mxu0 %v2310
    %v2312 = vand.u32 %v1595, 4294901760
    %v2313 = vsub.f32 %v1595, %v2312
    %2314 = vmatpush1.msra.mxu0 %v2313
    %v2315 = vand.u32 %v1598, 4294901760
    %v2316 = vsub.f32 %v1598, %v2315
    %2317 = vmatprep.subr.mxu0 %v2316
    %v2318 = vand.u32 %v1597, 4294901760
    %v2319 = vsub.f32 %v1597, %v2318
    %2320 = vmatpush1.msra.mxu0 %v2319
    %v2321 = vand.u32 %v1600, 4294901760
    %v2322 = vsub.f32 %v1600, %v2321
    %2323 = vmatprep.subr.mxu0 %v2322
    %v2324 = vand.u32 %v1599, 4294901760
    %v2325 = vsub.f32 %v1599, %v2324
    %2326 = vmatpush1.msra.mxu0 %v2325
    %v2327 = vand.u32 %v1602, 4294901760
    %v2328 = vsub.f32 %v1602, %v2327
    %2329 = vmatprep.subr.mxu0 %v2328
    %v2330 = vand.u32 %v1601, 4294901760
    %v2331 = vsub.f32 %v1601, %v2330
    %2332 = vmatpush1.msra.mxu0 %v2331
    %v2333 = vand.u32 %v1538, 4294901760
    %v2334 = vsub.f32 %v1538, %v2333
    %2335 = vmatprep.mubr.f32.mxu0 %v2334
    %v2336 = vand.u32 %v1430, 4294901760
    %v2337 = vsub.f32 %v1430, %v2336
    %2338 = vmatmul.mubr.f32.gmra.mrb[0].mxu0 %v2337
    %v2339 = vpop.f32.mrb[0].mxu0
    %v2340 = vadd.f32 %v2137, %v2339
    %v2341 = vpop.f32.mrb[0].mxu0
    %v2342 = vadd.f32 %v2139, %v2341
    %2343 = vdwg.mxu0
    %v2344 = vand.u32 %v1540, 4294901760
    %2345 = vmatprep.subr.mxu0 %v2344
    %v2346 = vand.u32 %v1539, 4294901760
    %2347 = vmatpush1.msra.mxu0 %v2346
    %v2348 = vand.u32 %v1542, 4294901760
    %2349 = vmatprep.subr.mxu0 %v2348
    %v2350 = vand.u32 %v1541, 4294901760
    %2351 = vmatpush1.msra.mxu0 %v2350
    %v2352 = vand.u32 %v1544, 4294901760
    %2353 = vmatprep.subr.mxu0 %v2352
    %v2354 = vand.u32 %v1543, 4294901760
    %2355 = vmatpush1.msra.mxu0 %v2354
    %v2356 = vand.u32 %v1546, 4294901760
    %2357 = vmatprep.subr.mxu0 %v2356
    %v2358 = vand.u32 %v1545, 4294901760
    %2359 = vmatpush1.msra.mxu0 %v2358
    %v2360 = vand.u32 %v1548, 4294901760
    %2361 = vmatprep.subr.mxu0 %v2360
    %v2362 = vand.u32 %v1547, 4294901760
    %2363 = vmatpush1.msra.mxu0 %v2362
    %v2364 = vand.u32 %v1550, 4294901760
    %2365 = vmatprep.subr.mxu0 %v2364
    %v2366 = vand.u32 %v1549, 4294901760
    %2367 = vmatpush1.msra.mxu0 %v2366
    %v2368 = vand.u32 %v1552, 4294901760
    %2369 = vmatprep.subr.mxu0 %v2368
    %v2370 = vand.u32 %v1551, 4294901760
    %2371 = vmatpush1.msra.mxu0 %v2370
    %v2372 = vand.u32 %v1554, 4294901760
    %2373 = vmatprep.subr.mxu0 %v2372
    %v2374 = vand.u32 %v1553, 4294901760
    %2375 = vmatpush1.msra.mxu0 %v2374
    %v2376 = vand.u32 %v1556, 4294901760
    %2377 = vmatprep.subr.mxu0 %v2376
    %v2378 = vand.u32 %v1555, 4294901760
    %2379 = vmatpush1.msra.mxu0 %v2378
    %v2380 = vand.u32 %v1558, 4294901760
    %2381 = vmatprep.subr.mxu0 %v2380
    %v2382 = vand.u32 %v1557, 4294901760
    %2383 = vmatpush1.msra.mxu0 %v2382
    %v2384 = vand.u32 %v1560, 4294901760
    %2385 = vmatprep.subr.mxu0 %v2384
    %v2386 = vand.u32 %v1559, 4294901760
    %2387 = vmatpush1.msra.mxu0 %v2386
    %v2388 = vand.u32 %v1562, 4294901760
    %2389 = vmatprep.subr.mxu0 %v2388
    %v2390 = vand.u32 %v1561, 4294901760
    %2391 = vmatpush1.msra.mxu0 %v2390
    %v2392 = vand.u32 %v1564, 4294901760
    %2393 = vmatprep.subr.mxu0 %v2392
    %v2394 = vand.u32 %v1563, 4294901760
    %2395 = vmatpush1.msra.mxu0 %v2394
    %v2396 = vand.u32 %v1566, 4294901760
    %2397 = vmatprep.subr.mxu0 %v2396
    %v2398 = vand.u32 %v1565, 4294901760
    %2399 = vmatpush1.msra.mxu0 %v2398
    %v2400 = vand.u32 %v1568, 4294901760
    %2401 = vmatprep.subr.mxu0 %v2400
    %v2402 = vand.u32 %v1567, 4294901760
    %2403 = vmatpush1.msra.mxu0 %v2402
    %v2404 = vand.u32 %v1570, 4294901760
    %2405 = vmatprep.subr.mxu0 %v2404
    %v2406 = vand.u32 %v1569, 4294901760
    %2407 = vmatpush1.msra.mxu0 %v2406
    %v2408 = vand.u32 %v1572, 4294901760
    %2409 = vmatprep.subr.mxu0 %v2408
    %v2410 = vand.u32 %v1571, 4294901760
    %2411 = vmatpush1.msra.mxu0 %v2410
    %v2412 = vand.u32 %v1574, 4294901760
    %2413 = vmatprep.subr.mxu0 %v2412
    %v2414 = vand.u32 %v1573, 4294901760
    %2415 = vmatpush1.msra.mxu0 %v2414
    %v2416 = vand.u32 %v1576, 4294901760
    %2417 = vmatprep.subr.mxu0 %v2416
    %v2418 = vand.u32 %v1575, 4294901760
    %2419 = vmatpush1.msra.mxu0 %v2418
    %v2420 = vand.u32 %v1578, 4294901760
    %2421 = vmatprep.subr.mxu0 %v2420
    %v2422 = vand.u32 %v1577, 4294901760
    %2423 = vmatpush1.msra.mxu0 %v2422
    %v2424 = vand.u32 %v1580, 4294901760
    %2425 = vmatprep.subr.mxu0 %v2424
    %v2426 = vand.u32 %v1579, 4294901760
    %2427 = vmatpush1.msra.mxu0 %v2426
    %v2428 = vand.u32 %v1582, 4294901760
    %2429 = vmatprep.subr.mxu0 %v2428
    %v2430 = vand.u32 %v1581, 4294901760
    %2431 = vmatpush1.msra.mxu0 %v2430
    %v2432 = vand.u32 %v1584, 4294901760
    %2433 = vmatprep.subr.mxu0 %v2432
    %v2434 = vand.u32 %v1583, 4294901760
    %2435 = vmatpush1.msra.mxu0 %v2434
    %v2436 = vand.u32 %v1586, 4294901760
    %2437 = vmatprep.subr.mxu0 %v2436
    %v2438 = vand.u32 %v1585, 4294901760
    %2439 = vmatpush1.msra.mxu0 %v2438
    %v2440 = vand.u32 %v1588, 4294901760
    %2441 = vmatprep.subr.mxu0 %v2440
    %v2442 = vand.u32 %v1587, 4294901760
    %2443 = vmatpush1.msra.mxu0 %v2442
    %v2444 = vand.u32 %v1590, 4294901760
    %2445 = vmatprep.subr.mxu0 %v2444
    %v2446 = vand.u32 %v1589, 4294901760
    %2447 = vmatpush1.msra.mxu0 %v2446
    %v2448 = vand.u32 %v1592, 4294901760
    %2449 = vmatprep.subr.mxu0 %v2448
    %v2450 = vand.u32 %v1591, 4294901760
    %2451 = vmatpush1.msra.mxu0 %v2450
    %v2452 = vand.u32 %v1594, 4294901760
    %2453 = vmatprep.subr.mxu0 %v2452
    %v2454 = vand.u32 %v1593, 4294901760
    %2455 = vmatpush1.msra.mxu0 %v2454
    %v2456 = vand.u32 %v1596, 4294901760
    %2457 = vmatprep.subr.mxu0 %v2456
    %v2458 = vand.u32 %v1595, 4294901760
    %2459 = vmatpush1.msra.mxu0 %v2458
    %v2460 = vand.u32 %v1598, 4294901760
    %2461 = vmatprep.subr.mxu0 %v2460
    %v2462 = vand.u32 %v1597, 4294901760
    %2463 = vmatpush1.msra.mxu0 %v2462
    %v2464 = vand.u32 %v1600, 4294901760
    %2465 = vmatprep.subr.mxu0 %v2464
    %v2466 = vand.u32 %v1599, 4294901760
    %2467 = vmatpush1.msra.mxu0 %v2466
    %v2468 = vand.u32 %v1602, 4294901760
    %2469 = vmatprep.subr.mxu0 %v2468
    %v2470 = vand.u32 %v1601, 4294901760
    %2471 = vmatpush1.msra.mxu0 %v2470
    %v2472 = vand.u32 %v1538, 4294901760
    %v2473 = vsub.f32 %v1538, %v2472
    %v2474 = vand.u32 %v2473, 4294901760
    %2475 = vmatprep.mubr.f32.mxu0 %v2474
    %v2476 = vand.u32 %v1430, 4294901760
    %v2477 = vsub.f32 %v1430, %v2476
    %v2478 = vand.u32 %v2477, 4294901760
    %2479 = vmatmul.mubr.f32.gmra.mrb[0].mxu0 %v2478
    %v2480 = vpop.f32.mrb[0].mxu0
    %v2481 = vadd.f32 %v2340, %v2480
    %v2482 = vpop.f32.mrb[0].mxu0
    %v2483 = vadd.f32 %v2342, %v2482
    %2484 = vdwg.mxu0
    %v2485 = vand.u32 %v1540, 4294901760
    %v2486 = vsub.f32 %v1540, %v2485
    %v2487 = vand.u32 %v2486, 4294901760
    %2488 = vmatprep.subr.mxu0 %v2487
    %v2489 = vand.u32 %v1539, 4294901760
    %v2490 = vsub.f32 %v1539, %v2489
    %v2491 = vand.u32 %v2490, 4294901760
    %2492 = vmatpush1.msra.mxu0 %v2491
    %v2493 = vand.u32 %v1542, 4294901760
    %v2494 = vsub.f32 %v1542, %v2493
    %v2495 = vand.u32 %v2494, 4294901760
    %2496 = vmatprep.subr.mxu0 %v2495
    %v2497 = vand.u32 %v1541, 4294901760
    %v2498 = vsub.f32 %v1541, %v2497
    %v2499 = vand.u32 %v2498, 4294901760
    %2500 = vmatpush1.msra.mxu0 %v2499
    %v2501 = vand.u32 %v1544, 4294901760
    %v2502 = vsub.f32 %v1544, %v2501
    %v2503 = vand.u32 %v2502, 4294901760
    %2504 = vmatprep.subr.mxu0 %v2503
    %v2505 = vand.u32 %v1543, 4294901760
    %v2506 = vsub.f32 %v1543, %v2505
    %v2507 = vand.u32 %v2506, 4294901760
    %2508 = vmatpush1.msra.mxu0 %v2507
    %v2509 = vand.u32 %v1546, 4294901760
    %v2510 = vsub.f32 %v1546, %v2509
    %v2511 = vand.u32 %v2510, 4294901760
    %2512 = vmatprep.subr.mxu0 %v2511
    %v2513 = vand.u32 %v1545, 4294901760
    %v2514 = vsub.f32 %v1545, %v2513
    %v2515 = vand.u32 %v2514, 4294901760
    %2516 = vmatpush1.msra.mxu0 %v2515
    %v2517 = vand.u32 %v1548, 4294901760
    %v2518 = vsub.f32 %v1548, %v2517
    %v2519 = vand.u32 %v2518, 4294901760
    %2520 = vmatprep.subr.mxu0 %v2519
    %v2521 = vand.u32 %v1547, 4294901760
    %v2522 = vsub.f32 %v1547, %v2521
    %v2523 = vand.u32 %v2522, 4294901760
    %2524 = vmatpush1.msra.mxu0 %v2523
    %v2525 = vand.u32 %v1550, 4294901760
    %v2526 = vsub.f32 %v1550, %v2525
    %v2527 = vand.u32 %v2526, 4294901760
    %2528 = vmatprep.subr.mxu0 %v2527
    %v2529 = vand.u32 %v1549, 4294901760
    %v2530 = vsub.f32 %v1549, %v2529
    %v2531 = vand.u32 %v2530, 4294901760
    %2532 = vmatpush1.msra.mxu0 %v2531
    %v2533 = vand.u32 %v1552, 4294901760
    %v2534 = vsub.f32 %v1552, %v2533
    %v2535 = vand.u32 %v2534, 4294901760
    %2536 = vmatprep.subr.mxu0 %v2535
    %v2537 = vand.u32 %v1551, 4294901760
    %v2538 = vsub.f32 %v1551, %v2537
    %v2539 = vand.u32 %v2538, 4294901760
    %2540 = vmatpush1.msra.mxu0 %v2539
    %v2541 = vand.u32 %v1554, 4294901760
    %v2542 = vsub.f32 %v1554, %v2541
    %v2543 = vand.u32 %v2542, 4294901760
    %2544 = vmatprep.subr.mxu0 %v2543
    %v2545 = vand.u32 %v1553, 4294901760
    %v2546 = vsub.f32 %v1553, %v2545
    %v2547 = vand.u32 %v2546, 4294901760
    %2548 = vmatpush1.msra.mxu0 %v2547
    %v2549 = vand.u32 %v1556, 4294901760
    %v2550 = vsub.f32 %v1556, %v2549
    %v2551 = vand.u32 %v2550, 4294901760
    %2552 = vmatprep.subr.mxu0 %v2551
    %v2553 = vand.u32 %v1555, 4294901760
    %v2554 = vsub.f32 %v1555, %v2553
    %v2555 = vand.u32 %v2554, 4294901760
    %2556 = vmatpush1.msra.mxu0 %v2555
    %v2557 = vand.u32 %v1558, 4294901760
    %v2558 = vsub.f32 %v1558, %v2557
    %v2559 = vand.u32 %v2558, 4294901760
    %2560 = vmatprep.subr.mxu0 %v2559
    %v2561 = vand.u32 %v1557, 4294901760
    %v2562 = vsub.f32 %v1557, %v2561
    %v2563 = vand.u32 %v2562, 4294901760
    %2564 = vmatpush1.msra.mxu0 %v2563
    %v2565 = vand.u32 %v1560, 4294901760
    %v2566 = vsub.f32 %v1560, %v2565
    %v2567 = vand.u32 %v2566, 4294901760
    %2568 = vmatprep.subr.mxu0 %v2567
    %v2569 = vand.u32 %v1559, 4294901760
    %v2570 = vsub.f32 %v1559, %v2569
    %v2571 = vand.u32 %v2570, 4294901760
    %2572 = vmatpush1.msra.mxu0 %v2571
    %v2573 = vand.u32 %v1562, 4294901760
    %v2574 = vsub.f32 %v1562, %v2573
    %v2575 = vand.u32 %v2574, 4294901760
    %2576 = vmatprep.subr.mxu0 %v2575
    %v2577 = vand.u32 %v1561, 4294901760
    %v2578 = vsub.f32 %v1561, %v2577
    %v2579 = vand.u32 %v2578, 4294901760
    %2580 = vmatpush1.msra.mxu0 %v2579
    %v2581 = vand.u32 %v1564, 4294901760
    %v2582 = vsub.f32 %v1564, %v2581
    %v2583 = vand.u32 %v2582, 4294901760
    %2584 = vmatprep.subr.mxu0 %v2583
    %v2585 = vand.u32 %v1563, 4294901760
    %v2586 = vsub.f32 %v1563, %v2585
    %v2587 = vand.u32 %v2586, 4294901760
    %2588 = vmatpush1.msra.mxu0 %v2587
    %v2589 = vand.u32 %v1566, 4294901760
    %v2590 = vsub.f32 %v1566, %v2589
    %v2591 = vand.u32 %v2590, 4294901760
    %2592 = vmatprep.subr.mxu0 %v2591
    %v2593 = vand.u32 %v1565, 4294901760
    %v2594 = vsub.f32 %v1565, %v2593
    %v2595 = vand.u32 %v2594, 4294901760
    %2596 = vmatpush1.msra.mxu0 %v2595
    %v2597 = vand.u32 %v1568, 4294901760
    %v2598 = vsub.f32 %v1568, %v2597
    %v2599 = vand.u32 %v2598, 4294901760
    %2600 = vmatprep.subr.mxu0 %v2599
    %v2601 = vand.u32 %v1567, 4294901760
    %v2602 = vsub.f32 %v1567, %v2601
    %v2603 = vand.u32 %v2602, 4294901760
    %2604 = vmatpush1.msra.mxu0 %v2603
    %v2605 = vand.u32 %v1570, 4294901760
    %v2606 = vsub.f32 %v1570, %v2605
    %v2607 = vand.u32 %v2606, 4294901760
    %2608 = vmatprep.subr.mxu0 %v2607
    %v2609 = vand.u32 %v1569, 4294901760
    %v2610 = vsub.f32 %v1569, %v2609
    %v2611 = vand.u32 %v2610, 4294901760
    %2612 = vmatpush1.msra.mxu0 %v2611
    %v2613 = vand.u32 %v1572, 4294901760
    %v2614 = vsub.f32 %v1572, %v2613
    %v2615 = vand.u32 %v2614, 4294901760
    %2616 = vmatprep.subr.mxu0 %v2615
    %v2617 = vand.u32 %v1571, 4294901760
    %v2618 = vsub.f32 %v1571, %v2617
    %v2619 = vand.u32 %v2618, 4294901760
    %2620 = vmatpush1.msra.mxu0 %v2619
    %v2621 = vand.u32 %v1574, 4294901760
    %v2622 = vsub.f32 %v1574, %v2621
    %v2623 = vand.u32 %v2622, 4294901760
    %2624 = vmatprep.subr.mxu0 %v2623
    %v2625 = vand.u32 %v1573, 4294901760
    %v2626 = vsub.f32 %v1573, %v2625
    %v2627 = vand.u32 %v2626, 4294901760
    %2628 = vmatpush1.msra.mxu0 %v2627
    %v2629 = vand.u32 %v1576, 4294901760
    %v2630 = vsub.f32 %v1576, %v2629
    %v2631 = vand.u32 %v2630, 4294901760
    %2632 = vmatprep.subr.mxu0 %v2631
    %v2633 = vand.u32 %v1575, 4294901760
    %v2634 = vsub.f32 %v1575, %v2633
    %v2635 = vand.u32 %v2634, 4294901760
    %2636 = vmatpush1.msra.mxu0 %v2635
    %v2637 = vand.u32 %v1578, 4294901760
    %v2638 = vsub.f32 %v1578, %v2637
    %v2639 = vand.u32 %v2638, 4294901760
    %2640 = vmatprep.subr.mxu0 %v2639
    %v2641 = vand.u32 %v1577, 4294901760
    %v2642 = vsub.f32 %v1577, %v2641
    %v2643 = vand.u32 %v2642, 4294901760
    %2644 = vmatpush1.msra.mxu0 %v2643
    %v2645 = vand.u32 %v1580, 4294901760
    %v2646 = vsub.f32 %v1580, %v2645
    %v2647 = vand.u32 %v2646, 4294901760
    %2648 = vmatprep.subr.mxu0 %v2647
    %v2649 = vand.u32 %v1579, 4294901760
    %v2650 = vsub.f32 %v1579, %v2649
    %v2651 = vand.u32 %v2650, 4294901760
    %2652 = vmatpush1.msra.mxu0 %v2651
    %v2653 = vand.u32 %v1582, 4294901760
    %v2654 = vsub.f32 %v1582, %v2653
    %v2655 = vand.u32 %v2654, 4294901760
    %2656 = vmatprep.subr.mxu0 %v2655
    %v2657 = vand.u32 %v1581, 4294901760
    %v2658 = vsub.f32 %v1581, %v2657
    %v2659 = vand.u32 %v2658, 4294901760
    %2660 = vmatpush1.msra.mxu0 %v2659
    %v2661 = vand.u32 %v1584, 4294901760
    %v2662 = vsub.f32 %v1584, %v2661
    %v2663 = vand.u32 %v2662, 4294901760
    %2664 = vmatprep.subr.mxu0 %v2663
    %v2665 = vand.u32 %v1583, 4294901760
    %v2666 = vsub.f32 %v1583, %v2665
    %v2667 = vand.u32 %v2666, 4294901760
    %2668 = vmatpush1.msra.mxu0 %v2667
    %v2669 = vand.u32 %v1586, 4294901760
    %v2670 = vsub.f32 %v1586, %v2669
    %v2671 = vand.u32 %v2670, 4294901760
    %2672 = vmatprep.subr.mxu0 %v2671
    %v2673 = vand.u32 %v1585, 4294901760
    %v2674 = vsub.f32 %v1585, %v2673
    %v2675 = vand.u32 %v2674, 4294901760
    %2676 = vmatpush1.msra.mxu0 %v2675
    %v2677 = vand.u32 %v1588, 4294901760
    %v2678 = vsub.f32 %v1588, %v2677
    %v2679 = vand.u32 %v2678, 4294901760
    %2680 = vmatprep.subr.mxu0 %v2679
    %v2681 = vand.u32 %v1587, 4294901760
    %v2682 = vsub.f32 %v1587, %v2681
    %v2683 = vand.u32 %v2682, 4294901760
    %2684 = vmatpush1.msra.mxu0 %v2683
    %v2685 = vand.u32 %v1590, 4294901760
    %v2686 = vsub.f32 %v1590, %v2685
    %v2687 = vand.u32 %v2686, 4294901760
    %2688 = vmatprep.subr.mxu0 %v2687
    %v2689 = vand.u32 %v1589, 4294901760
    %v2690 = vsub.f32 %v1589, %v2689
    %v2691 = vand.u32 %v2690, 4294901760
    %2692 = vmatpush1.msra.mxu0 %v2691
    %v2693 = vand.u32 %v1592, 4294901760
    %v2694 = vsub.f32 %v1592, %v2693
    %v2695 = vand.u32 %v2694, 4294901760
    %2696 = vmatprep.subr.mxu0 %v2695
    %v2697 = vand.u32 %v1591, 4294901760
    %v2698 = vsub.f32 %v1591, %v2697
    %v2699 = vand.u32 %v2698, 4294901760
    %2700 = vmatpush1.msra.mxu0 %v2699
    %v2701 = vand.u32 %v1594, 4294901760
    %v2702 = vsub.f32 %v1594, %v2701
    %v2703 = vand.u32 %v2702, 4294901760
    %2704 = vmatprep.subr.mxu0 %v2703
    %v2705 = vand.u32 %v1593, 4294901760
    %v2706 = vsub.f32 %v1593, %v2705
    %v2707 = vand.u32 %v2706, 4294901760
    %2708 = vmatpush1.msra.mxu0 %v2707
    %v2709 = vand.u32 %v1596, 4294901760
    %v2710 = vsub.f32 %v1596, %v2709
    %v2711 = vand.u32 %v2710, 4294901760
    %2712 = vmatprep.subr.mxu0 %v2711
    %v2713 = vand.u32 %v1595, 4294901760
    %v2714 = vsub.f32 %v1595, %v2713
    %v2715 = vand.u32 %v2714, 4294901760
    %2716 = vmatpush1.msra.mxu0 %v2715
    %v2717 = vand.u32 %v1598, 4294901760
    %v2718 = vsub.f32 %v1598, %v2717
    %v2719 = vand.u32 %v2718, 4294901760
    %2720 = vmatprep.subr.mxu0 %v2719
    %v2721 = vand.u32 %v1597, 4294901760
    %v2722 = vsub.f32 %v1597, %v2721
    %v2723 = vand.u32 %v2722, 4294901760
    %2724 = vmatpush1.msra.mxu0 %v2723
    %v2725 = vand.u32 %v1600, 4294901760
    %v2726 = vsub.f32 %v1600, %v2725
    %v2727 = vand.u32 %v2726, 4294901760
    %2728 = vmatprep.subr.mxu0 %v2727
    %v2729 = vand.u32 %v1599, 4294901760
    %v2730 = vsub.f32 %v1599, %v2729
    %v2731 = vand.u32 %v2730, 4294901760
    %2732 = vmatpush1.msra.mxu0 %v2731
    %v2733 = vand.u32 %v1602, 4294901760
    %v2734 = vsub.f32 %v1602, %v2733
    %v2735 = vand.u32 %v2734, 4294901760
    %2736 = vmatprep.subr.mxu0 %v2735
    %v2737 = vand.u32 %v1601, 4294901760
    %v2738 = vsub.f32 %v1601, %v2737
    %v2739 = vand.u32 %v2738, 4294901760
    %2740 = vmatpush1.msra.mxu0 %v2739
    %v2741 = vand.u32 %v1538, 4294901760
    %2742 = vmatprep.mubr.f32.mxu0 %v2741
    %v2743 = vand.u32 %v1430, 4294901760
    %2744 = vmatmul.mubr.f32.gmra.mrb[0].mxu0 %v2743
    %v2745 = vpop.f32.mrb[0].mxu0
    %v2746 = vadd.f32 %v2481, %v2745
    %v2747 = vpop.f32.mrb[0].mxu0
    %v2748 = vadd.f32 %v2483, %v2747
    %2749 = vdwg.mxu0
    %v2750 = vand.u32 %v1540, 4294901760
    %2751 = vmatprep.subr.mxu0 %v2750
    %v2752 = vand.u32 %v1539, 4294901760
    %2753 = vmatpush1.msra.mxu0 %v2752
    %v2754 = vand.u32 %v1542, 4294901760
    %2755 = vmatprep.subr.mxu0 %v2754
    %v2756 = vand.u32 %v1541, 4294901760
    %2757 = vmatpush1.msra.mxu0 %v2756
    %v2758 = vand.u32 %v1544, 4294901760
    %2759 = vmatprep.subr.mxu0 %v2758
    %v2760 = vand.u32 %v1543, 4294901760
    %2761 = vmatpush1.msra.mxu0 %v2760
    %v2762 = vand.u32 %v1546, 4294901760
    %2763 = vmatprep.subr.mxu0 %v2762
    %v2764 = vand.u32 %v1545, 4294901760
    %2765 = vmatpush1.msra.mxu0 %v2764
    %v2766 = vand.u32 %v1548, 4294901760
    %2767 = vmatprep.subr.mxu0 %v2766
    %v2768 = vand.u32 %v1547, 4294901760
    %2769 = vmatpush1.msra.mxu0 %v2768
    %v2770 = vand.u32 %v1550, 4294901760
    %2771 = vmatprep.subr.mxu0 %v2770
    %v2772 = vand.u32 %v1549, 4294901760
    %2773 = vmatpush1.msra.mxu0 %v2772
    %v2774 = vand.u32 %v1552, 4294901760
    %2775 = vmatprep.subr.mxu0 %v2774
    %v2776 = vand.u32 %v1551, 4294901760
    %2777 = vmatpush1.msra.mxu0 %v2776
    %v2778 = vand.u32 %v1554, 4294901760
    %2779 = vmatprep.subr.mxu0 %v2778
    %v2780 = vand.u32 %v1553, 4294901760
    %2781 = vmatpush1.msra.mxu0 %v2780
    %v2782 = vand.u32 %v1556, 4294901760
    %2783 = vmatprep.subr.mxu0 %v2782
    %v2784 = vand.u32 %v1555, 4294901760
    %2785 = vmatpush1.msra.mxu0 %v2784
    %v2786 = vand.u32 %v1558, 4294901760
    %2787 = vmatprep.subr.mxu0 %v2786
    %v2788 = vand.u32 %v1557, 4294901760
    %2789 = vmatpush1.msra.mxu0 %v2788
    %v2790 = vand.u32 %v1560, 4294901760
    %2791 = vmatprep.subr.mxu0 %v2790
    %v2792 = vand.u32 %v1559, 4294901760
    %2793 = vmatpush1.msra.mxu0 %v2792
    %v2794 = vand.u32 %v1562, 4294901760
    %2795 = vmatprep.subr.mxu0 %v2794
    %v2796 = vand.u32 %v1561, 4294901760
    %2797 = vmatpush1.msra.mxu0 %v2796
    %v2798 = vand.u32 %v1564, 4294901760
    %2799 = vmatprep.subr.mxu0 %v2798
    %v2800 = vand.u32 %v1563, 4294901760
    %2801 = vmatpush1.msra.mxu0 %v2800
    %v2802 = vand.u32 %v1566, 4294901760
    %2803 = vmatprep.subr.mxu0 %v2802
    %v2804 = vand.u32 %v1565, 4294901760
    %2805 = vmatpush1.msra.mxu0 %v2804
    %v2806 = vand.u32 %v1568, 4294901760
    %2807 = vmatprep.subr.mxu0 %v2806
    %v2808 = vand.u32 %v1567, 4294901760
    %2809 = vmatpush1.msra.mxu0 %v2808
    %v2810 = vand.u32 %v1570, 4294901760
    %2811 = vmatprep.subr.mxu0 %v2810
    %v2812 = vand.u32 %v1569, 4294901760
    %2813 = vmatpush1.msra.mxu0 %v2812
    %v2814 = vand.u32 %v1572, 4294901760
    %2815 = vmatprep.subr.mxu0 %v2814
    %v2816 = vand.u32 %v1571, 4294901760
    %2817 = vmatpush1.msra.mxu0 %v2816
    %v2818 = vand.u32 %v1574, 4294901760
    %2819 = vmatprep.subr.mxu0 %v2818
    %v2820 = vand.u32 %v1573, 4294901760
    %2821 = vmatpush1.msra.mxu0 %v2820
    %v2822 = vand.u32 %v1576, 4294901760
    %2823 = vmatprep.subr.mxu0 %v2822
    %v2824 = vand.u32 %v1575, 4294901760
    %2825 = vmatpush1.msra.mxu0 %v2824
    %v2826 = vand.u32 %v1578, 4294901760
    %2827 = vmatprep.subr.mxu0 %v2826
    %v2828 = vand.u32 %v1577, 4294901760
    %2829 = vmatpush1.msra.mxu0 %v2828
    %v2830 = vand.u32 %v1580, 4294901760
    %2831 = vmatprep.subr.mxu0 %v2830
    %v2832 = vand.u32 %v1579, 4294901760
    %2833 = vmatpush1.msra.mxu0 %v2832
    %v2834 = vand.u32 %v1582, 4294901760
    %2835 = vmatprep.subr.mxu0 %v2834
    %v2836 = vand.u32 %v1581, 4294901760
    %2837 = vmatpush1.msra.mxu0 %v2836
    %v2838 = vand.u32 %v1584, 4294901760
    %2839 = vmatprep.subr.mxu0 %v2838
    %v2840 = vand.u32 %v1583, 4294901760
    %2841 = vmatpush1.msra.mxu0 %v2840
    %v2842 = vand.u32 %v1586, 4294901760
    %2843 = vmatprep.subr.mxu0 %v2842
    %v2844 = vand.u32 %v1585, 4294901760
    %2845 = vmatpush1.msra.mxu0 %v2844
    %v2846 = vand.u32 %v1588, 4294901760
    %2847 = vmatprep.subr.mxu0 %v2846
    %v2848 = vand.u32 %v1587, 4294901760
    %2849 = vmatpush1.msra.mxu0 %v2848
    %v2850 = vand.u32 %v1590, 4294901760
    %2851 = vmatprep.subr.mxu0 %v2850
    %v2852 = vand.u32 %v1589, 4294901760
    %2853 = vmatpush1.msra.mxu0 %v2852
    %v2854 = vand.u32 %v1592, 4294901760
    %2855 = vmatprep.subr.mxu0 %v2854
    %v2856 = vand.u32 %v1591, 4294901760
    %2857 = vmatpush1.msra.mxu0 %v2856
    %v2858 = vand.u32 %v1594, 4294901760
    %2859 = vmatprep.subr.mxu0 %v2858
    %v2860 = vand.u32 %v1593, 4294901760
    %2861 = vmatpush1.msra.mxu0 %v2860
    %v2862 = vand.u32 %v1596, 4294901760
    %2863 = vmatprep.subr.mxu0 %v2862
    %v2864 = vand.u32 %v1595, 4294901760
    %2865 = vmatpush1.msra.mxu0 %v2864
    %v2866 = vand.u32 %v1598, 4294901760
    %2867 = vmatprep.subr.mxu0 %v2866
    %v2868 = vand.u32 %v1597, 4294901760
    %2869 = vmatpush1.msra.mxu0 %v2868
    %v2870 = vand.u32 %v1600, 4294901760
    %2871 = vmatprep.subr.mxu0 %v2870
    %v2872 = vand.u32 %v1599, 4294901760
    %2873 = vmatpush1.msra.mxu0 %v2872
    %v2874 = vand.u32 %v1602, 4294901760
    %2875 = vmatprep.subr.mxu0 %v2874
    %v2876 = vand.u32 %v1601, 4294901760
    %2877 = vmatpush1.msra.mxu0 %v2876
    %v2878 = vand.u32 %v1538, 4294901760
    %2879 = vmatprep.mubr.f32.mxu0 %v2878
    %v2880 = vand.u32 %v1430, 4294901760
    %2881 = vmatmul.mubr.f32.gmra.mrb[0].mxu0 %v2880
    %v2882 = vpop.f32.mrb[0].mxu0
    %v2883 = vadd.f32 %v2746, %v2882
    %v2884 = vpop.f32.mrb[0].mxu0
    %v2885 = vadd.f32 %v2748, %v2884
    %2886 = vdwg.mxu0
    %v2887 = vmul.f32 %v2883, %v2883
    %v2888 = vmul.f32 %v2885, %v2885
    %v2889 = vadd.f32 %v2887, %v2888
    %v2890 = vrsqrt.pop %v2889
    %v2891 = vmul.f32 %v2889, %v2890
    %vm2892 = vcmp.eq.f32.partialorder %v2889, inf
    %v2893 = vsel %vm2892, %v2889, %v2891
    %vm2894 = vcmp.eq.f32.partialorder %v2889, 0.0
    %v2895 = vand.u32 %v2889, 2147483648
    %v2896 = vsel %vm2894, %v2895, %v2893
    %v2897 = vmul.f32 %v2896, 0.015625
    %v2898 = vsub.f32 %v2897, %v1315
    %v2899 = vsel %vm74, %v2898, 0.0
    %v2900 = vrot.slane %v2899, 4
    %v2901 = vadd.f32 %v2899, %v2900
    %v2902 = vrot.slane %v2901, 2
    %v2903 = vadd.f32 %v2901, %v2902
    %v2904 = vrot.slane %v2903, 1
    %v2905 = vadd.f32 %v2903, %v2904
    %v2906 = vrcp.pop 4.0
    %v2907 = vmul.f32 %v2905, %v2906
    %v2908 = vsel %vm74, %v2898, -inf
    %v2909 = vrot.slane %v2908, 4
    %v2910 = vmax.f32 %v2908, %v2909
    %v2911 = vrot.slane %v2910, 2
    %v2912 = vmax.f32 %v2910, %v2911
    %v2913 = vrot.slane %v2912, 1
    %v2914 = vmax.f32 %v2912, %v2913
    %vm2915 = vcmask 1040384
    %v2916 = vsel %vm2915, %v2907, %v2914
    %2917 = vrot.lane.b32.xlu0 %v2916, 1
    %v2918 = vpop.permute.xlu0 %2917
    %v2919 = vmul.f32 %v2918, %v59
    %2920 = vrot.lane.b32.xlu0 %v2916, 127
    %v2921 = vpop.permute.xlu0 %2920
    %v2922 = vmul.f32 %v2921, %v69
    %v2924 = vrot.slane %v2916, 6
    %v2927 = vrot.slane %v2922, 4
    %vm2929 = vcmask 1041408
    %v2930 = vsel %vm2929, %v2919, %v2924
    %v2931 = vsel %vm74, %v2930, %v2927
    %vm2932 = vcmask 48128
    %v2934 = vsel %vm2932, %v49, 0
    %vm2936 = vcmask 1045504
    %v2938 = vsel %vm2936, %v2931, 0
    %2940 = vmatprep.subr.mxu0 0.0
    %v2941 = vand.u32 %v2938, 4294901760
    %2942 = vmatpush1.msra.mxu0 %v2941
    %2943 = vmatprep.subr.mxu0 0.0
    %2944 = vmatpush1.msra.mxu0 0.0
    %2945 = vmatprep.subr.mxu0 0.0
    %2946 = vmatpush1.msra.mxu0 0.0
    %2947 = vmatprep.subr.mxu0 0.0
    %2948 = vmatpush1.msra.mxu0 0.0
    %2949 = vmatprep.subr.mxu0 0.0
    %2950 = vmatpush1.msra.mxu0 0.0
    %2951 = vmatprep.subr.mxu0 0.0
    %2952 = vmatpush1.msra.mxu0 0.0
    %2953 = vmatprep.subr.mxu0 0.0
    %2954 = vmatpush1.msra.mxu0 0.0
    %2955 = vmatprep.subr.mxu0 0.0
    %2956 = vmatpush1.msra.mxu0 0.0
    %2957 = vmatprep.subr.mxu0 0.0
    %2958 = vmatpush1.msra.mxu0 0.0
    %2959 = vmatprep.subr.mxu0 0.0
    %2960 = vmatpush1.msra.mxu0 0.0
    %2961 = vmatprep.subr.mxu0 0.0
    %2962 = vmatpush1.msra.mxu0 0.0
    %2963 = vmatprep.subr.mxu0 0.0
    %2964 = vmatpush1.msra.mxu0 0.0
    %2965 = vmatprep.subr.mxu0 0.0
    %2966 = vmatpush1.msra.mxu0 0.0
    %2967 = vmatprep.subr.mxu0 0.0
    %2968 = vmatpush1.msra.mxu0 0.0
    %2969 = vmatprep.subr.mxu0 0.0
    %2970 = vmatpush1.msra.mxu0 0.0
    %2971 = vmatprep.subr.mxu0 0.0
    %2972 = vmatpush1.msra.mxu0 0.0
    %2973 = vmatprep.subr.mxu0 0.0
    %2974 = vmatpush1.msra.mxu0 0.0
    %2975 = vmatprep.subr.mxu0 0.0
    %2976 = vmatpush1.msra.mxu0 0.0
    %2977 = vmatprep.subr.mxu0 0.0
    %2978 = vmatpush1.msra.mxu0 0.0
    %2979 = vmatprep.subr.mxu0 0.0
    %2980 = vmatpush1.msra.mxu0 0.0
    %2981 = vmatprep.subr.mxu0 0.0
    %2982 = vmatpush1.msra.mxu0 0.0
    %2983 = vmatprep.subr.mxu0 0.0
    %2984 = vmatpush1.msra.mxu0 0.0
    %2985 = vmatprep.subr.mxu0 0.0
    %2986 = vmatpush1.msra.mxu0 0.0
    %2987 = vmatprep.subr.mxu0 0.0
    %2988 = vmatpush1.msra.mxu0 0.0
    %2989 = vmatprep.subr.mxu0 0.0
    %2990 = vmatpush1.msra.mxu0 0.0
    %2991 = vmatprep.subr.mxu0 0.0
    %2992 = vmatpush1.msra.mxu0 0.0
    %2993 = vmatprep.subr.mxu0 0.0
    %2994 = vmatpush1.msra.mxu0 0.0
    %2995 = vmatprep.subr.mxu0 0.0
    %2996 = vmatpush1.msra.mxu0 0.0
    %2997 = vmatprep.subr.mxu0 0.0
    %2998 = vmatpush1.msra.mxu0 0.0
    %2999 = vmatprep.subr.mxu0 0.0
    %3000 = vmatpush1.msra.mxu0 0.0
    %3001 = vmatprep.subr.mxu0 0.0
    %3002 = vmatpush1.msra.mxu0 0.0
    %3003 = vmatprep.subr.mxu0 0.0
    %3004 = vmatpush1.msra.mxu0 0.0
    %3005 = vmatprep.mubr.f32.mxu0 0.0
    %v3006 = vand.u32 %v2934, 4294901760
    %v3007 = vsub.f32 %v2934, %v3006
    %v3008 = vand.u32 %v3007, 4294901760
    %v3009 = vsub.f32 %v3007, %v3008
    %v3010 = vand.u32 %v3009, 4294901760
    %3011 = vmatmul.mubr.f32.gmra.mrb[0].mxu0 %v3010
    %v3012 = vpop.f32.mrb[0].mxu0
    %v3013 = vadd.f32 0.0, %v3012
    %v3014 = vpop.f32.mrb[0].mxu0
    %3015 = vdwg.mxu0
    %3016 = vmatprep.subr.mxu0 0.0
    %v3017 = vand.u32 %v2938, 4294901760
    %v3018 = vsub.f32 %v2938, %v3017
    %v3019 = vand.u32 %v3018, 4294901760
    %v3020 = vsub.f32 %v3018, %v3019
    %v3021 = vand.u32 %v3020, 4294901760
    %3022 = vmatpush1.msra.mxu0 %v3021
    %3023 = vmatprep.subr.mxu0 0.0
    %3024 = vmatpush1.msra.mxu0 0.0
    %3025 = vmatprep.subr.mxu0 0.0
    %3026 = vmatpush1.msra.mxu0 0.0
    %3027 = vmatprep.subr.mxu0 0.0
    %3028 = vmatpush1.msra.mxu0 0.0
    %3029 = vmatprep.subr.mxu0 0.0
    %3030 = vmatpush1.msra.mxu0 0.0
    %3031 = vmatprep.subr.mxu0 0.0
    %3032 = vmatpush1.msra.mxu0 0.0
    %3033 = vmatprep.subr.mxu0 0.0
    %3034 = vmatpush1.msra.mxu0 0.0
    %3035 = vmatprep.subr.mxu0 0.0
    %3036 = vmatpush1.msra.mxu0 0.0
    %3037 = vmatprep.subr.mxu0 0.0
    %3038 = vmatpush1.msra.mxu0 0.0
    %3039 = vmatprep.subr.mxu0 0.0
    %3040 = vmatpush1.msra.mxu0 0.0
    %3041 = vmatprep.subr.mxu0 0.0
    %3042 = vmatpush1.msra.mxu0 0.0
    %3043 = vmatprep.subr.mxu0 0.0
    %3044 = vmatpush1.msra.mxu0 0.0
    %3045 = vmatprep.subr.mxu0 0.0
    %3046 = vmatpush1.msra.mxu0 0.0
    %3047 = vmatprep.subr.mxu0 0.0
    %3048 = vmatpush1.msra.mxu0 0.0
    %3049 = vmatprep.subr.mxu0 0.0
    %3050 = vmatpush1.msra.mxu0 0.0
    %3051 = vmatprep.subr.mxu0 0.0
    %3052 = vmatpush1.msra.mxu0 0.0
    %3053 = vmatprep.subr.mxu0 0.0
    %3054 = vmatpush1.msra.mxu0 0.0
    %3055 = vmatprep.subr.mxu0 0.0
    %3056 = vmatpush1.msra.mxu0 0.0
    %3057 = vmatprep.subr.mxu0 0.0
    %3058 = vmatpush1.msra.mxu0 0.0
    %3059 = vmatprep.subr.mxu0 0.0
    %3060 = vmatpush1.msra.mxu0 0.0
    %3061 = vmatprep.subr.mxu0 0.0
    %3062 = vmatpush1.msra.mxu0 0.0
    %3063 = vmatprep.subr.mxu0 0.0
    %3064 = vmatpush1.msra.mxu0 0.0
    %3065 = vmatprep.subr.mxu0 0.0
    %3066 = vmatpush1.msra.mxu0 0.0
    %3067 = vmatprep.subr.mxu0 0.0
    %3068 = vmatpush1.msra.mxu0 0.0
    %3069 = vmatprep.subr.mxu0 0.0
    %3070 = vmatpush1.msra.mxu0 0.0
    %3071 = vmatprep.subr.mxu0 0.0
    %3072 = vmatpush1.msra.mxu0 0.0
    %3073 = vmatprep.subr.mxu0 0.0
    %3074 = vmatpush1.msra.mxu0 0.0
    %3075 = vmatprep.subr.mxu0 0.0
    %3076 = vmatpush1.msra.mxu0 0.0
    %3077 = vmatprep.subr.mxu0 0.0
    %3078 = vmatpush1.msra.mxu0 0.0
    %3079 = vmatprep.subr.mxu0 0.0
    %3080 = vmatpush1.msra.mxu0 0.0
    %3081 = vmatprep.subr.mxu0 0.0
    %3082 = vmatpush1.msra.mxu0 0.0
    %3083 = vmatprep.subr.mxu0 0.0
    %3084 = vmatpush1.msra.mxu0 0.0
    %3085 = vmatprep.mubr.f32.mxu0 0.0
    %v3086 = vand.u32 %v2934, 4294901760
    %3087 = vmatmul.mubr.f32.gmra.mrb[0].mxu0 %v3086
    %v3088 = vpop.f32.mrb[0].mxu0
    %v3089 = vadd.f32 %v3013, %v3088
    %v3090 = vpop.f32.mrb[0].mxu0
    %3091 = vdwg.mxu0
    %3092 = vmatprep.subr.mxu0 0.0
    %v3093 = vand.u32 %v2938, 4294901760
    %v3094 = vsub.f32 %v2938, %v3093
    %3095 = vmatpush1.msra.mxu0 %v3094
    %3096 = vmatprep.subr.mxu0 0.0
    %3097 = vmatpush1.msra.mxu0 0.0
    %3098 = vmatprep.subr.mxu0 0.0
    %3099 = vmatpush1.msra.mxu0 0.0
    %3100 = vmatprep.subr.mxu0 0.0
    %3101 = vmatpush1.msra.mxu0 0.0
    %3102 = vmatprep.subr.mxu0 0.0
    %3103 = vmatpush1.msra.mxu0 0.0
    %3104 = vmatprep.subr.mxu0 0.0
    %3105 = vmatpush1.msra.mxu0 0.0
    %3106 = vmatprep.subr.mxu0 0.0
    %3107 = vmatpush1.msra.mxu0 0.0
    %3108 = vmatprep.subr.mxu0 0.0
    %3109 = vmatpush1.msra.mxu0 0.0
    %3110 = vmatprep.subr.mxu0 0.0
    %3111 = vmatpush1.msra.mxu0 0.0
    %3112 = vmatprep.subr.mxu0 0.0
    %3113 = vmatpush1.msra.mxu0 0.0
    %3114 = vmatprep.subr.mxu0 0.0
    %3115 = vmatpush1.msra.mxu0 0.0
    %3116 = vmatprep.subr.mxu0 0.0
    %3117 = vmatpush1.msra.mxu0 0.0
    %3118 = vmatprep.subr.mxu0 0.0
    %3119 = vmatpush1.msra.mxu0 0.0
    %3120 = vmatprep.subr.mxu0 0.0
    %3121 = vmatpush1.msra.mxu0 0.0
    %3122 = vmatprep.subr.mxu0 0.0
    %3123 = vmatpush1.msra.mxu0 0.0
    %3124 = vmatprep.subr.mxu0 0.0
    %3125 = vmatpush1.msra.mxu0 0.0
    %3126 = vmatprep.subr.mxu0 0.0
    %3127 = vmatpush1.msra.mxu0 0.0
    %3128 = vmatprep.subr.mxu0 0.0
    %3129 = vmatpush1.msra.mxu0 0.0
    %3130 = vmatprep.subr.mxu0 0.0
    %3131 = vmatpush1.msra.mxu0 0.0
    %3132 = vmatprep.subr.mxu0 0.0
    %3133 = vmatpush1.msra.mxu0 0.0
    %3134 = vmatprep.subr.mxu0 0.0
    %3135 = vmatpush1.msra.mxu0 0.0
    %3136 = vmatprep.subr.mxu0 0.0
    %3137 = vmatpush1.msra.mxu0 0.0
    %3138 = vmatprep.subr.mxu0 0.0
    %3139 = vmatpush1.msra.mxu0 0.0
    %3140 = vmatprep.subr.mxu0 0.0
    %3141 = vmatpush1.msra.mxu0 0.0
    %3142 = vmatprep.subr.mxu0 0.0
    %3143 = vmatpush1.msra.mxu0 0.0
    %3144 = vmatprep.subr.mxu0 0.0
    %3145 = vmatpush1.msra.mxu0 0.0
    %3146 = vmatprep.subr.mxu0 0.0
    %3147 = vmatpush1.msra.mxu0 0.0
    %3148 = vmatprep.subr.mxu0 0.0
    %3149 = vmatpush1.msra.mxu0 0.0
    %3150 = vmatprep.subr.mxu0 0.0
    %3151 = vmatpush1.msra.mxu0 0.0
    %3152 = vmatprep.subr.mxu0 0.0
    %3153 = vmatpush1.msra.mxu0 0.0
    %3154 = vmatprep.subr.mxu0 0.0
    %3155 = vmatpush1.msra.mxu0 0.0
    %3156 = vmatprep.subr.mxu0 0.0
    %3157 = vmatpush1.msra.mxu0 0.0
    %3158 = vmatprep.mubr.f32.mxu0 0.0
    %v3159 = vand.u32 %v2934, 4294901760
    %v3160 = vsub.f32 %v2934, %v3159
    %3161 = vmatmul.mubr.f32.gmra.mrb[0].mxu0 %v3160
    %v3162 = vpop.f32.mrb[0].mxu0
    %v3163 = vadd.f32 %v3089, %v3162
    %v3164 = vpop.f32.mrb[0].mxu0
    %3165 = vdwg.mxu0
    %3166 = vmatprep.subr.mxu0 0.0
    %v3167 = vand.u32 %v2938, 4294901760
    %3168 = vmatpush1.msra.mxu0 %v3167
    %3169 = vmatprep.subr.mxu0 0.0
    %3170 = vmatpush1.msra.mxu0 0.0
    %3171 = vmatprep.subr.mxu0 0.0
    %3172 = vmatpush1.msra.mxu0 0.0
    %3173 = vmatprep.subr.mxu0 0.0
    %3174 = vmatpush1.msra.mxu0 0.0
    %3175 = vmatprep.subr.mxu0 0.0
    %3176 = vmatpush1.msra.mxu0 0.0
    %3177 = vmatprep.subr.mxu0 0.0
    %3178 = vmatpush1.msra.mxu0 0.0
    %3179 = vmatprep.subr.mxu0 0.0
    %3180 = vmatpush1.msra.mxu0 0.0
    %3181 = vmatprep.subr.mxu0 0.0
    %3182 = vmatpush1.msra.mxu0 0.0
    %3183 = vmatprep.subr.mxu0 0.0
    %3184 = vmatpush1.msra.mxu0 0.0
    %3185 = vmatprep.subr.mxu0 0.0
    %3186 = vmatpush1.msra.mxu0 0.0
    %3187 = vmatprep.subr.mxu0 0.0
    %3188 = vmatpush1.msra.mxu0 0.0
    %3189 = vmatprep.subr.mxu0 0.0
    %3190 = vmatpush1.msra.mxu0 0.0
    %3191 = vmatprep.subr.mxu0 0.0
    %3192 = vmatpush1.msra.mxu0 0.0
    %3193 = vmatprep.subr.mxu0 0.0
    %3194 = vmatpush1.msra.mxu0 0.0
    %3195 = vmatprep.subr.mxu0 0.0
    %3196 = vmatpush1.msra.mxu0 0.0
    %3197 = vmatprep.subr.mxu0 0.0
    %3198 = vmatpush1.msra.mxu0 0.0
    %3199 = vmatprep.subr.mxu0 0.0
    %3200 = vmatpush1.msra.mxu0 0.0
    %3201 = vmatprep.subr.mxu0 0.0
    %3202 = vmatpush1.msra.mxu0 0.0
    %3203 = vmatprep.subr.mxu0 0.0
    %3204 = vmatpush1.msra.mxu0 0.0
    %3205 = vmatprep.subr.mxu0 0.0
    %3206 = vmatpush1.msra.mxu0 0.0
    %3207 = vmatprep.subr.mxu0 0.0
    %3208 = vmatpush1.msra.mxu0 0.0
    %3209 = vmatprep.subr.mxu0 0.0
    %3210 = vmatpush1.msra.mxu0 0.0
    %3211 = vmatprep.subr.mxu0 0.0
    %3212 = vmatpush1.msra.mxu0 0.0
    %3213 = vmatprep.subr.mxu0 0.0
    %3214 = vmatpush1.msra.mxu0 0.0
    %3215 = vmatprep.subr.mxu0 0.0
    %3216 = vmatpush1.msra.mxu0 0.0
    %3217 = vmatprep.subr.mxu0 0.0
    %3218 = vmatpush1.msra.mxu0 0.0
    %3219 = vmatprep.subr.mxu0 0.0
    %3220 = vmatpush1.msra.mxu0 0.0
    %3221 = vmatprep.subr.mxu0 0.0
    %3222 = vmatpush1.msra.mxu0 0.0
    %3223 = vmatprep.subr.mxu0 0.0
    %3224 = vmatpush1.msra.mxu0 0.0
    %3225 = vmatprep.subr.mxu0 0.0
    %3226 = vmatpush1.msra.mxu0 0.0
    %3227 = vmatprep.subr.mxu0 0.0
    %3228 = vmatpush1.msra.mxu0 0.0
    %3229 = vmatprep.subr.mxu0 0.0
    %3230 = vmatpush1.msra.mxu0 0.0
    %3231 = vmatprep.mubr.f32.mxu0 0.0
    %v3232 = vand.u32 %v2934, 4294901760
    %v3233 = vsub.f32 %v2934, %v3232
    %v3234 = vand.u32 %v3233, 4294901760
    %3235 = vmatmul.mubr.f32.gmra.mrb[0].mxu0 %v3234
    %v3236 = vpop.f32.mrb[0].mxu0
    %v3237 = vadd.f32 %v3163, %v3236
    %v3238 = vpop.f32.mrb[0].mxu0
    %3239 = vdwg.mxu0
    %3240 = vmatprep.subr.mxu0 0.0
    %v3241 = vand.u32 %v2938, 4294901760
    %v3242 = vsub.f32 %v2938, %v3241
    %v3243 = vand.u32 %v3242, 4294901760
    %3244 = vmatpush1.msra.mxu0 %v3243
    %3245 = vmatprep.subr.mxu0 0.0
    %3246 = vmatpush1.msra.mxu0 0.0
    %3247 = vmatprep.subr.mxu0 0.0
    %3248 = vmatpush1.msra.mxu0 0.0
    %3249 = vmatprep.subr.mxu0 0.0
    %3250 = vmatpush1.msra.mxu0 0.0
    %3251 = vmatprep.subr.mxu0 0.0
    %3252 = vmatpush1.msra.mxu0 0.0
    %3253 = vmatprep.subr.mxu0 0.0
    %3254 = vmatpush1.msra.mxu0 0.0
    %3255 = vmatprep.subr.mxu0 0.0
    %3256 = vmatpush1.msra.mxu0 0.0
    %3257 = vmatprep.subr.mxu0 0.0
    %3258 = vmatpush1.msra.mxu0 0.0
    %3259 = vmatprep.subr.mxu0 0.0
    %3260 = vmatpush1.msra.mxu0 0.0
    %3261 = vmatprep.subr.mxu0 0.0
    %3262 = vmatpush1.msra.mxu0 0.0
    %3263 = vmatprep.subr.mxu0 0.0
    %3264 = vmatpush1.msra.mxu0 0.0
    %3265 = vmatprep.subr.mxu0 0.0
    %3266 = vmatpush1.msra.mxu0 0.0
    %3267 = vmatprep.subr.mxu0 0.0
    %3268 = vmatpush1.msra.mxu0 0.0
    %3269 = vmatprep.subr.mxu0 0.0
    %3270 = vmatpush1.msra.mxu0 0.0
    %3271 = vmatprep.subr.mxu0 0.0
    %3272 = vmatpush1.msra.mxu0 0.0
    %3273 = vmatprep.subr.mxu0 0.0
    %3274 = vmatpush1.msra.mxu0 0.0
    %3275 = vmatprep.subr.mxu0 0.0
    %3276 = vmatpush1.msra.mxu0 0.0
    %3277 = vmatprep.subr.mxu0 0.0
    %3278 = vmatpush1.msra.mxu0 0.0
    %3279 = vmatprep.subr.mxu0 0.0
    %3280 = vmatpush1.msra.mxu0 0.0
    %3281 = vmatprep.subr.mxu0 0.0
    %3282 = vmatpush1.msra.mxu0 0.0
    %3283 = vmatprep.subr.mxu0 0.0
    %3284 = vmatpush1.msra.mxu0 0.0
    %3285 = vmatprep.subr.mxu0 0.0
    %3286 = vmatpush1.msra.mxu0 0.0
    %3287 = vmatprep.subr.mxu0 0.0
    %3288 = vmatpush1.msra.mxu0 0.0
    %3289 = vmatprep.subr.mxu0 0.0
    %3290 = vmatpush1.msra.mxu0 0.0
    %3291 = vmatprep.subr.mxu0 0.0
    %3292 = vmatpush1.msra.mxu0 0.0
    %3293 = vmatprep.subr.mxu0 0.0
    %3294 = vmatpush1.msra.mxu0 0.0
    %3295 = vmatprep.subr.mxu0 0.0
    %3296 = vmatpush1.msra.mxu0 0.0
    %3297 = vmatprep.subr.mxu0 0.0
    %3298 = vmatpush1.msra.mxu0 0.0
    %3299 = vmatprep.subr.mxu0 0.0
    %3300 = vmatpush1.msra.mxu0 0.0
    %3301 = vmatprep.subr.mxu0 0.0
    %3302 = vmatpush1.msra.mxu0 0.0
    %3303 = vmatprep.subr.mxu0 0.0
    %3304 = vmatpush1.msra.mxu0 0.0
    %3305 = vmatprep.subr.mxu0 0.0
    %3306 = vmatpush1.msra.mxu0 0.0
    %3307 = vmatprep.mubr.f32.mxu0 0.0
    %v3308 = vand.u32 %v2934, 4294901760
    %3309 = vmatmul.mubr.f32.gmra.mrb[0].mxu0 %v3308
    %v3310 = vpop.f32.mrb[0].mxu0
    %v3311 = vadd.f32 %v3237, %v3310
    %v3312 = vpop.f32.mrb[0].mxu0
    %3313 = vdwg.mxu0
    %3314 = vmatprep.subr.mxu0 0.0
    %v3315 = vand.u32 %v2938, 4294901760
    %3316 = vmatpush1.msra.mxu0 %v3315
    %3317 = vmatprep.subr.mxu0 0.0
    %3318 = vmatpush1.msra.mxu0 0.0
    %3319 = vmatprep.subr.mxu0 0.0
    %3320 = vmatpush1.msra.mxu0 0.0
    %3321 = vmatprep.subr.mxu0 0.0
    %3322 = vmatpush1.msra.mxu0 0.0
    %3323 = vmatprep.subr.mxu0 0.0
    %3324 = vmatpush1.msra.mxu0 0.0
    %3325 = vmatprep.subr.mxu0 0.0
    %3326 = vmatpush1.msra.mxu0 0.0
    %3327 = vmatprep.subr.mxu0 0.0
    %3328 = vmatpush1.msra.mxu0 0.0
    %3329 = vmatprep.subr.mxu0 0.0
    %3330 = vmatpush1.msra.mxu0 0.0
    %3331 = vmatprep.subr.mxu0 0.0
    %3332 = vmatpush1.msra.mxu0 0.0
    %3333 = vmatprep.subr.mxu0 0.0
    %3334 = vmatpush1.msra.mxu0 0.0
    %3335 = vmatprep.subr.mxu0 0.0
    %3336 = vmatpush1.msra.mxu0 0.0
    %3337 = vmatprep.subr.mxu0 0.0
    %3338 = vmatpush1.msra.mxu0 0.0
    %3339 = vmatprep.subr.mxu0 0.0
    %3340 = vmatpush1.msra.mxu0 0.0
    %3341 = vmatprep.subr.mxu0 0.0
    %3342 = vmatpush1.msra.mxu0 0.0
    %3343 = vmatprep.subr.mxu0 0.0
    %3344 = vmatpush1.msra.mxu0 0.0
    %3345 = vmatprep.subr.mxu0 0.0
    %3346 = vmatpush1.msra.mxu0 0.0
    %3347 = vmatprep.subr.mxu0 0.0
    %3348 = vmatpush1.msra.mxu0 0.0
    %3349 = vmatprep.subr.mxu0 0.0
    %3350 = vmatpush1.msra.mxu0 0.0
    %3351 = vmatprep.subr.mxu0 0.0
    %3352 = vmatpush1.msra.mxu0 0.0
    %3353 = vmatprep.subr.mxu0 0.0
    %3354 = vmatpush1.msra.mxu0 0.0
    %3355 = vmatprep.subr.mxu0 0.0
    %3356 = vmatpush1.msra.mxu0 0.0
    %3357 = vmatprep.subr.mxu0 0.0
    %3358 = vmatpush1.msra.mxu0 0.0
    %3359 = vmatprep.subr.mxu0 0.0
    %3360 = vmatpush1.msra.mxu0 0.0
    %3361 = vmatprep.subr.mxu0 0.0
    %3362 = vmatpush1.msra.mxu0 0.0
    %3363 = vmatprep.subr.mxu0 0.0
    %3364 = vmatpush1.msra.mxu0 0.0
    %3365 = vmatprep.subr.mxu0 0.0
    %3366 = vmatpush1.msra.mxu0 0.0
    %3367 = vmatprep.subr.mxu0 0.0
    %3368 = vmatpush1.msra.mxu0 0.0
    %3369 = vmatprep.subr.mxu0 0.0
    %3370 = vmatpush1.msra.mxu0 0.0
    %3371 = vmatprep.subr.mxu0 0.0
    %3372 = vmatpush1.msra.mxu0 0.0
    %3373 = vmatprep.subr.mxu0 0.0
    %3374 = vmatpush1.msra.mxu0 0.0
    %3375 = vmatprep.subr.mxu0 0.0
    %3376 = vmatpush1.msra.mxu0 0.0
    %3377 = vmatprep.subr.mxu0 0.0
    %3378 = vmatpush1.msra.mxu0 0.0
    %3379 = vmatprep.mubr.f32.mxu0 0.0
    %v3380 = vand.u32 %v2934, 4294901760
    %3381 = vmatmul.mubr.f32.gmra.mrb[0].mxu0 %v3380
    %v3382 = vpop.f32.mrb[0].mxu0
    %v3383 = vadd.f32 %v3311, %v3382
    %v3384 = vpop.f32.mrb[0].mxu0
    %3385 = vdwg.mxu0
    %v3386 = vxor.u32 %v3383, 2147483648
    %v3387 = vmul.f32 %v3386, 1.442695
    %v3388 = vpow.pop %v3387
    %v3389 = vadd.f32 %v3388, 1.0
    %v3390 = vrcp.pop %v3389
    %v3391 = vmul.f32 1.0, %v3390
    %v3392 = vlaneseq
    %v3393 = vshrl.u32 %v3392, 7
    %v3394 = vsub.s32 0, %v3393
    %v3395 = vrot.slane %v3391, %v3394
    %v3396 = vmul.f32 %v3395, %v2898
    %v3397 = vadd.f32 %v1315, %v3396
    %3398 = vmatprep.subr.mxu0 0.0
    %v3399 = vand.u32 %v23, 4294901760
    %3400 = vmatpush1.msra.mxu0 %v3399
    %3401 = vmatprep.subr.mxu0 0.0
    %v3402 = vand.u32 %v24, 4294901760
    %3403 = vmatpush1.msra.mxu0 %v3402
    %3404 = vmatprep.subr.mxu0 0.0
    %v3405 = vand.u32 %v25, 4294901760
    %3406 = vmatpush1.msra.mxu0 %v3405
    %3407 = vmatprep.subr.mxu0 0.0
    %v3408 = vand.u32 %v26, 4294901760
    %3409 = vmatpush1.msra.mxu0 %v3408
    %3410 = vmatprep.subr.mxu0 0.0
    %v3411 = vand.u32 %v27, 4294901760
    %3412 = vmatpush1.msra.mxu0 %v3411
    %3413 = vmatprep.subr.mxu0 0.0
    %v3414 = vand.u32 %v28, 4294901760
    %3415 = vmatpush1.msra.mxu0 %v3414
    %3416 = vmatprep.subr.mxu0 0.0
    %v3417 = vand.u32 %v29, 4294901760
    %3418 = vmatpush1.msra.mxu0 %v3417
    %3419 = vmatprep.subr.mxu0 0.0
    %v3420 = vand.u32 %v30, 4294901760
    %3421 = vmatpush1.msra.mxu0 %v3420
    %3422 = vmatprep.subr.mxu0 0.0
    %v3423 = vand.u32 %v31, 4294901760
    %3424 = vmatpush1.msra.mxu0 %v3423
    %3425 = vmatprep.subr.mxu0 0.0
    %v3426 = vand.u32 %v32, 4294901760
    %3427 = vmatpush1.msra.mxu0 %v3426
    %3428 = vmatprep.subr.mxu0 0.0
    %v3429 = vand.u32 %v33, 4294901760
    %3430 = vmatpush1.msra.mxu0 %v3429
    %3431 = vmatprep.subr.mxu0 0.0
    %v3432 = vand.u32 %v34, 4294901760
    %3433 = vmatpush1.msra.mxu0 %v3432
    %3434 = vmatprep.subr.mxu0 0.0
    %v3435 = vand.u32 %v35, 4294901760
    %3436 = vmatpush1.msra.mxu0 %v3435
    %3437 = vmatprep.subr.mxu0 0.0
    %v3438 = vand.u32 %v36, 4294901760
    %3439 = vmatpush1.msra.mxu0 %v3438
    %3440 = vmatprep.subr.mxu0 0.0
    %v3441 = vand.u32 %v37, 4294901760
    %3442 = vmatpush1.msra.mxu0 %v3441
    %3443 = vmatprep.subr.mxu0 0.0
    %v3444 = vand.u32 %v38, 4294901760
    %3445 = vmatpush1.msra.mxu0 %v3444
    %3446 = vmatprep.subr.mxu0 0.0
    %3447 = vmatpush1.msra.mxu0 0.0
    %3448 = vmatprep.subr.mxu0 0.0
    %3449 = vmatpush1.msra.mxu0 0.0
    %3450 = vmatprep.subr.mxu0 0.0
    %3451 = vmatpush1.msra.mxu0 0.0
    %3452 = vmatprep.subr.mxu0 0.0
    %3453 = vmatpush1.msra.mxu0 0.0
    %3454 = vmatprep.subr.mxu0 0.0
    %3455 = vmatpush1.msra.mxu0 0.0
    %3456 = vmatprep.subr.mxu0 0.0
    %3457 = vmatpush1.msra.mxu0 0.0
    %3458 = vmatprep.subr.mxu0 0.0
    %3459 = vmatpush1.msra.mxu0 0.0
    %3460 = vmatprep.subr.mxu0 0.0
    %3461 = vmatpush1.msra.mxu0 0.0
    %3462 = vmatprep.subr.mxu0 0.0
    %3463 = vmatpush1.msra.mxu0 0.0
    %3464 = vmatprep.subr.mxu0 0.0
    %3465 = vmatpush1.msra.mxu0 0.0
    %3466 = vmatprep.subr.mxu0 0.0
    %3467 = vmatpush1.msra.mxu0 0.0
    %3468 = vmatprep.subr.mxu0 0.0
    %3469 = vmatpush1.msra.mxu0 0.0
    %3470 = vmatprep.subr.mxu0 0.0
    %3471 = vmatpush1.msra.mxu0 0.0
    %3472 = vmatprep.subr.mxu0 0.0
    %3473 = vmatpush1.msra.mxu0 0.0
    %3474 = vmatprep.subr.mxu0 0.0
    %3475 = vmatpush1.msra.mxu0 0.0
    %3476 = vmatprep.subr.mxu0 0.0
    %3477 = vmatpush1.msra.mxu0 0.0
    %3478 = vmatprep.mubr.f32.mxu0 0.0
    %v3479 = vand.u32 %v3397, 4294901760
    %v3480 = vsub.f32 %v3397, %v3479
    %v3481 = vand.u32 %v3480, 4294901760
    %v3482 = vsub.f32 %v3480, %v3481
    %v3483 = vand.u32 %v3482, 4294901760
    %3484 = vmatmul.mubr.f32.gmra.mrb[0].mxu0 %v3483
    %v3485 = vpop.f32.mrb[0].mxu0
    %v3486 = vadd.f32 0.0, %v3485
    %v3487 = vpop.f32.mrb[0].mxu0
    %3488 = vdwg.mxu0
    %3489 = vmatprep.subr.mxu0 0.0
    %v3490 = vand.u32 %v23, 4294901760
    %v3491 = vsub.f32 %v23, %v3490
    %v3492 = vand.u32 %v3491, 4294901760
    %v3493 = vsub.f32 %v3491, %v3492
    %v3494 = vand.u32 %v3493, 4294901760
    %3495 = vmatpush1.msra.mxu0 %v3494
    %3496 = vmatprep.subr.mxu0 0.0
    %v3497 = vand.u32 %v24, 4294901760
    %v3498 = vsub.f32 %v24, %v3497
    %v3499 = vand.u32 %v3498, 4294901760
    %v3500 = vsub.f32 %v3498, %v3499
    %v3501 = vand.u32 %v3500, 4294901760
    %3502 = vmatpush1.msra.mxu0 %v3501
    %3503 = vmatprep.subr.mxu0 0.0
    %v3504 = vand.u32 %v25, 4294901760
    %v3505 = vsub.f32 %v25, %v3504
    %v3506 = vand.u32 %v3505, 4294901760
    %v3507 = vsub.f32 %v3505, %v3506
    %v3508 = vand.u32 %v3507, 4294901760
    %3509 = vmatpush1.msra.mxu0 %v3508
    %3510 = vmatprep.subr.mxu0 0.0
    %v3511 = vand.u32 %v26, 4294901760
    %v3512 = vsub.f32 %v26, %v3511
    %v3513 = vand.u32 %v3512, 4294901760
    %v3514 = vsub.f32 %v3512, %v3513
    %v3515 = vand.u32 %v3514, 4294901760
    %3516 = vmatpush1.msra.mxu0 %v3515
    %3517 = vmatprep.subr.mxu0 0.0
    %v3518 = vand.u32 %v27, 4294901760
    %v3519 = vsub.f32 %v27, %v3518
    %v3520 = vand.u32 %v3519, 4294901760
    %v3521 = vsub.f32 %v3519, %v3520
    %v3522 = vand.u32 %v3521, 4294901760
    %3523 = vmatpush1.msra.mxu0 %v3522
    %3524 = vmatprep.subr.mxu0 0.0
    %v3525 = vand.u32 %v28, 4294901760
    %v3526 = vsub.f32 %v28, %v3525
    %v3527 = vand.u32 %v3526, 4294901760
    %v3528 = vsub.f32 %v3526, %v3527
    %v3529 = vand.u32 %v3528, 4294901760
    %3530 = vmatpush1.msra.mxu0 %v3529
    %3531 = vmatprep.subr.mxu0 0.0
    %v3532 = vand.u32 %v29, 4294901760
    %v3533 = vsub.f32 %v29, %v3532
    %v3534 = vand.u32 %v3533, 4294901760
    %v3535 = vsub.f32 %v3533, %v3534
    %v3536 = vand.u32 %v3535, 4294901760
    %3537 = vmatpush1.msra.mxu0 %v3536
    %3538 = vmatprep.subr.mxu0 0.0
    %v3539 = vand.u32 %v30, 4294901760
    %v3540 = vsub.f32 %v30, %v3539
    %v3541 = vand.u32 %v3540, 4294901760
    %v3542 = vsub.f32 %v3540, %v3541
    %v3543 = vand.u32 %v3542, 4294901760
    %3544 = vmatpush1.msra.mxu0 %v3543
    %3545 = vmatprep.subr.mxu0 0.0
    %v3546 = vand.u32 %v31, 4294901760
    %v3547 = vsub.f32 %v31, %v3546
    %v3548 = vand.u32 %v3547, 4294901760
    %v3549 = vsub.f32 %v3547, %v3548
    %v3550 = vand.u32 %v3549, 4294901760
    %3551 = vmatpush1.msra.mxu0 %v3550
    %3552 = vmatprep.subr.mxu0 0.0
    %v3553 = vand.u32 %v32, 4294901760
    %v3554 = vsub.f32 %v32, %v3553
    %v3555 = vand.u32 %v3554, 4294901760
    %v3556 = vsub.f32 %v3554, %v3555
    %v3557 = vand.u32 %v3556, 4294901760
    %3558 = vmatpush1.msra.mxu0 %v3557
    %3559 = vmatprep.subr.mxu0 0.0
    %v3560 = vand.u32 %v33, 4294901760
    %v3561 = vsub.f32 %v33, %v3560
    %v3562 = vand.u32 %v3561, 4294901760
    %v3563 = vsub.f32 %v3561, %v3562
    %v3564 = vand.u32 %v3563, 4294901760
    %3565 = vmatpush1.msra.mxu0 %v3564
    %3566 = vmatprep.subr.mxu0 0.0
    %v3567 = vand.u32 %v34, 4294901760
    %v3568 = vsub.f32 %v34, %v3567
    %v3569 = vand.u32 %v3568, 4294901760
    %v3570 = vsub.f32 %v3568, %v3569
    %v3571 = vand.u32 %v3570, 4294901760
    %3572 = vmatpush1.msra.mxu0 %v3571
    %3573 = vmatprep.subr.mxu0 0.0
    %v3574 = vand.u32 %v35, 4294901760
    %v3575 = vsub.f32 %v35, %v3574
    %v3576 = vand.u32 %v3575, 4294901760
    %v3577 = vsub.f32 %v3575, %v3576
    %v3578 = vand.u32 %v3577, 4294901760
    %3579 = vmatpush1.msra.mxu0 %v3578
    %3580 = vmatprep.subr.mxu0 0.0
    %v3581 = vand.u32 %v36, 4294901760
    %v3582 = vsub.f32 %v36, %v3581
    %v3583 = vand.u32 %v3582, 4294901760
    %v3584 = vsub.f32 %v3582, %v3583
    %v3585 = vand.u32 %v3584, 4294901760
    %3586 = vmatpush1.msra.mxu0 %v3585
    %3587 = vmatprep.subr.mxu0 0.0
    %v3588 = vand.u32 %v37, 4294901760
    %v3589 = vsub.f32 %v37, %v3588
    %v3590 = vand.u32 %v3589, 4294901760
    %v3591 = vsub.f32 %v3589, %v3590
    %v3592 = vand.u32 %v3591, 4294901760
    %3593 = vmatpush1.msra.mxu0 %v3592
    %3594 = vmatprep.subr.mxu0 0.0
    %v3595 = vand.u32 %v38, 4294901760
    %v3596 = vsub.f32 %v38, %v3595
    %v3597 = vand.u32 %v3596, 4294901760
    %v3598 = vsub.f32 %v3596, %v3597
    %v3599 = vand.u32 %v3598, 4294901760
    %3600 = vmatpush1.msra.mxu0 %v3599
    %3601 = vmatprep.subr.mxu0 0.0
    %3602 = vmatpush1.msra.mxu0 0.0
    %3603 = vmatprep.subr.mxu0 0.0
    %3604 = vmatpush1.msra.mxu0 0.0
    %3605 = vmatprep.subr.mxu0 0.0
    %3606 = vmatpush1.msra.mxu0 0.0
    %3607 = vmatprep.subr.mxu0 0.0
    %3608 = vmatpush1.msra.mxu0 0.0
    %3609 = vmatprep.subr.mxu0 0.0
    %3610 = vmatpush1.msra.mxu0 0.0
    %3611 = vmatprep.subr.mxu0 0.0
    %3612 = vmatpush1.msra.mxu0 0.0
    %3613 = vmatprep.subr.mxu0 0.0
    %3614 = vmatpush1.msra.mxu0 0.0
    %3615 = vmatprep.subr.mxu0 0.0
    %3616 = vmatpush1.msra.mxu0 0.0
    %3617 = vmatprep.subr.mxu0 0.0
    %3618 = vmatpush1.msra.mxu0 0.0
    %3619 = vmatprep.subr.mxu0 0.0
    %3620 = vmatpush1.msra.mxu0 0.0
    %3621 = vmatprep.subr.mxu0 0.0
    %3622 = vmatpush1.msra.mxu0 0.0
    %3623 = vmatprep.subr.mxu0 0.0
    %3624 = vmatpush1.msra.mxu0 0.0
    %3625 = vmatprep.subr.mxu0 0.0
    %3626 = vmatpush1.msra.mxu0 0.0
    %3627 = vmatprep.subr.mxu0 0.0
    %3628 = vmatpush1.msra.mxu0 0.0
    %3629 = vmatprep.subr.mxu0 0.0
    %3630 = vmatpush1.msra.mxu0 0.0
    %3631 = vmatprep.subr.mxu0 0.0
    %3632 = vmatpush1.msra.mxu0 0.0
    %3633 = vmatprep.mubr.f32.mxu0 0.0
    %v3634 = vand.u32 %v3397, 4294901760
    %3635 = vmatmul.mubr.f32.gmra.mrb[0].mxu0 %v3634
    %v3636 = vpop.f32.mrb[0].mxu0
    %v3637 = vadd.f32 %v3486, %v3636
    %v3638 = vpop.f32.mrb[0].mxu0
    %3639 = vdwg.mxu0
    %3640 = vmatprep.subr.mxu0 0.0
    %v3641 = vand.u32 %v23, 4294901760
    %v3642 = vsub.f32 %v23, %v3641
    %3643 = vmatpush1.msra.mxu0 %v3642
    %3644 = vmatprep.subr.mxu0 0.0
    %v3645 = vand.u32 %v24, 4294901760
    %v3646 = vsub.f32 %v24, %v3645
    %3647 = vmatpush1.msra.mxu0 %v3646
    %3648 = vmatprep.subr.mxu0 0.0
    %v3649 = vand.u32 %v25, 4294901760
    %v3650 = vsub.f32 %v25, %v3649
    %3651 = vmatpush1.msra.mxu0 %v3650
    %3652 = vmatprep.subr.mxu0 0.0
    %v3653 = vand.u32 %v26, 4294901760
    %v3654 = vsub.f32 %v26, %v3653
    %3655 = vmatpush1.msra.mxu0 %v3654
    %3656 = vmatprep.subr.mxu0 0.0
    %v3657 = vand.u32 %v27, 4294901760
    %v3658 = vsub.f32 %v27, %v3657
    %3659 = vmatpush1.msra.mxu0 %v3658
    %3660 = vmatprep.subr.mxu0 0.0
    %v3661 = vand.u32 %v28, 4294901760
    %v3662 = vsub.f32 %v28, %v3661
    %3663 = vmatpush1.msra.mxu0 %v3662
    %3664 = vmatprep.subr.mxu0 0.0
    %v3665 = vand.u32 %v29, 4294901760
    %v3666 = vsub.f32 %v29, %v3665
    %3667 = vmatpush1.msra.mxu0 %v3666
    %3668 = vmatprep.subr.mxu0 0.0
    %v3669 = vand.u32 %v30, 4294901760
    %v3670 = vsub.f32 %v30, %v3669
    %3671 = vmatpush1.msra.mxu0 %v3670
    %3672 = vmatprep.subr.mxu0 0.0
    %v3673 = vand.u32 %v31, 4294901760
    %v3674 = vsub.f32 %v31, %v3673
    %3675 = vmatpush1.msra.mxu0 %v3674
    %3676 = vmatprep.subr.mxu0 0.0
    %v3677 = vand.u32 %v32, 4294901760
    %v3678 = vsub.f32 %v32, %v3677
    %3679 = vmatpush1.msra.mxu0 %v3678
    %3680 = vmatprep.subr.mxu0 0.0
    %v3681 = vand.u32 %v33, 4294901760
    %v3682 = vsub.f32 %v33, %v3681
    %3683 = vmatpush1.msra.mxu0 %v3682
    %3684 = vmatprep.subr.mxu0 0.0
    %v3685 = vand.u32 %v34, 4294901760
    %v3686 = vsub.f32 %v34, %v3685
    %3687 = vmatpush1.msra.mxu0 %v3686
    %3688 = vmatprep.subr.mxu0 0.0
    %v3689 = vand.u32 %v35, 4294901760
    %v3690 = vsub.f32 %v35, %v3689
    %3691 = vmatpush1.msra.mxu0 %v3690
    %3692 = vmatprep.subr.mxu0 0.0
    %v3693 = vand.u32 %v36, 4294901760
    %v3694 = vsub.f32 %v36, %v3693
    %3695 = vmatpush1.msra.mxu0 %v3694
    %3696 = vmatprep.subr.mxu0 0.0
    %v3697 = vand.u32 %v37, 4294901760
    %v3698 = vsub.f32 %v37, %v3697
    %3699 = vmatpush1.msra.mxu0 %v3698
    %3700 = vmatprep.subr.mxu0 0.0
    %v3701 = vand.u32 %v38, 4294901760
    %v3702 = vsub.f32 %v38, %v3701
    %3703 = vmatpush1.msra.mxu0 %v3702
    %3704 = vmatprep.subr.mxu0 0.0
    %3705 = vmatpush1.msra.mxu0 0.0
    %3706 = vmatprep.subr.mxu0 0.0
    %3707 = vmatpush1.msra.mxu0 0.0
    %3708 = vmatprep.subr.mxu0 0.0
    %3709 = vmatpush1.msra.mxu0 0.0
    %3710 = vmatprep.subr.mxu0 0.0
    %3711 = vmatpush1.msra.mxu0 0.0
    %3712 = vmatprep.subr.mxu0 0.0
    %3713 = vmatpush1.msra.mxu0 0.0
    %3714 = vmatprep.subr.mxu0 0.0
    %3715 = vmatpush1.msra.mxu0 0.0
    %3716 = vmatprep.subr.mxu0 0.0
    %3717 = vmatpush1.msra.mxu0 0.0
    %3718 = vmatprep.subr.mxu0 0.0
    %3719 = vmatpush1.msra.mxu0 0.0
    %3720 = vmatprep.subr.mxu0 0.0
    %3721 = vmatpush1.msra.mxu0 0.0
    %3722 = vmatprep.subr.mxu0 0.0
    %3723 = vmatpush1.msra.mxu0 0.0
    %3724 = vmatprep.subr.mxu0 0.0
    %3725 = vmatpush1.msra.mxu0 0.0
    %3726 = vmatprep.subr.mxu0 0.0
    %3727 = vmatpush1.msra.mxu0 0.0
    %3728 = vmatprep.subr.mxu0 0.0
    %3729 = vmatpush1.msra.mxu0 0.0
    %3730 = vmatprep.subr.mxu0 0.0
    %3731 = vmatpush1.msra.mxu0 0.0
    %3732 = vmatprep.subr.mxu0 0.0
    %3733 = vmatpush1.msra.mxu0 0.0
    %3734 = vmatprep.subr.mxu0 0.0
    %3735 = vmatpush1.msra.mxu0 0.0
    %3736 = vmatprep.mubr.f32.mxu0 0.0
    %v3737 = vand.u32 %v3397, 4294901760
    %v3738 = vsub.f32 %v3397, %v3737
    %3739 = vmatmul.mubr.f32.gmra.mrb[0].mxu0 %v3738
    %v3740 = vpop.f32.mrb[0].mxu0
    %v3741 = vadd.f32 %v3637, %v3740
    %v3742 = vpop.f32.mrb[0].mxu0
    %3743 = vdwg.mxu0
    %3744 = vmatprep.subr.mxu0 0.0
    %v3745 = vand.u32 %v23, 4294901760
    %3746 = vmatpush1.msra.mxu0 %v3745
    %3747 = vmatprep.subr.mxu0 0.0
    %v3748 = vand.u32 %v24, 4294901760
    %3749 = vmatpush1.msra.mxu0 %v3748
    %3750 = vmatprep.subr.mxu0 0.0
    %v3751 = vand.u32 %v25, 4294901760
    %3752 = vmatpush1.msra.mxu0 %v3751
    %3753 = vmatprep.subr.mxu0 0.0
    %v3754 = vand.u32 %v26, 4294901760
    %3755 = vmatpush1.msra.mxu0 %v3754
    %3756 = vmatprep.subr.mxu0 0.0
    %v3757 = vand.u32 %v27, 4294901760
    %3758 = vmatpush1.msra.mxu0 %v3757
    %3759 = vmatprep.subr.mxu0 0.0
    %v3760 = vand.u32 %v28, 4294901760
    %3761 = vmatpush1.msra.mxu0 %v3760
    %3762 = vmatprep.subr.mxu0 0.0
    %v3763 = vand.u32 %v29, 4294901760
    %3764 = vmatpush1.msra.mxu0 %v3763
    %3765 = vmatprep.subr.mxu0 0.0
    %v3766 = vand.u32 %v30, 4294901760
    %3767 = vmatpush1.msra.mxu0 %v3766
    %3768 = vmatprep.subr.mxu0 0.0
    %v3769 = vand.u32 %v31, 4294901760
    %3770 = vmatpush1.msra.mxu0 %v3769
    %3771 = vmatprep.subr.mxu0 0.0
    %v3772 = vand.u32 %v32, 4294901760
    %3773 = vmatpush1.msra.mxu0 %v3772
    %3774 = vmatprep.subr.mxu0 0.0
    %v3775 = vand.u32 %v33, 4294901760
    %3776 = vmatpush1.msra.mxu0 %v3775
    %3777 = vmatprep.subr.mxu0 0.0
    %v3778 = vand.u32 %v34, 4294901760
    %3779 = vmatpush1.msra.mxu0 %v3778
    %3780 = vmatprep.subr.mxu0 0.0
    %v3781 = vand.u32 %v35, 4294901760
    %3782 = vmatpush1.msra.mxu0 %v3781
    %3783 = vmatprep.subr.mxu0 0.0
    %v3784 = vand.u32 %v36, 4294901760
    %3785 = vmatpush1.msra.mxu0 %v3784
    %3786 = vmatprep.subr.mxu0 0.0
    %v3787 = vand.u32 %v37, 4294901760
    %3788 = vmatpush1.msra.mxu0 %v3787
    %3789 = vmatprep.subr.mxu0 0.0
    %v3790 = vand.u32 %v38, 4294901760
    %3791 = vmatpush1.msra.mxu0 %v3790
    %3792 = vmatprep.subr.mxu0 0.0
    %3793 = vmatpush1.msra.mxu0 0.0
    %3794 = vmatprep.subr.mxu0 0.0
    %3795 = vmatpush1.msra.mxu0 0.0
    %3796 = vmatprep.subr.mxu0 0.0
    %3797 = vmatpush1.msra.mxu0 0.0
    %3798 = vmatprep.subr.mxu0 0.0
    %3799 = vmatpush1.msra.mxu0 0.0
    %3800 = vmatprep.subr.mxu0 0.0
    %3801 = vmatpush1.msra.mxu0 0.0
    %3802 = vmatprep.subr.mxu0 0.0
    %3803 = vmatpush1.msra.mxu0 0.0
    %3804 = vmatprep.subr.mxu0 0.0
    %3805 = vmatpush1.msra.mxu0 0.0
    %3806 = vmatprep.subr.mxu0 0.0
    %3807 = vmatpush1.msra.mxu0 0.0
    %3808 = vmatprep.subr.mxu0 0.0
    %3809 = vmatpush1.msra.mxu0 0.0
    %3810 = vmatprep.subr.mxu0 0.0
    %3811 = vmatpush1.msra.mxu0 0.0
    %3812 = vmatprep.subr.mxu0 0.0
    %3813 = vmatpush1.msra.mxu0 0.0
    %3814 = vmatprep.subr.mxu0 0.0
    %3815 = vmatpush1.msra.mxu0 0.0
    %3816 = vmatprep.subr.mxu0 0.0
    %3817 = vmatpush1.msra.mxu0 0.0
    %3818 = vmatprep.subr.mxu0 0.0
    %3819 = vmatpush1.msra.mxu0 0.0
    %3820 = vmatprep.subr.mxu0 0.0
    %3821 = vmatpush1.msra.mxu0 0.0
    %3822 = vmatprep.subr.mxu0 0.0
    %3823 = vmatpush1.msra.mxu0 0.0
    %3824 = vmatprep.mubr.f32.mxu0 0.0
    %v3825 = vand.u32 %v3397, 4294901760
    %v3826 = vsub.f32 %v3397, %v3825
    %v3827 = vand.u32 %v3826, 4294901760
    %3828 = vmatmul.mubr.f32.gmra.mrb[0].mxu0 %v3827
    %v3829 = vpop.f32.mrb[0].mxu0
    %v3830 = vadd.f32 %v3741, %v3829
    %v3831 = vpop.f32.mrb[0].mxu0
    %3832 = vdwg.mxu0
    %3833 = vmatprep.subr.mxu0 0.0
    %v3834 = vand.u32 %v23, 4294901760
    %v3835 = vsub.f32 %v23, %v3834
    %v3836 = vand.u32 %v3835, 4294901760
    %3837 = vmatpush1.msra.mxu0 %v3836
    %3838 = vmatprep.subr.mxu0 0.0
    %v3839 = vand.u32 %v24, 4294901760
    %v3840 = vsub.f32 %v24, %v3839
    %v3841 = vand.u32 %v3840, 4294901760
    %3842 = vmatpush1.msra.mxu0 %v3841
    %3843 = vmatprep.subr.mxu0 0.0
    %v3844 = vand.u32 %v25, 4294901760
    %v3845 = vsub.f32 %v25, %v3844
    %v3846 = vand.u32 %v3845, 4294901760
    %3847 = vmatpush1.msra.mxu0 %v3846
    %3848 = vmatprep.subr.mxu0 0.0
    %v3849 = vand.u32 %v26, 4294901760
    %v3850 = vsub.f32 %v26, %v3849
    %v3851 = vand.u32 %v3850, 4294901760
    %3852 = vmatpush1.msra.mxu0 %v3851
    %3853 = vmatprep.subr.mxu0 0.0
    %v3854 = vand.u32 %v27, 4294901760
    %v3855 = vsub.f32 %v27, %v3854
    %v3856 = vand.u32 %v3855, 4294901760
    %3857 = vmatpush1.msra.mxu0 %v3856
    %3858 = vmatprep.subr.mxu0 0.0
    %v3859 = vand.u32 %v28, 4294901760
    %v3860 = vsub.f32 %v28, %v3859
    %v3861 = vand.u32 %v3860, 4294901760
    %3862 = vmatpush1.msra.mxu0 %v3861
    %3863 = vmatprep.subr.mxu0 0.0
    %v3864 = vand.u32 %v29, 4294901760
    %v3865 = vsub.f32 %v29, %v3864
    %v3866 = vand.u32 %v3865, 4294901760
    %3867 = vmatpush1.msra.mxu0 %v3866
    %3868 = vmatprep.subr.mxu0 0.0
    %v3869 = vand.u32 %v30, 4294901760
    %v3870 = vsub.f32 %v30, %v3869
    %v3871 = vand.u32 %v3870, 4294901760
    %3872 = vmatpush1.msra.mxu0 %v3871
    %3873 = vmatprep.subr.mxu0 0.0
    %v3874 = vand.u32 %v31, 4294901760
    %v3875 = vsub.f32 %v31, %v3874
    %v3876 = vand.u32 %v3875, 4294901760
    %3877 = vmatpush1.msra.mxu0 %v3876
    %3878 = vmatprep.subr.mxu0 0.0
    %v3879 = vand.u32 %v32, 4294901760
    %v3880 = vsub.f32 %v32, %v3879
    %v3881 = vand.u32 %v3880, 4294901760
    %3882 = vmatpush1.msra.mxu0 %v3881
    %3883 = vmatprep.subr.mxu0 0.0
    %v3884 = vand.u32 %v33, 4294901760
    %v3885 = vsub.f32 %v33, %v3884
    %v3886 = vand.u32 %v3885, 4294901760
    %3887 = vmatpush1.msra.mxu0 %v3886
    %3888 = vmatprep.subr.mxu0 0.0
    %v3889 = vand.u32 %v34, 4294901760
    %v3890 = vsub.f32 %v34, %v3889
    %v3891 = vand.u32 %v3890, 4294901760
    %3892 = vmatpush1.msra.mxu0 %v3891
    %3893 = vmatprep.subr.mxu0 0.0
    %v3894 = vand.u32 %v35, 4294901760
    %v3895 = vsub.f32 %v35, %v3894
    %v3896 = vand.u32 %v3895, 4294901760
    %3897 = vmatpush1.msra.mxu0 %v3896
    %3898 = vmatprep.subr.mxu0 0.0
    %v3899 = vand.u32 %v36, 4294901760
    %v3900 = vsub.f32 %v36, %v3899
    %v3901 = vand.u32 %v3900, 4294901760
    %3902 = vmatpush1.msra.mxu0 %v3901
    %3903 = vmatprep.subr.mxu0 0.0
    %v3904 = vand.u32 %v37, 4294901760
    %v3905 = vsub.f32 %v37, %v3904
    %v3906 = vand.u32 %v3905, 4294901760
    %3907 = vmatpush1.msra.mxu0 %v3906
    %3908 = vmatprep.subr.mxu0 0.0
    %v3909 = vand.u32 %v38, 4294901760
    %v3910 = vsub.f32 %v38, %v3909
    %v3911 = vand.u32 %v3910, 4294901760
    %3912 = vmatpush1.msra.mxu0 %v3911
    %3913 = vmatprep.subr.mxu0 0.0
    %3914 = vmatpush1.msra.mxu0 0.0
    %3915 = vmatprep.subr.mxu0 0.0
    %3916 = vmatpush1.msra.mxu0 0.0
    %3917 = vmatprep.subr.mxu0 0.0
    %3918 = vmatpush1.msra.mxu0 0.0
    %3919 = vmatprep.subr.mxu0 0.0
    %3920 = vmatpush1.msra.mxu0 0.0
    %3921 = vmatprep.subr.mxu0 0.0
    %3922 = vmatpush1.msra.mxu0 0.0
    %3923 = vmatprep.subr.mxu0 0.0
    %3924 = vmatpush1.msra.mxu0 0.0
    %3925 = vmatprep.subr.mxu0 0.0
    %3926 = vmatpush1.msra.mxu0 0.0
    %3927 = vmatprep.subr.mxu0 0.0
    %3928 = vmatpush1.msra.mxu0 0.0
    %3929 = vmatprep.subr.mxu0 0.0
    %3930 = vmatpush1.msra.mxu0 0.0
    %3931 = vmatprep.subr.mxu0 0.0
    %3932 = vmatpush1.msra.mxu0 0.0
    %3933 = vmatprep.subr.mxu0 0.0
    %3934 = vmatpush1.msra.mxu0 0.0
    %3935 = vmatprep.subr.mxu0 0.0
    %3936 = vmatpush1.msra.mxu0 0.0
    %3937 = vmatprep.subr.mxu0 0.0
    %3938 = vmatpush1.msra.mxu0 0.0
    %3939 = vmatprep.subr.mxu0 0.0
    %3940 = vmatpush1.msra.mxu0 0.0
    %3941 = vmatprep.subr.mxu0 0.0
    %3942 = vmatpush1.msra.mxu0 0.0
    %3943 = vmatprep.subr.mxu0 0.0
    %3944 = vmatpush1.msra.mxu0 0.0
    %3945 = vmatprep.mubr.f32.mxu0 0.0
    %v3946 = vand.u32 %v3397, 4294901760
    %3947 = vmatmul.mubr.f32.gmra.mrb[0].mxu0 %v3946
    %v3948 = vpop.f32.mrb[0].mxu0
    %v3949 = vadd.f32 %v3830, %v3948
    %v3950 = vpop.f32.mrb[0].mxu0
    %3951 = vdwg.mxu0
    %3952 = vmatprep.subr.mxu0 0.0
    %v3953 = vand.u32 %v23, 4294901760
    %3954 = vmatpush1.msra.mxu0 %v3953
    %3955 = vmatprep.subr.mxu0 0.0
    %v3956 = vand.u32 %v24, 4294901760
    %3957 = vmatpush1.msra.mxu0 %v3956
    %3958 = vmatprep.subr.mxu0 0.0
    %v3959 = vand.u32 %v25, 4294901760
    %3960 = vmatpush1.msra.mxu0 %v3959
    %3961 = vmatprep.subr.mxu0 0.0
    %v3962 = vand.u32 %v26, 4294901760
    %3963 = vmatpush1.msra.mxu0 %v3962
    %3964 = vmatprep.subr.mxu0 0.0
    %v3965 = vand.u32 %v27, 4294901760
    %3966 = vmatpush1.msra.mxu0 %v3965
    %3967 = vmatprep.subr.mxu0 0.0
    %v3968 = vand.u32 %v28, 4294901760
    %3969 = vmatpush1.msra.mxu0 %v3968
    %3970 = vmatprep.subr.mxu0 0.0
    %v3971 = vand.u32 %v29, 4294901760
    %3972 = vmatpush1.msra.mxu0 %v3971
    %3973 = vmatprep.subr.mxu0 0.0
    %v3974 = vand.u32 %v30, 4294901760
    %3975 = vmatpush1.msra.mxu0 %v3974
    %3976 = vmatprep.subr.mxu0 0.0
    %v3977 = vand.u32 %v31, 4294901760
    %3978 = vmatpush1.msra.mxu0 %v3977
    %3979 = vmatprep.subr.mxu0 0.0
    %v3980 = vand.u32 %v32, 4294901760
    %3981 = vmatpush1.msra.mxu0 %v3980
    %3982 = vmatprep.subr.mxu0 0.0
    %v3983 = vand.u32 %v33, 4294901760
    %3984 = vmatpush1.msra.mxu0 %v3983
    %3985 = vmatprep.subr.mxu0 0.0
    %v3986 = vand.u32 %v34, 4294901760
    %3987 = vmatpush1.msra.mxu0 %v3986
    %3988 = vmatprep.subr.mxu0 0.0
    %v3989 = vand.u32 %v35, 4294901760
    %3990 = vmatpush1.msra.mxu0 %v3989
    %3991 = vmatprep.subr.mxu0 0.0
    %v3992 = vand.u32 %v36, 4294901760
    %3993 = vmatpush1.msra.mxu0 %v3992
    %3994 = vmatprep.subr.mxu0 0.0
    %v3995 = vand.u32 %v37, 4294901760
    %3996 = vmatpush1.msra.mxu0 %v3995
    %3997 = vmatprep.subr.mxu0 0.0
    %v3998 = vand.u32 %v38, 4294901760
    %3999 = vmatpush1.msra.mxu0 %v3998
    %4000 = vmatprep.subr.mxu0 0.0
    %4001 = vmatpush1.msra.mxu0 0.0
    %4002 = vmatprep.subr.mxu0 0.0
    %4003 = vmatpush1.msra.mxu0 0.0
    %4004 = vmatprep.subr.mxu0 0.0
    %4005 = vmatpush1.msra.mxu0 0.0
    %4006 = vmatprep.subr.mxu0 0.0
    %4007 = vmatpush1.msra.mxu0 0.0
    %4008 = vmatprep.subr.mxu0 0.0
    %4009 = vmatpush1.msra.mxu0 0.0
    %4010 = vmatprep.subr.mxu0 0.0
    %4011 = vmatpush1.msra.mxu0 0.0
    %4012 = vmatprep.subr.mxu0 0.0
    %4013 = vmatpush1.msra.mxu0 0.0
    %4014 = vmatprep.subr.mxu0 0.0
    %4015 = vmatpush1.msra.mxu0 0.0
    %4016 = vmatprep.subr.mxu0 0.0
    %4017 = vmatpush1.msra.mxu0 0.0
    %4018 = vmatprep.subr.mxu0 0.0
    %4019 = vmatpush1.msra.mxu0 0.0
    %4020 = vmatprep.subr.mxu0 0.0
    %4021 = vmatpush1.msra.mxu0 0.0
    %4022 = vmatprep.subr.mxu0 0.0
    %4023 = vmatpush1.msra.mxu0 0.0
    %4024 = vmatprep.subr.mxu0 0.0
    %4025 = vmatpush1.msra.mxu0 0.0
    %4026 = vmatprep.subr.mxu0 0.0
    %4027 = vmatpush1.msra.mxu0 0.0
    %4028 = vmatprep.subr.mxu0 0.0
    %4029 = vmatpush1.msra.mxu0 0.0
    %4030 = vmatprep.subr.mxu0 0.0
    %4031 = vmatpush1.msra.mxu0 0.0
    %4032 = vmatprep.mubr.f32.mxu0 0.0
    %v4033 = vand.u32 %v3397, 4294901760
    %4034 = vmatmul.mubr.f32.gmra.mrb[0].mxu0 %v4033
    %v4035 = vpop.f32.mrb[0].mxu0
    %v4036 = vadd.f32 %v3949, %v4035
    %v4037 = vpop.f32.mrb[0].mxu0
    %4038 = vdwg.mxu0
    %vm4039 = vcmp.gt.f32.partialorder %v22, 0.5
    %v4040 = vsel %vm4039, 1, 0
    %v4041 = vlaneseq
    %v4042 = vshrl.u32 %v4041, 7
    %v4043 = vsub.s32 0, %v4042
    %v4044 = vrot.slane %v4040, %v4043
    %vm4045 = vcmp.eq.s32.totalorder %v4044, 1
    %v4046 = vsel %vm4045, %v3397, -1e+30
    %v4047 = vsel %vm74, %v4046, -inf
    %4048 = vmax.xlane.f32.xlu0 %v4047
    %v4049 = vpop.xlane.xlu0 %4048
    %v4050 = vlaneseq
    %v4051 = vshrl.u32 %v4050, 7
    %v4052 = vsub.s32 1, %v4051
    %v4053 = vrot.slane %v4040, %v4052
    %vm4054 = vcmp.eq.s32.totalorder %v4053, 1
    %v4055 = vsel %vm4054, %v3397, -1e+30
    %v4056 = vsel %vm74, %v4055, -inf
    %4057 = vmax.xlane.f32.xlu0 %v4056
    %v4058 = vpop.xlane.xlu0 %4057
    %vm4059 = vcmask 7168
    %v4060 = vsel %vm4059, %v4049, %v4058
    %4062 = vrot.lane.b32.xlu0 %v4060, 2
    %v4063 = vpop.permute.xlu0 %4062
    %vm4065 = vcmask 15360
    %v4066 = vsel %vm4065, %v4036, %v4063
    %vm4067 = vcmask 31744
    %v4069 = vsel %vm4067, %v50, 0
    %v4072 = vsel %vm74, %v4066, 0
    %4074 = vmatprep.subr.mxu0 0.0
    %v4075 = vand.u32 %v4072, 4294901760
    %4076 = vmatpush1.msra.mxu0 %v4075
    %4077 = vmatprep.subr.mxu0 0.0
    %4078 = vmatpush1.msra.mxu0 0.0
    %4079 = vmatprep.subr.mxu0 0.0
    %4080 = vmatpush1.msra.mxu0 0.0
    %4081 = vmatprep.subr.mxu0 0.0
    %4082 = vmatpush1.msra.mxu0 0.0
    %4083 = vmatprep.subr.mxu0 0.0
    %4084 = vmatpush1.msra.mxu0 0.0
    %4085 = vmatprep.subr.mxu0 0.0
    %4086 = vmatpush1.msra.mxu0 0.0
    %4087 = vmatprep.subr.mxu0 0.0
    %4088 = vmatpush1.msra.mxu0 0.0
    %4089 = vmatprep.subr.mxu0 0.0
    %4090 = vmatpush1.msra.mxu0 0.0
    %4091 = vmatprep.subr.mxu0 0.0
    %4092 = vmatpush1.msra.mxu0 0.0
    %4093 = vmatprep.subr.mxu0 0.0
    %4094 = vmatpush1.msra.mxu0 0.0
    %4095 = vmatprep.subr.mxu0 0.0
    %4096 = vmatpush1.msra.mxu0 0.0
    %4097 = vmatprep.subr.mxu0 0.0
    %4098 = vmatpush1.msra.mxu0 0.0
    %4099 = vmatprep.subr.mxu0 0.0
    %4100 = vmatpush1.msra.mxu0 0.0
    %4101 = vmatprep.subr.mxu0 0.0
    %4102 = vmatpush1.msra.mxu0 0.0
    %4103 = vmatprep.subr.mxu0 0.0
    %4104 = vmatpush1.msra.mxu0 0.0
    %4105 = vmatprep.subr.mxu0 0.0
    %4106 = vmatpush1.msra.mxu0 0.0
    %4107 = vmatprep.subr.mxu0 0.0
    %4108 = vmatpush1.msra.mxu0 0.0
    %4109 = vmatprep.subr.mxu0 0.0
    %4110 = vmatpush1.msra.mxu0 0.0
    %4111 = vmatprep.subr.mxu0 0.0
    %4112 = vmatpush1.msra.mxu0 0.0
    %4113 = vmatprep.subr.mxu0 0.0
    %4114 = vmatpush1.msra.mxu0 0.0
    %4115 = vmatprep.subr.mxu0 0.0
    %4116 = vmatpush1.msra.mxu0 0.0
    %4117 = vmatprep.subr.mxu0 0.0
    %4118 = vmatpush1.msra.mxu0 0.0
    %4119 = vmatprep.subr.mxu0 0.0
    %4120 = vmatpush1.msra.mxu0 0.0
    %4121 = vmatprep.subr.mxu0 0.0
    %4122 = vmatpush1.msra.mxu0 0.0
    %4123 = vmatprep.subr.mxu0 0.0
    %4124 = vmatpush1.msra.mxu0 0.0
    %4125 = vmatprep.subr.mxu0 0.0
    %4126 = vmatpush1.msra.mxu0 0.0
    %4127 = vmatprep.subr.mxu0 0.0
    %4128 = vmatpush1.msra.mxu0 0.0
    %4129 = vmatprep.subr.mxu0 0.0
    %4130 = vmatpush1.msra.mxu0 0.0
    %4131 = vmatprep.subr.mxu0 0.0
    %4132 = vmatpush1.msra.mxu0 0.0
    %4133 = vmatprep.subr.mxu0 0.0
    %4134 = vmatpush1.msra.mxu0 0.0
    %4135 = vmatprep.subr.mxu0 0.0
    %4136 = vmatpush1.msra.mxu0 0.0
    %4137 = vmatprep.subr.mxu0 0.0
    %4138 = vmatpush1.msra.mxu0 0.0
    %4139 = vmatprep.mubr.f32.mxu0 0.0
    %v4140 = vand.u32 %v4069, 4294901760
    %v4141 = vsub.f32 %v4069, %v4140
    %v4142 = vand.u32 %v4141, 4294901760
    %v4143 = vsub.f32 %v4141, %v4142
    %v4144 = vand.u32 %v4143, 4294901760
    %4145 = vmatmul.mubr.f32.gmra.mrb[0].mxu0 %v4144
    %v4146 = vpop.f32.mrb[0].mxu0
    %v4147 = vadd.f32 0.0, %v4146
    %v4148 = vpop.f32.mrb[0].mxu0
    %4149 = vdwg.mxu0
    %4150 = vmatprep.subr.mxu0 0.0
    %v4151 = vand.u32 %v4072, 4294901760
    %v4152 = vsub.f32 %v4072, %v4151
    %v4153 = vand.u32 %v4152, 4294901760
    %v4154 = vsub.f32 %v4152, %v4153
    %v4155 = vand.u32 %v4154, 4294901760
    %4156 = vmatpush1.msra.mxu0 %v4155
    %4157 = vmatprep.subr.mxu0 0.0
    %4158 = vmatpush1.msra.mxu0 0.0
    %4159 = vmatprep.subr.mxu0 0.0
    %4160 = vmatpush1.msra.mxu0 0.0
    %4161 = vmatprep.subr.mxu0 0.0
    %4162 = vmatpush1.msra.mxu0 0.0
    %4163 = vmatprep.subr.mxu0 0.0
    %4164 = vmatpush1.msra.mxu0 0.0
    %4165 = vmatprep.subr.mxu0 0.0
    %4166 = vmatpush1.msra.mxu0 0.0
    %4167 = vmatprep.subr.mxu0 0.0
    %4168 = vmatpush1.msra.mxu0 0.0
    %4169 = vmatprep.subr.mxu0 0.0
    %4170 = vmatpush1.msra.mxu0 0.0
    %4171 = vmatprep.subr.mxu0 0.0
    %4172 = vmatpush1.msra.mxu0 0.0
    %4173 = vmatprep.subr.mxu0 0.0
    %4174 = vmatpush1.msra.mxu0 0.0
    %4175 = vmatprep.subr.mxu0 0.0
    %4176 = vmatpush1.msra.mxu0 0.0
    %4177 = vmatprep.subr.mxu0 0.0
    %4178 = vmatpush1.msra.mxu0 0.0
    %4179 = vmatprep.subr.mxu0 0.0
    %4180 = vmatpush1.msra.mxu0 0.0
    %4181 = vmatprep.subr.mxu0 0.0
    %4182 = vmatpush1.msra.mxu0 0.0
    %4183 = vmatprep.subr.mxu0 0.0
    %4184 = vmatpush1.msra.mxu0 0.0
    %4185 = vmatprep.subr.mxu0 0.0
    %4186 = vmatpush1.msra.mxu0 0.0
    %4187 = vmatprep.subr.mxu0 0.0
    %4188 = vmatpush1.msra.mxu0 0.0
    %4189 = vmatprep.subr.mxu0 0.0
    %4190 = vmatpush1.msra.mxu0 0.0
    %4191 = vmatprep.subr.mxu0 0.0
    %4192 = vmatpush1.msra.mxu0 0.0
    %4193 = vmatprep.subr.mxu0 0.0
    %4194 = vmatpush1.msra.mxu0 0.0
    %4195 = vmatprep.subr.mxu0 0.0
    %4196 = vmatpush1.msra.mxu0 0.0
    %4197 = vmatprep.subr.mxu0 0.0
    %4198 = vmatpush1.msra.mxu0 0.0
    %4199 = vmatprep.subr.mxu0 0.0
    %4200 = vmatpush1.msra.mxu0 0.0
    %4201 = vmatprep.subr.mxu0 0.0
    %4202 = vmatpush1.msra.mxu0 0.0
    %4203 = vmatprep.subr.mxu0 0.0
    %4204 = vmatpush1.msra.mxu0 0.0
    %4205 = vmatprep.subr.mxu0 0.0
    %4206 = vmatpush1.msra.mxu0 0.0
    %4207 = vmatprep.subr.mxu0 0.0
    %4208 = vmatpush1.msra.mxu0 0.0
    %4209 = vmatprep.subr.mxu0 0.0
    %4210 = vmatpush1.msra.mxu0 0.0
    %4211 = vmatprep.subr.mxu0 0.0
    %4212 = vmatpush1.msra.mxu0 0.0
    %4213 = vmatprep.subr.mxu0 0.0
    %4214 = vmatpush1.msra.mxu0 0.0
    %4215 = vmatprep.subr.mxu0 0.0
    %4216 = vmatpush1.msra.mxu0 0.0
    %4217 = vmatprep.subr.mxu0 0.0
    %4218 = vmatpush1.msra.mxu0 0.0
    %4219 = vmatprep.mubr.f32.mxu0 0.0
    %v4220 = vand.u32 %v4069, 4294901760
    %4221 = vmatmul.mubr.f32.gmra.mrb[0].mxu0 %v4220
    %v4222 = vpop.f32.mrb[0].mxu0
    %v4223 = vadd.f32 %v4147, %v4222
    %v4224 = vpop.f32.mrb[0].mxu0
    %4225 = vdwg.mxu0
    %4226 = vmatprep.subr.mxu0 0.0
    %v4227 = vand.u32 %v4072, 4294901760
    %v4228 = vsub.f32 %v4072, %v4227
    %4229 = vmatpush1.msra.mxu0 %v4228
    %4230 = vmatprep.subr.mxu0 0.0
    %4231 = vmatpush1.msra.mxu0 0.0
    %4232 = vmatprep.subr.mxu0 0.0
    %4233 = vmatpush1.msra.mxu0 0.0
    %4234 = vmatprep.subr.mxu0 0.0
    %4235 = vmatpush1.msra.mxu0 0.0
    %4236 = vmatprep.subr.mxu0 0.0
    %4237 = vmatpush1.msra.mxu0 0.0
    %4238 = vmatprep.subr.mxu0 0.0
    %4239 = vmatpush1.msra.mxu0 0.0
    %4240 = vmatprep.subr.mxu0 0.0
    %4241 = vmatpush1.msra.mxu0 0.0
    %4242 = vmatprep.subr.mxu0 0.0
    %4243 = vmatpush1.msra.mxu0 0.0
    %4244 = vmatprep.subr.mxu0 0.0
    %4245 = vmatpush1.msra.mxu0 0.0
    %4246 = vmatprep.subr.mxu0 0.0
    %4247 = vmatpush1.msra.mxu0 0.0
    %4248 = vmatprep.subr.mxu0 0.0
    %4249 = vmatpush1.msra.mxu0 0.0
    %4250 = vmatprep.subr.mxu0 0.0
    %4251 = vmatpush1.msra.mxu0 0.0
    %4252 = vmatprep.subr.mxu0 0.0
    %4253 = vmatpush1.msra.mxu0 0.0
    %4254 = vmatprep.subr.mxu0 0.0
    %4255 = vmatpush1.msra.mxu0 0.0
    %4256 = vmatprep.subr.mxu0 0.0
    %4257 = vmatpush1.msra.mxu0 0.0
    %4258 = vmatprep.subr.mxu0 0.0
    %4259 = vmatpush1.msra.mxu0 0.0
    %4260 = vmatprep.subr.mxu0 0.0
    %4261 = vmatpush1.msra.mxu0 0.0
    %4262 = vmatprep.subr.mxu0 0.0
    %4263 = vmatpush1.msra.mxu0 0.0
    %4264 = vmatprep.subr.mxu0 0.0
    %4265 = vmatpush1.msra.mxu0 0.0
    %4266 = vmatprep.subr.mxu0 0.0
    %4267 = vmatpush1.msra.mxu0 0.0
    %4268 = vmatprep.subr.mxu0 0.0
    %4269 = vmatpush1.msra.mxu0 0.0
    %4270 = vmatprep.subr.mxu0 0.0
    %4271 = vmatpush1.msra.mxu0 0.0
    %4272 = vmatprep.subr.mxu0 0.0
    %4273 = vmatpush1.msra.mxu0 0.0
    %4274 = vmatprep.subr.mxu0 0.0
    %4275 = vmatpush1.msra.mxu0 0.0
    %4276 = vmatprep.subr.mxu0 0.0
    %4277 = vmatpush1.msra.mxu0 0.0
    %4278 = vmatprep.subr.mxu0 0.0
    %4279 = vmatpush1.msra.mxu0 0.0
    %4280 = vmatprep.subr.mxu0 0.0
    %4281 = vmatpush1.msra.mxu0 0.0
    %4282 = vmatprep.subr.mxu0 0.0
    %4283 = vmatpush1.msra.mxu0 0.0
    %4284 = vmatprep.subr.mxu0 0.0
    %4285 = vmatpush1.msra.mxu0 0.0
    %4286 = vmatprep.subr.mxu0 0.0
    %4287 = vmatpush1.msra.mxu0 0.0
    %4288 = vmatprep.subr.mxu0 0.0
    %4289 = vmatpush1.msra.mxu0 0.0
    %4290 = vmatprep.subr.mxu0 0.0
    %4291 = vmatpush1.msra.mxu0 0.0
    %4292 = vmatprep.mubr.f32.mxu0 0.0
    %v4293 = vand.u32 %v4069, 4294901760
    %v4294 = vsub.f32 %v4069, %v4293
    %4295 = vmatmul.mubr.f32.gmra.mrb[0].mxu0 %v4294
    %v4296 = vpop.f32.mrb[0].mxu0
    %v4297 = vadd.f32 %v4223, %v4296
    %v4298 = vpop.f32.mrb[0].mxu0
    %4299 = vdwg.mxu0
    %4300 = vmatprep.subr.mxu0 0.0
    %v4301 = vand.u32 %v4072, 4294901760
    %4302 = vmatpush1.msra.mxu0 %v4301
    %4303 = vmatprep.subr.mxu0 0.0
    %4304 = vmatpush1.msra.mxu0 0.0
    %4305 = vmatprep.subr.mxu0 0.0
    %4306 = vmatpush1.msra.mxu0 0.0
    %4307 = vmatprep.subr.mxu0 0.0
    %4308 = vmatpush1.msra.mxu0 0.0
    %4309 = vmatprep.subr.mxu0 0.0
    %4310 = vmatpush1.msra.mxu0 0.0
    %4311 = vmatprep.subr.mxu0 0.0
    %4312 = vmatpush1.msra.mxu0 0.0
    %4313 = vmatprep.subr.mxu0 0.0
    %4314 = vmatpush1.msra.mxu0 0.0
    %4315 = vmatprep.subr.mxu0 0.0
    %4316 = vmatpush1.msra.mxu0 0.0
    %4317 = vmatprep.subr.mxu0 0.0
    %4318 = vmatpush1.msra.mxu0 0.0
    %4319 = vmatprep.subr.mxu0 0.0
    %4320 = vmatpush1.msra.mxu0 0.0
    %4321 = vmatprep.subr.mxu0 0.0
    %4322 = vmatpush1.msra.mxu0 0.0
    %4323 = vmatprep.subr.mxu0 0.0
    %4324 = vmatpush1.msra.mxu0 0.0
    %4325 = vmatprep.subr.mxu0 0.0
    %4326 = vmatpush1.msra.mxu0 0.0
    %4327 = vmatprep.subr.mxu0 0.0
    %4328 = vmatpush1.msra.mxu0 0.0
    %4329 = vmatprep.subr.mxu0 0.0
    %4330 = vmatpush1.msra.mxu0 0.0
    %4331 = vmatprep.subr.mxu0 0.0
    %4332 = vmatpush1.msra.mxu0 0.0
    %4333 = vmatprep.subr.mxu0 0.0
    %4334 = vmatpush1.msra.mxu0 0.0
    %4335 = vmatprep.subr.mxu0 0.0
    %4336 = vmatpush1.msra.mxu0 0.0
    %4337 = vmatprep.subr.mxu0 0.0
    %4338 = vmatpush1.msra.mxu0 0.0
    %4339 = vmatprep.subr.mxu0 0.0
    %4340 = vmatpush1.msra.mxu0 0.0
    %4341 = vmatprep.subr.mxu0 0.0
    %4342 = vmatpush1.msra.mxu0 0.0
    %4343 = vmatprep.subr.mxu0 0.0
    %4344 = vmatpush1.msra.mxu0 0.0
    %4345 = vmatprep.subr.mxu0 0.0
    %4346 = vmatpush1.msra.mxu0 0.0
    %4347 = vmatprep.subr.mxu0 0.0
    %4348 = vmatpush1.msra.mxu0 0.0
    %4349 = vmatprep.subr.mxu0 0.0
    %4350 = vmatpush1.msra.mxu0 0.0
    %4351 = vmatprep.subr.mxu0 0.0
    %4352 = vmatpush1.msra.mxu0 0.0
    %4353 = vmatprep.subr.mxu0 0.0
    %4354 = vmatpush1.msra.mxu0 0.0
    %4355 = vmatprep.subr.mxu0 0.0
    %4356 = vmatpush1.msra.mxu0 0.0
    %4357 = vmatprep.subr.mxu0 0.0
    %4358 = vmatpush1.msra.mxu0 0.0
    %4359 = vmatprep.subr.mxu0 0.0
    %4360 = vmatpush1.msra.mxu0 0.0
    %4361 = vmatprep.subr.mxu0 0.0
    %4362 = vmatpush1.msra.mxu0 0.0
    %4363 = vmatprep.subr.mxu0 0.0
    %4364 = vmatpush1.msra.mxu0 0.0
    %4365 = vmatprep.mubr.f32.mxu0 0.0
    %v4366 = vand.u32 %v4069, 4294901760
    %v4367 = vsub.f32 %v4069, %v4366
    %v4368 = vand.u32 %v4367, 4294901760
    %4369 = vmatmul.mubr.f32.gmra.mrb[0].mxu0 %v4368
    %v4370 = vpop.f32.mrb[0].mxu0
    %v4371 = vadd.f32 %v4297, %v4370
    %v4372 = vpop.f32.mrb[0].mxu0
    %4373 = vdwg.mxu0
    %4374 = vmatprep.subr.mxu0 0.0
    %v4375 = vand.u32 %v4072, 4294901760
    %v4376 = vsub.f32 %v4072, %v4375
    %v4377 = vand.u32 %v4376, 4294901760
    %4378 = vmatpush1.msra.mxu0 %v4377
    %4379 = vmatprep.subr.mxu0 0.0
    %4380 = vmatpush1.msra.mxu0 0.0
    %4381 = vmatprep.subr.mxu0 0.0
    %4382 = vmatpush1.msra.mxu0 0.0
    %4383 = vmatprep.subr.mxu0 0.0
    %4384 = vmatpush1.msra.mxu0 0.0
    %4385 = vmatprep.subr.mxu0 0.0
    %4386 = vmatpush1.msra.mxu0 0.0
    %4387 = vmatprep.subr.mxu0 0.0
    %4388 = vmatpush1.msra.mxu0 0.0
    %4389 = vmatprep.subr.mxu0 0.0
    %4390 = vmatpush1.msra.mxu0 0.0
    %4391 = vmatprep.subr.mxu0 0.0
    %4392 = vmatpush1.msra.mxu0 0.0
    %4393 = vmatprep.subr.mxu0 0.0
    %4394 = vmatpush1.msra.mxu0 0.0
    %4395 = vmatprep.subr.mxu0 0.0
    %4396 = vmatpush1.msra.mxu0 0.0
    %4397 = vmatprep.subr.mxu0 0.0
    %4398 = vmatpush1.msra.mxu0 0.0
    %4399 = vmatprep.subr.mxu0 0.0
    %4400 = vmatpush1.msra.mxu0 0.0
    %4401 = vmatprep.subr.mxu0 0.0
    %4402 = vmatpush1.msra.mxu0 0.0
    %4403 = vmatprep.subr.mxu0 0.0
    %4404 = vmatpush1.msra.mxu0 0.0
    %4405 = vmatprep.subr.mxu0 0.0
    %4406 = vmatpush1.msra.mxu0 0.0
    %4407 = vmatprep.subr.mxu0 0.0
    %4408 = vmatpush1.msra.mxu0 0.0
    %4409 = vmatprep.subr.mxu0 0.0
    %4410 = vmatpush1.msra.mxu0 0.0
    %4411 = vmatprep.subr.mxu0 0.0
    %4412 = vmatpush1.msra.mxu0 0.0
    %4413 = vmatprep.subr.mxu0 0.0
    %4414 = vmatpush1.msra.mxu0 0.0
    %4415 = vmatprep.subr.mxu0 0.0
    %4416 = vmatpush1.msra.mxu0 0.0
    %4417 = vmatprep.subr.mxu0 0.0
    %4418 = vmatpush1.msra.mxu0 0.0
    %4419 = vmatprep.subr.mxu0 0.0
    %4420 = vmatpush1.msra.mxu0 0.0
    %4421 = vmatprep.subr.mxu0 0.0
    %4422 = vmatpush1.msra.mxu0 0.0
    %4423 = vmatprep.subr.mxu0 0.0
    %4424 = vmatpush1.msra.mxu0 0.0
    %4425 = vmatprep.subr.mxu0 0.0
    %4426 = vmatpush1.msra.mxu0 0.0
    %4427 = vmatprep.subr.mxu0 0.0
    %4428 = vmatpush1.msra.mxu0 0.0
    %4429 = vmatprep.subr.mxu0 0.0
    %4430 = vmatpush1.msra.mxu0 0.0
    %4431 = vmatprep.subr.mxu0 0.0
    %4432 = vmatpush1.msra.mxu0 0.0
    %4433 = vmatprep.subr.mxu0 0.0
    %4434 = vmatpush1.msra.mxu0 0.0
    %4435 = vmatprep.subr.mxu0 0.0
    %4436 = vmatpush1.msra.mxu0 0.0
    %4437 = vmatprep.subr.mxu0 0.0
    %4438 = vmatpush1.msra.mxu0 0.0
    %4439 = vmatprep.subr.mxu0 0.0
    %4440 = vmatpush1.msra.mxu0 0.0
    %4441 = vmatprep.mubr.f32.mxu0 0.0
    %v4442 = vand.u32 %v4069, 4294901760
    %4443 = vmatmul.mubr.f32.gmra.mrb[0].mxu0 %v4442
    %v4444 = vpop.f32.mrb[0].mxu0
    %v4445 = vadd.f32 %v4371, %v4444
    %v4446 = vpop.f32.mrb[0].mxu0
    %4447 = vdwg.mxu0
    %4448 = vmatprep.subr.mxu0 0.0
    %v4449 = vand.u32 %v4072, 4294901760
    %4450 = vmatpush1.msra.mxu0 %v4449
    %4451 = vmatprep.subr.mxu0 0.0
    %4452 = vmatpush1.msra.mxu0 0.0
    %4453 = vmatprep.subr.mxu0 0.0
    %4454 = vmatpush1.msra.mxu0 0.0
    %4455 = vmatprep.subr.mxu0 0.0
    %4456 = vmatpush1.msra.mxu0 0.0
    %4457 = vmatprep.subr.mxu0 0.0
    %4458 = vmatpush1.msra.mxu0 0.0
    %4459 = vmatprep.subr.mxu0 0.0
    %4460 = vmatpush1.msra.mxu0 0.0
    %4461 = vmatprep.subr.mxu0 0.0
    %4462 = vmatpush1.msra.mxu0 0.0
    %4463 = vmatprep.subr.mxu0 0.0
    %4464 = vmatpush1.msra.mxu0 0.0
    %4465 = vmatprep.subr.mxu0 0.0
    %4466 = vmatpush1.msra.mxu0 0.0
    %4467 = vmatprep.subr.mxu0 0.0
    %4468 = vmatpush1.msra.mxu0 0.0
    %4469 = vmatprep.subr.mxu0 0.0
    %4470 = vmatpush1.msra.mxu0 0.0
    %4471 = vmatprep.subr.mxu0 0.0
    %4472 = vmatpush1.msra.mxu0 0.0
    %4473 = vmatprep.subr.mxu0 0.0
    %4474 = vmatpush1.msra.mxu0 0.0
    %4475 = vmatprep.subr.mxu0 0.0
    %4476 = vmatpush1.msra.mxu0 0.0
    %4477 = vmatprep.subr.mxu0 0.0
    %4478 = vmatpush1.msra.mxu0 0.0
    %4479 = vmatprep.subr.mxu0 0.0
    %4480 = vmatpush1.msra.mxu0 0.0
    %4481 = vmatprep.subr.mxu0 0.0
    %4482 = vmatpush1.msra.mxu0 0.0
    %4483 = vmatprep.subr.mxu0 0.0
    %4484 = vmatpush1.msra.mxu0 0.0
    %4485 = vmatprep.subr.mxu0 0.0
    %4486 = vmatpush1.msra.mxu0 0.0
    %4487 = vmatprep.subr.mxu0 0.0
    %4488 = vmatpush1.msra.mxu0 0.0
    %4489 = vmatprep.subr.mxu0 0.0
    %4490 = vmatpush1.msra.mxu0 0.0
    %4491 = vmatprep.subr.mxu0 0.0
    %4492 = vmatpush1.msra.mxu0 0.0
    %4493 = vmatprep.subr.mxu0 0.0
    %4494 = vmatpush1.msra.mxu0 0.0
    %4495 = vmatprep.subr.mxu0 0.0
    %4496 = vmatpush1.msra.mxu0 0.0
    %4497 = vmatprep.subr.mxu0 0.0
    %4498 = vmatpush1.msra.mxu0 0.0
    %4499 = vmatprep.subr.mxu0 0.0
    %4500 = vmatpush1.msra.mxu0 0.0
    %4501 = vmatprep.subr.mxu0 0.0
    %4502 = vmatpush1.msra.mxu0 0.0
    %4503 = vmatprep.subr.mxu0 0.0
    %4504 = vmatpush1.msra.mxu0 0.0
    %4505 = vmatprep.subr.mxu0 0.0
    %4506 = vmatpush1.msra.mxu0 0.0
    %4507 = vmatprep.subr.mxu0 0.0
    %4508 = vmatpush1.msra.mxu0 0.0
    %4509 = vmatprep.subr.mxu0 0.0
    %4510 = vmatpush1.msra.mxu0 0.0
    %4511 = vmatprep.subr.mxu0 0.0
    %4512 = vmatpush1.msra.mxu0 0.0
    %4513 = vmatprep.mubr.f32.mxu0 0.0
    %v4514 = vand.u32 %v4069, 4294901760
    %4515 = vmatmul.mubr.f32.gmra.mrb[0].mxu0 %v4514
    %v4516 = vpop.f32.mrb[0].mxu0
    %v4517 = vadd.f32 %v4445, %v4516
    %v4518 = vpop.f32.mrb[0].mxu0
    %4519 = vdwg.mxu0
    %v4520 = vmax.f32 %v4517, 0.0
    %v4522 = vsel %vm4065, %v51, 0
    %v4525 = vsel %vm2929, %v4520, 0
    %4527 = vmatprep.subr.mxu0 0.0
    %v4528 = vand.u32 %v4525, 4294901760
    %4529 = vmatpush1.msra.mxu0 %v4528
    %4530 = vmatprep.subr.mxu0 0.0
    %4531 = vmatpush1.msra.mxu0 0.0
    %4532 = vmatprep.subr.mxu0 0.0
    %4533 = vmatpush1.msra.mxu0 0.0
    %4534 = vmatprep.subr.mxu0 0.0
    %4535 = vmatpush1.msra.mxu0 0.0
    %4536 = vmatprep.subr.mxu0 0.0
    %4537 = vmatpush1.msra.mxu0 0.0
    %4538 = vmatprep.subr.mxu0 0.0
    %4539 = vmatpush1.msra.mxu0 0.0
    %4540 = vmatprep.subr.mxu0 0.0
    %4541 = vmatpush1.msra.mxu0 0.0
    %4542 = vmatprep.subr.mxu0 0.0
    %4543 = vmatpush1.msra.mxu0 0.0
    %4544 = vmatprep.subr.mxu0 0.0
    %4545 = vmatpush1.msra.mxu0 0.0
    %4546 = vmatprep.subr.mxu0 0.0
    %4547 = vmatpush1.msra.mxu0 0.0
    %4548 = vmatprep.subr.mxu0 0.0
    %4549 = vmatpush1.msra.mxu0 0.0
    %4550 = vmatprep.subr.mxu0 0.0
    %4551 = vmatpush1.msra.mxu0 0.0
    %4552 = vmatprep.subr.mxu0 0.0
    %4553 = vmatpush1.msra.mxu0 0.0
    %4554 = vmatprep.subr.mxu0 0.0
    %4555 = vmatpush1.msra.mxu0 0.0
    %4556 = vmatprep.subr.mxu0 0.0
    %4557 = vmatpush1.msra.mxu0 0.0
    %4558 = vmatprep.subr.mxu0 0.0
    %4559 = vmatpush1.msra.mxu0 0.0
    %4560 = vmatprep.subr.mxu0 0.0
    %4561 = vmatpush1.msra.mxu0 0.0
    %4562 = vmatprep.subr.mxu0 0.0
    %4563 = vmatpush1.msra.mxu0 0.0
    %4564 = vmatprep.subr.mxu0 0.0
    %4565 = vmatpush1.msra.mxu0 0.0
    %4566 = vmatprep.subr.mxu0 0.0
    %4567 = vmatpush1.msra.mxu0 0.0
    %4568 = vmatprep.subr.mxu0 0.0
    %4569 = vmatpush1.msra.mxu0 0.0
    %4570 = vmatprep.subr.mxu0 0.0
    %4571 = vmatpush1.msra.mxu0 0.0
    %4572 = vmatprep.subr.mxu0 0.0
    %4573 = vmatpush1.msra.mxu0 0.0
    %4574 = vmatprep.subr.mxu0 0.0
    %4575 = vmatpush1.msra.mxu0 0.0
    %4576 = vmatprep.subr.mxu0 0.0
    %4577 = vmatpush1.msra.mxu0 0.0
    %4578 = vmatprep.subr.mxu0 0.0
    %4579 = vmatpush1.msra.mxu0 0.0
    %4580 = vmatprep.subr.mxu0 0.0
    %4581 = vmatpush1.msra.mxu0 0.0
    %4582 = vmatprep.subr.mxu0 0.0
    %4583 = vmatpush1.msra.mxu0 0.0
    %4584 = vmatprep.subr.mxu0 0.0
    %4585 = vmatpush1.msra.mxu0 0.0
    %4586 = vmatprep.subr.mxu0 0.0
    %4587 = vmatpush1.msra.mxu0 0.0
    %4588 = vmatprep.subr.mxu0 0.0
    %4589 = vmatpush1.msra.mxu0 0.0
    %4590 = vmatprep.subr.mxu0 0.0
    %4591 = vmatpush1.msra.mxu0 0.0
    %4592 = vmatprep.mubr.f32.mxu0 0.0
    %v4593 = vand.u32 %v4522, 4294901760
    %v4594 = vsub.f32 %v4522, %v4593
    %v4595 = vand.u32 %v4594, 4294901760
    %v4596 = vsub.f32 %v4594, %v4595
    %v4597 = vand.u32 %v4596, 4294901760
    %4598 = vmatmul.mubr.f32.gmra.mrb[0].mxu0 %v4597
    %v4599 = vpop.f32.mrb[0].mxu0
    %v4600 = vadd.f32 0.0, %v4599
    %v4601 = vpop.f32.mrb[0].mxu0
    %4602 = vdwg.mxu0
    %4603 = vmatprep.subr.mxu0 0.0
    %v4604 = vand.u32 %v4525, 4294901760
    %v4605 = vsub.f32 %v4525, %v4604
    %v4606 = vand.u32 %v4605, 4294901760
    %v4607 = vsub.f32 %v4605, %v4606
    %v4608 = vand.u32 %v4607, 4294901760
    %4609 = vmatpush1.msra.mxu0 %v4608
    %4610 = vmatprep.subr.mxu0 0.0
    %4611 = vmatpush1.msra.mxu0 0.0
    %4612 = vmatprep.subr.mxu0 0.0
    %4613 = vmatpush1.msra.mxu0 0.0
    %4614 = vmatprep.subr.mxu0 0.0
    %4615 = vmatpush1.msra.mxu0 0.0
    %4616 = vmatprep.subr.mxu0 0.0
    %4617 = vmatpush1.msra.mxu0 0.0
    %4618 = vmatprep.subr.mxu0 0.0
    %4619 = vmatpush1.msra.mxu0 0.0
    %4620 = vmatprep.subr.mxu0 0.0
    %4621 = vmatpush1.msra.mxu0 0.0
    %4622 = vmatprep.subr.mxu0 0.0
    %4623 = vmatpush1.msra.mxu0 0.0
    %4624 = vmatprep.subr.mxu0 0.0
    %4625 = vmatpush1.msra.mxu0 0.0
    %4626 = vmatprep.subr.mxu0 0.0
    %4627 = vmatpush1.msra.mxu0 0.0
    %4628 = vmatprep.subr.mxu0 0.0
    %4629 = vmatpush1.msra.mxu0 0.0
    %4630 = vmatprep.subr.mxu0 0.0
    %4631 = vmatpush1.msra.mxu0 0.0
    %4632 = vmatprep.subr.mxu0 0.0
    %4633 = vmatpush1.msra.mxu0 0.0
    %4634 = vmatprep.subr.mxu0 0.0
    %4635 = vmatpush1.msra.mxu0 0.0
    %4636 = vmatprep.subr.mxu0 0.0
    %4637 = vmatpush1.msra.mxu0 0.0
    %4638 = vmatprep.subr.mxu0 0.0
    %4639 = vmatpush1.msra.mxu0 0.0
    %4640 = vmatprep.subr.mxu0 0.0
    %4641 = vmatpush1.msra.mxu0 0.0
    %4642 = vmatprep.subr.mxu0 0.0
    %4643 = vmatpush1.msra.mxu0 0.0
    %4644 = vmatprep.subr.mxu0 0.0
    %4645 = vmatpush1.msra.mxu0 0.0
    %4646 = vmatprep.subr.mxu0 0.0
    %4647 = vmatpush1.msra.mxu0 0.0
    %4648 = vmatprep.subr.mxu0 0.0
    %4649 = vmatpush1.msra.mxu0 0.0
    %4650 = vmatprep.subr.mxu0 0.0
    %4651 = vmatpush1.msra.mxu0 0.0
    %4652 = vmatprep.subr.mxu0 0.0
    %4653 = vmatpush1.msra.mxu0 0.0
    %4654 = vmatprep.subr.mxu0 0.0
    %4655 = vmatpush1.msra.mxu0 0.0
    %4656 = vmatprep.subr.mxu0 0.0
    %4657 = vmatpush1.msra.mxu0 0.0
    %4658 = vmatprep.subr.mxu0 0.0
    %4659 = vmatpush1.msra.mxu0 0.0
    %4660 = vmatprep.subr.mxu0 0.0
    %4661 = vmatpush1.msra.mxu0 0.0
    %4662 = vmatprep.subr.mxu0 0.0
    %4663 = vmatpush1.msra.mxu0 0.0
    %4664 = vmatprep.subr.mxu0 0.0
    %4665 = vmatpush1.msra.mxu0 0.0
    %4666 = vmatprep.subr.mxu0 0.0
    %4667 = vmatpush1.msra.mxu0 0.0
    %4668 = vmatprep.subr.mxu0 0.0
    %4669 = vmatpush1.msra.mxu0 0.0
    %4670 = vmatprep.subr.mxu0 0.0
    %4671 = vmatpush1.msra.mxu0 0.0
    %4672 = vmatprep.mubr.f32.mxu0 0.0
    %v4673 = vand.u32 %v4522, 4294901760
    %4674 = vmatmul.mubr.f32.gmra.mrb[0].mxu0 %v4673
    %v4675 = vpop.f32.mrb[0].mxu0
    %v4676 = vadd.f32 %v4600, %v4675
    %v4677 = vpop.f32.mrb[0].mxu0
    %4678 = vdwg.mxu0
    %4679 = vmatprep.subr.mxu0 0.0
    %v4680 = vand.u32 %v4525, 4294901760
    %v4681 = vsub.f32 %v4525, %v4680
    %4682 = vmatpush1.msra.mxu0 %v4681
    %4683 = vmatprep.subr.mxu0 0.0
    %4684 = vmatpush1.msra.mxu0 0.0
    %4685 = vmatprep.subr.mxu0 0.0
    %4686 = vmatpush1.msra.mxu0 0.0
    %4687 = vmatprep.subr.mxu0 0.0
    %4688 = vmatpush1.msra.mxu0 0.0
    %4689 = vmatprep.subr.mxu0 0.0
    %4690 = vmatpush1.msra.mxu0 0.0
    %4691 = vmatprep.subr.mxu0 0.0
    %4692 = vmatpush1.msra.mxu0 0.0
    %4693 = vmatprep.subr.mxu0 0.0
    %4694 = vmatpush1.msra.mxu0 0.0
    %4695 = vmatprep.subr.mxu0 0.0
    %4696 = vmatpush1.msra.mxu0 0.0
    %4697 = vmatprep.subr.mxu0 0.0
    %4698 = vmatpush1.msra.mxu0 0.0
    %4699 = vmatprep.subr.mxu0 0.0
    %4700 = vmatpush1.msra.mxu0 0.0
    %4701 = vmatprep.subr.mxu0 0.0
    %4702 = vmatpush1.msra.mxu0 0.0
    %4703 = vmatprep.subr.mxu0 0.0
    %4704 = vmatpush1.msra.mxu0 0.0
    %4705 = vmatprep.subr.mxu0 0.0
    %4706 = vmatpush1.msra.mxu0 0.0
    %4707 = vmatprep.subr.mxu0 0.0
    %4708 = vmatpush1.msra.mxu0 0.0
    %4709 = vmatprep.subr.mxu0 0.0
    %4710 = vmatpush1.msra.mxu0 0.0
    %4711 = vmatprep.subr.mxu0 0.0
    %4712 = vmatpush1.msra.mxu0 0.0
    %4713 = vmatprep.subr.mxu0 0.0
    %4714 = vmatpush1.msra.mxu0 0.0
    %4715 = vmatprep.subr.mxu0 0.0
    %4716 = vmatpush1.msra.mxu0 0.0
    %4717 = vmatprep.subr.mxu0 0.0
    %4718 = vmatpush1.msra.mxu0 0.0
    %4719 = vmatprep.subr.mxu0 0.0
    %4720 = vmatpush1.msra.mxu0 0.0
    %4721 = vmatprep.subr.mxu0 0.0
    %4722 = vmatpush1.msra.mxu0 0.0
    %4723 = vmatprep.subr.mxu0 0.0
    %4724 = vmatpush1.msra.mxu0 0.0
    %4725 = vmatprep.subr.mxu0 0.0
    %4726 = vmatpush1.msra.mxu0 0.0
    %4727 = vmatprep.subr.mxu0 0.0
    %4728 = vmatpush1.msra.mxu0 0.0
    %4729 = vmatprep.subr.mxu0 0.0
    %4730 = vmatpush1.msra.mxu0 0.0
    %4731 = vmatprep.subr.mxu0 0.0
    %4732 = vmatpush1.msra.mxu0 0.0
    %4733 = vmatprep.subr.mxu0 0.0
    %4734 = vmatpush1.msra.mxu0 0.0
    %4735 = vmatprep.subr.mxu0 0.0
    %4736 = vmatpush1.msra.mxu0 0.0
    %4737 = vmatprep.subr.mxu0 0.0
    %4738 = vmatpush1.msra.mxu0 0.0
    %4739 = vmatprep.subr.mxu0 0.0
    %4740 = vmatpush1.msra.mxu0 0.0
    %4741 = vmatprep.subr.mxu0 0.0
    %4742 = vmatpush1.msra.mxu0 0.0
    %4743 = vmatprep.subr.mxu0 0.0
    %4744 = vmatpush1.msra.mxu0 0.0
    %4745 = vmatprep.mubr.f32.mxu0 0.0
    %v4746 = vand.u32 %v4522, 4294901760
    %v4747 = vsub.f32 %v4522, %v4746
    %4748 = vmatmul.mubr.f32.gmra.mrb[0].mxu0 %v4747
    %v4749 = vpop.f32.mrb[0].mxu0
    %v4750 = vadd.f32 %v4676, %v4749
    %v4751 = vpop.f32.mrb[0].mxu0
    %4752 = vdwg.mxu0
    %4753 = vmatprep.subr.mxu0 0.0
    %v4754 = vand.u32 %v4525, 4294901760
    %4755 = vmatpush1.msra.mxu0 %v4754
    %4756 = vmatprep.subr.mxu0 0.0
    %4757 = vmatpush1.msra.mxu0 0.0
    %4758 = vmatprep.subr.mxu0 0.0
    %4759 = vmatpush1.msra.mxu0 0.0
    %4760 = vmatprep.subr.mxu0 0.0
    %4761 = vmatpush1.msra.mxu0 0.0
    %4762 = vmatprep.subr.mxu0 0.0
    %4763 = vmatpush1.msra.mxu0 0.0
    %4764 = vmatprep.subr.mxu0 0.0
    %4765 = vmatpush1.msra.mxu0 0.0
    %4766 = vmatprep.subr.mxu0 0.0
    %4767 = vmatpush1.msra.mxu0 0.0
    %4768 = vmatprep.subr.mxu0 0.0
    %4769 = vmatpush1.msra.mxu0 0.0
    %4770 = vmatprep.subr.mxu0 0.0
    %4771 = vmatpush1.msra.mxu0 0.0
    %4772 = vmatprep.subr.mxu0 0.0
    %4773 = vmatpush1.msra.mxu0 0.0
    %4774 = vmatprep.subr.mxu0 0.0
    %4775 = vmatpush1.msra.mxu0 0.0
    %4776 = vmatprep.subr.mxu0 0.0
    %4777 = vmatpush1.msra.mxu0 0.0
    %4778 = vmatprep.subr.mxu0 0.0
    %4779 = vmatpush1.msra.mxu0 0.0
    %4780 = vmatprep.subr.mxu0 0.0
    %4781 = vmatpush1.msra.mxu0 0.0
    %4782 = vmatprep.subr.mxu0 0.0
    %4783 = vmatpush1.msra.mxu0 0.0
    %4784 = vmatprep.subr.mxu0 0.0
    %4785 = vmatpush1.msra.mxu0 0.0
    %4786 = vmatprep.subr.mxu0 0.0
    %4787 = vmatpush1.msra.mxu0 0.0
    %4788 = vmatprep.subr.mxu0 0.0
    %4789 = vmatpush1.msra.mxu0 0.0
    %4790 = vmatprep.subr.mxu0 0.0
    %4791 = vmatpush1.msra.mxu0 0.0
    %4792 = vmatprep.subr.mxu0 0.0
    %4793 = vmatpush1.msra.mxu0 0.0
    %4794 = vmatprep.subr.mxu0 0.0
    %4795 = vmatpush1.msra.mxu0 0.0
    %4796 = vmatprep.subr.mxu0 0.0
    %4797 = vmatpush1.msra.mxu0 0.0
    %4798 = vmatprep.subr.mxu0 0.0
    %4799 = vmatpush1.msra.mxu0 0.0
    %4800 = vmatprep.subr.mxu0 0.0
    %4801 = vmatpush1.msra.mxu0 0.0
    %4802 = vmatprep.subr.mxu0 0.0
    %4803 = vmatpush1.msra.mxu0 0.0
    %4804 = vmatprep.subr.mxu0 0.0
    %4805 = vmatpush1.msra.mxu0 0.0
    %4806 = vmatprep.subr.mxu0 0.0
    %4807 = vmatpush1.msra.mxu0 0.0
    %4808 = vmatprep.subr.mxu0 0.0
    %4809 = vmatpush1.msra.mxu0 0.0
    %4810 = vmatprep.subr.mxu0 0.0
    %4811 = vmatpush1.msra.mxu0 0.0
    %4812 = vmatprep.subr.mxu0 0.0
    %4813 = vmatpush1.msra.mxu0 0.0
    %4814 = vmatprep.subr.mxu0 0.0
    %4815 = vmatpush1.msra.mxu0 0.0
    %4816 = vmatprep.subr.mxu0 0.0
    %4817 = vmatpush1.msra.mxu0 0.0
    %4818 = vmatprep.mubr.f32.mxu0 0.0
    %v4819 = vand.u32 %v4522, 4294901760
    %v4820 = vsub.f32 %v4522, %v4819
    %v4821 = vand.u32 %v4820, 4294901760
    %4822 = vmatmul.mubr.f32.gmra.mrb[0].mxu0 %v4821
    %v4823 = vpop.f32.mrb[0].mxu0
    %v4824 = vadd.f32 %v4750, %v4823
    %v4825 = vpop.f32.mrb[0].mxu0
    %4826 = vdwg.mxu0
    %4827 = vmatprep.subr.mxu0 0.0
    %v4828 = vand.u32 %v4525, 4294901760
    %v4829 = vsub.f32 %v4525, %v4828
    %v4830 = vand.u32 %v4829, 4294901760
    %4831 = vmatpush1.msra.mxu0 %v4830
    %4832 = vmatprep.subr.mxu0 0.0
    %4833 = vmatpush1.msra.mxu0 0.0
    %4834 = vmatprep.subr.mxu0 0.0
    %4835 = vmatpush1.msra.mxu0 0.0
    %4836 = vmatprep.subr.mxu0 0.0
    %4837 = vmatpush1.msra.mxu0 0.0
    %4838 = vmatprep.subr.mxu0 0.0
    %4839 = vmatpush1.msra.mxu0 0.0
    %4840 = vmatprep.subr.mxu0 0.0
    %4841 = vmatpush1.msra.mxu0 0.0
    %4842 = vmatprep.subr.mxu0 0.0
    %4843 = vmatpush1.msra.mxu0 0.0
    %4844 = vmatprep.subr.mxu0 0.0
    %4845 = vmatpush1.msra.mxu0 0.0
    %4846 = vmatprep.subr.mxu0 0.0
    %4847 = vmatpush1.msra.mxu0 0.0
    %4848 = vmatprep.subr.mxu0 0.0
    %4849 = vmatpush1.msra.mxu0 0.0
    %4850 = vmatprep.subr.mxu0 0.0
    %4851 = vmatpush1.msra.mxu0 0.0
    %4852 = vmatprep.subr.mxu0 0.0
    %4853 = vmatpush1.msra.mxu0 0.0
    %4854 = vmatprep.subr.mxu0 0.0
    %4855 = vmatpush1.msra.mxu0 0.0
    %4856 = vmatprep.subr.mxu0 0.0
    %4857 = vmatpush1.msra.mxu0 0.0
    %4858 = vmatprep.subr.mxu0 0.0
    %4859 = vmatpush1.msra.mxu0 0.0
    %4860 = vmatprep.subr.mxu0 0.0
    %4861 = vmatpush1.msra.mxu0 0.0
    %4862 = vmatprep.subr.mxu0 0.0
    %4863 = vmatpush1.msra.mxu0 0.0
    %4864 = vmatprep.subr.mxu0 0.0
    %4865 = vmatpush1.msra.mxu0 0.0
    %4866 = vmatprep.subr.mxu0 0.0
    %4867 = vmatpush1.msra.mxu0 0.0
    %4868 = vmatprep.subr.mxu0 0.0
    %4869 = vmatpush1.msra.mxu0 0.0
    %4870 = vmatprep.subr.mxu0 0.0
    %4871 = vmatpush1.msra.mxu0 0.0
    %4872 = vmatprep.subr.mxu0 0.0
    %4873 = vmatpush1.msra.mxu0 0.0
    %4874 = vmatprep.subr.mxu0 0.0
    %4875 = vmatpush1.msra.mxu0 0.0
    %4876 = vmatprep.subr.mxu0 0.0
    %4877 = vmatpush1.msra.mxu0 0.0
    %4878 = vmatprep.subr.mxu0 0.0
    %4879 = vmatpush1.msra.mxu0 0.0
    %4880 = vmatprep.subr.mxu0 0.0
    %4881 = vmatpush1.msra.mxu0 0.0
    %4882 = vmatprep.subr.mxu0 0.0
    %4883 = vmatpush1.msra.mxu0 0.0
    %4884 = vmatprep.subr.mxu0 0.0
    %4885 = vmatpush1.msra.mxu0 0.0
    %4886 = vmatprep.subr.mxu0 0.0
    %4887 = vmatpush1.msra.mxu0 0.0
    %4888 = vmatprep.subr.mxu0 0.0
    %4889 = vmatpush1.msra.mxu0 0.0
    %4890 = vmatprep.subr.mxu0 0.0
    %4891 = vmatpush1.msra.mxu0 0.0
    %4892 = vmatprep.subr.mxu0 0.0
    %4893 = vmatpush1.msra.mxu0 0.0
    %4894 = vmatprep.mubr.f32.mxu0 0.0
    %v4895 = vand.u32 %v4522, 4294901760
    %4896 = vmatmul.mubr.f32.gmra.mrb[0].mxu0 %v4895
    %v4897 = vpop.f32.mrb[0].mxu0
    %v4898 = vadd.f32 %v4824, %v4897
    %v4899 = vpop.f32.mrb[0].mxu0
    %4900 = vdwg.mxu0
    %4901 = vmatprep.subr.mxu0 0.0
    %v4902 = vand.u32 %v4525, 4294901760
    %4903 = vmatpush1.msra.mxu0 %v4902
    %4904 = vmatprep.subr.mxu0 0.0
    %4905 = vmatpush1.msra.mxu0 0.0
    %4906 = vmatprep.subr.mxu0 0.0
    %4907 = vmatpush1.msra.mxu0 0.0
    %4908 = vmatprep.subr.mxu0 0.0
    %4909 = vmatpush1.msra.mxu0 0.0
    %4910 = vmatprep.subr.mxu0 0.0
    %4911 = vmatpush1.msra.mxu0 0.0
    %4912 = vmatprep.subr.mxu0 0.0
    %4913 = vmatpush1.msra.mxu0 0.0
    %4914 = vmatprep.subr.mxu0 0.0
    %4915 = vmatpush1.msra.mxu0 0.0
    %4916 = vmatprep.subr.mxu0 0.0
    %4917 = vmatpush1.msra.mxu0 0.0
    %4918 = vmatprep.subr.mxu0 0.0
    %4919 = vmatpush1.msra.mxu0 0.0
    %4920 = vmatprep.subr.mxu0 0.0
    %4921 = vmatpush1.msra.mxu0 0.0
    %4922 = vmatprep.subr.mxu0 0.0
    %4923 = vmatpush1.msra.mxu0 0.0
    %4924 = vmatprep.subr.mxu0 0.0
    %4925 = vmatpush1.msra.mxu0 0.0
    %4926 = vmatprep.subr.mxu0 0.0
    %4927 = vmatpush1.msra.mxu0 0.0
    %4928 = vmatprep.subr.mxu0 0.0
    %4929 = vmatpush1.msra.mxu0 0.0
    %4930 = vmatprep.subr.mxu0 0.0
    %4931 = vmatpush1.msra.mxu0 0.0
    %4932 = vmatprep.subr.mxu0 0.0
    %4933 = vmatpush1.msra.mxu0 0.0
    %4934 = vmatprep.subr.mxu0 0.0
    %4935 = vmatpush1.msra.mxu0 0.0
    %4936 = vmatprep.subr.mxu0 0.0
    %4937 = vmatpush1.msra.mxu0 0.0
    %4938 = vmatprep.subr.mxu0 0.0
    %4939 = vmatpush1.msra.mxu0 0.0
    %4940 = vmatprep.subr.mxu0 0.0
    %4941 = vmatpush1.msra.mxu0 0.0
    %4942 = vmatprep.subr.mxu0 0.0
    %4943 = vmatpush1.msra.mxu0 0.0
    %4944 = vmatprep.subr.mxu0 0.0
    %4945 = vmatpush1.msra.mxu0 0.0
    %4946 = vmatprep.subr.mxu0 0.0
    %4947 = vmatpush1.msra.mxu0 0.0
    %4948 = vmatprep.subr.mxu0 0.0
    %4949 = vmatpush1.msra.mxu0 0.0
    %4950 = vmatprep.subr.mxu0 0.0
    %4951 = vmatpush1.msra.mxu0 0.0
    %4952 = vmatprep.subr.mxu0 0.0
    %4953 = vmatpush1.msra.mxu0 0.0
    %4954 = vmatprep.subr.mxu0 0.0
    %4955 = vmatpush1.msra.mxu0 0.0
    %4956 = vmatprep.subr.mxu0 0.0
    %4957 = vmatpush1.msra.mxu0 0.0
    %4958 = vmatprep.subr.mxu0 0.0
    %4959 = vmatpush1.msra.mxu0 0.0
    %4960 = vmatprep.subr.mxu0 0.0
    %4961 = vmatpush1.msra.mxu0 0.0
    %4962 = vmatprep.subr.mxu0 0.0
    %4963 = vmatpush1.msra.mxu0 0.0
    %4964 = vmatprep.subr.mxu0 0.0
    %4965 = vmatpush1.msra.mxu0 0.0
    %4966 = vmatprep.mubr.f32.mxu0 0.0
    %v4967 = vand.u32 %v4522, 4294901760
    %4968 = vmatmul.mubr.f32.gmra.mrb[0].mxu0 %v4967
    %v4969 = vpop.f32.mrb[0].mxu0
    %v4970 = vadd.f32 %v4898, %v4969
    %v4971 = vpop.f32.mrb[0].mxu0
    %4972 = vdwg.mxu0
    %4974 = vrot.lane.b32.xlu0 %v4970, 126
    %v4975 = vpop.permute.xlu0 %4974
    %v4977 = vadd.f32 %v4970, %v4975
    %v4978 = vxor.u32 %v4977, 2147483648
    %v4979 = vmul.f32 %v4978, 1.442695
    %v4980 = vpow.pop %v4979
    %v4981 = vadd.f32 %v4980, 1.0
    %v4982 = vrcp.pop %v4981
    %v4983 = vmul.f32 1.0, %v4982
    %v4985 = vsel %vm4065, %v4983, 0
    %v4988 = vsel %vm2929, %v22, 0
    %4990 = vmatprep.subr.mxu0 0.0
    %v4991 = vand.u32 %v4988, 4294901760
    %4992 = vmatpush1.msra.mxu0 %v4991
    %4993 = vmatprep.subr.mxu0 0.0
    %4994 = vmatpush1.msra.mxu0 0.0
    %4995 = vmatprep.subr.mxu0 0.0
    %4996 = vmatpush1.msra.mxu0 0.0
    %4997 = vmatprep.subr.mxu0 0.0
    %4998 = vmatpush1.msra.mxu0 0.0
    %4999 = vmatprep.subr.mxu0 0.0
    %5000 = vmatpush1.msra.mxu0 0.0
    %5001 = vmatprep.subr.mxu0 0.0
    %5002 = vmatpush1.msra.mxu0 0.0
    %5003 = vmatprep.subr.mxu0 0.0
    %5004 = vmatpush1.msra.mxu0 0.0
    %5005 = vmatprep.subr.mxu0 0.0
    %5006 = vmatpush1.msra.mxu0 0.0
    %5007 = vmatprep.subr.mxu0 0.0
    %5008 = vmatpush1.msra.mxu0 0.0
    %5009 = vmatprep.subr.mxu0 0.0
    %5010 = vmatpush1.msra.mxu0 0.0
    %5011 = vmatprep.subr.mxu0 0.0
    %5012 = vmatpush1.msra.mxu0 0.0
    %5013 = vmatprep.subr.mxu0 0.0
    %5014 = vmatpush1.msra.mxu0 0.0
    %5015 = vmatprep.subr.mxu0 0.0
    %5016 = vmatpush1.msra.mxu0 0.0
    %5017 = vmatprep.subr.mxu0 0.0
    %5018 = vmatpush1.msra.mxu0 0.0
    %5019 = vmatprep.subr.mxu0 0.0
    %5020 = vmatpush1.msra.mxu0 0.0
    %5021 = vmatprep.subr.mxu0 0.0
    %5022 = vmatpush1.msra.mxu0 0.0
    %5023 = vmatprep.subr.mxu0 0.0
    %5024 = vmatpush1.msra.mxu0 0.0
    %5025 = vmatprep.subr.mxu0 0.0
    %5026 = vmatpush1.msra.mxu0 0.0
    %5027 = vmatprep.subr.mxu0 0.0
    %5028 = vmatpush1.msra.mxu0 0.0
    %5029 = vmatprep.subr.mxu0 0.0
    %5030 = vmatpush1.msra.mxu0 0.0
    %5031 = vmatprep.subr.mxu0 0.0
    %5032 = vmatpush1.msra.mxu0 0.0
    %5033 = vmatprep.subr.mxu0 0.0
    %5034 = vmatpush1.msra.mxu0 0.0
    %5035 = vmatprep.subr.mxu0 0.0
    %5036 = vmatpush1.msra.mxu0 0.0
    %5037 = vmatprep.subr.mxu0 0.0
    %5038 = vmatpush1.msra.mxu0 0.0
    %5039 = vmatprep.subr.mxu0 0.0
    %5040 = vmatpush1.msra.mxu0 0.0
    %5041 = vmatprep.subr.mxu0 0.0
    %5042 = vmatpush1.msra.mxu0 0.0
    %5043 = vmatprep.subr.mxu0 0.0
    %5044 = vmatpush1.msra.mxu0 0.0
    %5045 = vmatprep.subr.mxu0 0.0
    %5046 = vmatpush1.msra.mxu0 0.0
    %5047 = vmatprep.subr.mxu0 0.0
    %5048 = vmatpush1.msra.mxu0 0.0
    %5049 = vmatprep.subr.mxu0 0.0
    %5050 = vmatpush1.msra.mxu0 0.0
    %5051 = vmatprep.subr.mxu0 0.0
    %5052 = vmatpush1.msra.mxu0 0.0
    %5053 = vmatprep.subr.mxu0 0.0
    %5054 = vmatpush1.msra.mxu0 0.0
    %5055 = vmatprep.mubr.f32.mxu0 0.0
    %v5056 = vand.u32 %v4985, 4294901760
    %v5057 = vsub.f32 %v4985, %v5056
    %v5058 = vand.u32 %v5057, 4294901760
    %v5059 = vsub.f32 %v5057, %v5058
    %v5060 = vand.u32 %v5059, 4294901760
    %5061 = vmatmul.mubr.f32.gmra.mrb[0].mxu0 %v5060
    %v5062 = vpop.f32.mrb[0].mxu0
    %v5063 = vadd.f32 0.0, %v5062
    %v5064 = vpop.f32.mrb[0].mxu0
    %5065 = vdwg.mxu0
    %5066 = vmatprep.subr.mxu0 0.0
    %v5067 = vand.u32 %v4988, 4294901760
    %v5068 = vsub.f32 %v4988, %v5067
    %v5069 = vand.u32 %v5068, 4294901760
    %v5070 = vsub.f32 %v5068, %v5069
    %v5071 = vand.u32 %v5070, 4294901760
    %5072 = vmatpush1.msra.mxu0 %v5071
    %5073 = vmatprep.subr.mxu0 0.0
    %5074 = vmatpush1.msra.mxu0 0.0
    %5075 = vmatprep.subr.mxu0 0.0
    %5076 = vmatpush1.msra.mxu0 0.0
    %5077 = vmatprep.subr.mxu0 0.0
    %5078 = vmatpush1.msra.mxu0 0.0
    %5079 = vmatprep.subr.mxu0 0.0
    %5080 = vmatpush1.msra.mxu0 0.0
    %5081 = vmatprep.subr.mxu0 0.0
    %5082 = vmatpush1.msra.mxu0 0.0
    %5083 = vmatprep.subr.mxu0 0.0
    %5084 = vmatpush1.msra.mxu0 0.0
    %5085 = vmatprep.subr.mxu0 0.0
    %5086 = vmatpush1.msra.mxu0 0.0
    %5087 = vmatprep.subr.mxu0 0.0
    %5088 = vmatpush1.msra.mxu0 0.0
    %5089 = vmatprep.subr.mxu0 0.0
    %5090 = vmatpush1.msra.mxu0 0.0
    %5091 = vmatprep.subr.mxu0 0.0
    %5092 = vmatpush1.msra.mxu0 0.0
    %5093 = vmatprep.subr.mxu0 0.0
    %5094 = vmatpush1.msra.mxu0 0.0
    %5095 = vmatprep.subr.mxu0 0.0
    %5096 = vmatpush1.msra.mxu0 0.0
    %5097 = vmatprep.subr.mxu0 0.0
    %5098 = vmatpush1.msra.mxu0 0.0
    %5099 = vmatprep.subr.mxu0 0.0
    %5100 = vmatpush1.msra.mxu0 0.0
    %5101 = vmatprep.subr.mxu0 0.0
    %5102 = vmatpush1.msra.mxu0 0.0
    %5103 = vmatprep.subr.mxu0 0.0
    %5104 = vmatpush1.msra.mxu0 0.0
    %5105 = vmatprep.subr.mxu0 0.0
    %5106 = vmatpush1.msra.mxu0 0.0
    %5107 = vmatprep.subr.mxu0 0.0
    %5108 = vmatpush1.msra.mxu0 0.0
    %5109 = vmatprep.subr.mxu0 0.0
    %5110 = vmatpush1.msra.mxu0 0.0
    %5111 = vmatprep.subr.mxu0 0.0
    %5112 = vmatpush1.msra.mxu0 0.0
    %5113 = vmatprep.subr.mxu0 0.0
    %5114 = vmatpush1.msra.mxu0 0.0
    %5115 = vmatprep.subr.mxu0 0.0
    %5116 = vmatpush1.msra.mxu0 0.0
    %5117 = vmatprep.subr.mxu0 0.0
    %5118 = vmatpush1.msra.mxu0 0.0
    %5119 = vmatprep.subr.mxu0 0.0
    %5120 = vmatpush1.msra.mxu0 0.0
    %5121 = vmatprep.subr.mxu0 0.0
    %5122 = vmatpush1.msra.mxu0 0.0
    %5123 = vmatprep.subr.mxu0 0.0
    %5124 = vmatpush1.msra.mxu0 0.0
    %5125 = vmatprep.subr.mxu0 0.0
    %5126 = vmatpush1.msra.mxu0 0.0
    %5127 = vmatprep.subr.mxu0 0.0
    %5128 = vmatpush1.msra.mxu0 0.0
    %5129 = vmatprep.subr.mxu0 0.0
    %5130 = vmatpush1.msra.mxu0 0.0
    %5131 = vmatprep.subr.mxu0 0.0
    %5132 = vmatpush1.msra.mxu0 0.0
    %5133 = vmatprep.subr.mxu0 0.0
    %5134 = vmatpush1.msra.mxu0 0.0
    %5135 = vmatprep.mubr.f32.mxu0 0.0
    %v5136 = vand.u32 %v4985, 4294901760
    %5137 = vmatmul.mubr.f32.gmra.mrb[0].mxu0 %v5136
    %v5138 = vpop.f32.mrb[0].mxu0
    %v5139 = vadd.f32 %v5063, %v5138
    %v5140 = vpop.f32.mrb[0].mxu0
    %5141 = vdwg.mxu0
    %5142 = vmatprep.subr.mxu0 0.0
    %v5143 = vand.u32 %v4988, 4294901760
    %v5144 = vsub.f32 %v4988, %v5143
    %5145 = vmatpush1.msra.mxu0 %v5144
    %5146 = vmatprep.subr.mxu0 0.0
    %5147 = vmatpush1.msra.mxu0 0.0
    %5148 = vmatprep.subr.mxu0 0.0
    %5149 = vmatpush1.msra.mxu0 0.0
    %5150 = vmatprep.subr.mxu0 0.0
    %5151 = vmatpush1.msra.mxu0 0.0
    %5152 = vmatprep.subr.mxu0 0.0
    %5153 = vmatpush1.msra.mxu0 0.0
    %5154 = vmatprep.subr.mxu0 0.0
    %5155 = vmatpush1.msra.mxu0 0.0
    %5156 = vmatprep.subr.mxu0 0.0
    %5157 = vmatpush1.msra.mxu0 0.0
    %5158 = vmatprep.subr.mxu0 0.0
    %5159 = vmatpush1.msra.mxu0 0.0
    %5160 = vmatprep.subr.mxu0 0.0
    %5161 = vmatpush1.msra.mxu0 0.0
    %5162 = vmatprep.subr.mxu0 0.0
    %5163 = vmatpush1.msra.mxu0 0.0
    %5164 = vmatprep.subr.mxu0 0.0
    %5165 = vmatpush1.msra.mxu0 0.0
    %5166 = vmatprep.subr.mxu0 0.0
    %5167 = vmatpush1.msra.mxu0 0.0
    %5168 = vmatprep.subr.mxu0 0.0
    %5169 = vmatpush1.msra.mxu0 0.0
    %5170 = vmatprep.subr.mxu0 0.0
    %5171 = vmatpush1.msra.mxu0 0.0
    %5172 = vmatprep.subr.mxu0 0.0
    %5173 = vmatpush1.msra.mxu0 0.0
    %5174 = vmatprep.subr.mxu0 0.0
    %5175 = vmatpush1.msra.mxu0 0.0
    %5176 = vmatprep.subr.mxu0 0.0
    %5177 = vmatpush1.msra.mxu0 0.0
    %5178 = vmatprep.subr.mxu0 0.0
    %5179 = vmatpush1.msra.mxu0 0.0
    %5180 = vmatprep.subr.mxu0 0.0
    %5181 = vmatpush1.msra.mxu0 0.0
    %5182 = vmatprep.subr.mxu0 0.0
    %5183 = vmatpush1.msra.mxu0 0.0
    %5184 = vmatprep.subr.mxu0 0.0
    %5185 = vmatpush1.msra.mxu0 0.0
    %5186 = vmatprep.subr.mxu0 0.0
    %5187 = vmatpush1.msra.mxu0 0.0
    %5188 = vmatprep.subr.mxu0 0.0
    %5189 = vmatpush1.msra.mxu0 0.0
    %5190 = vmatprep.subr.mxu0 0.0
    %5191 = vmatpush1.msra.mxu0 0.0
    %5192 = vmatprep.subr.mxu0 0.0
    %5193 = vmatpush1.msra.mxu0 0.0
    %5194 = vmatprep.subr.mxu0 0.0
    %5195 = vmatpush1.msra.mxu0 0.0
    %5196 = vmatprep.subr.mxu0 0.0
    %5197 = vmatpush1.msra.mxu0 0.0
    %5198 = vmatprep.subr.mxu0 0.0
    %5199 = vmatpush1.msra.mxu0 0.0
    %5200 = vmatprep.subr.mxu0 0.0
    %5201 = vmatpush1.msra.mxu0 0.0
    %5202 = vmatprep.subr.mxu0 0.0
    %5203 = vmatpush1.msra.mxu0 0.0
    %5204 = vmatprep.subr.mxu0 0.0
    %5205 = vmatpush1.msra.mxu0 0.0
    %5206 = vmatprep.subr.mxu0 0.0
    %5207 = vmatpush1.msra.mxu0 0.0
    %5208 = vmatprep.mubr.f32.mxu0 0.0
    %v5209 = vand.u32 %v4985, 4294901760
    %v5210 = vsub.f32 %v4985, %v5209
    %5211 = vmatmul.mubr.f32.gmra.mrb[0].mxu0 %v5210
    %v5212 = vpop.f32.mrb[0].mxu0
    %v5213 = vadd.f32 %v5139, %v5212
    %v5214 = vpop.f32.mrb[0].mxu0
    %5215 = vdwg.mxu0
    %5216 = vmatprep.subr.mxu0 0.0
    %v5217 = vand.u32 %v4988, 4294901760
    %5218 = vmatpush1.msra.mxu0 %v5217
    %5219 = vmatprep.subr.mxu0 0.0
    %5220 = vmatpush1.msra.mxu0 0.0
    %5221 = vmatprep.subr.mxu0 0.0
    %5222 = vmatpush1.msra.mxu0 0.0
    %5223 = vmatprep.subr.mxu0 0.0
    %5224 = vmatpush1.msra.mxu0 0.0
    %5225 = vmatprep.subr.mxu0 0.0
    %5226 = vmatpush1.msra.mxu0 0.0
    %5227 = vmatprep.subr.mxu0 0.0
    %5228 = vmatpush1.msra.mxu0 0.0
    %5229 = vmatprep.subr.mxu0 0.0
    %5230 = vmatpush1.msra.mxu0 0.0
    %5231 = vmatprep.subr.mxu0 0.0
    %5232 = vmatpush1.msra.mxu0 0.0
    %5233 = vmatprep.subr.mxu0 0.0
    %5234 = vmatpush1.msra.mxu0 0.0
    %5235 = vmatprep.subr.mxu0 0.0
    %5236 = vmatpush1.msra.mxu0 0.0
    %5237 = vmatprep.subr.mxu0 0.0
    %5238 = vmatpush1.msra.mxu0 0.0
    %5239 = vmatprep.subr.mxu0 0.0
    %5240 = vmatpush1.msra.mxu0 0.0
    %5241 = vmatprep.subr.mxu0 0.0
    %5242 = vmatpush1.msra.mxu0 0.0
    %5243 = vmatprep.subr.mxu0 0.0
    %5244 = vmatpush1.msra.mxu0 0.0
    %5245 = vmatprep.subr.mxu0 0.0
    %5246 = vmatpush1.msra.mxu0 0.0
    %5247 = vmatprep.subr.mxu0 0.0
    %5248 = vmatpush1.msra.mxu0 0.0
    %5249 = vmatprep.subr.mxu0 0.0
    %5250 = vmatpush1.msra.mxu0 0.0
    %5251 = vmatprep.subr.mxu0 0.0
    %5252 = vmatpush1.msra.mxu0 0.0
    %5253 = vmatprep.subr.mxu0 0.0
    %5254 = vmatpush1.msra.mxu0 0.0
    %5255 = vmatprep.subr.mxu0 0.0
    %5256 = vmatpush1.msra.mxu0 0.0
    %5257 = vmatprep.subr.mxu0 0.0
    %5258 = vmatpush1.msra.mxu0 0.0
    %5259 = vmatprep.subr.mxu0 0.0
    %5260 = vmatpush1.msra.mxu0 0.0
    %5261 = vmatprep.subr.mxu0 0.0
    %5262 = vmatpush1.msra.mxu0 0.0
    %5263 = vmatprep.subr.mxu0 0.0
    %5264 = vmatpush1.msra.mxu0 0.0
    %5265 = vmatprep.subr.mxu0 0.0
    %5266 = vmatpush1.msra.mxu0 0.0
    %5267 = vmatprep.subr.mxu0 0.0
    %5268 = vmatpush1.msra.mxu0 0.0
    %5269 = vmatprep.subr.mxu0 0.0
    %5270 = vmatpush1.msra.mxu0 0.0
    %5271 = vmatprep.subr.mxu0 0.0
    %5272 = vmatpush1.msra.mxu0 0.0
    %5273 = vmatprep.subr.mxu0 0.0
    %5274 = vmatpush1.msra.mxu0 0.0
    %5275 = vmatprep.subr.mxu0 0.0
    %5276 = vmatpush1.msra.mxu0 0.0
    %5277 = vmatprep.subr.mxu0 0.0
    %5278 = vmatpush1.msra.mxu0 0.0
    %5279 = vmatprep.subr.mxu0 0.0
    %5280 = vmatpush1.msra.mxu0 0.0
    %5281 = vmatprep.mubr.f32.mxu0 0.0
    %v5282 = vand.u32 %v4985, 4294901760
    %v5283 = vsub.f32 %v4985, %v5282
    %v5284 = vand.u32 %v5283, 4294901760
    %5285 = vmatmul.mubr.f32.gmra.mrb[0].mxu0 %v5284
    %v5286 = vpop.f32.mrb[0].mxu0
    %v5287 = vadd.f32 %v5213, %v5286
    %v5288 = vpop.f32.mrb[0].mxu0
    %5289 = vdwg.mxu0
    %5290 = vmatprep.subr.mxu0 0.0
    %v5291 = vand.u32 %v4988, 4294901760
    %v5292 = vsub.f32 %v4988, %v5291
    %v5293 = vand.u32 %v5292, 4294901760
    %5294 = vmatpush1.msra.mxu0 %v5293
    %5295 = vmatprep.subr.mxu0 0.0
    %5296 = vmatpush1.msra.mxu0 0.0
    %5297 = vmatprep.subr.mxu0 0.0
    %5298 = vmatpush1.msra.mxu0 0.0
    %5299 = vmatprep.subr.mxu0 0.0
    %5300 = vmatpush1.msra.mxu0 0.0
    %5301 = vmatprep.subr.mxu0 0.0
    %5302 = vmatpush1.msra.mxu0 0.0
    %5303 = vmatprep.subr.mxu0 0.0
    %5304 = vmatpush1.msra.mxu0 0.0
    %5305 = vmatprep.subr.mxu0 0.0
    %5306 = vmatpush1.msra.mxu0 0.0
    %5307 = vmatprep.subr.mxu0 0.0
    %5308 = vmatpush1.msra.mxu0 0.0
    %5309 = vmatprep.subr.mxu0 0.0
    %5310 = vmatpush1.msra.mxu0 0.0
    %5311 = vmatprep.subr.mxu0 0.0
    %5312 = vmatpush1.msra.mxu0 0.0
    %5313 = vmatprep.subr.mxu0 0.0
    %5314 = vmatpush1.msra.mxu0 0.0
    %5315 = vmatprep.subr.mxu0 0.0
    %5316 = vmatpush1.msra.mxu0 0.0
    %5317 = vmatprep.subr.mxu0 0.0
    %5318 = vmatpush1.msra.mxu0 0.0
    %5319 = vmatprep.subr.mxu0 0.0
    %5320 = vmatpush1.msra.mxu0 0.0
    %5321 = vmatprep.subr.mxu0 0.0
    %5322 = vmatpush1.msra.mxu0 0.0
    %5323 = vmatprep.subr.mxu0 0.0
    %5324 = vmatpush1.msra.mxu0 0.0
    %5325 = vmatprep.subr.mxu0 0.0
    %5326 = vmatpush1.msra.mxu0 0.0
    %5327 = vmatprep.subr.mxu0 0.0
    %5328 = vmatpush1.msra.mxu0 0.0
    %5329 = vmatprep.subr.mxu0 0.0
    %5330 = vmatpush1.msra.mxu0 0.0
    %5331 = vmatprep.subr.mxu0 0.0
    %5332 = vmatpush1.msra.mxu0 0.0
    %5333 = vmatprep.subr.mxu0 0.0
    %5334 = vmatpush1.msra.mxu0 0.0
    %5335 = vmatprep.subr.mxu0 0.0
    %5336 = vmatpush1.msra.mxu0 0.0
    %5337 = vmatprep.subr.mxu0 0.0
    %5338 = vmatpush1.msra.mxu0 0.0
    %5339 = vmatprep.subr.mxu0 0.0
    %5340 = vmatpush1.msra.mxu0 0.0
    %5341 = vmatprep.subr.mxu0 0.0
    %5342 = vmatpush1.msra.mxu0 0.0
    %5343 = vmatprep.subr.mxu0 0.0
    %5344 = vmatpush1.msra.mxu0 0.0
    %5345 = vmatprep.subr.mxu0 0.0
    %5346 = vmatpush1.msra.mxu0 0.0
    %5347 = vmatprep.subr.mxu0 0.0
    %5348 = vmatpush1.msra.mxu0 0.0
    %5349 = vmatprep.subr.mxu0 0.0
    %5350 = vmatpush1.msra.mxu0 0.0
    %5351 = vmatprep.subr.mxu0 0.0
    %5352 = vmatpush1.msra.mxu0 0.0
    %5353 = vmatprep.subr.mxu0 0.0
    %5354 = vmatpush1.msra.mxu0 0.0
    %5355 = vmatprep.subr.mxu0 0.0
    %5356 = vmatpush1.msra.mxu0 0.0
    %5357 = vmatprep.mubr.f32.mxu0 0.0
    %v5358 = vand.u32 %v4985, 4294901760
    %5359 = vmatmul.mubr.f32.gmra.mrb[0].mxu0 %v5358
    %v5360 = vpop.f32.mrb[0].mxu0
    %v5361 = vadd.f32 %v5287, %v5360
    %v5362 = vpop.f32.mrb[0].mxu0
    %5363 = vdwg.mxu0
    %5364 = vmatprep.subr.mxu0 0.0
    %v5365 = vand.u32 %v4988, 4294901760
    %5366 = vmatpush1.msra.mxu0 %v5365
    %5367 = vmatprep.subr.mxu0 0.0
    %5368 = vmatpush1.msra.mxu0 0.0
    %5369 = vmatprep.subr.mxu0 0.0
    %5370 = vmatpush1.msra.mxu0 0.0
    %5371 = vmatprep.subr.mxu0 0.0
    %5372 = vmatpush1.msra.mxu0 0.0
    %5373 = vmatprep.subr.mxu0 0.0
    %5374 = vmatpush1.msra.mxu0 0.0
    %5375 = vmatprep.subr.mxu0 0.0
    %5376 = vmatpush1.msra.mxu0 0.0
    %5377 = vmatprep.subr.mxu0 0.0
    %5378 = vmatpush1.msra.mxu0 0.0
    %5379 = vmatprep.subr.mxu0 0.0
    %5380 = vmatpush1.msra.mxu0 0.0
    %5381 = vmatprep.subr.mxu0 0.0
    %5382 = vmatpush1.msra.mxu0 0.0
    %5383 = vmatprep.subr.mxu0 0.0
    %5384 = vmatpush1.msra.mxu0 0.0
    %5385 = vmatprep.subr.mxu0 0.0
    %5386 = vmatpush1.msra.mxu0 0.0
    %5387 = vmatprep.subr.mxu0 0.0
    %5388 = vmatpush1.msra.mxu0 0.0
    %5389 = vmatprep.subr.mxu0 0.0
    %5390 = vmatpush1.msra.mxu0 0.0
    %5391 = vmatprep.subr.mxu0 0.0
    %5392 = vmatpush1.msra.mxu0 0.0
    %5393 = vmatprep.subr.mxu0 0.0
    %5394 = vmatpush1.msra.mxu0 0.0
    %5395 = vmatprep.subr.mxu0 0.0
    %5396 = vmatpush1.msra.mxu0 0.0
    %5397 = vmatprep.subr.mxu0 0.0
    %5398 = vmatpush1.msra.mxu0 0.0
    %5399 = vmatprep.subr.mxu0 0.0
    %5400 = vmatpush1.msra.mxu0 0.0
    %5401 = vmatprep.subr.mxu0 0.0
    %5402 = vmatpush1.msra.mxu0 0.0
    %5403 = vmatprep.subr.mxu0 0.0
    %5404 = vmatpush1.msra.mxu0 0.0
    %5405 = vmatprep.subr.mxu0 0.0
    %5406 = vmatpush1.msra.mxu0 0.0
    %5407 = vmatprep.subr.mxu0 0.0
    %5408 = vmatpush1.msra.mxu0 0.0
    %5409 = vmatprep.subr.mxu0 0.0
    %5410 = vmatpush1.msra.mxu0 0.0
    %5411 = vmatprep.subr.mxu0 0.0
    %5412 = vmatpush1.msra.mxu0 0.0
    %5413 = vmatprep.subr.mxu0 0.0
    %5414 = vmatpush1.msra.mxu0 0.0
    %5415 = vmatprep.subr.mxu0 0.0
    %5416 = vmatpush1.msra.mxu0 0.0
    %5417 = vmatprep.subr.mxu0 0.0
    %5418 = vmatpush1.msra.mxu0 0.0
    %5419 = vmatprep.subr.mxu0 0.0
    %5420 = vmatpush1.msra.mxu0 0.0
    %5421 = vmatprep.subr.mxu0 0.0
    %5422 = vmatpush1.msra.mxu0 0.0
    %5423 = vmatprep.subr.mxu0 0.0
    %5424 = vmatpush1.msra.mxu0 0.0
    %5425 = vmatprep.subr.mxu0 0.0
    %5426 = vmatpush1.msra.mxu0 0.0
    %5427 = vmatprep.subr.mxu0 0.0
    %5428 = vmatpush1.msra.mxu0 0.0
    %5429 = vmatprep.mubr.f32.mxu0 0.0
    %v5430 = vand.u32 %v4985, 4294901760
    %5431 = vmatmul.mubr.f32.gmra.mrb[0].mxu0 %v5430
    %v5432 = vpop.f32.mrb[0].mxu0
    %v5433 = vadd.f32 %v5361, %v5432
    %v5434 = vpop.f32.mrb[0].mxu0
    %5435 = vdwg.mxu0
    %v5436 = vmul.f32 %v5433, %v3397
    %v5437 = vadd.f32 %v5436, %v18
    %v5438 = vld [vmem:[%s1 + $0x4f] sm:$0x1]
    %v5439 = vld [vmem:[%s1 + $0x50] sm:$0x1]
    %5440 = vrot.lane.b32.xlu0 %v5437, 1
    %v5441 = vpop.permute.xlu0 %5440
    %v5442 = vmul.f32 %v5441, %v59
    %5443 = vrot.lane.b32.xlu0 %v5437, 127
    %v5444 = vpop.permute.xlu0 %5443
    %v5445 = vmul.f32 %v5444, %v69
    %v5447 = vrot.slane %v5437, 4
    %v5449 = vsel %vm74, %v5442, %v5447
    %5451 = vset.pattern.permute.xlu0 0
    %5452 = vperm.xlu0 %5451, %v5439
    %v5453 = vpop.permute.xlu0 %5452
    %vm5455 = vcmask 97280
    %v5457 = vsel %vm5455, %v5438, 0
    %v5460 = vsel %vm74, %v5445, 0
    %5462 = vmatprep.subr.mxu0 0.0
    %v5463 = vand.u32 %v5449, 4294901760
    %5464 = vmatpush1.msra.mxu0 %v5463
    %5465 = vmatprep.subr.mxu0 0.0
    %v5466 = vand.u32 %v5460, 4294901760
    %5467 = vmatpush1.msra.mxu0 %v5466
    %5468 = vmatprep.subr.mxu0 0.0
    %5469 = vmatpush1.msra.mxu0 0.0
    %5470 = vmatprep.subr.mxu0 0.0
    %5471 = vmatpush1.msra.mxu0 0.0
    %5472 = vmatprep.subr.mxu0 0.0
    %5473 = vmatpush1.msra.mxu0 0.0
    %5474 = vmatprep.subr.mxu0 0.0
    %5475 = vmatpush1.msra.mxu0 0.0
    %5476 = vmatprep.subr.mxu0 0.0
    %5477 = vmatpush1.msra.mxu0 0.0
    %5478 = vmatprep.subr.mxu0 0.0
    %5479 = vmatpush1.msra.mxu0 0.0
    %5480 = vmatprep.subr.mxu0 0.0
    %5481 = vmatpush1.msra.mxu0 0.0
    %5482 = vmatprep.subr.mxu0 0.0
    %5483 = vmatpush1.msra.mxu0 0.0
    %5484 = vmatprep.subr.mxu0 0.0
    %5485 = vmatpush1.msra.mxu0 0.0
    %5486 = vmatprep.subr.mxu0 0.0
    %5487 = vmatpush1.msra.mxu0 0.0
    %5488 = vmatprep.subr.mxu0 0.0
    %5489 = vmatpush1.msra.mxu0 0.0
    %5490 = vmatprep.subr.mxu0 0.0
    %5491 = vmatpush1.msra.mxu0 0.0
    %5492 = vmatprep.subr.mxu0 0.0
    %5493 = vmatpush1.msra.mxu0 0.0
    %5494 = vmatprep.subr.mxu0 0.0
    %5495 = vmatpush1.msra.mxu0 0.0
    %5496 = vmatprep.subr.mxu0 0.0
    %5497 = vmatpush1.msra.mxu0 0.0
    %5498 = vmatprep.subr.mxu0 0.0
    %5499 = vmatpush1.msra.mxu0 0.0
    %5500 = vmatprep.subr.mxu0 0.0
    %5501 = vmatpush1.msra.mxu0 0.0
    %5502 = vmatprep.subr.mxu0 0.0
    %5503 = vmatpush1.msra.mxu0 0.0
    %5504 = vmatprep.subr.mxu0 0.0
    %5505 = vmatpush1.msra.mxu0 0.0
    %5506 = vmatprep.subr.mxu0 0.0
    %5507 = vmatpush1.msra.mxu0 0.0
    %5508 = vmatprep.subr.mxu0 0.0
    %5509 = vmatpush1.msra.mxu0 0.0
    %5510 = vmatprep.subr.mxu0 0.0
    %5511 = vmatpush1.msra.mxu0 0.0
    %5512 = vmatprep.subr.mxu0 0.0
    %5513 = vmatpush1.msra.mxu0 0.0
    %5514 = vmatprep.subr.mxu0 0.0
    %5515 = vmatpush1.msra.mxu0 0.0
    %5516 = vmatprep.subr.mxu0 0.0
    %5517 = vmatpush1.msra.mxu0 0.0
    %5518 = vmatprep.subr.mxu0 0.0
    %5519 = vmatpush1.msra.mxu0 0.0
    %5520 = vmatprep.subr.mxu0 0.0
    %5521 = vmatpush1.msra.mxu0 0.0
    %5522 = vmatprep.subr.mxu0 0.0
    %5523 = vmatpush1.msra.mxu0 0.0
    %5524 = vmatprep.subr.mxu0 0.0
    %5525 = vmatpush1.msra.mxu0 0.0
    %5526 = vmatprep.subr.mxu0 0.0
    %5527 = vmatpush1.msra.mxu0 0.0
    %5528 = vmatprep.mubr.f32.mxu0 0.0
    %v5529 = vand.u32 %v5457, 4294901760
    %v5530 = vsub.f32 %v5457, %v5529
    %v5531 = vand.u32 %v5530, 4294901760
    %v5532 = vsub.f32 %v5530, %v5531
    %v5533 = vand.u32 %v5532, 4294901760
    %5534 = vmatmul.mubr.f32.gmra.mrb[0].mxu0 %v5533
    %v5535 = vpop.f32.mrb[0].mxu0
    %v5536 = vadd.f32 %v5453, %v5535
    %v5537 = vpop.f32.mrb[0].mxu0
    %5538 = vdwg.mxu0
    %5539 = vmatprep.subr.mxu0 0.0
    %v5540 = vand.u32 %v5449, 4294901760
    %v5541 = vsub.f32 %v5449, %v5540
    %v5542 = vand.u32 %v5541, 4294901760
    %v5543 = vsub.f32 %v5541, %v5542
    %v5544 = vand.u32 %v5543, 4294901760
    %5545 = vmatpush1.msra.mxu0 %v5544
    %5546 = vmatprep.subr.mxu0 0.0
    %v5547 = vand.u32 %v5460, 4294901760
    %v5548 = vsub.f32 %v5460, %v5547
    %v5549 = vand.u32 %v5548, 4294901760
    %v5550 = vsub.f32 %v5548, %v5549
    %v5551 = vand.u32 %v5550, 4294901760
    %5552 = vmatpush1.msra.mxu0 %v5551
    %5553 = vmatprep.subr.mxu0 0.0
    %5554 = vmatpush1.msra.mxu0 0.0
    %5555 = vmatprep.subr.mxu0 0.0
    %5556 = vmatpush1.msra.mxu0 0.0
    %5557 = vmatprep.subr.mxu0 0.0
    %5558 = vmatpush1.msra.mxu0 0.0
    %5559 = vmatprep.subr.mxu0 0.0
    %5560 = vmatpush1.msra.mxu0 0.0
    %5561 = vmatprep.subr.mxu0 0.0
    %5562 = vmatpush1.msra.mxu0 0.0
    %5563 = vmatprep.subr.mxu0 0.0
    %5564 = vmatpush1.msra.mxu0 0.0
    %5565 = vmatprep.subr.mxu0 0.0
    %5566 = vmatpush1.msra.mxu0 0.0
    %5567 = vmatprep.subr.mxu0 0.0
    %5568 = vmatpush1.msra.mxu0 0.0
    %5569 = vmatprep.subr.mxu0 0.0
    %5570 = vmatpush1.msra.mxu0 0.0
    %5571 = vmatprep.subr.mxu0 0.0
    %5572 = vmatpush1.msra.mxu0 0.0
    %5573 = vmatprep.subr.mxu0 0.0
    %5574 = vmatpush1.msra.mxu0 0.0
    %5575 = vmatprep.subr.mxu0 0.0
    %5576 = vmatpush1.msra.mxu0 0.0
    %5577 = vmatprep.subr.mxu0 0.0
    %5578 = vmatpush1.msra.mxu0 0.0
    %5579 = vmatprep.subr.mxu0 0.0
    %5580 = vmatpush1.msra.mxu0 0.0
    %5581 = vmatprep.subr.mxu0 0.0
    %5582 = vmatpush1.msra.mxu0 0.0
    %5583 = vmatprep.subr.mxu0 0.0
    %5584 = vmatpush1.msra.mxu0 0.0
    %5585 = vmatprep.subr.mxu0 0.0
    %5586 = vmatpush1.msra.mxu0 0.0
    %5587 = vmatprep.subr.mxu0 0.0
    %5588 = vmatpush1.msra.mxu0 0.0
    %5589 = vmatprep.subr.mxu0 0.0
    %5590 = vmatpush1.msra.mxu0 0.0
    %5591 = vmatprep.subr.mxu0 0.0
    %5592 = vmatpush1.msra.mxu0 0.0
    %5593 = vmatprep.subr.mxu0 0.0
    %5594 = vmatpush1.msra.mxu0 0.0
    %5595 = vmatprep.subr.mxu0 0.0
    %5596 = vmatpush1.msra.mxu0 0.0
    %5597 = vmatprep.subr.mxu0 0.0
    %5598 = vmatpush1.msra.mxu0 0.0
    %5599 = vmatprep.subr.mxu0 0.0
    %5600 = vmatpush1.msra.mxu0 0.0
    %5601 = vmatprep.subr.mxu0 0.0
    %5602 = vmatpush1.msra.mxu0 0.0
    %5603 = vmatprep.subr.mxu0 0.0
    %5604 = vmatpush1.msra.mxu0 0.0
    %5605 = vmatprep.subr.mxu0 0.0
    %5606 = vmatpush1.msra.mxu0 0.0
    %5607 = vmatprep.subr.mxu0 0.0
    %5608 = vmatpush1.msra.mxu0 0.0
    %5609 = vmatprep.subr.mxu0 0.0
    %5610 = vmatpush1.msra.mxu0 0.0
    %5611 = vmatprep.subr.mxu0 0.0
    %5612 = vmatpush1.msra.mxu0 0.0
    %5613 = vmatprep.mubr.f32.mxu0 0.0
    %v5614 = vand.u32 %v5457, 4294901760
    %5615 = vmatmul.mubr.f32.gmra.mrb[0].mxu0 %v5614
    %v5616 = vpop.f32.mrb[0].mxu0
    %v5617 = vadd.f32 %v5536, %v5616
    %v5618 = vpop.f32.mrb[0].mxu0
    %5619 = vdwg.mxu0
    %5620 = vmatprep.subr.mxu0 0.0
    %v5621 = vand.u32 %v5449, 4294901760
    %v5622 = vsub.f32 %v5449, %v5621
    %5623 = vmatpush1.msra.mxu0 %v5622
    %5624 = vmatprep.subr.mxu0 0.0
    %v5625 = vand.u32 %v5460, 4294901760
    %v5626 = vsub.f32 %v5460, %v5625
    %5627 = vmatpush1.msra.mxu0 %v5626
    %5628 = vmatprep.subr.mxu0 0.0
    %5629 = vmatpush1.msra.mxu0 0.0
    %5630 = vmatprep.subr.mxu0 0.0
    %5631 = vmatpush1.msra.mxu0 0.0
    %5632 = vmatprep.subr.mxu0 0.0
    %5633 = vmatpush1.msra.mxu0 0.0
    %5634 = vmatprep.subr.mxu0 0.0
    %5635 = vmatpush1.msra.mxu0 0.0
    %5636 = vmatprep.subr.mxu0 0.0
    %5637 = vmatpush1.msra.mxu0 0.0
    %5638 = vmatprep.subr.mxu0 0.0
    %5639 = vmatpush1.msra.mxu0 0.0
    %5640 = vmatprep.subr.mxu0 0.0
    %5641 = vmatpush1.msra.mxu0 0.0
    %5642 = vmatprep.subr.mxu0 0.0
    %5643 = vmatpush1.msra.mxu0 0.0
    %5644 = vmatprep.subr.mxu0 0.0
    %5645 = vmatpush1.msra.mxu0 0.0
    %5646 = vmatprep.subr.mxu0 0.0
    %5647 = vmatpush1.msra.mxu0 0.0
    %5648 = vmatprep.subr.mxu0 0.0
    %5649 = vmatpush1.msra.mxu0 0.0
    %5650 = vmatprep.subr.mxu0 0.0
    %5651 = vmatpush1.msra.mxu0 0.0
    %5652 = vmatprep.subr.mxu0 0.0
    %5653 = vmatpush1.msra.mxu0 0.0
    %5654 = vmatprep.subr.mxu0 0.0
    %5655 = vmatpush1.msra.mxu0 0.0
    %5656 = vmatprep.subr.mxu0 0.0
    %5657 = vmatpush1.msra.mxu0 0.0
    %5658 = vmatprep.subr.mxu0 0.0
    %5659 = vmatpush1.msra.mxu0 0.0
    %5660 = vmatprep.subr.mxu0 0.0
    %5661 = vmatpush1.msra.mxu0 0.0
    %5662 = vmatprep.subr.mxu0 0.0
    %5663 = vmatpush1.msra.mxu0 0.0
    %5664 = vmatprep.subr.mxu0 0.0
    %5665 = vmatpush1.msra.mxu0 0.0
    %5666 = vmatprep.subr.mxu0 0.0
    %5667 = vmatpush1.msra.mxu0 0.0
    %5668 = vmatprep.subr.mxu0 0.0
    %5669 = vmatpush1.msra.mxu0 0.0
    %5670 = vmatprep.subr.mxu0 0.0
    %5671 = vmatpush1.msra.mxu0 0.0
    %5672 = vmatprep.subr.mxu0 0.0
    %5673 = vmatpush1.msra.mxu0 0.0
    %5674 = vmatprep.subr.mxu0 0.0
    %5675 = vmatpush1.msra.mxu0 0.0
    %5676 = vmatprep.subr.mxu0 0.0
    %5677 = vmatpush1.msra.mxu0 0.0
    %5678 = vmatprep.subr.mxu0 0.0
    %5679 = vmatpush1.msra.mxu0 0.0
    %5680 = vmatprep.subr.mxu0 0.0
    %5681 = vmatpush1.msra.mxu0 0.0
    %5682 = vmatprep.subr.mxu0 0.0
    %5683 = vmatpush1.msra.mxu0 0.0
    %5684 = vmatprep.subr.mxu0 0.0
    %5685 = vmatpush1.msra.mxu0 0.0
    %5686 = vmatprep.subr.mxu0 0.0
    %5687 = vmatpush1.msra.mxu0 0.0
    %5688 = vmatprep.mubr.f32.mxu0 0.0
    %v5689 = vand.u32 %v5457, 4294901760
    %v5690 = vsub.f32 %v5457, %v5689
    %5691 = vmatmul.mubr.f32.gmra.mrb[0].mxu0 %v5690
    %v5692 = vpop.f32.mrb[0].mxu0
    %v5693 = vadd.f32 %v5617, %v5692
    %v5694 = vpop.f32.mrb[0].mxu0
    %5695 = vdwg.mxu0
    %5696 = vmatprep.subr.mxu0 0.0
    %v5697 = vand.u32 %v5449, 4294901760
    %5698 = vmatpush1.msra.mxu0 %v5697
    %5699 = vmatprep.subr.mxu0 0.0
    %v5700 = vand.u32 %v5460, 4294901760
    %5701 = vmatpush1.msra.mxu0 %v5700
    %5702 = vmatprep.subr.mxu0 0.0
    %5703 = vmatpush1.msra.mxu0 0.0
    %5704 = vmatprep.subr.mxu0 0.0
    %5705 = vmatpush1.msra.mxu0 0.0
    %5706 = vmatprep.subr.mxu0 0.0
    %5707 = vmatpush1.msra.mxu0 0.0
    %5708 = vmatprep.subr.mxu0 0.0
    %5709 = vmatpush1.msra.mxu0 0.0
    %5710 = vmatprep.subr.mxu0 0.0
    %5711 = vmatpush1.msra.mxu0 0.0
    %5712 = vmatprep.subr.mxu0 0.0
    %5713 = vmatpush1.msra.mxu0 0.0
    %5714 = vmatprep.subr.mxu0 0.0
    %5715 = vmatpush1.msra.mxu0 0.0
    %5716 = vmatprep.subr.mxu0 0.0
    %5717 = vmatpush1.msra.mxu0 0.0
    %5718 = vmatprep.subr.mxu0 0.0
    %5719 = vmatpush1.msra.mxu0 0.0
    %5720 = vmatprep.subr.mxu0 0.0
    %5721 = vmatpush1.msra.mxu0 0.0
    %5722 = vmatprep.subr.mxu0 0.0
    %5723 = vmatpush1.msra.mxu0 0.0
    %5724 = vmatprep.subr.mxu0 0.0
    %5725 = vmatpush1.msra.mxu0 0.0
    %5726 = vmatprep.subr.mxu0 0.0
    %5727 = vmatpush1.msra.mxu0 0.0
    %5728 = vmatprep.subr.mxu0 0.0
    %5729 = vmatpush1.msra.mxu0 0.0
    %5730 = vmatprep.subr.mxu0 0.0
    %5731 = vmatpush1.msra.mxu0 0.0
    %5732 = vmatprep.subr.mxu0 0.0
    %5733 = vmatpush1.msra.mxu0 0.0
    %5734 = vmatprep.subr.mxu0 0.0
    %5735 = vmatpush1.msra.mxu0 0.0
    %5736 = vmatprep.subr.mxu0 0.0
    %5737 = vmatpush1.msra.mxu0 0.0
    %5738 = vmatprep.subr.mxu0 0.0
    %5739 = vmatpush1.msra.mxu0 0.0
    %5740 = vmatprep.subr.mxu0 0.0
    %5741 = vmatpush1.msra.mxu0 0.0
    %5742 = vmatprep.subr.mxu0 0.0
    %5743 = vmatpush1.msra.mxu0 0.0
    %5744 = vmatprep.subr.mxu0 0.0
    %5745 = vmatpush1.msra.mxu0 0.0
    %5746 = vmatprep.subr.mxu0 0.0
    %5747 = vmatpush1.msra.mxu0 0.0
    %5748 = vmatprep.subr.mxu0 0.0
    %5749 = vmatpush1.msra.mxu0 0.0
    %5750 = vmatprep.subr.mxu0 0.0
    %5751 = vmatpush1.msra.mxu0 0.0
    %5752 = vmatprep.subr.mxu0 0.0
    %5753 = vmatpush1.msra.mxu0 0.0
    %5754 = vmatprep.subr.mxu0 0.0
    %5755 = vmatpush1.msra.mxu0 0.0
    %5756 = vmatprep.subr.mxu0 0.0
    %5757 = vmatpush1.msra.mxu0 0.0
    %5758 = vmatprep.subr.mxu0 0.0
    %5759 = vmatpush1.msra.mxu0 0.0
    %5760 = vmatprep.subr.mxu0 0.0
    %5761 = vmatpush1.msra.mxu0 0.0
    %5762 = vmatprep.mubr.f32.mxu0 0.0
    %v5763 = vand.u32 %v5457, 4294901760
    %v5764 = vsub.f32 %v5457, %v5763
    %v5765 = vand.u32 %v5764, 4294901760
    %5766 = vmatmul.mubr.f32.gmra.mrb[0].mxu0 %v5765
    %v5767 = vpop.f32.mrb[0].mxu0
    %v5768 = vadd.f32 %v5693, %v5767
    %v5769 = vpop.f32.mrb[0].mxu0
    %5770 = vdwg.mxu0
    %5771 = vmatprep.subr.mxu0 0.0
    %v5772 = vand.u32 %v5449, 4294901760
    %v5773 = vsub.f32 %v5449, %v5772
    %v5774 = vand.u32 %v5773, 4294901760
    %5775 = vmatpush1.msra.mxu0 %v5774
    %5776 = vmatprep.subr.mxu0 0.0
    %v5777 = vand.u32 %v5460, 4294901760
    %v5778 = vsub.f32 %v5460, %v5777
    %v5779 = vand.u32 %v5778, 4294901760
    %5780 = vmatpush1.msra.mxu0 %v5779
    %5781 = vmatprep.subr.mxu0 0.0
    %5782 = vmatpush1.msra.mxu0 0.0
    %5783 = vmatprep.subr.mxu0 0.0
    %5784 = vmatpush1.msra.mxu0 0.0
    %5785 = vmatprep.subr.mxu0 0.0
    %5786 = vmatpush1.msra.mxu0 0.0
    %5787 = vmatprep.subr.mxu0 0.0
    %5788 = vmatpush1.msra.mxu0 0.0
    %5789 = vmatprep.subr.mxu0 0.0
    %5790 = vmatpush1.msra.mxu0 0.0
    %5791 = vmatprep.subr.mxu0 0.0
    %5792 = vmatpush1.msra.mxu0 0.0
    %5793 = vmatprep.subr.mxu0 0.0
    %5794 = vmatpush1.msra.mxu0 0.0
    %5795 = vmatprep.subr.mxu0 0.0
    %5796 = vmatpush1.msra.mxu0 0.0
    %5797 = vmatprep.subr.mxu0 0.0
    %5798 = vmatpush1.msra.mxu0 0.0
    %5799 = vmatprep.subr.mxu0 0.0
    %5800 = vmatpush1.msra.mxu0 0.0
    %5801 = vmatprep.subr.mxu0 0.0
    %5802 = vmatpush1.msra.mxu0 0.0
    %5803 = vmatprep.subr.mxu0 0.0
    %5804 = vmatpush1.msra.mxu0 0.0
    %5805 = vmatprep.subr.mxu0 0.0
    %5806 = vmatpush1.msra.mxu0 0.0
    %5807 = vmatprep.subr.mxu0 0.0
    %5808 = vmatpush1.msra.mxu0 0.0
    %5809 = vmatprep.subr.mxu0 0.0
    %5810 = vmatpush1.msra.mxu0 0.0
    %5811 = vmatprep.subr.mxu0 0.0
    %5812 = vmatpush1.msra.mxu0 0.0
    %5813 = vmatprep.subr.mxu0 0.0
    %5814 = vmatpush1.msra.mxu0 0.0
    %5815 = vmatprep.subr.mxu0 0.0
    %5816 = vmatpush1.msra.mxu0 0.0
    %5817 = vmatprep.subr.mxu0 0.0
    %5818 = vmatpush1.msra.mxu0 0.0
    %5819 = vmatprep.subr.mxu0 0.0
    %5820 = vmatpush1.msra.mxu0 0.0
    %5821 = vmatprep.subr.mxu0 0.0
    %5822 = vmatpush1.msra.mxu0 0.0
    %5823 = vmatprep.subr.mxu0 0.0
    %5824 = vmatpush1.msra.mxu0 0.0
    %5825 = vmatprep.subr.mxu0 0.0
    %5826 = vmatpush1.msra.mxu0 0.0
    %5827 = vmatprep.subr.mxu0 0.0
    %5828 = vmatpush1.msra.mxu0 0.0
    %5829 = vmatprep.subr.mxu0 0.0
    %5830 = vmatpush1.msra.mxu0 0.0
    %5831 = vmatprep.subr.mxu0 0.0
    %5832 = vmatpush1.msra.mxu0 0.0
    %5833 = vmatprep.subr.mxu0 0.0
    %5834 = vmatpush1.msra.mxu0 0.0
    %5835 = vmatprep.subr.mxu0 0.0
    %5836 = vmatpush1.msra.mxu0 0.0
    %5837 = vmatprep.subr.mxu0 0.0
    %5838 = vmatpush1.msra.mxu0 0.0
    %5839 = vmatprep.subr.mxu0 0.0
    %5840 = vmatpush1.msra.mxu0 0.0
    %5841 = vmatprep.mubr.f32.mxu0 0.0
    %v5842 = vand.u32 %v5457, 4294901760
    %5843 = vmatmul.mubr.f32.gmra.mrb[0].mxu0 %v5842
    %v5844 = vpop.f32.mrb[0].mxu0
    %v5845 = vadd.f32 %v5768, %v5844
    %v5846 = vpop.f32.mrb[0].mxu0
    %5847 = vdwg.mxu0
    %5848 = vmatprep.subr.mxu0 0.0
    %v5849 = vand.u32 %v5449, 4294901760
    %5850 = vmatpush1.msra.mxu0 %v5849
    %5851 = vmatprep.subr.mxu0 0.0
    %v5852 = vand.u32 %v5460, 4294901760
    %5853 = vmatpush1.msra.mxu0 %v5852
    %5854 = vmatprep.subr.mxu0 0.0
    %5855 = vmatpush1.msra.mxu0 0.0
    %5856 = vmatprep.subr.mxu0 0.0
    %5857 = vmatpush1.msra.mxu0 0.0
    %5858 = vmatprep.subr.mxu0 0.0
    %5859 = vmatpush1.msra.mxu0 0.0
    %5860 = vmatprep.subr.mxu0 0.0
    %5861 = vmatpush1.msra.mxu0 0.0
    %5862 = vmatprep.subr.mxu0 0.0
    %5863 = vmatpush1.msra.mxu0 0.0
    %5864 = vmatprep.subr.mxu0 0.0
    %5865 = vmatpush1.msra.mxu0 0.0
    %5866 = vmatprep.subr.mxu0 0.0
    %5867 = vmatpush1.msra.mxu0 0.0
    %5868 = vmatprep.subr.mxu0 0.0
    %5869 = vmatpush1.msra.mxu0 0.0
    %5870 = vmatprep.subr.mxu0 0.0
    %5871 = vmatpush1.msra.mxu0 0.0
    %5872 = vmatprep.subr.mxu0 0.0
    %5873 = vmatpush1.msra.mxu0 0.0
    %5874 = vmatprep.subr.mxu0 0.0
    %5875 = vmatpush1.msra.mxu0 0.0
    %5876 = vmatprep.subr.mxu0 0.0
    %5877 = vmatpush1.msra.mxu0 0.0
    %5878 = vmatprep.subr.mxu0 0.0
    %5879 = vmatpush1.msra.mxu0 0.0
    %5880 = vmatprep.subr.mxu0 0.0
    %5881 = vmatpush1.msra.mxu0 0.0
    %5882 = vmatprep.subr.mxu0 0.0
    %5883 = vmatpush1.msra.mxu0 0.0
    %5884 = vmatprep.subr.mxu0 0.0
    %5885 = vmatpush1.msra.mxu0 0.0
    %5886 = vmatprep.subr.mxu0 0.0
    %5887 = vmatpush1.msra.mxu0 0.0
    %5888 = vmatprep.subr.mxu0 0.0
    %5889 = vmatpush1.msra.mxu0 0.0
    %5890 = vmatprep.subr.mxu0 0.0
    %5891 = vmatpush1.msra.mxu0 0.0
    %5892 = vmatprep.subr.mxu0 0.0
    %5893 = vmatpush1.msra.mxu0 0.0
    %5894 = vmatprep.subr.mxu0 0.0
    %5895 = vmatpush1.msra.mxu0 0.0
    %5896 = vmatprep.subr.mxu0 0.0
    %5897 = vmatpush1.msra.mxu0 0.0
    %5898 = vmatprep.subr.mxu0 0.0
    %5899 = vmatpush1.msra.mxu0 0.0
    %5900 = vmatprep.subr.mxu0 0.0
    %5901 = vmatpush1.msra.mxu0 0.0
    %5902 = vmatprep.subr.mxu0 0.0
    %5903 = vmatpush1.msra.mxu0 0.0
    %5904 = vmatprep.subr.mxu0 0.0
    %5905 = vmatpush1.msra.mxu0 0.0
    %5906 = vmatprep.subr.mxu0 0.0
    %5907 = vmatpush1.msra.mxu0 0.0
    %5908 = vmatprep.subr.mxu0 0.0
    %5909 = vmatpush1.msra.mxu0 0.0
    %5910 = vmatprep.subr.mxu0 0.0
    %5911 = vmatpush1.msra.mxu0 0.0
    %5912 = vmatprep.subr.mxu0 0.0
    %5913 = vmatpush1.msra.mxu0 0.0
    %5914 = vmatprep.mubr.f32.mxu0 0.0
    %v5915 = vand.u32 %v5457, 4294901760
    %5916 = vmatmul.mubr.f32.gmra.mrb[0].mxu0 %v5915
    %v5917 = vpop.f32.mrb[0].mxu0
    %v5918 = vadd.f32 %v5845, %v5917
    %v5919 = vpop.f32.mrb[0].mxu0
    %5920 = vdwg.mxu0
    %5921 = vset.pattern.permute.xlu0 1
    %5922 = vperm.xlu0 %5921, %v5439
    %v5923 = vpop.permute.xlu0 %5922
    %5941 = vrot.lane.b32.xlu0 %v23, 126
    %v5942 = vpop.permute.xlu0 %5941
    %5943 = vrot.lane.b32.xlu0 %v24, 126
    %v5944 = vpop.permute.xlu0 %5943
    %5945 = vrot.lane.b32.xlu0 %v25, 126
    %v5946 = vpop.permute.xlu0 %5945
    %5947 = vrot.lane.b32.xlu0 %v26, 126
    %v5948 = vpop.permute.xlu0 %5947
    %5949 = vrot.lane.b32.xlu0 %v27, 126
    %v5950 = vpop.permute.xlu0 %5949
    %5951 = vrot.lane.b32.xlu0 %v28, 126
    %v5952 = vpop.permute.xlu0 %5951
    %5953 = vrot.lane.b32.xlu0 %v29, 126
    %v5954 = vpop.permute.xlu0 %5953
    %5955 = vrot.lane.b32.xlu0 %v30, 126
    %v5956 = vpop.permute.xlu0 %5955
    %5957 = vrot.lane.b32.xlu0 %v31, 126
    %v5958 = vpop.permute.xlu0 %5957
    %5959 = vrot.lane.b32.xlu0 %v32, 126
    %v5960 = vpop.permute.xlu0 %5959
    %5961 = vrot.lane.b32.xlu0 %v33, 126
    %v5962 = vpop.permute.xlu0 %5961
    %5963 = vrot.lane.b32.xlu0 %v34, 126
    %v5964 = vpop.permute.xlu0 %5963
    %5965 = vrot.lane.b32.xlu0 %v35, 126
    %v5966 = vpop.permute.xlu0 %5965
    %5967 = vrot.lane.b32.xlu0 %v36, 126
    %v5968 = vpop.permute.xlu0 %5967
    %5969 = vrot.lane.b32.xlu0 %v37, 126
    %v5970 = vpop.permute.xlu0 %5969
    %5971 = vrot.lane.b32.xlu0 %v38, 126
    %v5972 = vpop.permute.xlu0 %5971
    %5989 = vmatprep.subr.mxu0 0.0
    %v5990 = vand.u32 %v5942, 4294901760
    %5991 = vmatpush1.msra.mxu0 %v5990
    %5992 = vmatprep.subr.mxu0 0.0
    %v5993 = vand.u32 %v5944, 4294901760
    %5994 = vmatpush1.msra.mxu0 %v5993
    %5995 = vmatprep.subr.mxu0 0.0
    %v5996 = vand.u32 %v5946, 4294901760
    %5997 = vmatpush1.msra.mxu0 %v5996
    %5998 = vmatprep.subr.mxu0 0.0
    %v5999 = vand.u32 %v5948, 4294901760
    %6000 = vmatpush1.msra.mxu0 %v5999
    %6001 = vmatprep.subr.mxu0 0.0
    %v6002 = vand.u32 %v5950, 4294901760
    %6003 = vmatpush1.msra.mxu0 %v6002
    %6004 = vmatprep.subr.mxu0 0.0
    %v6005 = vand.u32 %v5952, 4294901760
    %6006 = vmatpush1.msra.mxu0 %v6005
    %6007 = vmatprep.subr.mxu0 0.0
    %v6008 = vand.u32 %v5954, 4294901760
    %6009 = vmatpush1.msra.mxu0 %v6008
    %6010 = vmatprep.subr.mxu0 0.0
    %v6011 = vand.u32 %v5956, 4294901760
    %6012 = vmatpush1.msra.mxu0 %v6011
    %6013 = vmatprep.subr.mxu0 0.0
    %v6014 = vand.u32 %v5958, 4294901760
    %6015 = vmatpush1.msra.mxu0 %v6014
    %6016 = vmatprep.subr.mxu0 0.0
    %v6017 = vand.u32 %v5960, 4294901760
    %6018 = vmatpush1.msra.mxu0 %v6017
    %6019 = vmatprep.subr.mxu0 0.0
    %v6020 = vand.u32 %v5962, 4294901760
    %6021 = vmatpush1.msra.mxu0 %v6020
    %6022 = vmatprep.subr.mxu0 0.0
    %v6023 = vand.u32 %v5964, 4294901760
    %6024 = vmatpush1.msra.mxu0 %v6023
    %6025 = vmatprep.subr.mxu0 0.0
    %v6026 = vand.u32 %v5966, 4294901760
    %6027 = vmatpush1.msra.mxu0 %v6026
    %6028 = vmatprep.subr.mxu0 0.0
    %v6029 = vand.u32 %v5968, 4294901760
    %6030 = vmatpush1.msra.mxu0 %v6029
    %6031 = vmatprep.subr.mxu0 0.0
    %v6032 = vand.u32 %v5970, 4294901760
    %6033 = vmatpush1.msra.mxu0 %v6032
    %6034 = vmatprep.subr.mxu0 0.0
    %v6035 = vand.u32 %v5972, 4294901760
    %6036 = vmatpush1.msra.mxu0 %v6035
    %6037 = vmatprep.subr.mxu0 0.0
    %6038 = vmatpush1.msra.mxu0 0.0
    %6039 = vmatprep.subr.mxu0 0.0
    %6040 = vmatpush1.msra.mxu0 0.0
    %6041 = vmatprep.subr.mxu0 0.0
    %6042 = vmatpush1.msra.mxu0 0.0
    %6043 = vmatprep.subr.mxu0 0.0
    %6044 = vmatpush1.msra.mxu0 0.0
    %6045 = vmatprep.subr.mxu0 0.0
    %6046 = vmatpush1.msra.mxu0 0.0
    %6047 = vmatprep.subr.mxu0 0.0
    %6048 = vmatpush1.msra.mxu0 0.0
    %6049 = vmatprep.subr.mxu0 0.0
    %6050 = vmatpush1.msra.mxu0 0.0
    %6051 = vmatprep.subr.mxu0 0.0
    %6052 = vmatpush1.msra.mxu0 0.0
    %6053 = vmatprep.subr.mxu0 0.0
    %6054 = vmatpush1.msra.mxu0 0.0
    %6055 = vmatprep.subr.mxu0 0.0
    %6056 = vmatpush1.msra.mxu0 0.0
    %6057 = vmatprep.subr.mxu0 0.0
    %6058 = vmatpush1.msra.mxu0 0.0
    %6059 = vmatprep.subr.mxu0 0.0
    %6060 = vmatpush1.msra.mxu0 0.0
    %6061 = vmatprep.subr.mxu0 0.0
    %6062 = vmatpush1.msra.mxu0 0.0
    %6063 = vmatprep.subr.mxu0 0.0
    %6064 = vmatpush1.msra.mxu0 0.0
    %6065 = vmatprep.subr.mxu0 0.0
    %6066 = vmatpush1.msra.mxu0 0.0
    %6067 = vmatprep.subr.mxu0 0.0
    %6068 = vmatpush1.msra.mxu0 0.0
    %6069 = vmatprep.mubr.f32.mxu0 0.0
    %v6070 = vand.u32 %v5918, 4294901760
    %v6071 = vsub.f32 %v5918, %v6070
    %v6072 = vand.u32 %v6071, 4294901760
    %v6073 = vsub.f32 %v6071, %v6072
    %v6074 = vand.u32 %v6073, 4294901760
    %6075 = vmatmul.mubr.f32.gmra.mrb[0].mxu0 %v6074
    %v6076 = vpop.f32.mrb[0].mxu0
    %v6077 = vadd.f32 %v5923, %v6076
    %v6078 = vpop.f32.mrb[0].mxu0
    %6079 = vdwg.mxu0
    %6080 = vmatprep.subr.mxu0 0.0
    %v6081 = vand.u32 %v5942, 4294901760
    %v6082 = vsub.f32 %v5942, %v6081
    %v6083 = vand.u32 %v6082, 4294901760
    %v6084 = vsub.f32 %v6082, %v6083
    %v6085 = vand.u32 %v6084, 4294901760
    %6086 = vmatpush1.msra.mxu0 %v6085
    %6087 = vmatprep.subr.mxu0 0.0
    %v6088 = vand.u32 %v5944, 4294901760
    %v6089 = vsub.f32 %v5944, %v6088
    %v6090 = vand.u32 %v6089, 4294901760
    %v6091 = vsub.f32 %v6089, %v6090
    %v6092 = vand.u32 %v6091, 4294901760
    %6093 = vmatpush1.msra.mxu0 %v6092
    %6094 = vmatprep.subr.mxu0 0.0
    %v6095 = vand.u32 %v5946, 4294901760
    %v6096 = vsub.f32 %v5946, %v6095
    %v6097 = vand.u32 %v6096, 4294901760
    %v6098 = vsub.f32 %v6096, %v6097
    %v6099 = vand.u32 %v6098, 4294901760
    %6100 = vmatpush1.msra.mxu0 %v6099
    %6101 = vmatprep.subr.mxu0 0.0
    %v6102 = vand.u32 %v5948, 4294901760
    %v6103 = vsub.f32 %v5948, %v6102
    %v6104 = vand.u32 %v6103, 4294901760
    %v6105 = vsub.f32 %v6103, %v6104
    %v6106 = vand.u32 %v6105, 4294901760
    %6107 = vmatpush1.msra.mxu0 %v6106
    %6108 = vmatprep.subr.mxu0 0.0
    %v6109 = vand.u32 %v5950, 4294901760
    %v6110 = vsub.f32 %v5950, %v6109
    %v6111 = vand.u32 %v6110, 4294901760
    %v6112 = vsub.f32 %v6110, %v6111
    %v6113 = vand.u32 %v6112, 4294901760
    %6114 = vmatpush1.msra.mxu0 %v6113
    %6115 = vmatprep.subr.mxu0 0.0
    %v6116 = vand.u32 %v5952, 4294901760
    %v6117 = vsub.f32 %v5952, %v6116
    %v6118 = vand.u32 %v6117, 4294901760
    %v6119 = vsub.f32 %v6117, %v6118
    %v6120 = vand.u32 %v6119, 4294901760
    %6121 = vmatpush1.msra.mxu0 %v6120
    %6122 = vmatprep.subr.mxu0 0.0
    %v6123 = vand.u32 %v5954, 4294901760
    %v6124 = vsub.f32 %v5954, %v6123
    %v6125 = vand.u32 %v6124, 4294901760
    %v6126 = vsub.f32 %v6124, %v6125
    %v6127 = vand.u32 %v6126, 4294901760
    %6128 = vmatpush1.msra.mxu0 %v6127
    %6129 = vmatprep.subr.mxu0 0.0
    %v6130 = vand.u32 %v5956, 4294901760
    %v6131 = vsub.f32 %v5956, %v6130
    %v6132 = vand.u32 %v6131, 4294901760
    %v6133 = vsub.f32 %v6131, %v6132
    %v6134 = vand.u32 %v6133, 4294901760
    %6135 = vmatpush1.msra.mxu0 %v6134
    %6136 = vmatprep.subr.mxu0 0.0
    %v6137 = vand.u32 %v5958, 4294901760
    %v6138 = vsub.f32 %v5958, %v6137
    %v6139 = vand.u32 %v6138, 4294901760
    %v6140 = vsub.f32 %v6138, %v6139
    %v6141 = vand.u32 %v6140, 4294901760
    %6142 = vmatpush1.msra.mxu0 %v6141
    %6143 = vmatprep.subr.mxu0 0.0
    %v6144 = vand.u32 %v5960, 4294901760
    %v6145 = vsub.f32 %v5960, %v6144
    %v6146 = vand.u32 %v6145, 4294901760
    %v6147 = vsub.f32 %v6145, %v6146
    %v6148 = vand.u32 %v6147, 4294901760
    %6149 = vmatpush1.msra.mxu0 %v6148
    %6150 = vmatprep.subr.mxu0 0.0
    %v6151 = vand.u32 %v5962, 4294901760
    %v6152 = vsub.f32 %v5962, %v6151
    %v6153 = vand.u32 %v6152, 4294901760
    %v6154 = vsub.f32 %v6152, %v6153
    %v6155 = vand.u32 %v6154, 4294901760
    %6156 = vmatpush1.msra.mxu0 %v6155
    %6157 = vmatprep.subr.mxu0 0.0
    %v6158 = vand.u32 %v5964, 4294901760
    %v6159 = vsub.f32 %v5964, %v6158
    %v6160 = vand.u32 %v6159, 4294901760
    %v6161 = vsub.f32 %v6159, %v6160
    %v6162 = vand.u32 %v6161, 4294901760
    %6163 = vmatpush1.msra.mxu0 %v6162
    %6164 = vmatprep.subr.mxu0 0.0
    %v6165 = vand.u32 %v5966, 4294901760
    %v6166 = vsub.f32 %v5966, %v6165
    %v6167 = vand.u32 %v6166, 4294901760
    %v6168 = vsub.f32 %v6166, %v6167
    %v6169 = vand.u32 %v6168, 4294901760
    %6170 = vmatpush1.msra.mxu0 %v6169
    %6171 = vmatprep.subr.mxu0 0.0
    %v6172 = vand.u32 %v5968, 4294901760
    %v6173 = vsub.f32 %v5968, %v6172
    %v6174 = vand.u32 %v6173, 4294901760
    %v6175 = vsub.f32 %v6173, %v6174
    %v6176 = vand.u32 %v6175, 4294901760
    %6177 = vmatpush1.msra.mxu0 %v6176
    %6178 = vmatprep.subr.mxu0 0.0
    %v6179 = vand.u32 %v5970, 4294901760
    %v6180 = vsub.f32 %v5970, %v6179
    %v6181 = vand.u32 %v6180, 4294901760
    %v6182 = vsub.f32 %v6180, %v6181
    %v6183 = vand.u32 %v6182, 4294901760
    %6184 = vmatpush1.msra.mxu0 %v6183
    %6185 = vmatprep.subr.mxu0 0.0
    %v6186 = vand.u32 %v5972, 4294901760
    %v6187 = vsub.f32 %v5972, %v6186
    %v6188 = vand.u32 %v6187, 4294901760
    %v6189 = vsub.f32 %v6187, %v6188
    %v6190 = vand.u32 %v6189, 4294901760
    %6191 = vmatpush1.msra.mxu0 %v6190
    %6192 = vmatprep.subr.mxu0 0.0
    %6193 = vmatpush1.msra.mxu0 0.0
    %6194 = vmatprep.subr.mxu0 0.0
    %6195 = vmatpush1.msra.mxu0 0.0
    %6196 = vmatprep.subr.mxu0 0.0
    %6197 = vmatpush1.msra.mxu0 0.0
    %6198 = vmatprep.subr.mxu0 0.0
    %6199 = vmatpush1.msra.mxu0 0.0
    %6200 = vmatprep.subr.mxu0 0.0
    %6201 = vmatpush1.msra.mxu0 0.0
    %6202 = vmatprep.subr.mxu0 0.0
    %6203 = vmatpush1.msra.mxu0 0.0
    %6204 = vmatprep.subr.mxu0 0.0
    %6205 = vmatpush1.msra.mxu0 0.0
    %6206 = vmatprep.subr.mxu0 0.0
    %6207 = vmatpush1.msra.mxu0 0.0
    %6208 = vmatprep.subr.mxu0 0.0
    %6209 = vmatpush1.msra.mxu0 0.0
    %6210 = vmatprep.subr.mxu0 0.0
    %6211 = vmatpush1.msra.mxu0 0.0
    %6212 = vmatprep.subr.mxu0 0.0
    %6213 = vmatpush1.msra.mxu0 0.0
    %6214 = vmatprep.subr.mxu0 0.0
    %6215 = vmatpush1.msra.mxu0 0.0
    %6216 = vmatprep.subr.mxu0 0.0
    %6217 = vmatpush1.msra.mxu0 0.0
    %6218 = vmatprep.subr.mxu0 0.0
    %6219 = vmatpush1.msra.mxu0 0.0
    %6220 = vmatprep.subr.mxu0 0.0
    %6221 = vmatpush1.msra.mxu0 0.0
    %6222 = vmatprep.subr.mxu0 0.0
    %6223 = vmatpush1.msra.mxu0 0.0
    %6224 = vmatprep.mubr.f32.mxu0 0.0
    %v6225 = vand.u32 %v5918, 4294901760
    %6226 = vmatmul.mubr.f32.gmra.mrb[0].mxu0 %v6225
    %v6227 = vpop.f32.mrb[0].mxu0
    %v6228 = vadd.f32 %v6077, %v6227
    %v6229 = vpop.f32.mrb[0].mxu0
    %6230 = vdwg.mxu0
    %6231 = vmatprep.subr.mxu0 0.0
    %v6232 = vand.u32 %v5942, 4294901760
    %v6233 = vsub.f32 %v5942, %v6232
    %6234 = vmatpush1.msra.mxu0 %v6233
    %6235 = vmatprep.subr.mxu0 0.0
    %v6236 = vand.u32 %v5944, 4294901760
    %v6237 = vsub.f32 %v5944, %v6236
    %6238 = vmatpush1.msra.mxu0 %v6237
    %6239 = vmatprep.subr.mxu0 0.0
    %v6240 = vand.u32 %v5946, 4294901760
    %v6241 = vsub.f32 %v5946, %v6240
    %6242 = vmatpush1.msra.mxu0 %v6241
    %6243 = vmatprep.subr.mxu0 0.0
    %v6244 = vand.u32 %v5948, 4294901760
    %v6245 = vsub.f32 %v5948, %v6244
    %6246 = vmatpush1.msra.mxu0 %v6245
    %6247 = vmatprep.subr.mxu0 0.0
    %v6248 = vand.u32 %v5950, 4294901760
    %v6249 = vsub.f32 %v5950, %v6248
    %6250 = vmatpush1.msra.mxu0 %v6249
    %6251 = vmatprep.subr.mxu0 0.0
    %v6252 = vand.u32 %v5952, 4294901760
    %v6253 = vsub.f32 %v5952, %v6252
    %6254 = vmatpush1.msra.mxu0 %v6253
    %6255 = vmatprep.subr.mxu0 0.0
    %v6256 = vand.u32 %v5954, 4294901760
    %v6257 = vsub.f32 %v5954, %v6256
    %6258 = vmatpush1.msra.mxu0 %v6257
    %6259 = vmatprep.subr.mxu0 0.0
    %v6260 = vand.u32 %v5956, 4294901760
    %v6261 = vsub.f32 %v5956, %v6260
    %6262 = vmatpush1.msra.mxu0 %v6261
    %6263 = vmatprep.subr.mxu0 0.0
    %v6264 = vand.u32 %v5958, 4294901760
    %v6265 = vsub.f32 %v5958, %v6264
    %6266 = vmatpush1.msra.mxu0 %v6265
    %6267 = vmatprep.subr.mxu0 0.0
    %v6268 = vand.u32 %v5960, 4294901760
    %v6269 = vsub.f32 %v5960, %v6268
    %6270 = vmatpush1.msra.mxu0 %v6269
    %6271 = vmatprep.subr.mxu0 0.0
    %v6272 = vand.u32 %v5962, 4294901760
    %v6273 = vsub.f32 %v5962, %v6272
    %6274 = vmatpush1.msra.mxu0 %v6273
    %6275 = vmatprep.subr.mxu0 0.0
    %v6276 = vand.u32 %v5964, 4294901760
    %v6277 = vsub.f32 %v5964, %v6276
    %6278 = vmatpush1.msra.mxu0 %v6277
    %6279 = vmatprep.subr.mxu0 0.0
    %v6280 = vand.u32 %v5966, 4294901760
    %v6281 = vsub.f32 %v5966, %v6280
    %6282 = vmatpush1.msra.mxu0 %v6281
    %6283 = vmatprep.subr.mxu0 0.0
    %v6284 = vand.u32 %v5968, 4294901760
    %v6285 = vsub.f32 %v5968, %v6284
    %6286 = vmatpush1.msra.mxu0 %v6285
    %6287 = vmatprep.subr.mxu0 0.0
    %v6288 = vand.u32 %v5970, 4294901760
    %v6289 = vsub.f32 %v5970, %v6288
    %6290 = vmatpush1.msra.mxu0 %v6289
    %6291 = vmatprep.subr.mxu0 0.0
    %v6292 = vand.u32 %v5972, 4294901760
    %v6293 = vsub.f32 %v5972, %v6292
    %6294 = vmatpush1.msra.mxu0 %v6293
    %6295 = vmatprep.subr.mxu0 0.0
    %6296 = vmatpush1.msra.mxu0 0.0
    %6297 = vmatprep.subr.mxu0 0.0
    %6298 = vmatpush1.msra.mxu0 0.0
    %6299 = vmatprep.subr.mxu0 0.0
    %6300 = vmatpush1.msra.mxu0 0.0
    %6301 = vmatprep.subr.mxu0 0.0
    %6302 = vmatpush1.msra.mxu0 0.0
    %6303 = vmatprep.subr.mxu0 0.0
    %6304 = vmatpush1.msra.mxu0 0.0
    %6305 = vmatprep.subr.mxu0 0.0
    %6306 = vmatpush1.msra.mxu0 0.0
    %6307 = vmatprep.subr.mxu0 0.0
    %6308 = vmatpush1.msra.mxu0 0.0
    %6309 = vmatprep.subr.mxu0 0.0
    %6310 = vmatpush1.msra.mxu0 0.0
    %6311 = vmatprep.subr.mxu0 0.0
    %6312 = vmatpush1.msra.mxu0 0.0
    %6313 = vmatprep.subr.mxu0 0.0
    %6314 = vmatpush1.msra.mxu0 0.0
    %6315 = vmatprep.subr.mxu0 0.0
    %6316 = vmatpush1.msra.mxu0 0.0
    %6317 = vmatprep.subr.mxu0 0.0
    %6318 = vmatpush1.msra.mxu0 0.0
    %6319 = vmatprep.subr.mxu0 0.0
    %6320 = vmatpush1.msra.mxu0 0.0
    %6321 = vmatprep.subr.mxu0 0.0
    %6322 = vmatpush1.msra.mxu0 0.0
    %6323 = vmatprep.subr.mxu0 0.0
    %6324 = vmatpush1.msra.mxu0 0.0
    %6325 = vmatprep.subr.mxu0 0.0
    %6326 = vmatpush1.msra.mxu0 0.0
    %6327 = vmatprep.mubr.f32.mxu0 0.0
    %v6328 = vand.u32 %v5918, 4294901760
    %v6329 = vsub.f32 %v5918, %v6328
    %6330 = vmatmul.mubr.f32.gmra.mrb[0].mxu0 %v6329
    %v6331 = vpop.f32.mrb[0].mxu0
    %v6332 = vadd.f32 %v6228, %v6331
    %v6333 = vpop.f32.mrb[0].mxu0
    %6334 = vdwg.mxu0
    %6335 = vmatprep.subr.mxu0 0.0
    %v6336 = vand.u32 %v5942, 4294901760
    %6337 = vmatpush1.msra.mxu0 %v6336
    %6338 = vmatprep.subr.mxu0 0.0
    %v6339 = vand.u32 %v5944, 4294901760
    %6340 = vmatpush1.msra.mxu0 %v6339
    %6341 = vmatprep.subr.mxu0 0.0
    %v6342 = vand.u32 %v5946, 4294901760
    %6343 = vmatpush1.msra.mxu0 %v6342
    %6344 = vmatprep.subr.mxu0 0.0
    %v6345 = vand.u32 %v5948, 4294901760
    %6346 = vmatpush1.msra.mxu0 %v6345
    %6347 = vmatprep.subr.mxu0 0.0
    %v6348 = vand.u32 %v5950, 4294901760
    %6349 = vmatpush1.msra.mxu0 %v6348
    %6350 = vmatprep.subr.mxu0 0.0
    %v6351 = vand.u32 %v5952, 4294901760
    %6352 = vmatpush1.msra.mxu0 %v6351
    %6353 = vmatprep.subr.mxu0 0.0
    %v6354 = vand.u32 %v5954, 4294901760
    %6355 = vmatpush1.msra.mxu0 %v6354
    %6356 = vmatprep.subr.mxu0 0.0
    %v6357 = vand.u32 %v5956, 4294901760
    %6358 = vmatpush1.msra.mxu0 %v6357
    %6359 = vmatprep.subr.mxu0 0.0
    %v6360 = vand.u32 %v5958, 4294901760
    %6361 = vmatpush1.msra.mxu0 %v6360
    %6362 = vmatprep.subr.mxu0 0.0
    %v6363 = vand.u32 %v5960, 4294901760
    %6364 = vmatpush1.msra.mxu0 %v6363
    %6365 = vmatprep.subr.mxu0 0.0
    %v6366 = vand.u32 %v5962, 4294901760
    %6367 = vmatpush1.msra.mxu0 %v6366
    %6368 = vmatprep.subr.mxu0 0.0
    %v6369 = vand.u32 %v5964, 4294901760
    %6370 = vmatpush1.msra.mxu0 %v6369
    %6371 = vmatprep.subr.mxu0 0.0
    %v6372 = vand.u32 %v5966, 4294901760
    %6373 = vmatpush1.msra.mxu0 %v6372
    %6374 = vmatprep.subr.mxu0 0.0
    %v6375 = vand.u32 %v5968, 4294901760
    %6376 = vmatpush1.msra.mxu0 %v6375
    %6377 = vmatprep.subr.mxu0 0.0
    %v6378 = vand.u32 %v5970, 4294901760
    %6379 = vmatpush1.msra.mxu0 %v6378
    %6380 = vmatprep.subr.mxu0 0.0
    %v6381 = vand.u32 %v5972, 4294901760
    %6382 = vmatpush1.msra.mxu0 %v6381
    %6383 = vmatprep.subr.mxu0 0.0
    %6384 = vmatpush1.msra.mxu0 0.0
    %6385 = vmatprep.subr.mxu0 0.0
    %6386 = vmatpush1.msra.mxu0 0.0
    %6387 = vmatprep.subr.mxu0 0.0
    %6388 = vmatpush1.msra.mxu0 0.0
    %6389 = vmatprep.subr.mxu0 0.0
    %6390 = vmatpush1.msra.mxu0 0.0
    %6391 = vmatprep.subr.mxu0 0.0
    %6392 = vmatpush1.msra.mxu0 0.0
    %6393 = vmatprep.subr.mxu0 0.0
    %6394 = vmatpush1.msra.mxu0 0.0
    %6395 = vmatprep.subr.mxu0 0.0
    %6396 = vmatpush1.msra.mxu0 0.0
    %6397 = vmatprep.subr.mxu0 0.0
    %6398 = vmatpush1.msra.mxu0 0.0
    %6399 = vmatprep.subr.mxu0 0.0
    %6400 = vmatpush1.msra.mxu0 0.0
    %6401 = vmatprep.subr.mxu0 0.0
    %6402 = vmatpush1.msra.mxu0 0.0
    %6403 = vmatprep.subr.mxu0 0.0
    %6404 = vmatpush1.msra.mxu0 0.0
    %6405 = vmatprep.subr.mxu0 0.0
    %6406 = vmatpush1.msra.mxu0 0.0
    %6407 = vmatprep.subr.mxu0 0.0
    %6408 = vmatpush1.msra.mxu0 0.0
    %6409 = vmatprep.subr.mxu0 0.0
    %6410 = vmatpush1.msra.mxu0 0.0
    %6411 = vmatprep.subr.mxu0 0.0
    %6412 = vmatpush1.msra.mxu0 0.0
    %6413 = vmatprep.subr.mxu0 0.0
    %6414 = vmatpush1.msra.mxu0 0.0
    %6415 = vmatprep.mubr.f32.mxu0 0.0
    %v6416 = vand.u32 %v5918, 4294901760
    %v6417 = vsub.f32 %v5918, %v6416
    %v6418 = vand.u32 %v6417, 4294901760
    %6419 = vmatmul.mubr.f32.gmra.mrb[0].mxu0 %v6418
    %v6420 = vpop.f32.mrb[0].mxu0
    %v6421 = vadd.f32 %v6332, %v6420
    %v6422 = vpop.f32.mrb[0].mxu0
    %6423 = vdwg.mxu0
    %6424 = vmatprep.subr.mxu0 0.0
    %v6425 = vand.u32 %v5942, 4294901760
    %v6426 = vsub.f32 %v5942, %v6425
    %v6427 = vand.u32 %v6426, 4294901760
    %6428 = vmatpush1.msra.mxu0 %v6427
    %6429 = vmatprep.subr.mxu0 0.0
    %v6430 = vand.u32 %v5944, 4294901760
    %v6431 = vsub.f32 %v5944, %v6430
    %v6432 = vand.u32 %v6431, 4294901760
    %6433 = vmatpush1.msra.mxu0 %v6432
    %6434 = vmatprep.subr.mxu0 0.0
    %v6435 = vand.u32 %v5946, 4294901760
    %v6436 = vsub.f32 %v5946, %v6435
    %v6437 = vand.u32 %v6436, 4294901760
    %6438 = vmatpush1.msra.mxu0 %v6437
    %6439 = vmatprep.subr.mxu0 0.0
    %v6440 = vand.u32 %v5948, 4294901760
    %v6441 = vsub.f32 %v5948, %v6440
    %v6442 = vand.u32 %v6441, 4294901760
    %6443 = vmatpush1.msra.mxu0 %v6442
    %6444 = vmatprep.subr.mxu0 0.0
    %v6445 = vand.u32 %v5950, 4294901760
    %v6446 = vsub.f32 %v5950, %v6445
    %v6447 = vand.u32 %v6446, 4294901760
    %6448 = vmatpush1.msra.mxu0 %v6447
    %6449 = vmatprep.subr.mxu0 0.0
    %v6450 = vand.u32 %v5952, 4294901760
    %v6451 = vsub.f32 %v5952, %v6450
    %v6452 = vand.u32 %v6451, 4294901760
    %6453 = vmatpush1.msra.mxu0 %v6452
    %6454 = vmatprep.subr.mxu0 0.0
    %v6455 = vand.u32 %v5954, 4294901760
    %v6456 = vsub.f32 %v5954, %v6455
    %v6457 = vand.u32 %v6456, 4294901760
    %6458 = vmatpush1.msra.mxu0 %v6457
    %6459 = vmatprep.subr.mxu0 0.0
    %v6460 = vand.u32 %v5956, 4294901760
    %v6461 = vsub.f32 %v5956, %v6460
    %v6462 = vand.u32 %v6461, 4294901760
    %6463 = vmatpush1.msra.mxu0 %v6462
    %6464 = vmatprep.subr.mxu0 0.0
    %v6465 = vand.u32 %v5958, 4294901760
    %v6466 = vsub.f32 %v5958, %v6465
    %v6467 = vand.u32 %v6466, 4294901760
    %6468 = vmatpush1.msra.mxu0 %v6467
    %6469 = vmatprep.subr.mxu0 0.0
    %v6470 = vand.u32 %v5960, 4294901760
    %v6471 = vsub.f32 %v5960, %v6470
    %v6472 = vand.u32 %v6471, 4294901760
    %6473 = vmatpush1.msra.mxu0 %v6472
    %6474 = vmatprep.subr.mxu0 0.0
    %v6475 = vand.u32 %v5962, 4294901760
    %v6476 = vsub.f32 %v5962, %v6475
    %v6477 = vand.u32 %v6476, 4294901760
    %6478 = vmatpush1.msra.mxu0 %v6477
    %6479 = vmatprep.subr.mxu0 0.0
    %v6480 = vand.u32 %v5964, 4294901760
    %v6481 = vsub.f32 %v5964, %v6480
    %v6482 = vand.u32 %v6481, 4294901760
    %6483 = vmatpush1.msra.mxu0 %v6482
    %6484 = vmatprep.subr.mxu0 0.0
    %v6485 = vand.u32 %v5966, 4294901760
    %v6486 = vsub.f32 %v5966, %v6485
    %v6487 = vand.u32 %v6486, 4294901760
    %6488 = vmatpush1.msra.mxu0 %v6487
    %6489 = vmatprep.subr.mxu0 0.0
    %v6490 = vand.u32 %v5968, 4294901760
    %v6491 = vsub.f32 %v5968, %v6490
    %v6492 = vand.u32 %v6491, 4294901760
    %6493 = vmatpush1.msra.mxu0 %v6492
    %6494 = vmatprep.subr.mxu0 0.0
    %v6495 = vand.u32 %v5970, 4294901760
    %v6496 = vsub.f32 %v5970, %v6495
    %v6497 = vand.u32 %v6496, 4294901760
    %6498 = vmatpush1.msra.mxu0 %v6497
    %6499 = vmatprep.subr.mxu0 0.0
    %v6500 = vand.u32 %v5972, 4294901760
    %v6501 = vsub.f32 %v5972, %v6500
    %v6502 = vand.u32 %v6501, 4294901760
    %6503 = vmatpush1.msra.mxu0 %v6502
    %6504 = vmatprep.subr.mxu0 0.0
    %6505 = vmatpush1.msra.mxu0 0.0
    %6506 = vmatprep.subr.mxu0 0.0
    %6507 = vmatpush1.msra.mxu0 0.0
    %6508 = vmatprep.subr.mxu0 0.0
    %6509 = vmatpush1.msra.mxu0 0.0
    %6510 = vmatprep.subr.mxu0 0.0
    %6511 = vmatpush1.msra.mxu0 0.0
    %6512 = vmatprep.subr.mxu0 0.0
    %6513 = vmatpush1.msra.mxu0 0.0
    %6514 = vmatprep.subr.mxu0 0.0
    %6515 = vmatpush1.msra.mxu0 0.0
    %6516 = vmatprep.subr.mxu0 0.0
    %6517 = vmatpush1.msra.mxu0 0.0
    %6518 = vmatprep.subr.mxu0 0.0
    %6519 = vmatpush1.msra.mxu0 0.0
    %6520 = vmatprep.subr.mxu0 0.0
    %6521 = vmatpush1.msra.mxu0 0.0
    %6522 = vmatprep.subr.mxu0 0.0
    %6523 = vmatpush1.msra.mxu0 0.0
    %6524 = vmatprep.subr.mxu0 0.0
    %6525 = vmatpush1.msra.mxu0 0.0
    %6526 = vmatprep.subr.mxu0 0.0
    %6527 = vmatpush1.msra.mxu0 0.0
    %6528 = vmatprep.subr.mxu0 0.0
    %6529 = vmatpush1.msra.mxu0 0.0
    %6530 = vmatprep.subr.mxu0 0.0
    %6531 = vmatpush1.msra.mxu0 0.0
    %6532 = vmatprep.subr.mxu0 0.0
    %6533 = vmatpush1.msra.mxu0 0.0
    %6534 = vmatprep.subr.mxu0 0.0
    %6535 = vmatpush1.msra.mxu0 0.0
    %6536 = vmatprep.mubr.f32.mxu0 0.0
    %v6537 = vand.u32 %v5918, 4294901760
    %6538 = vmatmul.mubr.f32.gmra.mrb[0].mxu0 %v6537
    %v6539 = vpop.f32.mrb[0].mxu0
    %v6540 = vadd.f32 %v6421, %v6539
    %v6541 = vpop.f32.mrb[0].mxu0
    %6542 = vdwg.mxu0
    %6543 = vmatprep.subr.mxu0 0.0
    %v6544 = vand.u32 %v5942, 4294901760
    %6545 = vmatpush1.msra.mxu0 %v6544
    %6546 = vmatprep.subr.mxu0 0.0
    %v6547 = vand.u32 %v5944, 4294901760
    %6548 = vmatpush1.msra.mxu0 %v6547
    %6549 = vmatprep.subr.mxu0 0.0
    %v6550 = vand.u32 %v5946, 4294901760
    %6551 = vmatpush1.msra.mxu0 %v6550
    %6552 = vmatprep.subr.mxu0 0.0
    %v6553 = vand.u32 %v5948, 4294901760
    %6554 = vmatpush1.msra.mxu0 %v6553
    %6555 = vmatprep.subr.mxu0 0.0
    %v6556 = vand.u32 %v5950, 4294901760
    %6557 = vmatpush1.msra.mxu0 %v6556
    %6558 = vmatprep.subr.mxu0 0.0
    %v6559 = vand.u32 %v5952, 4294901760
    %6560 = vmatpush1.msra.mxu0 %v6559
    %6561 = vmatprep.subr.mxu0 0.0
    %v6562 = vand.u32 %v5954, 4294901760
    %6563 = vmatpush1.msra.mxu0 %v6562
    %6564 = vmatprep.subr.mxu0 0.0
    %v6565 = vand.u32 %v5956, 4294901760
    %6566 = vmatpush1.msra.mxu0 %v6565
    %6567 = vmatprep.subr.mxu0 0.0
    %v6568 = vand.u32 %v5958, 4294901760
    %6569 = vmatpush1.msra.mxu0 %v6568
    %6570 = vmatprep.subr.mxu0 0.0
    %v6571 = vand.u32 %v5960, 4294901760
    %6572 = vmatpush1.msra.mxu0 %v6571
    %6573 = vmatprep.subr.mxu0 0.0
    %v6574 = vand.u32 %v5962, 4294901760
    %6575 = vmatpush1.msra.mxu0 %v6574
    %6576 = vmatprep.subr.mxu0 0.0
    %v6577 = vand.u32 %v5964, 4294901760
    %6578 = vmatpush1.msra.mxu0 %v6577
    %6579 = vmatprep.subr.mxu0 0.0
    %v6580 = vand.u32 %v5966, 4294901760
    %6581 = vmatpush1.msra.mxu0 %v6580
    %6582 = vmatprep.subr.mxu0 0.0
    %v6583 = vand.u32 %v5968, 4294901760
    %6584 = vmatpush1.msra.mxu0 %v6583
    %6585 = vmatprep.subr.mxu0 0.0
    %v6586 = vand.u32 %v5970, 4294901760
    %6587 = vmatpush1.msra.mxu0 %v6586
    %6588 = vmatprep.subr.mxu0 0.0
    %v6589 = vand.u32 %v5972, 4294901760
    %6590 = vmatpush1.msra.mxu0 %v6589
    %6591 = vmatprep.subr.mxu0 0.0
    %6592 = vmatpush1.msra.mxu0 0.0
    %6593 = vmatprep.subr.mxu0 0.0
    %6594 = vmatpush1.msra.mxu0 0.0
    %6595 = vmatprep.subr.mxu0 0.0
    %6596 = vmatpush1.msra.mxu0 0.0
    %6597 = vmatprep.subr.mxu0 0.0
    %6598 = vmatpush1.msra.mxu0 0.0
    %6599 = vmatprep.subr.mxu0 0.0
    %6600 = vmatpush1.msra.mxu0 0.0
    %6601 = vmatprep.subr.mxu0 0.0
    %6602 = vmatpush1.msra.mxu0 0.0
    %6603 = vmatprep.subr.mxu0 0.0
    %6604 = vmatpush1.msra.mxu0 0.0
    %6605 = vmatprep.subr.mxu0 0.0
    %6606 = vmatpush1.msra.mxu0 0.0
    %6607 = vmatprep.subr.mxu0 0.0
    %6608 = vmatpush1.msra.mxu0 0.0
    %6609 = vmatprep.subr.mxu0 0.0
    %6610 = vmatpush1.msra.mxu0 0.0
    %6611 = vmatprep.subr.mxu0 0.0
    %6612 = vmatpush1.msra.mxu0 0.0
    %6613 = vmatprep.subr.mxu0 0.0
    %6614 = vmatpush1.msra.mxu0 0.0
    %6615 = vmatprep.subr.mxu0 0.0
    %6616 = vmatpush1.msra.mxu0 0.0
    %6617 = vmatprep.subr.mxu0 0.0
    %6618 = vmatpush1.msra.mxu0 0.0
    %6619 = vmatprep.subr.mxu0 0.0
    %6620 = vmatpush1.msra.mxu0 0.0
    %6621 = vmatprep.subr.mxu0 0.0
    %6622 = vmatpush1.msra.mxu0 0.0
    %6623 = vmatprep.mubr.f32.mxu0 0.0
    %v6624 = vand.u32 %v5918, 4294901760
    %6625 = vmatmul.mubr.f32.gmra.mrb[0].mxu0 %v6624
    %v6626 = vpop.f32.mrb[0].mxu0
    %v6627 = vadd.f32 %v6540, %v6626
    %v6628 = vpop.f32.mrb[0].mxu0
    %6629 = vdwg.mxu0
    %vm6630 = vcmask 8192
    %6631 = vst.msk [vmem:[#allocation2] sm:$0x1] %vm6630, %v6627
    // Predicated region
    $region18: #{sffnet_pallas.3} parent=1 // pred_check
      _
    $region19: #{sffnet_pallas.3} parent=1 // pred_check_branch
      %6633 = sbr.rel (0) target = $region21
    $region20: #{sffnet_pallas.3} parent=1 // pred_region
      %s6635 = ssub.s32 16, 16
      %6636 = vsyncadd [#allocation3], %s6635
      %s6638 = sshll.u32 [#allocation2], 4
      %s6639 = int_to_ptr.vmem [resolvable:$true] %s6638
      %6641 = dma.vmem_to_hbm [thread:$0]  %s6639, 16, %s4, [#allocation3]
    $region21: #{sffnet_pallas.3} parent=1 // pred_fallthru
      _
    // Predicated region
    $region22: #{sffnet_pallas.3} parent=1 // pred_check
      _
    $region23: #{sffnet_pallas.3} parent=1 // pred_check_branch
      %6643 = sbr.rel (0) target = $region25
    $region24: #{sffnet_pallas.3} parent=1 // pred_region
      %6644 = dma.done [#allocation3], 16
    $region25: #{sffnet_pallas.3} parent=1 // pred_fallthru
      _
    %6645 = vsyncpa [#allocation3], 1

</llo_original>
